<compile_context>
chip_gen: v6e
topology: v6e:2x2x1
jax: 0.10.0
libtpu: 0.0.40
codegen_flags: <defaults>
</compile_context>

<pallas_src>
import functools

import jax
import jax.numpy as jnp
from jax.experimental import pallas as pl
from jax.experimental.pallas import tpu as pltpu

LN_EPS = 1e-5              # PyTorch nn.LayerNorm default
NEG_INF = -1e30            # finite causal-mask / vocab-pad sentinel
MXU_DTYPE = jnp.bfloat16   # dtype fed to the MXU (f32 accumulation everywhere)


def _layernorm(v, w, b):
    mu = jnp.mean(v, axis=-1, keepdims=True)
    var = jnp.mean(jnp.square(v - mu), axis=-1, keepdims=True)
    return (v - mu) * jax.lax.rsqrt(var + LN_EPS) * w + b


# ---------------------------------------------------------------------------
# Fused kernel.
# grid = (num_batch_tiles, num_layer_steps); each step applies
# `layers_per_step` DecoderBlocks to a (batch_tile, T, D) activation that
# stays resident in VMEM scratch across the layer axis.  The projection head
# (+ softmax) is fused into the last layer step.
# ---------------------------------------------------------------------------
def fused_decoder_kernel(x0_ref, wcat_ref, misc_ref, wp_ref, bp_ref, o_ref,
                         x_sc, *, num_heads, layers_per_step):
    lo = pl.program_id(1)
    n_lo = pl.num_programs(1)
    Bt, T, D = x_sc.shape
    H = num_heads
    hd = D // H

    # Load the embedded input into the resident activation at the first step.
    @pl.when(lo == 0)
    def _():
        x_sc[...] = x0_ref[...]

    # Causal mask, hoisted out of the layer/batch loops.
    row = jax.lax.broadcasted_iota(jnp.int32, (T, T), 0)
    col = jax.lax.broadcasted_iota(jnp.int32, (T, T), 1)
    causal = (row >= col)[None, :, :]                           # (1, T, T)

    for li in range(layers_per_step):                           # static unroll
        misc = misc_ref[li]                                     # (10, D) f32
        ln1w, ln1b = misc[0:1], misc[1:2]
        ln3w, ln3b = misc[2:3], misc[3:4]
        bq, bk, bv = misc[4:5], misc[5:6], misc[6:7]
        bo, b1, b2 = misc[7:8], misc[8:9], misc[9:10]

        # Weights are DMA'd once per grid step; the static batch loop below
        # reuses them for every element of the batch tile (the main HBM win).
        for b in range(Bt):                                     # static unroll
            x = x_sc[b]                                         # (T, D) f32

            # ---- masked multi-head self-attention (pre-LN) ----
            pre_x = _layernorm(x, ln1w, ln1b)
            qkv = jnp.dot(pre_x.astype(MXU_DTYPE),
                          wcat_ref[li, :, 0:3 * D],             # fused QKV
                          preferred_element_type=jnp.float32)   # (T, 3D) f32
            # Reference scales by model_dim ** 0.5 (NOT head_dim); fold into q.
            q = (qkv[:, 0:D] + bq) * (1.0 / (D ** 0.5))
            k = qkv[:, D:2 * D] + bk
            v = qkv[:, 2 * D:3 * D] + bv
            q3 = q.reshape(T, H, hd).astype(MXU_DTYPE)          # bf16 to MXU
            k3 = k.reshape(T, H, hd).astype(MXU_DTYPE)
            v3 = v.reshape(T, H, hd).astype(MXU_DTYPE)

            s = jnp.einsum("qhd,khd->hqk", q3, k3,
                           preferred_element_type=jnp.float32)  # (H, T, T) f32
            s = jnp.where(causal, s, NEG_INF)
            s = s - jnp.max(s, axis=-1, keepdims=True)          # stable softmax
            p = jnp.exp(s)
            # approx reciprocal (EUP) for the attention denominator: intentional
            # perf/accuracy tradeoff; the final vocab softmax uses exact division.
            p = p * pl.reciprocal(jnp.sum(p, axis=-1, keepdims=True), approx=True)
            attn = jnp.einsum("hqk,khd->qhd", p.astype(MXU_DTYPE), v3,
                              preferred_element_type=jnp.float32)  # (T, H, hd)
            attn = attn.reshape(T, D)
            attn = jnp.dot(attn.astype(MXU_DTYPE),
                           wcat_ref[li, :, 3 * D:4 * D],        # output proj
                           preferred_element_type=jnp.float32) + bo

            x = x + attn                                        # residual
            # ln_2 / cross-attention are dead code when enc is None.
            xn = _layernorm(x, ln3w, ln3b)
            h1 = jnp.maximum(
                jnp.dot(xn.astype(MXU_DTYPE), wcat_ref[li, :, 4 * D:5 * D],
                        preferred_element_type=jnp.float32) + b1, 0.0)
            ff = jnp.dot(h1.astype(MXU_DTYPE), wcat_ref[li, :, 5 * D:6 * D],
                         preferred_element_type=jnp.float32) + b2
            x_sc[b] = ff + x                                    # FFN residual

    # ---- fused projection head (lane-dense, vocab padded to 128) ----
    @pl.when(lo == n_lo - 1)
    def _():
        for b in range(Bt):
            logits = jnp.dot(x_sc[b].astype(MXU_DTYPE), wp_ref[...],
                             preferred_element_type=jnp.float32) + bp_ref[...]
            logits = logits - jnp.max(logits, axis=-1, keepdims=True)
            e = jnp.exp(logits)      # padded cols carry a -1e30 bias -> exp = 0
            o_ref[b] = (e / jnp.sum(e, axis=-1, keepdims=True)).astype(o_ref.dtype)


# ---------------------------------------------------------------------------
# Wrapper
# ---------------------------------------------------------------------------
def decoder_forward(tokens, tok_emb, pos_emb, stacked, wp_pad, bp_pad, *,
                    num_heads, vocab_size, batch_tile=None, layers_per_step=None):
    B, T = tokens.shape
    D = tok_emb.shape[1]
    L = stacked["wcat"].shape[0]
    Vp = wp_pad.shape[1]

    # Token embedding gather + positional embedding in plain JAX (no clean
    # rectangular BlockSpec form for the gather at this size).
    x0 = jnp.take(tok_emb, tokens, axis=0) + pos_emb[:T][None, :, :]

    if batch_tile is None:
        # Amortize weight DMA over the batch while keeping >= 2 parallel grid
        # steps when possible (v7x megacore gets both TensorCores busy).
        batch_tile = B // 2 if (B % 2 == 0 and B >= 4) else 1
    assert B % batch_tile == 0
    if layers_per_step is None:
        # Collapse the layer axis entirely when the whole weight stack is tiny
        # (per-step overhead dominates at toy sizes); otherwise stream layers.
        wbytes = stacked["wcat"].size * stacked["wcat"].dtype.itemsize
        layers_per_step = L if wbytes < (4 << 20) else 1
    assert L % layers_per_step == 0

    num_b_tiles = B // batch_tile
    num_l_steps = L // layers_per_step

    probs_padded = pl.pallas_call(
        functools.partial(fused_decoder_kernel, num_heads=num_heads,
                          layers_per_step=layers_per_step),
        grid=(num_b_tiles, num_l_steps),
        in_specs=[
            pl.BlockSpec((batch_tile, T, D), lambda b, l: (b, 0, 0)),           # x0
            pl.BlockSpec((layers_per_step, D, 6 * D), lambda b, l: (l, 0, 0)),  # fused weights (bf16)
            pl.BlockSpec((layers_per_step, 10, D), lambda b, l: (l, 0, 0)),     # LN/bias slab (f32)
            pl.BlockSpec((D, Vp), lambda b, l: (0, 0)),                         # wp (bf16, resident)
            pl.BlockSpec((1, Vp), lambda b, l: (0, 0)),                         # bp (padded, f32)
        ],
        out_specs=pl.BlockSpec((batch_tile, T, Vp), lambda b, l: (b, 0, 0)),
        out_shape=jax.ShapeDtypeStruct((B, T, Vp), jnp.float32),
        scratch_shapes=[pltpu.VMEM((batch_tile, T, D), jnp.float32)],
        compiler_params=pltpu.CompilerParams(
            dimension_semantics=("parallel", "arbitrary"),
            vmem_limit_bytes=56 * 1024 * 1024),
    )(x0, stacked["wcat"], stacked["misc"], wp_pad, bp_pad)
    return probs_padded[:, :, :vocab_size]


# ---------------------------------------------------------------------------
# Parameter / embedding setup (plain-JAX glue)
# ---------------------------------------------------------------------------
def positional_embedding(block_size, emb_dim):
    pos = jnp.arange(block_size, dtype=jnp.float32)[:, None]
    _2i = jnp.arange(0, emb_dim, 2, dtype=jnp.float32)
    angle = pos / (10000.0 ** (_2i / emb_dim))
    pe = jnp.zeros((block_size, emb_dim), jnp.float32)
    pe = pe.at[:, 0::2].set(jnp.sin(angle))
    pe = pe.at[:, 1::2].set(jnp.cos(angle))
    return pe


def init_params(key, vocab_size, num_blocks, model_dim):
    D = model_dim
    keys = iter(jax.random.split(key, 16 * num_blocks + 8))

    def w(in_d, out_d):
        return 0.02 * jax.random.normal(next(keys), (in_d, out_d), jnp.float32)

    def bvec(out_d):
        return 0.02 * jax.random.normal(next(keys), (out_d,), jnp.float32)

    tok_emb = 0.02 * jax.random.normal(next(keys), (vocab_size, D), jnp.float32)

    ones = jnp.ones((D,), jnp.float32)
    zeros = jnp.zeros((D,), jnp.float32)
    wcat_l, misc_l = [], []
    for _ in range(num_blocks):
        wq, wk, wv, wo = w(D, D), w(D, D), w(D, D), w(D, D)
        bq, bk, bv, bo = bvec(D), bvec(D), bvec(D), bvec(D)
        w1, b1 = w(D, D), bvec(D)   # FeedForwardNetwork(model_dim, model_dim)
        w2, b2 = w(D, D), bvec(D)
        # ln_2 / cross-attention params exist in the reference but never affect
        # the Decoder output (enc is always None) -> not materialized.
        wcat_l.append(jnp.concatenate([wq, wk, wv, wo, w1, w2], axis=1))  # (D, 6D)
        misc_l.append(jnp.stack([ones, zeros, ones, zeros,                # ln1, ln3
                                 bq, bk, bv, bo, b1, b2]))                # (10, D)

    stacked = {
        "wcat": jnp.stack(wcat_l).astype(MXU_DTYPE),   # (L, D, 6D) bf16
        "misc": jnp.stack(misc_l),                     # (L, 10, D) f32
    }

    wp, bp = w(D, vocab_size), bvec(vocab_size)
    v_pad = ((vocab_size + 127) // 128) * 128          # lane-dense output width
    wp_pad = jnp.zeros((D, v_pad), jnp.float32).at[:, :vocab_size].set(wp)
    wp_pad = wp_pad.astype(MXU_DTYPE)
    bp_pad = jnp.full((1, v_pad), NEG_INF, jnp.float32).at[0, :vocab_size].set(bp)
    return tok_emb, stacked, wp_pad, bp_pad


# ---------------------------------------------------------------------------
if __name__ == "__main__":
    vocab_size = 64
    block_size = 16
    num_dec_blocks = 2
    emb_dim = 32          # must equal model_dim for the reference to be shape-valid
    model_dim = 32
    num_heads = 4
    B, T = 4, 8           # B=4 -> batch_tile=2, two parallel grid steps

    key = jax.random.PRNGKey(0)
    kparam, ktok = jax.random.split(key)

    tok_emb, stacked, wp_pad, bp_pad = init_params(
        kparam, vocab_size, num_dec_blocks, model_dim)
    pos_emb = positional_embedding(block_size, emb_dim)
    tokens = jax.random.randint(ktok, (B, T), 0, vocab_size, dtype=jnp.int32)

    probs = decoder_forward(tokens, tok_emb, pos_emb, stacked, wp_pad, bp_pad,
                            num_heads=num_heads, vocab_size=vocab_size)
    probs = jax.block_until_ready(probs)

    assert probs.shape == (B, T, vocab_size)
    # rows of the projection head output are softmax distributions
    assert bool(jnp.allclose(jnp.sum(probs, axis=-1), 1.0, atol=1e-4))
    print("KERNEL_OK")
</pallas_src>

<mosaic_0001>
module attributes {stable_mosaic.version = 11 : i64} {
  func.func @fused_decoder_kernel(%arg0: i32, %arg1: i32, %arg2: memref<2x8x32xf32, #tpu.memory_space<vmem>>, %arg3: memref<2x32x192xbf16, #tpu.memory_space<vmem>>, %arg4: memref<2x10x32xf32, #tpu.memory_space<vmem>>, %arg5: memref<32x128xbf16, #tpu.memory_space<vmem>>, %arg6: memref<1x128xf32, #tpu.memory_space<vmem>>, %arg7: memref<2x8x128xf32, #tpu.memory_space<vmem>>, %arg8: memref<2x8x32xf32, #tpu.memory_space<vmem>>) attributes {dimension_semantics = [#tpu.dimension_semantics<parallel>, #tpu.dimension_semantics<arbitrary>], iteration_bounds = array<i64: 2, 1>, scalar_prefetch = 0 : i64, scratch_operands = 1 : i64, tpu.core_type = #tpu.core_type<tc>, window_params = [{transform_indices = @transform_0, window_bounds = array<i64: 2, 8, 32>}, {transform_indices = @transform_1, window_bounds = array<i64: 2, 32, 192>}, {transform_indices = @transform_2, window_bounds = array<i64: 2, 10, 32>}, {pipeline_mode = #tpu.pipeline_mode<synchronous>, transform_indices = @transform_3, window_bounds = array<i64: 32, 128>}, {pipeline_mode = #tpu.pipeline_mode<synchronous>, transform_indices = @transform_4, window_bounds = array<i64: 1, 128>}, {transform_indices = @transform_5, window_bounds = array<i64: 2, 8, 128>}]} {
    %c0_i32 = arith.constant 0 : i32
    %0 = arith.cmpi eq, %arg1, %c0_i32 : i32
    %1 = arith.extui %0 : i1 to i32
    %c0_i32_0 = arith.constant 0 : i32
    %2 = arith.cmpi ne, %1, %c0_i32_0 : i32
    scf.if %2 {
      %c0_159 = arith.constant 0 : index
      %c0_160 = arith.constant 0 : index
      %c0_161 = arith.constant 0 : index
      %478 = vector.load %arg2[%c0_159, %c0_160, %c0_161] : memref<2x8x32xf32, #tpu.memory_space<vmem>>, vector<2x8x32xf32>
      %c0_162 = arith.constant 0 : index
      %c0_163 = arith.constant 0 : index
      %c0_164 = arith.constant 0 : index
      %479 = vector.load %arg8[%c0_162, %c0_163, %c0_164] : memref<2x8x32xf32, #tpu.memory_space<vmem>>, vector<2x8x32xf32>
      tpu.vector_store %arg8[%c0_162, %c0_163, %c0_164], %478 {strides = array<i32>} : memref<2x8x32xf32, #tpu.memory_space<vmem>>, vector<2x8x32xf32>,
    } else {
    }
    %3 = tpu.iota {dimensions = array<i32: 0>} : vector<8x8xi32>
    %4 = tpu.iota {dimensions = array<i32: 1>} : vector<8x8xi32>
    %5 = arith.cmpi sge, %3, %4 : vector<8x8xi32>
    %6 = vector.shape_cast %5 : vector<8x8xi1> to vector<1x8x8xi1>
    %c0 = arith.constant 0 : index
    %c0_1 = arith.constant 0 : index
    %c0_2 = arith.constant 0 : index
    %7 = vector.load %arg4[%c0, %c0_1, %c0_2] : memref<2x10x32xf32, #tpu.memory_space<vmem>>, vector<1x10x32xf32>
    %8 = vector.shape_cast %7 : vector<1x10x32xf32> to vector<10x32xf32>
    %9 = vector.extract_strided_slice %8 {offsets = [0, 0], sizes = [1, 32], strides = [1, 1]} : vector<10x32xf32> to vector<1x32xf32>
    %10 = vector.extract_strided_slice %8 {offsets = [1, 0], sizes = [1, 32], strides = [1, 1]} : vector<10x32xf32> to vector<1x32xf32>
    %11 = vector.extract_strided_slice %8 {offsets = [2, 0], sizes = [1, 32], strides = [1, 1]} : vector<10x32xf32> to vector<1x32xf32>
    %12 = vector.extract_strided_slice %8 {offsets = [3, 0], sizes = [1, 32], strides = [1, 1]} : vector<10x32xf32> to vector<1x32xf32>
    %13 = vector.extract_strided_slice %8 {offsets = [4, 0], sizes = [1, 32], strides = [1, 1]} : vector<10x32xf32> to vector<1x32xf32>
    %14 = vector.extract_strided_slice %8 {offsets = [5, 0], sizes = [1, 32], strides = [1, 1]} : vector<10x32xf32> to vector<1x32xf32>
    %15 = vector.extract_strided_slice %8 {offsets = [6, 0], sizes = [1, 32], strides = [1, 1]} : vector<10x32xf32> to vector<1x32xf32>
    %16 = vector.extract_strided_slice %8 {offsets = [7, 0], sizes = [1, 32], strides = [1, 1]} : vector<10x32xf32> to vector<1x32xf32>
    %17 = vector.extract_strided_slice %8 {offsets = [8, 0], sizes = [1, 32], strides = [1, 1]} : vector<10x32xf32> to vector<1x32xf32>
    %18 = vector.extract_strided_slice %8 {offsets = [9, 0], sizes = [1, 32], strides = [1, 1]} : vector<10x32xf32> to vector<1x32xf32>
    %c0_3 = arith.constant 0 : index
    %c0_4 = arith.constant 0 : index
    %c0_5 = arith.constant 0 : index
    %19 = vector.load %arg8[%c0_3, %c0_4, %c0_5] : memref<2x8x32xf32, #tpu.memory_space<vmem>>, vector<1x8x32xf32>
    %20 = vector.shape_cast %19 : vector<1x8x32xf32> to vector<8x32xf32>
    %cst = arith.constant dense<0.000000e+00> : vector<8xf32>
    %21 = vector.multi_reduction <add>, %20, %cst [1] : vector<8x32xf32> to vector<8xf32>
    %22 = vector.shape_cast %21 : vector<8xf32> to vector<8x1xf32>
    %cst_6 = arith.constant 3.200000e+01 : f32
    %23 = vector.broadcast %cst_6 : f32 to vector<8x1xf32>
    %24 = arith.divf %22, %23 : vector<8x1xf32>
    %25 = vector.broadcast %24 : vector<8x1xf32> to vector<8x32xf32>
    %26 = arith.subf %20, %25 : vector<8x32xf32>
    %27 = arith.mulf %26, %26 : vector<8x32xf32>
    %cst_7 = arith.constant dense<0.000000e+00> : vector<8xf32>
    %28 = vector.multi_reduction <add>, %27, %cst_7 [1] : vector<8x32xf32> to vector<8xf32>
    %29 = vector.shape_cast %28 : vector<8xf32> to vector<8x1xf32>
    %cst_8 = arith.constant 3.200000e+01 : f32
    %30 = vector.broadcast %cst_8 : f32 to vector<8x1xf32>
    %31 = arith.divf %29, %30 : vector<8x1xf32>
    %32 = vector.broadcast %24 : vector<8x1xf32> to vector<8x32xf32>
    %33 = arith.subf %20, %32 : vector<8x32xf32>
    %cst_9 = arith.constant 9.99999974E-6 : f32
    %34 = vector.broadcast %cst_9 : f32 to vector<8x1xf32>
    %35 = arith.addf %31, %34 : vector<8x1xf32>
    %36 = math.rsqrt %35 : vector<8x1xf32>
    %37 = vector.broadcast %36 : vector<8x1xf32> to vector<8x32xf32>
    %38 = arith.mulf %33, %37 : vector<8x32xf32>
    %39 = vector.broadcast %9 : vector<1x32xf32> to vector<8x32xf32>
    %40 = arith.mulf %38, %39 : vector<8x32xf32>
    %41 = vector.broadcast %10 : vector<1x32xf32> to vector<8x32xf32>
    %42 = arith.addf %40, %41 : vector<8x32xf32>
    %43 = arith.truncf %42 : vector<8x32xf32> to vector<8x32xbf16>
    %c0_10 = arith.constant 0 : index
    %c0_11 = arith.constant 0 : index
    %c0_12 = arith.constant 0 : index
    %44 = vector.load %arg3[%c0_10, %c0_11, %c0_12] : memref<2x32x192xbf16, #tpu.memory_space<vmem>>, vector<1x32x96xbf16>
    %45 = vector.shape_cast %44 : vector<1x32x96xbf16> to vector<32x96xbf16>
    %cst_13 = arith.constant dense<0.000000e+00> : vector<8x96xf32>
    %46 = tpu.matmul %43, %45, %cst_13 {dimension_numbers = #tpu.dot_dimension_numbers<[1], [0], [0], [1], [0, 0, 1, 1], [], []>} : vector<8x32xbf16>, vector<32x96xbf16>, vector<8x96xf32> -> vector<8x96xf32>
    %47 = vector.extract_strided_slice %46 {offsets = [0, 0], sizes = [8, 32], strides = [1, 1]} : vector<8x96xf32> to vector<8x32xf32>
    %48 = vector.broadcast %13 : vector<1x32xf32> to vector<8x32xf32>
    %49 = arith.addf %47, %48 : vector<8x32xf32>
    %cst_14 = arith.constant 0.176776692 : f32
    %50 = vector.broadcast %cst_14 : f32 to vector<8x32xf32>
    %51 = arith.mulf %49, %50 : vector<8x32xf32>
    %52 = vector.extract_strided_slice %46 {offsets = [0, 32], sizes = [8, 32], strides = [1, 1]} : vector<8x96xf32> to vector<8x32xf32>
    %53 = vector.broadcast %14 : vector<1x32xf32> to vector<8x32xf32>
    %54 = arith.addf %52, %53 : vector<8x32xf32>
    %55 = vector.extract_strided_slice %46 {offsets = [0, 64], sizes = [8, 32], strides = [1, 1]} : vector<8x96xf32> to vector<8x32xf32>
    %56 = vector.broadcast %15 : vector<1x32xf32> to vector<8x32xf32>
    %57 = arith.addf %55, %56 : vector<8x32xf32>
    %58 = vector.shape_cast %51 : vector<8x32xf32> to vector<8x4x8xf32>
    %59 = arith.truncf %58 : vector<8x4x8xf32> to vector<8x4x8xbf16>
    %60 = vector.shape_cast %54 : vector<8x32xf32> to vector<8x4x8xf32>
    %61 = arith.truncf %60 : vector<8x4x8xf32> to vector<8x4x8xbf16>
    %62 = vector.shape_cast %57 : vector<8x32xf32> to vector<8x4x8xf32>
    %63 = arith.truncf %62 : vector<8x4x8xf32> to vector<8x4x8xbf16>
    "tpu.trace_start"() <{level = 10 : i32, message = "qhd,khd->hqk"}> : () -> ()
    %cst_15 = arith.constant dense<0.000000e+00> : vector<4x8x8xf32>
    %64 = tpu.matmul %59, %61, %cst_15 {dimension_numbers = #tpu.dot_dimension_numbers<[2], [2], [0], [0], [0, 1, 0, 0, 1, 0], [1], [1]>} : vector<8x4x8xbf16>, vector<8x4x8xbf16>, vector<4x8x8xf32> -> vector<4x8x8xf32>
    %cst_16 = arith.constant -1.000000e+30 : f32
    "tpu.trace_stop"() : () -> ()
    %65 = vector.shape_cast %6 : vector<1x8x8xi1> to vector<1x8x8xi1>
    %66 = vector.broadcast %65 : vector<1x8x8xi1> to vector<4x8x8xi1>
    %67 = vector.broadcast %cst_16 : f32 to vector<4x8x8xf32>
    %68 = arith.select %66, %64, %67 : vector<4x8x8xi1>, vector<4x8x8xf32>
    %cst_17 = arith.constant dense<0xFF800000> : vector<4x8xf32>
    %69 = vector.multi_reduction <maximumf>, %68, %cst_17 [2] : vector<4x8x8xf32> to vector<4x8xf32>
    %70 = vector.shape_cast %69 : vector<4x8xf32> to vector<4x8x1xf32>
    %71 = vector.broadcast %70 : vector<4x8x1xf32> to vector<4x8x8xf32>
    %72 = arith.subf %68, %71 : vector<4x8x8xf32>
    %73 = math.exp %72 : vector<4x8x8xf32>
    %cst_18 = arith.constant dense<0.000000e+00> : vector<4x8xf32>
    %74 = vector.multi_reduction <add>, %73, %cst_18 [2] : vector<4x8x8xf32> to vector<4x8xf32>
    %75 = vector.shape_cast %74 : vector<4x8xf32> to vector<4x8x1xf32>
    %76 = tpu.reciprocal %75 {approx = true} : vector<4x8x1xf32> -> vector<4x8x1xf32>
    %77 = vector.broadcast %76 : vector<4x8x1xf32> to vector<4x8x8xf32>
    %78 = arith.mulf %73, %77 : vector<4x8x8xf32>
    %79 = arith.truncf %78 : vector<4x8x8xf32> to vector<4x8x8xbf16>
    "tpu.trace_start"() <{level = 10 : i32, message = "hqk,khd->qhd"}> : () -> ()
    %cst_19 = arith.constant dense<0.000000e+00> : vector<4x8x8xf32>
    %80 = tpu.matmul %63, %79, %cst_19 {dimension_numbers = #tpu.dot_dimension_numbers<[0], [2], [2], [1], [0, 1, 0, 2, 1, 1], [1], [0]>} : vector<8x4x8xbf16>, vector<4x8x8xbf16>, vector<4x8x8xf32> -> vector<4x8x8xf32>
    %81 = tpu.transpose %80, [2, 0, 1] : vector<4x8x8xf32> -> vector<8x4x8xf32>
    "tpu.trace_stop"() : () -> ()
    %82 = vector.shape_cast %81 : vector<8x4x8xf32> to vector<8x32xf32>
    %83 = arith.truncf %82 : vector<8x32xf32> to vector<8x32xbf16>
    %c0_20 = arith.constant 0 : index
    %c0_21 = arith.constant 0 : index
    %c96 = arith.constant 96 : index
    %84 = vector.load %arg3[%c0_20, %c0_21, %c96] : memref<2x32x192xbf16, #tpu.memory_space<vmem>>, vector<1x32x32xbf16>
    %85 = vector.shape_cast %84 : vector<1x32x32xbf16> to vector<32x32xbf16>
    %cst_22 = arith.constant dense<0.000000e+00> : vector<8x32xf32>
    %86 = tpu.matmul %83, %85, %cst_22 {dimension_numbers = #tpu.dot_dimension_numbers<[1], [0], [0], [1], [0, 0, 1, 1], [], []>} : vector<8x32xbf16>, vector<32x32xbf16>, vector<8x32xf32> -> vector<8x32xf32>
    %87 = vector.broadcast %16 : vector<1x32xf32> to vector<8x32xf32>
    %88 = arith.addf %86, %87 : vector<8x32xf32>
    %89 = arith.addf %20, %88 : vector<8x32xf32>
    %cst_23 = arith.constant dense<0.000000e+00> : vector<8xf32>
    %90 = vector.multi_reduction <add>, %89, %cst_23 [1] : vector<8x32xf32> to vector<8xf32>
    %91 = vector.shape_cast %90 : vector<8xf32> to vector<8x1xf32>
    %cst_24 = arith.constant 3.200000e+01 : f32
    %92 = vector.broadcast %cst_24 : f32 to vector<8x1xf32>
    %93 = arith.divf %91, %92 : vector<8x1xf32>
    %94 = vector.broadcast %93 : vector<8x1xf32> to vector<8x32xf32>
    %95 = arith.subf %89, %94 : vector<8x32xf32>
    %96 = arith.mulf %95, %95 : vector<8x32xf32>
    %cst_25 = arith.constant dense<0.000000e+00> : vector<8xf32>
    %97 = vector.multi_reduction <add>, %96, %cst_25 [1] : vector<8x32xf32> to vector<8xf32>
    %98 = vector.shape_cast %97 : vector<8xf32> to vector<8x1xf32>
    %cst_26 = arith.constant 3.200000e+01 : f32
    %99 = vector.broadcast %cst_26 : f32 to vector<8x1xf32>
    %100 = arith.divf %98, %99 : vector<8x1xf32>
    %101 = vector.broadcast %93 : vector<8x1xf32> to vector<8x32xf32>
    %102 = arith.subf %89, %101 : vector<8x32xf32>
    %cst_27 = arith.constant 9.99999974E-6 : f32
    %103 = vector.broadcast %cst_27 : f32 to vector<8x1xf32>
    %104 = arith.addf %100, %103 : vector<8x1xf32>
    %105 = math.rsqrt %104 : vector<8x1xf32>
    %106 = vector.broadcast %105 : vector<8x1xf32> to vector<8x32xf32>
    %107 = arith.mulf %102, %106 : vector<8x32xf32>
    %108 = vector.broadcast %11 : vector<1x32xf32> to vector<8x32xf32>
    %109 = arith.mulf %107, %108 : vector<8x32xf32>
    %110 = vector.broadcast %12 : vector<1x32xf32> to vector<8x32xf32>
    %111 = arith.addf %109, %110 : vector<8x32xf32>
    %112 = arith.truncf %111 : vector<8x32xf32> to vector<8x32xbf16>
    %c0_28 = arith.constant 0 : index
    %c0_29 = arith.constant 0 : index
    %c128 = arith.constant 128 : index
    %113 = vector.load %arg3[%c0_28, %c0_29, %c128] : memref<2x32x192xbf16, #tpu.memory_space<vmem>>, vector<1x32x32xbf16>
    %114 = vector.shape_cast %113 : vector<1x32x32xbf16> to vector<32x32xbf16>
    %cst_30 = arith.constant dense<0.000000e+00> : vector<8x32xf32>
    %115 = tpu.matmul %112, %114, %cst_30 {dimension_numbers = #tpu.dot_dimension_numbers<[1], [0], [0], [1], [0, 0, 1, 1], [], []>} : vector<8x32xbf16>, vector<32x32xbf16>, vector<8x32xf32> -> vector<8x32xf32>
    %116 = vector.broadcast %17 : vector<1x32xf32> to vector<8x32xf32>
    %117 = arith.addf %115, %116 : vector<8x32xf32>
    %cst_31 = arith.constant 0.000000e+00 : f32
    %118 = vector.broadcast %cst_31 : f32 to vector<8x32xf32>
    %119 = arith.maximumf %117, %118 : vector<8x32xf32>
    %120 = arith.truncf %119 : vector<8x32xf32> to vector<8x32xbf16>
    %c0_32 = arith.constant 0 : index
    %c0_33 = arith.constant 0 : index
    %c160 = arith.constant 160 : index
    %121 = vector.load %arg3[%c0_32, %c0_33, %c160] : memref<2x32x192xbf16, #tpu.memory_space<vmem>>, vector<1x32x32xbf16>
    %122 = vector.shape_cast %121 : vector<1x32x32xbf16> to vector<32x32xbf16>
    %cst_34 = arith.constant dense<0.000000e+00> : vector<8x32xf32>
    %123 = tpu.matmul %120, %122, %cst_34 {dimension_numbers = #tpu.dot_dimension_numbers<[1], [0], [0], [1], [0, 0, 1, 1], [], []>} : vector<8x32xbf16>, vector<32x32xbf16>, vector<8x32xf32> -> vector<8x32xf32>
    %124 = vector.broadcast %18 : vector<1x32xf32> to vector<8x32xf32>
    %125 = arith.addf %123, %124 : vector<8x32xf32>
    %126 = arith.addf %125, %89 : vector<8x32xf32>
    %c0_35 = arith.constant 0 : index
    %c0_36 = arith.constant 0 : index
    %c0_37 = arith.constant 0 : index
    %127 = vector.load %arg8[%c0_35, %c0_36, %c0_37] : memref<2x8x32xf32, #tpu.memory_space<vmem>>, vector<1x8x32xf32>
    %128 = vector.shape_cast %127 : vector<1x8x32xf32> to vector<8x32xf32>
    %129 = vector.shape_cast %126 : vector<8x32xf32> to vector<1x8x32xf32>
    tpu.vector_store %arg8[%c0_35, %c0_36, %c0_37], %129 {strides = array<i32>} : memref<2x8x32xf32, #tpu.memory_space<vmem>>, vector<1x8x32xf32>,
    %c1 = arith.constant 1 : index
    %c0_38 = arith.constant 0 : index
    %c0_39 = arith.constant 0 : index
    %130 = vector.load %arg8[%c1, %c0_38, %c0_39] : memref<2x8x32xf32, #tpu.memory_space<vmem>>, vector<1x8x32xf32>
    %131 = vector.shape_cast %130 : vector<1x8x32xf32> to vector<8x32xf32>
    %cst_40 = arith.constant dense<0.000000e+00> : vector<8xf32>
    %132 = vector.multi_reduction <add>, %131, %cst_40 [1] : vector<8x32xf32> to vector<8xf32>
    %133 = vector.shape_cast %132 : vector<8xf32> to vector<8x1xf32>
    %cst_41 = arith.constant 3.200000e+01 : f32
    %134 = vector.broadcast %cst_41 : f32 to vector<8x1xf32>
    %135 = arith.divf %133, %134 : vector<8x1xf32>
    %136 = vector.broadcast %135 : vector<8x1xf32> to vector<8x32xf32>
    %137 = arith.subf %131, %136 : vector<8x32xf32>
    %138 = arith.mulf %137, %137 : vector<8x32xf32>
    %cst_42 = arith.constant dense<0.000000e+00> : vector<8xf32>
    %139 = vector.multi_reduction <add>, %138, %cst_42 [1] : vector<8x32xf32> to vector<8xf32>
    %140 = vector.shape_cast %139 : vector<8xf32> to vector<8x1xf32>
    %cst_43 = arith.constant 3.200000e+01 : f32
    %141 = vector.broadcast %cst_43 : f32 to vector<8x1xf32>
    %142 = arith.divf %140, %141 : vector<8x1xf32>
    %143 = vector.broadcast %135 : vector<8x1xf32> to vector<8x32xf32>
    %144 = arith.subf %131, %143 : vector<8x32xf32>
    %cst_44 = arith.constant 9.99999974E-6 : f32
    %145 = vector.broadcast %cst_44 : f32 to vector<8x1xf32>
    %146 = arith.addf %142, %145 : vector<8x1xf32>
    %147 = math.rsqrt %146 : vector<8x1xf32>
    %148 = vector.broadcast %147 : vector<8x1xf32> to vector<8x32xf32>
    %149 = arith.mulf %144, %148 : vector<8x32xf32>
    %150 = vector.broadcast %9 : vector<1x32xf32> to vector<8x32xf32>
    %151 = arith.mulf %149, %150 : vector<8x32xf32>
    %152 = vector.broadcast %10 : vector<1x32xf32> to vector<8x32xf32>
    %153 = arith.addf %151, %152 : vector<8x32xf32>
    %154 = arith.truncf %153 : vector<8x32xf32> to vector<8x32xbf16>
    %c0_45 = arith.constant 0 : index
    %c0_46 = arith.constant 0 : index
    %c0_47 = arith.constant 0 : index
    %155 = vector.load %arg3[%c0_45, %c0_46, %c0_47] : memref<2x32x192xbf16, #tpu.memory_space<vmem>>, vector<1x32x96xbf16>
    %156 = vector.shape_cast %155 : vector<1x32x96xbf16> to vector<32x96xbf16>
    %cst_48 = arith.constant dense<0.000000e+00> : vector<8x96xf32>
    %157 = tpu.matmul %154, %156, %cst_48 {dimension_numbers = #tpu.dot_dimension_numbers<[1], [0], [0], [1], [0, 0, 1, 1], [], []>} : vector<8x32xbf16>, vector<32x96xbf16>, vector<8x96xf32> -> vector<8x96xf32>
    %158 = vector.extract_strided_slice %157 {offsets = [0, 0], sizes = [8, 32], strides = [1, 1]} : vector<8x96xf32> to vector<8x32xf32>
    %159 = vector.broadcast %13 : vector<1x32xf32> to vector<8x32xf32>
    %160 = arith.addf %158, %159 : vector<8x32xf32>
    %cst_49 = arith.constant 0.176776692 : f32
    %161 = vector.broadcast %cst_49 : f32 to vector<8x32xf32>
    %162 = arith.mulf %160, %161 : vector<8x32xf32>
    %163 = vector.extract_strided_slice %157 {offsets = [0, 32], sizes = [8, 32], strides = [1, 1]} : vector<8x96xf32> to vector<8x32xf32>
    %164 = vector.broadcast %14 : vector<1x32xf32> to vector<8x32xf32>
    %165 = arith.addf %163, %164 : vector<8x32xf32>
    %166 = vector.extract_strided_slice %157 {offsets = [0, 64], sizes = [8, 32], strides = [1, 1]} : vector<8x96xf32> to vector<8x32xf32>
    %167 = vector.broadcast %15 : vector<1x32xf32> to vector<8x32xf32>
    %168 = arith.addf %166, %167 : vector<8x32xf32>
    %169 = vector.shape_cast %162 : vector<8x32xf32> to vector<8x4x8xf32>
    %170 = arith.truncf %169 : vector<8x4x8xf32> to vector<8x4x8xbf16>
    %171 = vector.shape_cast %165 : vector<8x32xf32> to vector<8x4x8xf32>
    %172 = arith.truncf %171 : vector<8x4x8xf32> to vector<8x4x8xbf16>
    %173 = vector.shape_cast %168 : vector<8x32xf32> to vector<8x4x8xf32>
    %174 = arith.truncf %173 : vector<8x4x8xf32> to vector<8x4x8xbf16>
    "tpu.trace_start"() <{level = 10 : i32, message = "qhd,khd->hqk"}> : () -> ()
    %cst_50 = arith.constant dense<0.000000e+00> : vector<4x8x8xf32>
    %175 = tpu.matmul %170, %172, %cst_50 {dimension_numbers = #tpu.dot_dimension_numbers<[2], [2], [0], [0], [0, 1, 0, 0, 1, 0], [1], [1]>} : vector<8x4x8xbf16>, vector<8x4x8xbf16>, vector<4x8x8xf32> -> vector<4x8x8xf32>
    %cst_51 = arith.constant -1.000000e+30 : f32
    "tpu.trace_stop"() : () -> ()
    %176 = vector.shape_cast %6 : vector<1x8x8xi1> to vector<1x8x8xi1>
    %177 = vector.broadcast %176 : vector<1x8x8xi1> to vector<4x8x8xi1>
    %178 = vector.broadcast %cst_51 : f32 to vector<4x8x8xf32>
    %179 = arith.select %177, %175, %178 : vector<4x8x8xi1>, vector<4x8x8xf32>
    %cst_52 = arith.constant dense<0xFF800000> : vector<4x8xf32>
    %180 = vector.multi_reduction <maximumf>, %179, %cst_52 [2] : vector<4x8x8xf32> to vector<4x8xf32>
    %181 = vector.shape_cast %180 : vector<4x8xf32> to vector<4x8x1xf32>
    %182 = vector.broadcast %181 : vector<4x8x1xf32> to vector<4x8x8xf32>
    %183 = arith.subf %179, %182 : vector<4x8x8xf32>
    %184 = math.exp %183 : vector<4x8x8xf32>
    %cst_53 = arith.constant dense<0.000000e+00> : vector<4x8xf32>
    %185 = vector.multi_reduction <add>, %184, %cst_53 [2] : vector<4x8x8xf32> to vector<4x8xf32>
    %186 = vector.shape_cast %185 : vector<4x8xf32> to vector<4x8x1xf32>
    %187 = tpu.reciprocal %186 {approx = true} : vector<4x8x1xf32> -> vector<4x8x1xf32>
    %188 = vector.broadcast %187 : vector<4x8x1xf32> to vector<4x8x8xf32>
    %189 = arith.mulf %184, %188 : vector<4x8x8xf32>
    %190 = arith.truncf %189 : vector<4x8x8xf32> to vector<4x8x8xbf16>
    "tpu.trace_start"() <{level = 10 : i32, message = "hqk,khd->qhd"}> : () -> ()
    %cst_54 = arith.constant dense<0.000000e+00> : vector<4x8x8xf32>
    %191 = tpu.matmul %174, %190, %cst_54 {dimension_numbers = #tpu.dot_dimension_numbers<[0], [2], [2], [1], [0, 1, 0, 2, 1, 1], [1], [0]>} : vector<8x4x8xbf16>, vector<4x8x8xbf16>, vector<4x8x8xf32> -> vector<4x8x8xf32>
    %192 = tpu.transpose %191, [2, 0, 1] : vector<4x8x8xf32> -> vector<8x4x8xf32>
    "tpu.trace_stop"() : () -> ()
    %193 = vector.shape_cast %192 : vector<8x4x8xf32> to vector<8x32xf32>
    %194 = arith.truncf %193 : vector<8x32xf32> to vector<8x32xbf16>
    %c0_55 = arith.constant 0 : index
    %c0_56 = arith.constant 0 : index
    %c96_57 = arith.constant 96 : index
    %195 = vector.load %arg3[%c0_55, %c0_56, %c96_57] : memref<2x32x192xbf16, #tpu.memory_space<vmem>>, vector<1x32x32xbf16>
    %196 = vector.shape_cast %195 : vector<1x32x32xbf16> to vector<32x32xbf16>
    %cst_58 = arith.constant dense<0.000000e+00> : vector<8x32xf32>
    %197 = tpu.matmul %194, %196, %cst_58 {dimension_numbers = #tpu.dot_dimension_numbers<[1], [0], [0], [1], [0, 0, 1, 1], [], []>} : vector<8x32xbf16>, vector<32x32xbf16>, vector<8x32xf32> -> vector<8x32xf32>
    %198 = vector.broadcast %16 : vector<1x32xf32> to vector<8x32xf32>
    %199 = arith.addf %197, %198 : vector<8x32xf32>
    %200 = arith.addf %131, %199 : vector<8x32xf32>
    %cst_59 = arith.constant dense<0.000000e+00> : vector<8xf32>
    %201 = vector.multi_reduction <add>, %200, %cst_59 [1] : vector<8x32xf32> to vector<8xf32>
    %202 = vector.shape_cast %201 : vector<8xf32> to vector<8x1xf32>
    %cst_60 = arith.constant 3.200000e+01 : f32
    %203 = vector.broadcast %cst_60 : f32 to vector<8x1xf32>
    %204 = arith.divf %202, %203 : vector<8x1xf32>
    %205 = vector.broadcast %204 : vector<8x1xf32> to vector<8x32xf32>
    %206 = arith.subf %200, %205 : vector<8x32xf32>
    %207 = arith.mulf %206, %206 : vector<8x32xf32>
    %cst_61 = arith.constant dense<0.000000e+00> : vector<8xf32>
    %208 = vector.multi_reduction <add>, %207, %cst_61 [1] : vector<8x32xf32> to vector<8xf32>
    %209 = vector.shape_cast %208 : vector<8xf32> to vector<8x1xf32>
    %cst_62 = arith.constant 3.200000e+01 : f32
    %210 = vector.broadcast %cst_62 : f32 to vector<8x1xf32>
    %211 = arith.divf %209, %210 : vector<8x1xf32>
    %212 = vector.broadcast %204 : vector<8x1xf32> to vector<8x32xf32>
    %213 = arith.subf %200, %212 : vector<8x32xf32>
    %cst_63 = arith.constant 9.99999974E-6 : f32
    %214 = vector.broadcast %cst_63 : f32 to vector<8x1xf32>
    %215 = arith.addf %211, %214 : vector<8x1xf32>
    %216 = math.rsqrt %215 : vector<8x1xf32>
    %217 = vector.broadcast %216 : vector<8x1xf32> to vector<8x32xf32>
    %218 = arith.mulf %213, %217 : vector<8x32xf32>
    %219 = vector.broadcast %11 : vector<1x32xf32> to vector<8x32xf32>
    %220 = arith.mulf %218, %219 : vector<8x32xf32>
    %221 = vector.broadcast %12 : vector<1x32xf32> to vector<8x32xf32>
    %222 = arith.addf %220, %221 : vector<8x32xf32>
    %223 = arith.truncf %222 : vector<8x32xf32> to vector<8x32xbf16>
    %c0_64 = arith.constant 0 : index
    %c0_65 = arith.constant 0 : index
    %c128_66 = arith.constant 128 : index
    %224 = vector.load %arg3[%c0_64, %c0_65, %c128_66] : memref<2x32x192xbf16, #tpu.memory_space<vmem>>, vector<1x32x32xbf16>
    %225 = vector.shape_cast %224 : vector<1x32x32xbf16> to vector<32x32xbf16>
    %cst_67 = arith.constant dense<0.000000e+00> : vector<8x32xf32>
    %226 = tpu.matmul %223, %225, %cst_67 {dimension_numbers = #tpu.dot_dimension_numbers<[1], [0], [0], [1], [0, 0, 1, 1], [], []>} : vector<8x32xbf16>, vector<32x32xbf16>, vector<8x32xf32> -> vector<8x32xf32>
    %227 = vector.broadcast %17 : vector<1x32xf32> to vector<8x32xf32>
    %228 = arith.addf %226, %227 : vector<8x32xf32>
    %cst_68 = arith.constant 0.000000e+00 : f32
    %229 = vector.broadcast %cst_68 : f32 to vector<8x32xf32>
    %230 = arith.maximumf %228, %229 : vector<8x32xf32>
    %231 = arith.truncf %230 : vector<8x32xf32> to vector<8x32xbf16>
    %c0_69 = arith.constant 0 : index
    %c0_70 = arith.constant 0 : index
    %c160_71 = arith.constant 160 : index
    %232 = vector.load %arg3[%c0_69, %c0_70, %c160_71] : memref<2x32x192xbf16, #tpu.memory_space<vmem>>, vector<1x32x32xbf16>
    %233 = vector.shape_cast %232 : vector<1x32x32xbf16> to vector<32x32xbf16>
    %cst_72 = arith.constant dense<0.000000e+00> : vector<8x32xf32>
    %234 = tpu.matmul %231, %233, %cst_72 {dimension_numbers = #tpu.dot_dimension_numbers<[1], [0], [0], [1], [0, 0, 1, 1], [], []>} : vector<8x32xbf16>, vector<32x32xbf16>, vector<8x32xf32> -> vector<8x32xf32>
    %235 = vector.broadcast %18 : vector<1x32xf32> to vector<8x32xf32>
    %236 = arith.addf %234, %235 : vector<8x32xf32>
    %237 = arith.addf %236, %200 : vector<8x32xf32>
    %c1_73 = arith.constant 1 : index
    %c0_74 = arith.constant 0 : index
    %c0_75 = arith.constant 0 : index
    %238 = vector.load %arg8[%c1_73, %c0_74, %c0_75] : memref<2x8x32xf32, #tpu.memory_space<vmem>>, vector<1x8x32xf32>
    %239 = vector.shape_cast %238 : vector<1x8x32xf32> to vector<8x32xf32>
    %240 = vector.shape_cast %237 : vector<8x32xf32> to vector<1x8x32xf32>
    tpu.vector_store %arg8[%c1_73, %c0_74, %c0_75], %240 {strides = array<i32>} : memref<2x8x32xf32, #tpu.memory_space<vmem>>, vector<1x8x32xf32>,
    %c1_76 = arith.constant 1 : index
    %c0_77 = arith.constant 0 : index
    %c0_78 = arith.constant 0 : index
    %241 = vector.load %arg4[%c1_76, %c0_77, %c0_78] : memref<2x10x32xf32, #tpu.memory_space<vmem>>, vector<1x10x32xf32>
    %242 = vector.shape_cast %241 : vector<1x10x32xf32> to vector<10x32xf32>
    %243 = vector.extract_strided_slice %242 {offsets = [0, 0], sizes = [1, 32], strides = [1, 1]} : vector<10x32xf32> to vector<1x32xf32>
    %244 = vector.extract_strided_slice %242 {offsets = [1, 0], sizes = [1, 32], strides = [1, 1]} : vector<10x32xf32> to vector<1x32xf32>
    %245 = vector.extract_strided_slice %242 {offsets = [2, 0], sizes = [1, 32], strides = [1, 1]} : vector<10x32xf32> to vector<1x32xf32>
    %246 = vector.extract_strided_slice %242 {offsets = [3, 0], sizes = [1, 32], strides = [1, 1]} : vector<10x32xf32> to vector<1x32xf32>
    %247 = vector.extract_strided_slice %242 {offsets = [4, 0], sizes = [1, 32], strides = [1, 1]} : vector<10x32xf32> to vector<1x32xf32>
    %248 = vector.extract_strided_slice %242 {offsets = [5, 0], sizes = [1, 32], strides = [1, 1]} : vector<10x32xf32> to vector<1x32xf32>
    %249 = vector.extract_strided_slice %242 {offsets = [6, 0], sizes = [1, 32], strides = [1, 1]} : vector<10x32xf32> to vector<1x32xf32>
    %250 = vector.extract_strided_slice %242 {offsets = [7, 0], sizes = [1, 32], strides = [1, 1]} : vector<10x32xf32> to vector<1x32xf32>
    %251 = vector.extract_strided_slice %242 {offsets = [8, 0], sizes = [1, 32], strides = [1, 1]} : vector<10x32xf32> to vector<1x32xf32>
    %252 = vector.extract_strided_slice %242 {offsets = [9, 0], sizes = [1, 32], strides = [1, 1]} : vector<10x32xf32> to vector<1x32xf32>
    %c0_79 = arith.constant 0 : index
    %c0_80 = arith.constant 0 : index
    %c0_81 = arith.constant 0 : index
    %253 = vector.load %arg8[%c0_79, %c0_80, %c0_81] : memref<2x8x32xf32, #tpu.memory_space<vmem>>, vector<1x8x32xf32>
    %254 = vector.shape_cast %253 : vector<1x8x32xf32> to vector<8x32xf32>
    %cst_82 = arith.constant dense<0.000000e+00> : vector<8xf32>
    %255 = vector.multi_reduction <add>, %254, %cst_82 [1] : vector<8x32xf32> to vector<8xf32>
    %256 = vector.shape_cast %255 : vector<8xf32> to vector<8x1xf32>
    %cst_83 = arith.constant 3.200000e+01 : f32
    %257 = vector.broadcast %cst_83 : f32 to vector<8x1xf32>
    %258 = arith.divf %256, %257 : vector<8x1xf32>
    %259 = vector.broadcast %258 : vector<8x1xf32> to vector<8x32xf32>
    %260 = arith.subf %254, %259 : vector<8x32xf32>
    %261 = arith.mulf %260, %260 : vector<8x32xf32>
    %cst_84 = arith.constant dense<0.000000e+00> : vector<8xf32>
    %262 = vector.multi_reduction <add>, %261, %cst_84 [1] : vector<8x32xf32> to vector<8xf32>
    %263 = vector.shape_cast %262 : vector<8xf32> to vector<8x1xf32>
    %cst_85 = arith.constant 3.200000e+01 : f32
    %264 = vector.broadcast %cst_85 : f32 to vector<8x1xf32>
    %265 = arith.divf %263, %264 : vector<8x1xf32>
    %266 = vector.broadcast %258 : vector<8x1xf32> to vector<8x32xf32>
    %267 = arith.subf %254, %266 : vector<8x32xf32>
    %cst_86 = arith.constant 9.99999974E-6 : f32
    %268 = vector.broadcast %cst_86 : f32 to vector<8x1xf32>
    %269 = arith.addf %265, %268 : vector<8x1xf32>
    %270 = math.rsqrt %269 : vector<8x1xf32>
    %271 = vector.broadcast %270 : vector<8x1xf32> to vector<8x32xf32>
    %272 = arith.mulf %267, %271 : vector<8x32xf32>
    %273 = vector.broadcast %243 : vector<1x32xf32> to vector<8x32xf32>
    %274 = arith.mulf %272, %273 : vector<8x32xf32>
    %275 = vector.broadcast %244 : vector<1x32xf32> to vector<8x32xf32>
    %276 = arith.addf %274, %275 : vector<8x32xf32>
    %277 = arith.truncf %276 : vector<8x32xf32> to vector<8x32xbf16>
    %c1_87 = arith.constant 1 : index
    %c0_88 = arith.constant 0 : index
    %c0_89 = arith.constant 0 : index
    %278 = vector.load %arg3[%c1_87, %c0_88, %c0_89] : memref<2x32x192xbf16, #tpu.memory_space<vmem>>, vector<1x32x96xbf16>
    %279 = vector.shape_cast %278 : vector<1x32x96xbf16> to vector<32x96xbf16>
    %cst_90 = arith.constant dense<0.000000e+00> : vector<8x96xf32>
    %280 = tpu.matmul %277, %279, %cst_90 {dimension_numbers = #tpu.dot_dimension_numbers<[1], [0], [0], [1], [0, 0, 1, 1], [], []>} : vector<8x32xbf16>, vector<32x96xbf16>, vector<8x96xf32> -> vector<8x96xf32>
    %281 = vector.extract_strided_slice %280 {offsets = [0, 0], sizes = [8, 32], strides = [1, 1]} : vector<8x96xf32> to vector<8x32xf32>
    %282 = vector.broadcast %247 : vector<1x32xf32> to vector<8x32xf32>
    %283 = arith.addf %281, %282 : vector<8x32xf32>
    %cst_91 = arith.constant 0.176776692 : f32
    %284 = vector.broadcast %cst_91 : f32 to vector<8x32xf32>
    %285 = arith.mulf %283, %284 : vector<8x32xf32>
    %286 = vector.extract_strided_slice %280 {offsets = [0, 32], sizes = [8, 32], strides = [1, 1]} : vector<8x96xf32> to vector<8x32xf32>
    %287 = vector.broadcast %248 : vector<1x32xf32> to vector<8x32xf32>
    %288 = arith.addf %286, %287 : vector<8x32xf32>
    %289 = vector.extract_strided_slice %280 {offsets = [0, 64], sizes = [8, 32], strides = [1, 1]} : vector<8x96xf32> to vector<8x32xf32>
    %290 = vector.broadcast %249 : vector<1x32xf32> to vector<8x32xf32>
    %291 = arith.addf %289, %290 : vector<8x32xf32>
    %292 = vector.shape_cast %285 : vector<8x32xf32> to vector<8x4x8xf32>
    %293 = arith.truncf %292 : vector<8x4x8xf32> to vector<8x4x8xbf16>
    %294 = vector.shape_cast %288 : vector<8x32xf32> to vector<8x4x8xf32>
    %295 = arith.truncf %294 : vector<8x4x8xf32> to vector<8x4x8xbf16>
    %296 = vector.shape_cast %291 : vector<8x32xf32> to vector<8x4x8xf32>
    %297 = arith.truncf %296 : vector<8x4x8xf32> to vector<8x4x8xbf16>
    "tpu.trace_start"() <{level = 10 : i32, message = "qhd,khd->hqk"}> : () -> ()
    %cst_92 = arith.constant dense<0.000000e+00> : vector<4x8x8xf32>
    %298 = tpu.matmul %293, %295, %cst_92 {dimension_numbers = #tpu.dot_dimension_numbers<[2], [2], [0], [0], [0, 1, 0, 0, 1, 0], [1], [1]>} : vector<8x4x8xbf16>, vector<8x4x8xbf16>, vector<4x8x8xf32> -> vector<4x8x8xf32>
    %cst_93 = arith.constant -1.000000e+30 : f32
    "tpu.trace_stop"() : () -> ()
    %299 = vector.shape_cast %6 : vector<1x8x8xi1> to vector<1x8x8xi1>
    %300 = vector.broadcast %299 : vector<1x8x8xi1> to vector<4x8x8xi1>
    %301 = vector.broadcast %cst_93 : f32 to vector<4x8x8xf32>
    %302 = arith.select %300, %298, %301 : vector<4x8x8xi1>, vector<4x8x8xf32>
    %cst_94 = arith.constant dense<0xFF800000> : vector<4x8xf32>
    %303 = vector.multi_reduction <maximumf>, %302, %cst_94 [2] : vector<4x8x8xf32> to vector<4x8xf32>
    %304 = vector.shape_cast %303 : vector<4x8xf32> to vector<4x8x1xf32>
    %305 = vector.broadcast %304 : vector<4x8x1xf32> to vector<4x8x8xf32>
    %306 = arith.subf %302, %305 : vector<4x8x8xf32>
    %307 = math.exp %306 : vector<4x8x8xf32>
    %cst_95 = arith.constant dense<0.000000e+00> : vector<4x8xf32>
    %308 = vector.multi_reduction <add>, %307, %cst_95 [2] : vector<4x8x8xf32> to vector<4x8xf32>
    %309 = vector.shape_cast %308 : vector<4x8xf32> to vector<4x8x1xf32>
    %310 = tpu.reciprocal %309 {approx = true} : vector<4x8x1xf32> -> vector<4x8x1xf32>
    %311 = vector.broadcast %310 : vector<4x8x1xf32> to vector<4x8x8xf32>
    %312 = arith.mulf %307, %311 : vector<4x8x8xf32>
    %313 = arith.truncf %312 : vector<4x8x8xf32> to vector<4x8x8xbf16>
    "tpu.trace_start"() <{level = 10 : i32, message = "hqk,khd->qhd"}> : () -> ()
    %cst_96 = arith.constant dense<0.000000e+00> : vector<4x8x8xf32>
    %314 = tpu.matmul %297, %313, %cst_96 {dimension_numbers = #tpu.dot_dimension_numbers<[0], [2], [2], [1], [0, 1, 0, 2, 1, 1], [1], [0]>} : vector<8x4x8xbf16>, vector<4x8x8xbf16>, vector<4x8x8xf32> -> vector<4x8x8xf32>
    %315 = tpu.transpose %314, [2, 0, 1] : vector<4x8x8xf32> -> vector<8x4x8xf32>
    "tpu.trace_stop"() : () -> ()
    %316 = vector.shape_cast %315 : vector<8x4x8xf32> to vector<8x32xf32>
    %317 = arith.truncf %316 : vector<8x32xf32> to vector<8x32xbf16>
    %c1_97 = arith.constant 1 : index
    %c0_98 = arith.constant 0 : index
    %c96_99 = arith.constant 96 : index
    %318 = vector.load %arg3[%c1_97, %c0_98, %c96_99] : memref<2x32x192xbf16, #tpu.memory_space<vmem>>, vector<1x32x32xbf16>
    %319 = vector.shape_cast %318 : vector<1x32x32xbf16> to vector<32x32xbf16>
    %cst_100 = arith.constant dense<0.000000e+00> : vector<8x32xf32>
    %320 = tpu.matmul %317, %319, %cst_100 {dimension_numbers = #tpu.dot_dimension_numbers<[1], [0], [0], [1], [0, 0, 1, 1], [], []>} : vector<8x32xbf16>, vector<32x32xbf16>, vector<8x32xf32> -> vector<8x32xf32>
    %321 = vector.broadcast %250 : vector<1x32xf32> to vector<8x32xf32>
    %322 = arith.addf %320, %321 : vector<8x32xf32>
    %323 = arith.addf %254, %322 : vector<8x32xf32>
    %cst_101 = arith.constant dense<0.000000e+00> : vector<8xf32>
    %324 = vector.multi_reduction <add>, %323, %cst_101 [1] : vector<8x32xf32> to vector<8xf32>
    %325 = vector.shape_cast %324 : vector<8xf32> to vector<8x1xf32>
    %cst_102 = arith.constant 3.200000e+01 : f32
    %326 = vector.broadcast %cst_102 : f32 to vector<8x1xf32>
    %327 = arith.divf %325, %326 : vector<8x1xf32>
    %328 = vector.broadcast %327 : vector<8x1xf32> to vector<8x32xf32>
    %329 = arith.subf %323, %328 : vector<8x32xf32>
    %330 = arith.mulf %329, %329 : vector<8x32xf32>
    %cst_103 = arith.constant dense<0.000000e+00> : vector<8xf32>
    %331 = vector.multi_reduction <add>, %330, %cst_103 [1] : vector<8x32xf32> to vector<8xf32>
    %332 = vector.shape_cast %331 : vector<8xf32> to vector<8x1xf32>
    %cst_104 = arith.constant 3.200000e+01 : f32
    %333 = vector.broadcast %cst_104 : f32 to vector<8x1xf32>
    %334 = arith.divf %332, %333 : vector<8x1xf32>
    %335 = vector.broadcast %327 : vector<8x1xf32> to vector<8x32xf32>
    %336 = arith.subf %323, %335 : vector<8x32xf32>
    %cst_105 = arith.constant 9.99999974E-6 : f32
    %337 = vector.broadcast %cst_105 : f32 to vector<8x1xf32>
    %338 = arith.addf %334, %337 : vector<8x1xf32>
    %339 = math.rsqrt %338 : vector<8x1xf32>
    %340 = vector.broadcast %339 : vector<8x1xf32> to vector<8x32xf32>
    %341 = arith.mulf %336, %340 : vector<8x32xf32>
    %342 = vector.broadcast %245 : vector<1x32xf32> to vector<8x32xf32>
    %343 = arith.mulf %341, %342 : vector<8x32xf32>
    %344 = vector.broadcast %246 : vector<1x32xf32> to vector<8x32xf32>
    %345 = arith.addf %343, %344 : vector<8x32xf32>
    %346 = arith.truncf %345 : vector<8x32xf32> to vector<8x32xbf16>
    %c1_106 = arith.constant 1 : index
    %c0_107 = arith.constant 0 : index
    %c128_108 = arith.constant 128 : index
    %347 = vector.load %arg3[%c1_106, %c0_107, %c128_108] : memref<2x32x192xbf16, #tpu.memory_space<vmem>>, vector<1x32x32xbf16>
    %348 = vector.shape_cast %347 : vector<1x32x32xbf16> to vector<32x32xbf16>
    %cst_109 = arith.constant dense<0.000000e+00> : vector<8x32xf32>
    %349 = tpu.matmul %346, %348, %cst_109 {dimension_numbers = #tpu.dot_dimension_numbers<[1], [0], [0], [1], [0, 0, 1, 1], [], []>} : vector<8x32xbf16>, vector<32x32xbf16>, vector<8x32xf32> -> vector<8x32xf32>
    %350 = vector.broadcast %251 : vector<1x32xf32> to vector<8x32xf32>
    %351 = arith.addf %349, %350 : vector<8x32xf32>
    %cst_110 = arith.constant 0.000000e+00 : f32
    %352 = vector.broadcast %cst_110 : f32 to vector<8x32xf32>
    %353 = arith.maximumf %351, %352 : vector<8x32xf32>
    %354 = arith.truncf %353 : vector<8x32xf32> to vector<8x32xbf16>
    %c1_111 = arith.constant 1 : index
    %c0_112 = arith.constant 0 : index
    %c160_113 = arith.constant 160 : index
    %355 = vector.load %arg3[%c1_111, %c0_112, %c160_113] : memref<2x32x192xbf16, #tpu.memory_space<vmem>>, vector<1x32x32xbf16>
    %356 = vector.shape_cast %355 : vector<1x32x32xbf16> to vector<32x32xbf16>
    %cst_114 = arith.constant dense<0.000000e+00> : vector<8x32xf32>
    %357 = tpu.matmul %354, %356, %cst_114 {dimension_numbers = #tpu.dot_dimension_numbers<[1], [0], [0], [1], [0, 0, 1, 1], [], []>} : vector<8x32xbf16>, vector<32x32xbf16>, vector<8x32xf32> -> vector<8x32xf32>
    %358 = vector.broadcast %252 : vector<1x32xf32> to vector<8x32xf32>
    %359 = arith.addf %357, %358 : vector<8x32xf32>
    %360 = arith.addf %359, %323 : vector<8x32xf32>
    %c0_115 = arith.constant 0 : index
    %c0_116 = arith.constant 0 : index
    %c0_117 = arith.constant 0 : index
    %361 = vector.load %arg8[%c0_115, %c0_116, %c0_117] : memref<2x8x32xf32, #tpu.memory_space<vmem>>, vector<1x8x32xf32>
    %362 = vector.shape_cast %361 : vector<1x8x32xf32> to vector<8x32xf32>
    %363 = vector.shape_cast %360 : vector<8x32xf32> to vector<1x8x32xf32>
    tpu.vector_store %arg8[%c0_115, %c0_116, %c0_117], %363 {strides = array<i32>} : memref<2x8x32xf32, #tpu.memory_space<vmem>>, vector<1x8x32xf32>,
    %c1_118 = arith.constant 1 : index
    %c0_119 = arith.constant 0 : index
    %c0_120 = arith.constant 0 : index
    %364 = vector.load %arg8[%c1_118, %c0_119, %c0_120] : memref<2x8x32xf32, #tpu.memory_space<vmem>>, vector<1x8x32xf32>
    %365 = vector.shape_cast %364 : vector<1x8x32xf32> to vector<8x32xf32>
    %cst_121 = arith.constant dense<0.000000e+00> : vector<8xf32>
    %366 = vector.multi_reduction <add>, %365, %cst_121 [1] : vector<8x32xf32> to vector<8xf32>
    %367 = vector.shape_cast %366 : vector<8xf32> to vector<8x1xf32>
    %cst_122 = arith.constant 3.200000e+01 : f32
    %368 = vector.broadcast %cst_122 : f32 to vector<8x1xf32>
    %369 = arith.divf %367, %368 : vector<8x1xf32>
    %370 = vector.broadcast %369 : vector<8x1xf32> to vector<8x32xf32>
    %371 = arith.subf %365, %370 : vector<8x32xf32>
    %372 = arith.mulf %371, %371 : vector<8x32xf32>
    %cst_123 = arith.constant dense<0.000000e+00> : vector<8xf32>
    %373 = vector.multi_reduction <add>, %372, %cst_123 [1] : vector<8x32xf32> to vector<8xf32>
    %374 = vector.shape_cast %373 : vector<8xf32> to vector<8x1xf32>
    %cst_124 = arith.constant 3.200000e+01 : f32
    %375 = vector.broadcast %cst_124 : f32 to vector<8x1xf32>
    %376 = arith.divf %374, %375 : vector<8x1xf32>
    %377 = vector.broadcast %369 : vector<8x1xf32> to vector<8x32xf32>
    %378 = arith.subf %365, %377 : vector<8x32xf32>
    %cst_125 = arith.constant 9.99999974E-6 : f32
    %379 = vector.broadcast %cst_125 : f32 to vector<8x1xf32>
    %380 = arith.addf %376, %379 : vector<8x1xf32>
    %381 = math.rsqrt %380 : vector<8x1xf32>
    %382 = vector.broadcast %381 : vector<8x1xf32> to vector<8x32xf32>
    %383 = arith.mulf %378, %382 : vector<8x32xf32>
    %384 = vector.broadcast %243 : vector<1x32xf32> to vector<8x32xf32>
    %385 = arith.mulf %383, %384 : vector<8x32xf32>
    %386 = vector.broadcast %244 : vector<1x32xf32> to vector<8x32xf32>
    %387 = arith.addf %385, %386 : vector<8x32xf32>
    %388 = arith.truncf %387 : vector<8x32xf32> to vector<8x32xbf16>
    %c1_126 = arith.constant 1 : index
    %c0_127 = arith.constant 0 : index
    %c0_128 = arith.constant 0 : index
    %389 = vector.load %arg3[%c1_126, %c0_127, %c0_128] : memref<2x32x192xbf16, #tpu.memory_space<vmem>>, vector<1x32x96xbf16>
    %390 = vector.shape_cast %389 : vector<1x32x96xbf16> to vector<32x96xbf16>
    %cst_129 = arith.constant dense<0.000000e+00> : vector<8x96xf32>
    %391 = tpu.matmul %388, %390, %cst_129 {dimension_numbers = #tpu.dot_dimension_numbers<[1], [0], [0], [1], [0, 0, 1, 1], [], []>} : vector<8x32xbf16>, vector<32x96xbf16>, vector<8x96xf32> -> vector<8x96xf32>
    %392 = vector.extract_strided_slice %391 {offsets = [0, 0], sizes = [8, 32], strides = [1, 1]} : vector<8x96xf32> to vector<8x32xf32>
    %393 = vector.broadcast %247 : vector<1x32xf32> to vector<8x32xf32>
    %394 = arith.addf %392, %393 : vector<8x32xf32>
    %cst_130 = arith.constant 0.176776692 : f32
    %395 = vector.broadcast %cst_130 : f32 to vector<8x32xf32>
    %396 = arith.mulf %394, %395 : vector<8x32xf32>
    %397 = vector.extract_strided_slice %391 {offsets = [0, 32], sizes = [8, 32], strides = [1, 1]} : vector<8x96xf32> to vector<8x32xf32>
    %398 = vector.broadcast %248 : vector<1x32xf32> to vector<8x32xf32>
    %399 = arith.addf %397, %398 : vector<8x32xf32>
    %400 = vector.extract_strided_slice %391 {offsets = [0, 64], sizes = [8, 32], strides = [1, 1]} : vector<8x96xf32> to vector<8x32xf32>
    %401 = vector.broadcast %249 : vector<1x32xf32> to vector<8x32xf32>
    %402 = arith.addf %400, %401 : vector<8x32xf32>
    %403 = vector.shape_cast %396 : vector<8x32xf32> to vector<8x4x8xf32>
    %404 = arith.truncf %403 : vector<8x4x8xf32> to vector<8x4x8xbf16>
    %405 = vector.shape_cast %399 : vector<8x32xf32> to vector<8x4x8xf32>
    %406 = arith.truncf %405 : vector<8x4x8xf32> to vector<8x4x8xbf16>
    %407 = vector.shape_cast %402 : vector<8x32xf32> to vector<8x4x8xf32>
    %408 = arith.truncf %407 : vector<8x4x8xf32> to vector<8x4x8xbf16>
    "tpu.trace_start"() <{level = 10 : i32, message = "qhd,khd->hqk"}> : () -> ()
    %cst_131 = arith.constant dense<0.000000e+00> : vector<4x8x8xf32>
    %409 = tpu.matmul %404, %406, %cst_131 {dimension_numbers = #tpu.dot_dimension_numbers<[2], [2], [0], [0], [0, 1, 0, 0, 1, 0], [1], [1]>} : vector<8x4x8xbf16>, vector<8x4x8xbf16>, vector<4x8x8xf32> -> vector<4x8x8xf32>
    %cst_132 = arith.constant -1.000000e+30 : f32
    "tpu.trace_stop"() : () -> ()
    %410 = vector.shape_cast %6 : vector<1x8x8xi1> to vector<1x8x8xi1>
    %411 = vector.broadcast %410 : vector<1x8x8xi1> to vector<4x8x8xi1>
    %412 = vector.broadcast %cst_132 : f32 to vector<4x8x8xf32>
    %413 = arith.select %411, %409, %412 : vector<4x8x8xi1>, vector<4x8x8xf32>
    %cst_133 = arith.constant dense<0xFF800000> : vector<4x8xf32>
    %414 = vector.multi_reduction <maximumf>, %413, %cst_133 [2] : vector<4x8x8xf32> to vector<4x8xf32>
    %415 = vector.shape_cast %414 : vector<4x8xf32> to vector<4x8x1xf32>
    %416 = vector.broadcast %415 : vector<4x8x1xf32> to vector<4x8x8xf32>
    %417 = arith.subf %413, %416 : vector<4x8x8xf32>
    %418 = math.exp %417 : vector<4x8x8xf32>
    %cst_134 = arith.constant dense<0.000000e+00> : vector<4x8xf32>
    %419 = vector.multi_reduction <add>, %418, %cst_134 [2] : vector<4x8x8xf32> to vector<4x8xf32>
    %420 = vector.shape_cast %419 : vector<4x8xf32> to vector<4x8x1xf32>
    %421 = tpu.reciprocal %420 {approx = true} : vector<4x8x1xf32> -> vector<4x8x1xf32>
    %422 = vector.broadcast %421 : vector<4x8x1xf32> to vector<4x8x8xf32>
    %423 = arith.mulf %418, %422 : vector<4x8x8xf32>
    %424 = arith.truncf %423 : vector<4x8x8xf32> to vector<4x8x8xbf16>
    "tpu.trace_start"() <{level = 10 : i32, message = "hqk,khd->qhd"}> : () -> ()
    %cst_135 = arith.constant dense<0.000000e+00> : vector<4x8x8xf32>
    %425 = tpu.matmul %408, %424, %cst_135 {dimension_numbers = #tpu.dot_dimension_numbers<[0], [2], [2], [1], [0, 1, 0, 2, 1, 1], [1], [0]>} : vector<8x4x8xbf16>, vector<4x8x8xbf16>, vector<4x8x8xf32> -> vector<4x8x8xf32>
    %426 = tpu.transpose %425, [2, 0, 1] : vector<4x8x8xf32> -> vector<8x4x8xf32>
    "tpu.trace_stop"() : () -> ()
    %427 = vector.shape_cast %426 : vector<8x4x8xf32> to vector<8x32xf32>
    %428 = arith.truncf %427 : vector<8x32xf32> to vector<8x32xbf16>
    %c1_136 = arith.constant 1 : index
    %c0_137 = arith.constant 0 : index
    %c96_138 = arith.constant 96 : index
    %429 = vector.load %arg3[%c1_136, %c0_137, %c96_138] : memref<2x32x192xbf16, #tpu.memory_space<vmem>>, vector<1x32x32xbf16>
    %430 = vector.shape_cast %429 : vector<1x32x32xbf16> to vector<32x32xbf16>
    %cst_139 = arith.constant dense<0.000000e+00> : vector<8x32xf32>
    %431 = tpu.matmul %428, %430, %cst_139 {dimension_numbers = #tpu.dot_dimension_numbers<[1], [0], [0], [1], [0, 0, 1, 1], [], []>} : vector<8x32xbf16>, vector<32x32xbf16>, vector<8x32xf32> -> vector<8x32xf32>
    %432 = vector.broadcast %250 : vector<1x32xf32> to vector<8x32xf32>
    %433 = arith.addf %431, %432 : vector<8x32xf32>
    %434 = arith.addf %365, %433 : vector<8x32xf32>
    %cst_140 = arith.constant dense<0.000000e+00> : vector<8xf32>
    %435 = vector.multi_reduction <add>, %434, %cst_140 [1] : vector<8x32xf32> to vector<8xf32>
    %436 = vector.shape_cast %435 : vector<8xf32> to vector<8x1xf32>
    %cst_141 = arith.constant 3.200000e+01 : f32
    %437 = vector.broadcast %cst_141 : f32 to vector<8x1xf32>
    %438 = arith.divf %436, %437 : vector<8x1xf32>
    %439 = vector.broadcast %438 : vector<8x1xf32> to vector<8x32xf32>
    %440 = arith.subf %434, %439 : vector<8x32xf32>
    %441 = arith.mulf %440, %440 : vector<8x32xf32>
    %cst_142 = arith.constant dense<0.000000e+00> : vector<8xf32>
    %442 = vector.multi_reduction <add>, %441, %cst_142 [1] : vector<8x32xf32> to vector<8xf32>
    %443 = vector.shape_cast %442 : vector<8xf32> to vector<8x1xf32>
    %cst_143 = arith.constant 3.200000e+01 : f32
    %444 = vector.broadcast %cst_143 : f32 to vector<8x1xf32>
    %445 = arith.divf %443, %444 : vector<8x1xf32>
    %446 = vector.broadcast %438 : vector<8x1xf32> to vector<8x32xf32>
    %447 = arith.subf %434, %446 : vector<8x32xf32>
    %cst_144 = arith.constant 9.99999974E-6 : f32
    %448 = vector.broadcast %cst_144 : f32 to vector<8x1xf32>
    %449 = arith.addf %445, %448 : vector<8x1xf32>
    %450 = math.rsqrt %449 : vector<8x1xf32>
    %451 = vector.broadcast %450 : vector<8x1xf32> to vector<8x32xf32>
    %452 = arith.mulf %447, %451 : vector<8x32xf32>
    %453 = vector.broadcast %245 : vector<1x32xf32> to vector<8x32xf32>
    %454 = arith.mulf %452, %453 : vector<8x32xf32>
    %455 = vector.broadcast %246 : vector<1x32xf32> to vector<8x32xf32>
    %456 = arith.addf %454, %455 : vector<8x32xf32>
    %457 = arith.truncf %456 : vector<8x32xf32> to vector<8x32xbf16>
    %c1_145 = arith.constant 1 : index
    %c0_146 = arith.constant 0 : index
    %c128_147 = arith.constant 128 : index
    %458 = vector.load %arg3[%c1_145, %c0_146, %c128_147] : memref<2x32x192xbf16, #tpu.memory_space<vmem>>, vector<1x32x32xbf16>
    %459 = vector.shape_cast %458 : vector<1x32x32xbf16> to vector<32x32xbf16>
    %cst_148 = arith.constant dense<0.000000e+00> : vector<8x32xf32>
    %460 = tpu.matmul %457, %459, %cst_148 {dimension_numbers = #tpu.dot_dimension_numbers<[1], [0], [0], [1], [0, 0, 1, 1], [], []>} : vector<8x32xbf16>, vector<32x32xbf16>, vector<8x32xf32> -> vector<8x32xf32>
    %461 = vector.broadcast %251 : vector<1x32xf32> to vector<8x32xf32>
    %462 = arith.addf %460, %461 : vector<8x32xf32>
    %cst_149 = arith.constant 0.000000e+00 : f32
    %463 = vector.broadcast %cst_149 : f32 to vector<8x32xf32>
    %464 = arith.maximumf %462, %463 : vector<8x32xf32>
    %465 = arith.truncf %464 : vector<8x32xf32> to vector<8x32xbf16>
    %c1_150 = arith.constant 1 : index
    %c0_151 = arith.constant 0 : index
    %c160_152 = arith.constant 160 : index
    %466 = vector.load %arg3[%c1_150, %c0_151, %c160_152] : memref<2x32x192xbf16, #tpu.memory_space<vmem>>, vector<1x32x32xbf16>
    %467 = vector.shape_cast %466 : vector<1x32x32xbf16> to vector<32x32xbf16>
    %cst_153 = arith.constant dense<0.000000e+00> : vector<8x32xf32>
    %468 = tpu.matmul %465, %467, %cst_153 {dimension_numbers = #tpu.dot_dimension_numbers<[1], [0], [0], [1], [0, 0, 1, 1], [], []>} : vector<8x32xbf16>, vector<32x32xbf16>, vector<8x32xf32> -> vector<8x32xf32>
    %469 = vector.broadcast %252 : vector<1x32xf32> to vector<8x32xf32>
    %470 = arith.addf %468, %469 : vector<8x32xf32>
    %471 = arith.addf %470, %434 : vector<8x32xf32>
    %c1_154 = arith.constant 1 : index
    %c0_155 = arith.constant 0 : index
    %c0_156 = arith.constant 0 : index
    %472 = vector.load %arg8[%c1_154, %c0_155, %c0_156] : memref<2x8x32xf32, #tpu.memory_space<vmem>>, vector<1x8x32xf32>
    %473 = vector.shape_cast %472 : vector<1x8x32xf32> to vector<8x32xf32>
    %474 = vector.shape_cast %471 : vector<8x32xf32> to vector<1x8x32xf32>
    tpu.vector_store %arg8[%c1_154, %c0_155, %c0_156], %474 {strides = array<i32>} : memref<2x8x32xf32, #tpu.memory_space<vmem>>, vector<1x8x32xf32>,
    %c0_i32_157 = arith.constant 0 : i32
    %475 = arith.cmpi eq, %arg1, %c0_i32_157 : i32
    %476 = arith.extui %475 : i1 to i32
    %c0_i32_158 = arith.constant 0 : i32
    %477 = arith.cmpi ne, %476, %c0_i32_158 : i32
    scf.if %477 {
      %c0_159 = arith.constant 0 : index
      %c0_160 = arith.constant 0 : index
      %c0_161 = arith.constant 0 : index
      %478 = vector.load %arg8[%c0_159, %c0_160, %c0_161] : memref<2x8x32xf32, #tpu.memory_space<vmem>>, vector<1x8x32xf32>
      %479 = vector.shape_cast %478 : vector<1x8x32xf32> to vector<8x32xf32>
      %480 = arith.truncf %479 : vector<8x32xf32> to vector<8x32xbf16>
      %c0_162 = arith.constant 0 : index
      %c0_163 = arith.constant 0 : index
      %481 = vector.load %arg5[%c0_162, %c0_163] : memref<32x128xbf16, #tpu.memory_space<vmem>>, vector<32x128xbf16>
      %cst_164 = arith.constant dense<0.000000e+00> : vector<8x128xf32>
      %482 = tpu.matmul %480, %481, %cst_164 {dimension_numbers = #tpu.dot_dimension_numbers<[1], [0], [0], [1], [0, 0, 1, 1], [], []>} : vector<8x32xbf16>, vector<32x128xbf16>, vector<8x128xf32> -> vector<8x128xf32>
      %c0_165 = arith.constant 0 : index
      %c0_166 = arith.constant 0 : index
      %483 = vector.load %arg6[%c0_165, %c0_166] : memref<1x128xf32, #tpu.memory_space<vmem>>, vector<1x128xf32>
      %484 = vector.broadcast %483 : vector<1x128xf32> to vector<8x128xf32>
      %485 = arith.addf %482, %484 : vector<8x128xf32>
      %cst_167 = arith.constant dense<0xFF800000> : vector<8xf32>
      %486 = vector.multi_reduction <maximumf>, %485, %cst_167 [1] : vector<8x128xf32> to vector<8xf32>
      %487 = vector.shape_cast %486 : vector<8xf32> to vector<8x1xf32>
      %488 = vector.broadcast %487 : vector<8x1xf32> to vector<8x128xf32>
      %489 = arith.subf %485, %488 : vector<8x128xf32>
      %490 = math.exp %489 : vector<8x128xf32>
      %cst_168 = arith.constant dense<0.000000e+00> : vector<8xf32>
      %491 = vector.multi_reduction <add>, %490, %cst_168 [1] : vector<8x128xf32> to vector<8xf32>
      %492 = vector.shape_cast %491 : vector<8xf32> to vector<8x1xf32>
      %493 = vector.broadcast %492 : vector<8x1xf32> to vector<8x128xf32>
      %494 = arith.divf %490, %493 : vector<8x128xf32>
      %c0_169 = arith.constant 0 : index
      %c0_170 = arith.constant 0 : index
      %c0_171 = arith.constant 0 : index
      %495 = vector.load %arg7[%c0_169, %c0_170, %c0_171] : memref<2x8x128xf32, #tpu.memory_space<vmem>>, vector<1x8x128xf32>
      %496 = vector.shape_cast %495 : vector<1x8x128xf32> to vector<8x128xf32>
      %497 = vector.shape_cast %494 : vector<8x128xf32> to vector<1x8x128xf32>
      tpu.vector_store %arg7[%c0_169, %c0_170, %c0_171], %497 {strides = array<i32>} : memref<2x8x128xf32, #tpu.memory_space<vmem>>, vector<1x8x128xf32>,
      %c1_172 = arith.constant 1 : index
      %c0_173 = arith.constant 0 : index
      %c0_174 = arith.constant 0 : index
      %498 = vector.load %arg8[%c1_172, %c0_173, %c0_174] : memref<2x8x32xf32, #tpu.memory_space<vmem>>, vector<1x8x32xf32>
      %499 = vector.shape_cast %498 : vector<1x8x32xf32> to vector<8x32xf32>
      %500 = arith.truncf %499 : vector<8x32xf32> to vector<8x32xbf16>
      %c0_175 = arith.constant 0 : index
      %c0_176 = arith.constant 0 : index
      %501 = vector.load %arg5[%c0_175, %c0_176] : memref<32x128xbf16, #tpu.memory_space<vmem>>, vector<32x128xbf16>
      %cst_177 = arith.constant dense<0.000000e+00> : vector<8x128xf32>
      %502 = tpu.matmul %500, %501, %cst_177 {dimension_numbers = #tpu.dot_dimension_numbers<[1], [0], [0], [1], [0, 0, 1, 1], [], []>} : vector<8x32xbf16>, vector<32x128xbf16>, vector<8x128xf32> -> vector<8x128xf32>
      %c0_178 = arith.constant 0 : index
      %c0_179 = arith.constant 0 : index
      %503 = vector.load %arg6[%c0_178, %c0_179] : memref<1x128xf32, #tpu.memory_space<vmem>>, vector<1x128xf32>
      %504 = vector.broadcast %503 : vector<1x128xf32> to vector<8x128xf32>
      %505 = arith.addf %502, %504 : vector<8x128xf32>
      %cst_180 = arith.constant dense<0xFF800000> : vector<8xf32>
      %506 = vector.multi_reduction <maximumf>, %505, %cst_180 [1] : vector<8x128xf32> to vector<8xf32>
      %507 = vector.shape_cast %506 : vector<8xf32> to vector<8x1xf32>
      %508 = vector.broadcast %507 : vector<8x1xf32> to vector<8x128xf32>
      %509 = arith.subf %505, %508 : vector<8x128xf32>
      %510 = math.exp %509 : vector<8x128xf32>
      %cst_181 = arith.constant dense<0.000000e+00> : vector<8xf32>
      %511 = vector.multi_reduction <add>, %510, %cst_181 [1] : vector<8x128xf32> to vector<8xf32>
      %512 = vector.shape_cast %511 : vector<8xf32> to vector<8x1xf32>
      %513 = vector.broadcast %512 : vector<8x1xf32> to vector<8x128xf32>
      %514 = arith.divf %510, %513 : vector<8x128xf32>
      %c1_182 = arith.constant 1 : index
      %c0_183 = arith.constant 0 : index
      %c0_184 = arith.constant 0 : index
      %515 = vector.load %arg7[%c1_182, %c0_183, %c0_184] : memref<2x8x128xf32, #tpu.memory_space<vmem>>, vector<1x8x128xf32>
      %516 = vector.shape_cast %515 : vector<1x8x128xf32> to vector<8x128xf32>
      %517 = vector.shape_cast %514 : vector<8x128xf32> to vector<1x8x128xf32>
      tpu.vector_store %arg7[%c1_182, %c0_183, %c0_184], %517 {strides = array<i32>} : memref<2x8x128xf32, #tpu.memory_space<vmem>>, vector<1x8x128xf32>,
    } else {
    }
    return
  }
  func.func @transform_0(%arg0: i32, %arg1: i32) -> (i32, i32, i32) {
    %c0_i32 = arith.constant 0 : i32
    %c0_i32_0 = arith.constant 0 : i32
    %c0_i32_1 = arith.constant 0 : i32
    return %arg0, %c0_i32, %c0_i32_0 : i32, i32, i32
  }
  func.func @transform_1(%arg0: i32, %arg1: i32) -> (i32, i32, i32) {
    %c0_i32 = arith.constant 0 : i32
    %c0_i32_0 = arith.constant 0 : i32
    %c0_i32_1 = arith.constant 0 : i32
    return %arg1, %c0_i32, %c0_i32_0 : i32, i32, i32
  }
  func.func @transform_2(%arg0: i32, %arg1: i32) -> (i32, i32, i32) {
    %c0_i32 = arith.constant 0 : i32
    %c0_i32_0 = arith.constant 0 : i32
    %c0_i32_1 = arith.constant 0 : i32
    return %arg1, %c0_i32, %c0_i32_0 : i32, i32, i32
  }
  func.func @transform_3(%arg0: i32, %arg1: i32) -> (i32, i32) {
    %c0_i32 = arith.constant 0 : i32
    %c0_i32_0 = arith.constant 0 : i32
    %c0_i32_1 = arith.constant 0 : i32
    return %c0_i32, %c0_i32_0 : i32, i32
  }
  func.func @transform_4(%arg0: i32, %arg1: i32) -> (i32, i32) {
    %c0_i32 = arith.constant 0 : i32
    %c0_i32_0 = arith.constant 0 : i32
    %c0_i32_1 = arith.constant 0 : i32
    return %c0_i32, %c0_i32_0 : i32, i32
  }
  func.func @transform_5(%arg0: i32, %arg1: i32) -> (i32, i32, i32) {
    %c0_i32 = arith.constant 0 : i32
    %c0_i32_0 = arith.constant 0 : i32
    %c0_i32_1 = arith.constant 0 : i32
    return %arg0, %c0_i32, %c0_i32_0 : i32, i32, i32
  }
}

</mosaic_0001>

<llo_original>
// kernel: tpu_custom_call.1
$region0: #{tpu_custom_call.1}
  #allocation0 [shape = 'u32[]', space=smem, size = 0x4, offset = 0x4, fixed_abs, tag = 'smem constant byte address 0x4 - core index']
  #allocation1 [shape = 'u32[144,128]{1,0:T(1,128)}', space=vmem, size = 0x12000, scoped, tag = 'internal scratch']
  #allocation2 [shape = 'f32[2,8,32]{2,1,0:T(8,128)}', space=vmem, size = 0x2000, scoped, tag = 'scratch operand']
  %s0 = inlined_call_operand.vmem [shape: f32[4,8,32], index: 0, kind: input, shape index: {}]
  %s1 = inlined_call_operand.hbm [shape: bf16[2,32,192], index: 1, kind: input, shape index: {}]
  %s2 = inlined_call_operand.vmem [shape: f32[2,10,32], index: 2, kind: input, shape index: {}]
  %s3 = inlined_call_operand.vmem [shape: bf16[32,128], index: 3, kind: input, shape index: {}]
  %s4 = inlined_call_operand.vmem [shape: f32[1,128], index: 4, kind: input, shape index: {}]
  %s5 = inlined_call_operand.hbm [shape: f32[4,8,128], index: 5, kind: output, shape index: {}]
  %s6 = sld [smem:[#allocation0]]
  $region65: #{tpu_custom_call.1} parent=0
    _
  %s8 = ssub.s32 1, %s6
  %s9 = scalar_select 0, %s8, %s6
  $region1: #{tpu_custom_call.1} parent=0
    #allocation3 [shape = 'u8[32768]{0}', space=vmem, size = 0x8000, scoped, tag = 'input window, operand 1, single buffered']
    #allocation4 [shape = 's32[2]{0}', space=sflag, size = 0x8, scoped, tag = 'scoped memory for tpu_custom_call.1']
    #allocation5 [shape = 's32[2]{0}', space=sflag, size = 0x8, scoped, tag = 'scoped memory for tpu_custom_call.1']
    #allocation6 [shape = 'u8[16384]{0}', space=vmem, size = 0x4000, scoped, tag = 'output window, operand 0']
    %10 = vsyncpa [#allocation4], 0
    %11 = vsyncpa [#allocation5], 0
    %s12 = scalar_lea.sflag [#allocation5], 1
    %13 = vsyncpa %s12, 0
    loop: start=0, step=1, limit=4
    $region2: #{tpu_custom_call.1} parent=1 // loop_pre_header
      _
    $region3: #{tpu_custom_call.1} parent=1 // loop_header
      %s15 = sphi 0, %s19
      %p16 = scmp.ge.s32.totalorder %s15, 4
      %s22 = sphi 0, %s34
      %s23 = sphi 0, %s30
      %s24 = sphi 0, %s22
      %s25 = sphi 0, %s23
      %s26 = sphi 0, %s24
      %s27 = sphi 0, %s25
      %s37 = sphi 0, %s39
      %s40 = sphi 0, %s37
      %s41 = sphi 0, %s40
      %s57 = sphi 0, %s41
      %s63 = sphi 0, %s65
      %s66 = sphi 0, %s63
      %s67 = sphi 0, %s66
      %s83 = sphi 0, %s67
      %s89 = sphi 0, %s91
      %s92 = sphi 0, %s89
      %s93 = sphi 0, %s92
      %s109 = sphi 0, %s93
      %s113 = sphi 0, %s113
      %s115 = sphi 0, %s113
      %s116 = sphi 0, %s115
      %s130 = sphi 0, %s116
      %s134 = sphi 0, %s134
      %s136 = sphi 0, %s134
      %s137 = sphi 0, %s136
      %s151 = sphi 0, %s137
      %s157 = sphi 0, %s159
      %s160 = sphi 0, %s157
      %s161 = sphi 0, %s160
      %s177 = sphi 0, %s161
    $region4: #{tpu_custom_call.1} parent=1 // loop_header_branch
      %18 = sbr.rel (%p16) target = $region8
    $region5: #{tpu_custom_call.1} parent=1 // loop_body
      %s20 = ssub.s32 %s15, 1
      %s21 = ssub.s32 %s15, 2
      %s28 = sadd.s32 1, %s23
      %p29 = scmp.ge.s32.totalorder %s28, 1
      %s30 = scalar_select %p29, 0, %s28
      %s31 = sadd.s32 1, %s22
      %s32 = scalar_select %p29, %s31, %s22
      %p33 = scmp.ge.s32.totalorder %s32, 2
      %s34 = scalar_select %p33, 0, %s32
      %s35 = ssub.s32 %s22, %s34
      %p36 = scmp.eq.s32.totalorder %s35, 0
      %s38 = sadd.s32 %s37, 1
      %s39 = scalar_select %p36, %s37, %s38
      %p42 = pneg %p36
      %p43 = scmp.eq.s32.totalorder %s15, 1
      %p44 = por %p42, %p43
      %p45 = scmp.ne.s32.totalorder %s37, %s40
      %p46 = scmp.eq.s32.totalorder %s15, 0
      %p47 = por %p45, %p46
      %p48 = scmp.ne.s32.totalorder %s37, %s40
      %p49 = scmp.eq.s32.totalorder %s20, 1
      %p50 = por %p48, %p49
      %p51 = scmp.ne.s32.totalorder %s40, %s41
      %p52 = scmp.eq.s32.totalorder %s20, 0
      %p53 = por %p51, %p52
      %p54 = scmp.ne.s32.totalorder %s40, %s41
      %p55 = scmp.eq.s32.totalorder %s21, 1
      %p56 = por %p54, %p55
      %p58 = scmp.ne.s32.totalorder %s41, %s57
      %p59 = scmp.eq.s32.totalorder %s21, 0
      %p60 = por %p58, %p59
      %s61 = ssub.s32 %s23, %s30
      %p62 = scmp.eq.s32.totalorder %s61, 0
      %s64 = sadd.s32 %s63, 1
      %s65 = scalar_select %p62, %s63, %s64
      %p68 = pneg %p62
      %p69 = scmp.eq.s32.totalorder %s15, 1
      %p70 = por %p68, %p69
      %p71 = scmp.ne.s32.totalorder %s63, %s66
      %p72 = scmp.eq.s32.totalorder %s15, 0
      %p73 = por %p71, %p72
      %p74 = scmp.ne.s32.totalorder %s63, %s66
      %p75 = scmp.eq.s32.totalorder %s20, 1
      %p76 = por %p74, %p75
      %p77 = scmp.ne.s32.totalorder %s66, %s67
      %p78 = scmp.eq.s32.totalorder %s20, 0
      %p79 = por %p77, %p78
      %p80 = scmp.ne.s32.totalorder %s66, %s67
      %p81 = scmp.eq.s32.totalorder %s21, 1
      %p82 = por %p80, %p81
      %p84 = scmp.ne.s32.totalorder %s67, %s83
      %p85 = scmp.eq.s32.totalorder %s21, 0
      %p86 = por %p84, %p85
      %s87 = ssub.s32 %s23, %s30
      %p88 = scmp.eq.s32.totalorder %s87, 0
      %s90 = sadd.s32 %s89, 1
      %s91 = scalar_select %p88, %s89, %s90
      %p94 = pneg %p88
      %p95 = scmp.eq.s32.totalorder %s15, 1
      %p96 = por %p94, %p95
      %p97 = scmp.ne.s32.totalorder %s89, %s92
      %p98 = scmp.eq.s32.totalorder %s15, 0
      %p99 = por %p97, %p98
      %p100 = scmp.ne.s32.totalorder %s89, %s92
      %p101 = scmp.eq.s32.totalorder %s20, 1
      %p102 = por %p100, %p101
      %p103 = scmp.ne.s32.totalorder %s92, %s93
      %p104 = scmp.eq.s32.totalorder %s20, 0
      %p105 = por %p103, %p104
      %p106 = scmp.ne.s32.totalorder %s92, %s93
      %p107 = scmp.eq.s32.totalorder %s21, 1
      %p108 = por %p106, %p107
      %p110 = scmp.ne.s32.totalorder %s93, %s109
      %p111 = scmp.eq.s32.totalorder %s21, 0
      %p112 = por %p110, %p111
      %s114 = sadd.s32 %s113, 1
      %p117 = scmp.eq.s32.totalorder %s15, 1
      %p118 = scmp.ne.s32.totalorder %s113, %s115
      %p119 = scmp.eq.s32.totalorder %s15, 0
      %p120 = por %p118, %p119
      %p121 = scmp.ne.s32.totalorder %s113, %s115
      %p122 = scmp.eq.s32.totalorder %s20, 1
      %p123 = por %p121, %p122
      %p124 = scmp.ne.s32.totalorder %s115, %s116
      %p125 = scmp.eq.s32.totalorder %s20, 0
      %p126 = por %p124, %p125
      %p127 = scmp.ne.s32.totalorder %s115, %s116
      %p128 = scmp.eq.s32.totalorder %s21, 1
      %p129 = por %p127, %p128
      %p131 = scmp.ne.s32.totalorder %s116, %s130
      %p132 = scmp.eq.s32.totalorder %s21, 0
      %p133 = por %p131, %p132
      %s135 = sadd.s32 %s134, 1
      %p138 = scmp.eq.s32.totalorder %s15, 1
      %p139 = scmp.ne.s32.totalorder %s134, %s136
      %p140 = scmp.eq.s32.totalorder %s15, 0
      %p141 = por %p139, %p140
      %p142 = scmp.ne.s32.totalorder %s134, %s136
      %p143 = scmp.eq.s32.totalorder %s20, 1
      %p144 = por %p142, %p143
      %p145 = scmp.ne.s32.totalorder %s136, %s137
      %p146 = scmp.eq.s32.totalorder %s20, 0
      %p147 = por %p145, %p146
      %p148 = scmp.ne.s32.totalorder %s136, %s137
      %p149 = scmp.eq.s32.totalorder %s21, 1
      %p150 = por %p148, %p149
      %p152 = scmp.ne.s32.totalorder %s137, %s151
      %p153 = scmp.eq.s32.totalorder %s21, 0
      %p154 = por %p152, %p153
      %s155 = ssub.s32 %s22, %s34
      %p156 = scmp.eq.s32.totalorder %s155, 0
      %s158 = sadd.s32 %s157, 1
      %s159 = scalar_select %p156, %s157, %s158
      %p162 = pneg %p156
      %p163 = scmp.eq.s32.totalorder %s15, 1
      %p164 = por %p162, %p163
      %p165 = scmp.ne.s32.totalorder %s157, %s160
      %p166 = scmp.eq.s32.totalorder %s15, 0
      %p167 = por %p165, %p166
      %p168 = scmp.ne.s32.totalorder %s157, %s160
      %p169 = scmp.eq.s32.totalorder %s20, 1
      %p170 = por %p168, %p169
      %p171 = scmp.ne.s32.totalorder %s160, %s161
      %p172 = scmp.eq.s32.totalorder %s20, 0
      %p173 = por %p171, %p172
      %p174 = scmp.ne.s32.totalorder %s160, %s161
      %p175 = scmp.eq.s32.totalorder %s21, 1
      %p176 = por %p174, %p175
      %p178 = scmp.ne.s32.totalorder %s161, %s177
      %p179 = scmp.eq.s32.totalorder %s21, 0
      %p180 = por %p178, %p179
      %p181 = scmp.le.s32.totalorder 1, %s15
      %p182 = scmp.lt.s32.totalorder %s15, 3
      %p183 = pnand %p181, %p182
      %p184 = pneg %p183
      // Predicated region
      $region9: #{tpu_custom_call.1} parent=5 // pred_check
        _
      $region10: #{tpu_custom_call.1} parent=5 // pred_check_branch
        %186 = sbr.rel (%p183) target = $region12
      $region11: #{tpu_custom_call.1} parent=5 // pred_region
        %s187 = ssub.s32 %s15, 1
        // Predicated region
        $region13: #{tpu_custom_call.1} parent=11 // pred_check
          %p188 = pneg %p79
        $region14: #{tpu_custom_call.1} parent=11 // pred_check_branch
          %190 = sbr.rel (%p188) target = $region16
        $region15: #{tpu_custom_call.1} parent=11 // pred_region
          %s191 = smul.u32 2, %s25
          %s193 = ssub.s32 1024, 1024
          %194 = vsyncadd [#allocation4], %s193
          %s195 = smul.addr %s191, 8
          %s196 = smul.addr %s195, 64
          %s197 = scalar_lea.hbm %s1, %s196
          %s198 = sshll.u32 [#allocation3], 4
          %s199 = int_to_ptr.vmem [resolvable:$true] %s198
          %204 = dma.hbm_to_vmem [thread:$0]  %s197, 1024, %s199, [#allocation4], 128, 128, 8
        $region16: #{tpu_custom_call.1} parent=11 // pred_fallthru
          _
        // Predicated region
        $region17: #{tpu_custom_call.1} parent=11 // pred_check
          %p205 = pneg %p105
        $region18: #{tpu_custom_call.1} parent=11 // pred_check_branch
          %207 = sbr.rel (%p205) target = $region20
        $region19: #{tpu_custom_call.1} parent=11 // pred_region
          %s208 = smul.u32 2, %s25
          %p209 = scmp.lt.s32.totalorder %s208, 1
          %s210 = scalar_select %p209, %s208, 1
          %s211 = smul.addr %s210, 2
          %s212 = smul.addr %s211, 8
          %s213 = scalar_lea.vmem %s2, %s212
          %s214 = smul.u32 2, %s25
        $region20: #{tpu_custom_call.1} parent=11 // pred_fallthru
          _
        // Predicated region
        $region21: #{tpu_custom_call.1} parent=11 // pred_check
          %p215 = pneg %p126
        $region22: #{tpu_custom_call.1} parent=11 // pred_check_branch
          %217 = sbr.rel (%p215) target = $region24
        $region23: #{tpu_custom_call.1} parent=11 // pred_region
          _
        $region24: #{tpu_custom_call.1} parent=11 // pred_fallthru
          _
        // Predicated region
        $region25: #{tpu_custom_call.1} parent=11 // pred_check
          %p218 = pneg %p147
        $region26: #{tpu_custom_call.1} parent=11 // pred_check_branch
          %220 = sbr.rel (%p218) target = $region28
        $region27: #{tpu_custom_call.1} parent=11 // pred_region
          _
        $region28: #{tpu_custom_call.1} parent=11 // pred_fallthru
          _
      $region12: #{tpu_custom_call.1} parent=5 // pred_fallthru
        _
      %p221 = scmp.lt.s32.totalorder %s15, 2
      // Predicated region
      $region29: #{tpu_custom_call.1} parent=5 // pred_check
        %p222 = pneg %p221
      $region30: #{tpu_custom_call.1} parent=5 // pred_check_branch
        %224 = sbr.rel (%p222) target = $region32
      $region31: #{tpu_custom_call.1} parent=5 // pred_region
        // Predicated region
        $region33: #{tpu_custom_call.1} parent=31 // pred_check
          %p225 = pneg %p47
        $region34: #{tpu_custom_call.1} parent=31 // pred_check_branch
          %227 = sbr.rel (%p225) target = $region36
        $region35: #{tpu_custom_call.1} parent=31 // pred_region
          %s228 = smul.u32 2, %s22
          %p229 = scmp.lt.s32.totalorder %s228, 3
          %s230 = scalar_select %p229, %s228, 3
          %s231 = smul.addr %s230, 8
          %s232 = scalar_lea.vmem %s0, %s231
          %s233 = smul.u32 2, %s22
        $region36: #{tpu_custom_call.1} parent=31 // pred_fallthru
          _
      $region32: #{tpu_custom_call.1} parent=5 // pred_fallthru
        _
      %p234 = scmp.le.s32.totalorder 1, %s15
      %p235 = scmp.lt.s32.totalorder %s15, 3
      %p236 = pnand %p234, %p235
      %p237 = pneg %p236
      // Predicated region
      $region37: #{tpu_custom_call.1} parent=5 // pred_check
        _
      $region38: #{tpu_custom_call.1} parent=5 // pred_check_branch
        %239 = sbr.rel (%p236) target = $region40
      $region39: #{tpu_custom_call.1} parent=5 // pred_region
        %s240 = ssub.s32 %s15, 1
        // Predicated region
        $region41: #{tpu_custom_call.1} parent=39 // pred_check
          %p241 = pneg %p79
        $region42: #{tpu_custom_call.1} parent=39 // pred_check_branch
          %243 = sbr.rel (%p241) target = $region44
        $region43: #{tpu_custom_call.1} parent=39 // pred_region
          %244 = dma.done [#allocation4], 1024
        $region44: #{tpu_custom_call.1} parent=39 // pred_fallthru
          _
        %s245 = smul.u32 2, %s24
        %p246 = scmp.lt.s32.totalorder %s245, 3
        %s247 = scalar_select %p246, %s245, 3
        %s248 = smul.addr %s247, 8
        %s249 = scalar_lea.vmem %s0, %s248
        %p250 = pneg %p53
        %p251 = pneg %p50
        %p252 = pneg %p79
        %p253 = pneg %p76
        %s254 = smul.u32 2, %s25
        %p255 = scmp.lt.s32.totalorder %s254, 1
        %s256 = scalar_select %p255, %s254, 1
        %s257 = smul.addr %s256, 2
        %s258 = smul.addr %s257, 8
        %s259 = scalar_lea.vmem %s2, %s258
        %p260 = pneg %p105
        %p261 = pneg %p102
        %p262 = pneg %p126
        %p263 = pneg %p123
        %p264 = pneg %p147
        %p265 = pneg %p144
        %p266 = pneg %p173
        %p267 = pneg %p170
        %s268 = sand.u32 %s160, 1
        %s269 = scalar_lea.sflag [#allocation5], %s268
        %s270 = sand.u32 %s160, 1
        %s271 = smul.addr %s270, 16
        %s272 = scalar_lea.vmem [#allocation6], %s271
        %s273 = smul.u32 2, %s24
        %p274 = scmp.lt.s32.totalorder %s273, 3
        %s275 = scalar_select %p274, %s273, 3
        %s276 = smul.addr %s275, 8
        %s277 = scalar_lea.vmem %s0, %s276
        %s278 = smul.u32 2, %s24
        %s279 = smul.u32 2, %s25
        %s280 = smul.u32 2, %s25
        %p281 = scmp.lt.s32.totalorder %s280, 1
        %s282 = scalar_select %p281, %s280, 1
        %s283 = smul.addr %s282, 2
        %s284 = smul.addr %s283, 8
        %s285 = scalar_lea.vmem %s2, %s284
        %s286 = smul.u32 2, %s25
        %s287 = smul.u32 2, %s24
        %p289 = scmp.eq.s32.totalorder %s25, 0
        // Predicated region
        $region45: #{tpu_custom_call.1} parent=39 // pred_check
          %p290 = pneg %p289
        $region46: #{tpu_custom_call.1} parent=39 // pred_check_branch
          %292 = sbr.rel (%p290) target = $region48
        $region47: #{tpu_custom_call.1} parent=39 // pred_region
          %v293 = vld [vmem:[%s277] sm:$0xff]
          %v294 = vld [vmem:[%s277 + $0x8] sm:$0xff]
          %vm295 = vcmask 261120
          %296 = vst.msk [vmem:[#allocation2] sm:$0xff] %vm295, %v293
          %297 = vst.msk [vmem:[#allocation2 + $0x8] sm:$0xff] %vm295, %v294
        $region48: #{tpu_custom_call.1} parent=39 // pred_fallthru
          _
        %v298 = vlaneseq
        %v299 = vshrl.u32 %v298, 7
        %v300 = vlaneseq
        %v301 = vand.u32 %v300, 127
        %vm302 = vcmp.ge.s32.totalorder %v299, %v301
        %v303 = vld [vmem:[%s285] sm:$0xff]
        %v304 = vld [vmem:[%s285 + $0x8] sm:$0x3]
        %v305 = vld [vmem:[#allocation2] sm:$0xff]
        %vm306 = vcmask 261120
        %v307 = vsel %vm306, %v305, 0.0
        %308 = vadd.xlane.f32.xlu0 %v307
        %v309 = vpop.xlane.xlu0 %308
        %v310 = vrcp.pop 32.0
        %v311 = vmul.f32 %v309, %v310
        %v312 = vsub.f32 %v305, %v311
        %v313 = vmul.f32 %v312, %v312
        %v314 = vsel %vm306, %v313, 0.0
        %315 = vadd.xlane.f32.xlu0 %v314
        %v316 = vpop.xlane.xlu0 %315
        %v317 = vmul.f32 %v316, %v310
        %v318 = vadd.f32 %v317, 1e-05
        %v319 = vrsqrt.pop %v318
        %v320 = vmul.f32 %v312, %v319
        %v321 = vlaneseq
        %v322 = vshrl.u32 %v321, 7
        %v323 = vsub.s32 0, %v322
        %v324 = vrot.slane %v303, %v323
        %v325 = vmul.f32 %v320, %v324
        %v326 = vlaneseq
        %v327 = vshrl.u32 %v326, 7
        %v328 = vsub.s32 1, %v327
        %v329 = vrot.slane %v303, %v328
        %v330 = vadd.f32 %v325, %v329
        %v331 = vpack.c.bf16 %v330, %v330
        %v332 = vld [vmem:[#allocation3] sm:$0xf]
        %v333 = vld [vmem:[#allocation3 + $0x8] sm:$0xf]
        %v334 = vld [vmem:[#allocation3 + $0x10] sm:$0xf]
        %v335 = vld [vmem:[#allocation3 + $0x18] sm:$0xf]
        %v340 = vunpack.c.l.b16 %v332
        %v341 = vunpack.c.l.b16 %v333
        %v342 = vunpack.c.l.b16 %v334
        %v343 = vunpack.c.l.b16 %v335
        %v344 = vpack.c.b16 %v341, %v340
        %v345 = vpack.c.b16 %v343, %v342
        %v349 = vsel %vm306, %v331, 0
        %351 = vmatprep.subr.bf16.mxu0 0
        %352 = vmatpush1.bf16.msra.mxu0 0
        %353 = vmatprep.subr.bf16.mxu0 0
        %354 = vmatpush1.bf16.msra.mxu0 0
        %355 = vmatprep.subr.bf16.mxu0 0
        %356 = vmatpush1.bf16.msra.mxu0 0
        %357 = vmatprep.subr.bf16.mxu0 0
        %358 = vmatpush1.bf16.msra.mxu0 0
        %359 = vmatprep.subr.bf16.mxu0 0
        %360 = vmatpush1.bf16.msra.mxu0 0
        %361 = vmatprep.subr.bf16.mxu0 0
        %362 = vmatpush1.bf16.msra.mxu0 0
        %363 = vmatprep.subr.bf16.mxu0 0
        %364 = vmatpush1.bf16.msra.mxu0 %v345
        %365 = vmatprep.subr.bf16.mxu0 0
        %366 = vmatpush1.bf16.msra.mxu0 %v344
        %367 = vmatprep.subr.bf16.mxu0 0
        %368 = vmatpush2.bf16.msra.mxu0 0
        %369 = vmatprep.subr.bf16.mxu0 0
        %370 = vmatpush2.bf16.msra.mxu0 0
        %371 = vmatprep.subr.bf16.mxu0 0
        %372 = vmatpush2.bf16.msra.mxu0 0
        %373 = vmatprep.subr.bf16.mxu0 0
        %374 = vmatpush2.bf16.msra.mxu0 0
        %375 = vmatprep.subr.bf16.mxu0 0
        %376 = vmatpush2.bf16.msra.mxu0 0
        %377 = vmatprep.subr.bf16.mxu0 0
        %378 = vmatpush2.bf16.msra.mxu0 0
        %379 = vmatprep.subr.bf16.mxu0 0
        %380 = vmatpush2.bf16.msra.mxu0 0
        %381 = vmatprep.subr.bf16.mxu0 0
        %382 = vmatpush2.bf16.msra.mxu0 0
        %383 = vmatprep.mubr.bf16.mxu0 0
        %384 = vmatmul.mubr.bf16.gmra.mxu0 %v349
        %v385 = vpop.f32.mrf.mxu0
        %v386 = vadd.f32 0.0, %v385
        %v387 = vpop.f32.mrf.mxu0
        %v388 = vpop.f32.mrf.mxu0
        %v389 = vpop.f32.mrf.mxu0
        %390 = vdwg.mxu0
        %v391 = vlaneseq
        %v392 = vshrl.u32 %v391, 7
        %v393 = vsub.s32 4, %v392
        %v394 = vrot.slane %v303, %v393
        %v395 = vadd.f32 %v386, %v394
        %v396 = vmul.f32 %v395, 0.17677669
        %v397 = vlaneseq
        %v398 = vshrl.u32 %v397, 7
        %v399 = vsub.s32 5, %v398
        %v400 = vrot.slane %v303, %v399
        %402 = vrot.lane.b32.xlu0 %v400, 32
        %v403 = vpop.permute.xlu0 %402
        %v405 = vadd.f32 %v386, %v403
        %v406 = vlaneseq
        %v407 = vshrl.u32 %v406, 7
        %v408 = vsub.s32 6, %v407
        %v409 = vrot.slane %v303, %v408
        %411 = vrot.lane.b32.xlu0 %v409, 64
        %v412 = vpop.permute.xlu0 %411
        %v414 = vadd.f32 %v386, %v412
        %416 = vrot.lane.b32.xlu0 %v396, 120
        %v417 = vpop.permute.xlu0 %416
        %419 = vrot.lane.b32.xlu0 %v396, 112
        %v420 = vpop.permute.xlu0 %419
        %422 = vrot.lane.b32.xlu0 %v396, 104
        %v423 = vpop.permute.xlu0 %422
        %v425 = vcombine.low %v396, %v420
        %v426 = vcombine.high %v396, %v420
        %v428 = vunpack.c.l.s4 1983009808
        %v429 = vunpack.c.0.s8 %v428
        %v430 = vlaneseq
        %v431 = vshrl.u32 %v430, 7
        %v432 = vsub.s32 %v429, %v431
        %v433 = vrot.slane %v425, %v432
        %v435 = vunpack.c.l.s4 1983009808
        %v436 = vunpack.c.0.s8 %v435
        %v437 = vlaneseq
        %v438 = vshrl.u32 %v437, 7
        %v439 = vsub.s32 %v436, %v438
        %v440 = vrot.slane %v426, %v439
        %v441 = vcombine.low %v417, %v423
        %v442 = vcombine.high %v417, %v423
        %v444 = vunpack.c.l.s4 1983009808
        %v445 = vunpack.c.0.s8 %v444
        %v446 = vlaneseq
        %v447 = vshrl.u32 %v446, 7
        %v448 = vsub.s32 %v445, %v447
        %v449 = vrot.slane %v441, %v448
        %v451 = vunpack.c.l.s4 1983009808
        %v452 = vunpack.c.0.s8 %v451
        %v453 = vlaneseq
        %v454 = vshrl.u32 %v453, 7
        %v455 = vsub.s32 %v452, %v454
        %v456 = vrot.slane %v442, %v455
        %v457 = vcombine.low %v433, %v449
        %v458 = vcombine.high %v433, %v449
        %v460 = vunpack.c.l.s4 1934713408
        %v461 = vunpack.c.0.s8 %v460
        %v462 = vlaneseq
        %v463 = vshrl.u32 %v462, 7
        %v464 = vsub.s32 %v461, %v463
        %v465 = vrot.slane %v457, %v464
        %v467 = vunpack.c.l.s4 1934713408
        %v468 = vunpack.c.0.s8 %v467
        %v469 = vlaneseq
        %v470 = vshrl.u32 %v469, 7
        %v471 = vsub.s32 %v468, %v470
        %v472 = vrot.slane %v458, %v471
        %v473 = vcombine.low %v440, %v456
        %v474 = vcombine.high %v440, %v456
        %v476 = vunpack.c.l.s4 1934713408
        %v477 = vunpack.c.0.s8 %v476
        %v478 = vlaneseq
        %v479 = vshrl.u32 %v478, 7
        %v480 = vsub.s32 %v477, %v479
        %v481 = vrot.slane %v473, %v480
        %v483 = vunpack.c.l.s4 1934713408
        %v484 = vunpack.c.0.s8 %v483
        %v485 = vlaneseq
        %v486 = vshrl.u32 %v485, 7
        %v487 = vsub.s32 %v484, %v486
        %v488 = vrot.slane %v474, %v487
        %v489 = vcombine.high %v465, 0.0
        %v490 = vcombine.high %v472, 0.0
        %v491 = vcombine.high %v481, 0.0
        %v492 = vcombine.high %v488, 0.0
        %v493 = vpack.c.bf16 %v465, %v465
        %v494 = vpack.c.bf16 %v489, %v489
        %v495 = vpack.c.bf16 %v472, %v472
        %v496 = vpack.c.bf16 %v490, %v490
        %v497 = vpack.c.bf16 %v481, %v481
        %v498 = vpack.c.bf16 %v491, %v491
        %v499 = vpack.c.bf16 %v488, %v488
        %v500 = vpack.c.bf16 %v492, %v492
        %502 = vrot.lane.b32.xlu0 %v405, 120
        %v503 = vpop.permute.xlu0 %502
        %504 = vrot.lane.b32.xlu0 %v405, 112
        %v505 = vpop.permute.xlu0 %504
        %506 = vrot.lane.b32.xlu0 %v405, 104
        %v507 = vpop.permute.xlu0 %506
        %508 = vrot.lane.b32.xlu0 %v405, 96
        %v509 = vpop.permute.xlu0 %508
        %510 = vrot.lane.b32.xlu0 %v503, 96
        %v511 = vpop.permute.xlu0 %510
        %512 = vrot.lane.b32.xlu0 %v505, 96
        %v513 = vpop.permute.xlu0 %512
        %514 = vrot.lane.b32.xlu0 %v507, 96
        %v515 = vpop.permute.xlu0 %514
        %v520 = vcombine.low %v509, %v513
        %v521 = vcombine.high %v509, %v513
        %v523 = vunpack.c.l.s4 1983009808
        %v524 = vunpack.c.0.s8 %v523
        %v525 = vlaneseq
        %v526 = vshrl.u32 %v525, 7
        %v527 = vsub.s32 %v524, %v526
        %v528 = vrot.slane %v520, %v527
        %v530 = vunpack.c.l.s4 1983009808
        %v531 = vunpack.c.0.s8 %v530
        %v532 = vlaneseq
        %v533 = vshrl.u32 %v532, 7
        %v534 = vsub.s32 %v531, %v533
        %v535 = vrot.slane %v521, %v534
        %v536 = vcombine.low %v511, %v515
        %v537 = vcombine.high %v511, %v515
        %v539 = vunpack.c.l.s4 1983009808
        %v540 = vunpack.c.0.s8 %v539
        %v541 = vlaneseq
        %v542 = vshrl.u32 %v541, 7
        %v543 = vsub.s32 %v540, %v542
        %v544 = vrot.slane %v536, %v543
        %v546 = vunpack.c.l.s4 1983009808
        %v547 = vunpack.c.0.s8 %v546
        %v548 = vlaneseq
        %v549 = vshrl.u32 %v548, 7
        %v550 = vsub.s32 %v547, %v549
        %v551 = vrot.slane %v537, %v550
        %v552 = vcombine.low %v528, %v544
        %v553 = vcombine.high %v528, %v544
        %v555 = vunpack.c.l.s4 1934713408
        %v556 = vunpack.c.0.s8 %v555
        %v557 = vlaneseq
        %v558 = vshrl.u32 %v557, 7
        %v559 = vsub.s32 %v556, %v558
        %v560 = vrot.slane %v552, %v559
        %v562 = vunpack.c.l.s4 1934713408
        %v563 = vunpack.c.0.s8 %v562
        %v564 = vlaneseq
        %v565 = vshrl.u32 %v564, 7
        %v566 = vsub.s32 %v563, %v565
        %v567 = vrot.slane %v553, %v566
        %v568 = vcombine.low %v535, %v551
        %v569 = vcombine.high %v535, %v551
        %v571 = vunpack.c.l.s4 1934713408
        %v572 = vunpack.c.0.s8 %v571
        %v573 = vlaneseq
        %v574 = vshrl.u32 %v573, 7
        %v575 = vsub.s32 %v572, %v574
        %v576 = vrot.slane %v568, %v575
        %v578 = vunpack.c.l.s4 1934713408
        %v579 = vunpack.c.0.s8 %v578
        %v580 = vlaneseq
        %v581 = vshrl.u32 %v580, 7
        %v582 = vsub.s32 %v579, %v581
        %v583 = vrot.slane %v569, %v582
        %v584 = vcombine.high %v560, 0.0
        %v585 = vcombine.high %v567, 0.0
        %v586 = vcombine.high %v576, 0.0
        %v587 = vcombine.high %v583, 0.0
        %v588 = vpack.c.bf16 %v560, %v560
        %v589 = vpack.c.bf16 %v584, %v584
        %v590 = vpack.c.bf16 %v567, %v567
        %v591 = vpack.c.bf16 %v585, %v585
        %v592 = vpack.c.bf16 %v576, %v576
        %v593 = vpack.c.bf16 %v586, %v586
        %v594 = vpack.c.bf16 %v583, %v583
        %v595 = vpack.c.bf16 %v587, %v587
        %597 = vrot.lane.b32.xlu0 %v414, 120
        %v598 = vpop.permute.xlu0 %597
        %599 = vrot.lane.b32.xlu0 %v414, 112
        %v600 = vpop.permute.xlu0 %599
        %601 = vrot.lane.b32.xlu0 %v414, 104
        %v602 = vpop.permute.xlu0 %601
        %603 = vrot.lane.b32.xlu0 %v414, 64
        %v604 = vpop.permute.xlu0 %603
        %605 = vrot.lane.b32.xlu0 %v598, 64
        %v606 = vpop.permute.xlu0 %605
        %607 = vrot.lane.b32.xlu0 %v600, 64
        %v608 = vpop.permute.xlu0 %607
        %609 = vrot.lane.b32.xlu0 %v602, 64
        %v610 = vpop.permute.xlu0 %609
        %v615 = vcombine.low %v604, %v608
        %v616 = vcombine.high %v604, %v608
        %v618 = vunpack.c.l.s4 1983009808
        %v619 = vunpack.c.0.s8 %v618
        %v620 = vlaneseq
        %v621 = vshrl.u32 %v620, 7
        %v622 = vsub.s32 %v619, %v621
        %v623 = vrot.slane %v615, %v622
        %v625 = vunpack.c.l.s4 1983009808
        %v626 = vunpack.c.0.s8 %v625
        %v627 = vlaneseq
        %v628 = vshrl.u32 %v627, 7
        %v629 = vsub.s32 %v626, %v628
        %v630 = vrot.slane %v616, %v629
        %v631 = vcombine.low %v606, %v610
        %v632 = vcombine.high %v606, %v610
        %v634 = vunpack.c.l.s4 1983009808
        %v635 = vunpack.c.0.s8 %v634
        %v636 = vlaneseq
        %v637 = vshrl.u32 %v636, 7
        %v638 = vsub.s32 %v635, %v637
        %v639 = vrot.slane %v631, %v638
        %v641 = vunpack.c.l.s4 1983009808
        %v642 = vunpack.c.0.s8 %v641
        %v643 = vlaneseq
        %v644 = vshrl.u32 %v643, 7
        %v645 = vsub.s32 %v642, %v644
        %v646 = vrot.slane %v632, %v645
        %v647 = vcombine.low %v623, %v639
        %v648 = vcombine.high %v623, %v639
        %v650 = vunpack.c.l.s4 1934713408
        %v651 = vunpack.c.0.s8 %v650
        %v652 = vlaneseq
        %v653 = vshrl.u32 %v652, 7
        %v654 = vsub.s32 %v651, %v653
        %v655 = vrot.slane %v647, %v654
        %v657 = vunpack.c.l.s4 1934713408
        %v658 = vunpack.c.0.s8 %v657
        %v659 = vlaneseq
        %v660 = vshrl.u32 %v659, 7
        %v661 = vsub.s32 %v658, %v660
        %v662 = vrot.slane %v648, %v661
        %v663 = vcombine.low %v630, %v646
        %v664 = vcombine.high %v630, %v646
        %v666 = vunpack.c.l.s4 1934713408
        %v667 = vunpack.c.0.s8 %v666
        %v668 = vlaneseq
        %v669 = vshrl.u32 %v668, 7
        %v670 = vsub.s32 %v667, %v669
        %v671 = vrot.slane %v663, %v670
        %v673 = vunpack.c.l.s4 1934713408
        %v674 = vunpack.c.0.s8 %v673
        %v675 = vlaneseq
        %v676 = vshrl.u32 %v675, 7
        %v677 = vsub.s32 %v674, %v676
        %v678 = vrot.slane %v664, %v677
        %v679 = vcombine.high %v655, 0.0
        %v680 = vcombine.high %v662, 0.0
        %v681 = vcombine.high %v671, 0.0
        %v682 = vcombine.high %v678, 0.0
        %v683 = vpack.c.bf16 %v655, %v655
        %v684 = vpack.c.bf16 %v679, %v679
        %v685 = vpack.c.bf16 %v662, %v662
        %v686 = vpack.c.bf16 %v680, %v680
        %v687 = vpack.c.bf16 %v671, %v671
        %v688 = vpack.c.bf16 %v681, %v681
        %v689 = vpack.c.bf16 %v678, %v678
        %v690 = vpack.c.bf16 %v682, %v682
        %v691 = vcombine.low %v493, %v497
        %v693 = vunpack.c.l.s4 1983009808
        %v694 = vunpack.c.0.s8 %v693
        %v695 = vlaneseq
        %v696 = vshrl.u32 %v695, 7
        %v697 = vsub.s32 %v694, %v696
        %v698 = vrot.slane %v691, %v697
        %v699 = vcombine.low %v495, %v499
        %v701 = vunpack.c.l.s4 1983009808
        %v702 = vunpack.c.0.s8 %v701
        %v703 = vlaneseq
        %v704 = vshrl.u32 %v703, 7
        %v705 = vsub.s32 %v702, %v704
        %v706 = vrot.slane %v699, %v705
        %v707 = vcombine.low %v698, %v706
        %v709 = vunpack.c.l.s4 1934713408
        %v710 = vunpack.c.0.s8 %v709
        %v711 = vlaneseq
        %v712 = vshrl.u32 %v711, 7
        %v713 = vsub.s32 %v710, %v712
        %v714 = vrot.slane %v707, %v713
        %v715 = vcombine.high %v714, 0
        %v716 = vcombine.low %v494, %v498
        %v718 = vunpack.c.l.s4 1983009808
        %v719 = vunpack.c.0.s8 %v718
        %v720 = vlaneseq
        %v721 = vshrl.u32 %v720, 7
        %v722 = vsub.s32 %v719, %v721
        %v723 = vrot.slane %v716, %v722
        %v724 = vcombine.low %v496, %v500
        %v726 = vunpack.c.l.s4 1983009808
        %v727 = vunpack.c.0.s8 %v726
        %v728 = vlaneseq
        %v729 = vshrl.u32 %v728, 7
        %v730 = vsub.s32 %v727, %v729
        %v731 = vrot.slane %v724, %v730
        %v732 = vcombine.low %v723, %v731
        %v734 = vunpack.c.l.s4 1934713408
        %v735 = vunpack.c.0.s8 %v734
        %v736 = vlaneseq
        %v737 = vshrl.u32 %v736, 7
        %v738 = vsub.s32 %v735, %v737
        %v739 = vrot.slane %v732, %v738
        %v740 = vcombine.high %v739, 0
        %v743 = vpack.i.b16 %v739, %v714
        %v744 = vshrl.u32 %v714, 16
        %v745 = vshrl.u32 %v739, 16
        %v746 = vpack.i.b16 %v745, %v744
        %v749 = vpack.i.b16 %v740, %v715
        %v750 = vshrl.u32 %v715, 16
        %v751 = vshrl.u32 %v740, 16
        %v752 = vpack.i.b16 %v751, %v750
        %753 = vxpose.xlu0.c.b16.start [1/8] %v588, 128
        %754 = vxpose.xlu0.c.b16.cont [2/8] 0, 128
        %755 = vxpose.xlu0.c.b16.cont [3/8] 0, 128
        %756 = vxpose.xlu0.c.b16.cont [4/8] 0, 128
        %757 = vxpose.xlu0.c.b16.cont [5/8] 0, 128
        %758 = vxpose.xlu0.c.b16.cont [6/8] 0, 128
        %759 = vxpose.xlu0.c.b16.cont [7/8] 0, 128
        %760 = vxpose.xlu0.c.b16.end [8/8] 0, 128
        %v761 = vpop.trf.xlu0
        %v762 = vpop.trf.xlu0
        %v763 = vpop.trf.xlu0
        %v764 = vpop.trf.xlu0
        %v765 = vpop.trf.xlu0
        %v766 = vpop.trf.xlu0
        %v767 = vpop.trf.xlu0
        %v768 = vpop.trf.xlu0
        %769 = vxpose.xlu0.c.b16.start [1/8] %v589, 128
        %770 = vxpose.xlu0.c.b16.cont [2/8] 0, 128
        %771 = vxpose.xlu0.c.b16.cont [3/8] 0, 128
        %772 = vxpose.xlu0.c.b16.cont [4/8] 0, 128
        %773 = vxpose.xlu0.c.b16.cont [5/8] 0, 128
        %774 = vxpose.xlu0.c.b16.cont [6/8] 0, 128
        %775 = vxpose.xlu0.c.b16.cont [7/8] 0, 128
        %776 = vxpose.xlu0.c.b16.end [8/8] 0, 128
        %v777 = vpop.trf.xlu0
        %v778 = vpop.trf.xlu0
        %v779 = vpop.trf.xlu0
        %v780 = vpop.trf.xlu0
        %v781 = vpop.trf.xlu0
        %v782 = vpop.trf.xlu0
        %v783 = vpop.trf.xlu0
        %v784 = vpop.trf.xlu0
        %785 = vxpose.xlu0.c.b16.start [1/8] %v590, 128
        %786 = vxpose.xlu0.c.b16.cont [2/8] 0, 128
        %787 = vxpose.xlu0.c.b16.cont [3/8] 0, 128
        %788 = vxpose.xlu0.c.b16.cont [4/8] 0, 128
        %789 = vxpose.xlu0.c.b16.cont [5/8] 0, 128
        %790 = vxpose.xlu0.c.b16.cont [6/8] 0, 128
        %791 = vxpose.xlu0.c.b16.cont [7/8] 0, 128
        %792 = vxpose.xlu0.c.b16.end [8/8] 0, 128
        %v793 = vpop.trf.xlu0
        %v794 = vpop.trf.xlu0
        %v795 = vpop.trf.xlu0
        %v796 = vpop.trf.xlu0
        %v797 = vpop.trf.xlu0
        %v798 = vpop.trf.xlu0
        %v799 = vpop.trf.xlu0
        %v800 = vpop.trf.xlu0
        %801 = vxpose.xlu0.c.b16.start [1/8] %v591, 128
        %802 = vxpose.xlu0.c.b16.cont [2/8] 0, 128
        %803 = vxpose.xlu0.c.b16.cont [3/8] 0, 128
        %804 = vxpose.xlu0.c.b16.cont [4/8] 0, 128
        %805 = vxpose.xlu0.c.b16.cont [5/8] 0, 128
        %806 = vxpose.xlu0.c.b16.cont [6/8] 0, 128
        %807 = vxpose.xlu0.c.b16.cont [7/8] 0, 128
        %808 = vxpose.xlu0.c.b16.end [8/8] 0, 128
        %v809 = vpop.trf.xlu0
        %v810 = vpop.trf.xlu0
        %v811 = vpop.trf.xlu0
        %v812 = vpop.trf.xlu0
        %v813 = vpop.trf.xlu0
        %v814 = vpop.trf.xlu0
        %v815 = vpop.trf.xlu0
        %v816 = vpop.trf.xlu0
        %817 = vxpose.xlu0.c.b16.start [1/8] %v592, 128
        %818 = vxpose.xlu0.c.b16.cont [2/8] 0, 128
        %819 = vxpose.xlu0.c.b16.cont [3/8] 0, 128
        %820 = vxpose.xlu0.c.b16.cont [4/8] 0, 128
        %821 = vxpose.xlu0.c.b16.cont [5/8] 0, 128
        %822 = vxpose.xlu0.c.b16.cont [6/8] 0, 128
        %823 = vxpose.xlu0.c.b16.cont [7/8] 0, 128
        %824 = vxpose.xlu0.c.b16.end [8/8] 0, 128
        %v825 = vpop.trf.xlu0
        %v826 = vpop.trf.xlu0
        %v827 = vpop.trf.xlu0
        %v828 = vpop.trf.xlu0
        %v829 = vpop.trf.xlu0
        %v830 = vpop.trf.xlu0
        %v831 = vpop.trf.xlu0
        %v832 = vpop.trf.xlu0
        %833 = vxpose.xlu0.c.b16.start [1/8] %v593, 128
        %834 = vxpose.xlu0.c.b16.cont [2/8] 0, 128
        %835 = vxpose.xlu0.c.b16.cont [3/8] 0, 128
        %836 = vxpose.xlu0.c.b16.cont [4/8] 0, 128
        %837 = vxpose.xlu0.c.b16.cont [5/8] 0, 128
        %838 = vxpose.xlu0.c.b16.cont [6/8] 0, 128
        %839 = vxpose.xlu0.c.b16.cont [7/8] 0, 128
        %840 = vxpose.xlu0.c.b16.end [8/8] 0, 128
        %v841 = vpop.trf.xlu0
        %v842 = vpop.trf.xlu0
        %v843 = vpop.trf.xlu0
        %v844 = vpop.trf.xlu0
        %v845 = vpop.trf.xlu0
        %v846 = vpop.trf.xlu0
        %v847 = vpop.trf.xlu0
        %v848 = vpop.trf.xlu0
        %849 = vxpose.xlu0.c.b16.start [1/8] %v594, 128
        %850 = vxpose.xlu0.c.b16.cont [2/8] 0, 128
        %851 = vxpose.xlu0.c.b16.cont [3/8] 0, 128
        %852 = vxpose.xlu0.c.b16.cont [4/8] 0, 128
        %853 = vxpose.xlu0.c.b16.cont [5/8] 0, 128
        %854 = vxpose.xlu0.c.b16.cont [6/8] 0, 128
        %855 = vxpose.xlu0.c.b16.cont [7/8] 0, 128
        %856 = vxpose.xlu0.c.b16.end [8/8] 0, 128
        %v857 = vpop.trf.xlu0
        %v858 = vpop.trf.xlu0
        %v859 = vpop.trf.xlu0
        %v860 = vpop.trf.xlu0
        %v861 = vpop.trf.xlu0
        %v862 = vpop.trf.xlu0
        %v863 = vpop.trf.xlu0
        %v864 = vpop.trf.xlu0
        %865 = vxpose.xlu0.c.b16.start [1/8] %v595, 128
        %866 = vxpose.xlu0.c.b16.cont [2/8] 0, 128
        %867 = vxpose.xlu0.c.b16.cont [3/8] 0, 128
        %868 = vxpose.xlu0.c.b16.cont [4/8] 0, 128
        %869 = vxpose.xlu0.c.b16.cont [5/8] 0, 128
        %870 = vxpose.xlu0.c.b16.cont [6/8] 0, 128
        %871 = vxpose.xlu0.c.b16.cont [7/8] 0, 128
        %872 = vxpose.xlu0.c.b16.end [8/8] 0, 128
        %v873 = vpop.trf.xlu0
        %v874 = vpop.trf.xlu0
        %v875 = vpop.trf.xlu0
        %v876 = vpop.trf.xlu0
        %v877 = vpop.trf.xlu0
        %v878 = vpop.trf.xlu0
        %v879 = vpop.trf.xlu0
        %v880 = vpop.trf.xlu0
        %v881 = vcombine.low %v761, %v825
        %v883 = vunpack.c.l.s4 1983009808
        %v884 = vunpack.c.0.s8 %v883
        %v885 = vlaneseq
        %v886 = vshrl.u32 %v885, 7
        %v887 = vsub.s32 %v884, %v886
        %v888 = vrot.slane %v881, %v887
        %v889 = vcombine.low %v793, %v857
        %v891 = vunpack.c.l.s4 1983009808
        %v892 = vunpack.c.0.s8 %v891
        %v893 = vlaneseq
        %v894 = vshrl.u32 %v893, 7
        %v895 = vsub.s32 %v892, %v894
        %v896 = vrot.slane %v889, %v895
        %v897 = vcombine.low %v888, %v896
        %v898 = vcombine.high %v888, %v896
        %v900 = vunpack.c.l.s4 1934713408
        %v901 = vunpack.c.0.s8 %v900
        %v902 = vlaneseq
        %v903 = vshrl.u32 %v902, 7
        %v904 = vsub.s32 %v901, %v903
        %v905 = vrot.slane %v897, %v904
        %v907 = vunpack.c.l.s4 1934713408
        %v908 = vunpack.c.0.s8 %v907
        %v909 = vlaneseq
        %v910 = vshrl.u32 %v909, 7
        %v911 = vsub.s32 %v908, %v910
        %v912 = vrot.slane %v898, %v911
        %v913 = vcombine.high %v905, 0
        %v914 = vcombine.high %v912, 0
        %v915 = vcombine.low %v777, %v841
        %v917 = vunpack.c.l.s4 1983009808
        %v918 = vunpack.c.0.s8 %v917
        %v919 = vlaneseq
        %v920 = vshrl.u32 %v919, 7
        %v921 = vsub.s32 %v918, %v920
        %v922 = vrot.slane %v915, %v921
        %v923 = vcombine.low %v809, %v873
        %v925 = vunpack.c.l.s4 1983009808
        %v926 = vunpack.c.0.s8 %v925
        %v927 = vlaneseq
        %v928 = vshrl.u32 %v927, 7
        %v929 = vsub.s32 %v926, %v928
        %v930 = vrot.slane %v923, %v929
        %v931 = vcombine.low %v922, %v930
        %v932 = vcombine.high %v922, %v930
        %v934 = vunpack.c.l.s4 1934713408
        %v935 = vunpack.c.0.s8 %v934
        %v936 = vlaneseq
        %v937 = vshrl.u32 %v936, 7
        %v938 = vsub.s32 %v935, %v937
        %v939 = vrot.slane %v931, %v938
        %v941 = vunpack.c.l.s4 1934713408
        %v942 = vunpack.c.0.s8 %v941
        %v943 = vlaneseq
        %v944 = vshrl.u32 %v943, 7
        %v945 = vsub.s32 %v942, %v944
        %v946 = vrot.slane %v932, %v945
        %v947 = vcombine.high %v939, 0
        %v948 = vcombine.high %v946, 0
        %v951 = vpack.i.b16 %v939, %v905
        %v953 = vshrl.u32 %v905, 16
        %v954 = vshrl.u32 %v939, 16
        %v955 = vpack.i.b16 %v954, %v953
        %v959 = vpack.i.b16 %v947, %v913
        %v961 = vshrl.u32 %v913, 16
        %v962 = vshrl.u32 %v947, 16
        %v963 = vpack.i.b16 %v962, %v961
        %v967 = vpack.i.b16 %v946, %v912
        %v969 = vshrl.u32 %v912, 16
        %v970 = vshrl.u32 %v946, 16
        %v971 = vpack.i.b16 %v970, %v969
        %v975 = vpack.i.b16 %v948, %v914
        %v977 = vshrl.u32 %v914, 16
        %v978 = vshrl.u32 %v948, 16
        %v979 = vpack.i.b16 %v978, %v977
        %981 = vxpose.xlu0.c.b16.start [1/8] %v951, 128
        %982 = vxpose.xlu0.c.b16.cont [2/8] 0, 128
        %983 = vxpose.xlu0.c.b16.cont [3/8] 0, 128
        %984 = vxpose.xlu0.c.b16.cont [4/8] 0, 128
        %985 = vxpose.xlu0.c.b16.cont [5/8] 0, 128
        %986 = vxpose.xlu0.c.b16.cont [6/8] 0, 128
        %987 = vxpose.xlu0.c.b16.cont [7/8] 0, 128
        %988 = vxpose.xlu0.c.b16.end [8/8] 0, 128
        %v989 = vpop.trf.xlu0
        %v990 = vpop.trf.xlu0
        %v991 = vpop.trf.xlu0
        %v992 = vpop.trf.xlu0
        %v993 = vpop.trf.xlu0
        %v994 = vpop.trf.xlu0
        %v995 = vpop.trf.xlu0
        %v996 = vpop.trf.xlu0
        %997 = vxpose.xlu0.c.b16.start [1/8] %v955, 128
        %998 = vxpose.xlu0.c.b16.cont [2/8] 0, 128
        %999 = vxpose.xlu0.c.b16.cont [3/8] 0, 128
        %1000 = vxpose.xlu0.c.b16.cont [4/8] 0, 128
        %1001 = vxpose.xlu0.c.b16.cont [5/8] 0, 128
        %1002 = vxpose.xlu0.c.b16.cont [6/8] 0, 128
        %1003 = vxpose.xlu0.c.b16.cont [7/8] 0, 128
        %1004 = vxpose.xlu0.c.b16.end [8/8] 0, 128
        %v1005 = vpop.trf.xlu0
        %v1006 = vpop.trf.xlu0
        %v1007 = vpop.trf.xlu0
        %v1008 = vpop.trf.xlu0
        %v1009 = vpop.trf.xlu0
        %v1010 = vpop.trf.xlu0
        %v1011 = vpop.trf.xlu0
        %v1012 = vpop.trf.xlu0
        %1013 = vxpose.xlu0.c.b16.start [1/8] %v959, 128
        %1014 = vxpose.xlu0.c.b16.cont [2/8] 0, 128
        %1015 = vxpose.xlu0.c.b16.cont [3/8] 0, 128
        %1016 = vxpose.xlu0.c.b16.cont [4/8] 0, 128
        %1017 = vxpose.xlu0.c.b16.cont [5/8] 0, 128
        %1018 = vxpose.xlu0.c.b16.cont [6/8] 0, 128
        %1019 = vxpose.xlu0.c.b16.cont [7/8] 0, 128
        %1020 = vxpose.xlu0.c.b16.end [8/8] 0, 128
        %v1021 = vpop.trf.xlu0
        %v1022 = vpop.trf.xlu0
        %v1023 = vpop.trf.xlu0
        %v1024 = vpop.trf.xlu0
        %v1025 = vpop.trf.xlu0
        %v1026 = vpop.trf.xlu0
        %v1027 = vpop.trf.xlu0
        %v1028 = vpop.trf.xlu0
        %1029 = vxpose.xlu0.c.b16.start [1/8] %v963, 128
        %1030 = vxpose.xlu0.c.b16.cont [2/8] 0, 128
        %1031 = vxpose.xlu0.c.b16.cont [3/8] 0, 128
        %1032 = vxpose.xlu0.c.b16.cont [4/8] 0, 128
        %1033 = vxpose.xlu0.c.b16.cont [5/8] 0, 128
        %1034 = vxpose.xlu0.c.b16.cont [6/8] 0, 128
        %1035 = vxpose.xlu0.c.b16.cont [7/8] 0, 128
        %1036 = vxpose.xlu0.c.b16.end [8/8] 0, 128
        %v1037 = vpop.trf.xlu0
        %v1038 = vpop.trf.xlu0
        %v1039 = vpop.trf.xlu0
        %v1040 = vpop.trf.xlu0
        %v1041 = vpop.trf.xlu0
        %v1042 = vpop.trf.xlu0
        %v1043 = vpop.trf.xlu0
        %v1044 = vpop.trf.xlu0
        %1045 = vxpose.xlu0.c.b16.start [1/8] %v967, 128
        %1046 = vxpose.xlu0.c.b16.cont [2/8] 0, 128
        %1047 = vxpose.xlu0.c.b16.cont [3/8] 0, 128
        %1048 = vxpose.xlu0.c.b16.cont [4/8] 0, 128
        %1049 = vxpose.xlu0.c.b16.cont [5/8] 0, 128
        %1050 = vxpose.xlu0.c.b16.cont [6/8] 0, 128
        %1051 = vxpose.xlu0.c.b16.cont [7/8] 0, 128
        %1052 = vxpose.xlu0.c.b16.end [8/8] 0, 128
        %v1053 = vpop.trf.xlu0
        %v1054 = vpop.trf.xlu0
        %v1055 = vpop.trf.xlu0
        %v1056 = vpop.trf.xlu0
        %v1057 = vpop.trf.xlu0
        %v1058 = vpop.trf.xlu0
        %v1059 = vpop.trf.xlu0
        %v1060 = vpop.trf.xlu0
        %1061 = vxpose.xlu0.c.b16.start [1/8] %v971, 128
        %1062 = vxpose.xlu0.c.b16.cont [2/8] 0, 128
        %1063 = vxpose.xlu0.c.b16.cont [3/8] 0, 128
        %1064 = vxpose.xlu0.c.b16.cont [4/8] 0, 128
        %1065 = vxpose.xlu0.c.b16.cont [5/8] 0, 128
        %1066 = vxpose.xlu0.c.b16.cont [6/8] 0, 128
        %1067 = vxpose.xlu0.c.b16.cont [7/8] 0, 128
        %1068 = vxpose.xlu0.c.b16.end [8/8] 0, 128
        %v1069 = vpop.trf.xlu0
        %v1070 = vpop.trf.xlu0
        %v1071 = vpop.trf.xlu0
        %v1072 = vpop.trf.xlu0
        %v1073 = vpop.trf.xlu0
        %v1074 = vpop.trf.xlu0
        %v1075 = vpop.trf.xlu0
        %v1076 = vpop.trf.xlu0
        %1077 = vxpose.xlu0.c.b16.start [1/8] %v975, 128
        %1078 = vxpose.xlu0.c.b16.cont [2/8] 0, 128
        %1079 = vxpose.xlu0.c.b16.cont [3/8] 0, 128
        %1080 = vxpose.xlu0.c.b16.cont [4/8] 0, 128
        %1081 = vxpose.xlu0.c.b16.cont [5/8] 0, 128
        %1082 = vxpose.xlu0.c.b16.cont [6/8] 0, 128
        %1083 = vxpose.xlu0.c.b16.cont [7/8] 0, 128
        %1084 = vxpose.xlu0.c.b16.end [8/8] 0, 128
        %v1085 = vpop.trf.xlu0
        %v1086 = vpop.trf.xlu0
        %v1087 = vpop.trf.xlu0
        %v1088 = vpop.trf.xlu0
        %v1089 = vpop.trf.xlu0
        %v1090 = vpop.trf.xlu0
        %v1091 = vpop.trf.xlu0
        %v1092 = vpop.trf.xlu0
        %1093 = vxpose.xlu0.c.b16.start [1/8] %v979, 128
        %1094 = vxpose.xlu0.c.b16.cont [2/8] 0, 128
        %1095 = vxpose.xlu0.c.b16.cont [3/8] 0, 128
        %1096 = vxpose.xlu0.c.b16.cont [4/8] 0, 128
        %1097 = vxpose.xlu0.c.b16.cont [5/8] 0, 128
        %1098 = vxpose.xlu0.c.b16.cont [6/8] 0, 128
        %1099 = vxpose.xlu0.c.b16.cont [7/8] 0, 128
        %1100 = vxpose.xlu0.c.b16.end [8/8] 0, 128
        %v1101 = vpop.trf.xlu0
        %v1102 = vpop.trf.xlu0
        %v1103 = vpop.trf.xlu0
        %v1104 = vpop.trf.xlu0
        %v1105 = vpop.trf.xlu0
        %v1106 = vpop.trf.xlu0
        %v1107 = vpop.trf.xlu0
        %v1108 = vpop.trf.xlu0
        %v1109 = vcombine.low %v989, %v1053
        %v1111 = vunpack.c.l.s4 1983009808
        %v1112 = vunpack.c.0.s8 %v1111
        %v1113 = vlaneseq
        %v1114 = vshrl.u32 %v1113, 7
        %v1115 = vsub.s32 %v1112, %v1114
        %v1116 = vrot.slane %v1109, %v1115
        %v1117 = vcombine.low %v1021, %v1085
        %v1119 = vunpack.c.l.s4 1983009808
        %v1120 = vunpack.c.0.s8 %v1119
        %v1121 = vlaneseq
        %v1122 = vshrl.u32 %v1121, 7
        %v1123 = vsub.s32 %v1120, %v1122
        %v1124 = vrot.slane %v1117, %v1123
        %v1125 = vcombine.low %v1116, %v1124
        %v1127 = vunpack.c.l.s4 1934713408
        %v1128 = vunpack.c.0.s8 %v1127
        %v1129 = vlaneseq
        %v1130 = vshrl.u32 %v1129, 7
        %v1131 = vsub.s32 %v1128, %v1130
        %v1132 = vrot.slane %v1125, %v1131
        %v1133 = vcombine.high %v1132, 0
        %v1134 = vcombine.low %v1005, %v1069
        %v1136 = vunpack.c.l.s4 1983009808
        %v1137 = vunpack.c.0.s8 %v1136
        %v1138 = vlaneseq
        %v1139 = vshrl.u32 %v1138, 7
        %v1140 = vsub.s32 %v1137, %v1139
        %v1141 = vrot.slane %v1134, %v1140
        %v1142 = vcombine.low %v1037, %v1101
        %v1144 = vunpack.c.l.s4 1983009808
        %v1145 = vunpack.c.0.s8 %v1144
        %v1146 = vlaneseq
        %v1147 = vshrl.u32 %v1146, 7
        %v1148 = vsub.s32 %v1145, %v1147
        %v1149 = vrot.slane %v1142, %v1148
        %v1150 = vcombine.low %v1141, %v1149
        %v1152 = vunpack.c.l.s4 1934713408
        %v1153 = vunpack.c.0.s8 %v1152
        %v1154 = vlaneseq
        %v1155 = vshrl.u32 %v1154, 7
        %v1156 = vsub.s32 %v1153, %v1155
        %v1157 = vrot.slane %v1150, %v1156
        %v1158 = vcombine.high %v1157, 0
        %v1161 = vpack.i.b16 %v1157, %v1132
        %v1162 = vshrl.u32 %v1132, 16
        %v1163 = vshrl.u32 %v1157, 16
        %v1164 = vpack.i.b16 %v1163, %v1162
        %v1167 = vpack.i.b16 %v1158, %v1133
        %v1168 = vshrl.u32 %v1133, 16
        %v1169 = vshrl.u32 %v1158, 16
        %v1170 = vpack.i.b16 %v1169, %v1168
        %vm1171 = vcmask 64512
        %v1173 = vsel %vm1171, %v743, 0
        %vm1175 = vcmask 1043456
        %v1177 = vsel %vm1175, %v1161, 0
        %1179 = vmatprep.subr.bf16.mxu0 0
        %1180 = vmatpush1.bf16.msra.mxu0 0
        %1181 = vmatprep.subr.bf16.mxu0 0
        %1182 = vmatpush1.bf16.msra.mxu0 0
        %1183 = vmatprep.subr.bf16.mxu0 0
        %1184 = vmatpush1.bf16.msra.mxu0 0
        %1185 = vmatprep.subr.bf16.mxu0 0
        %1186 = vmatpush1.bf16.msra.mxu0 0
        %1187 = vmatprep.subr.bf16.mxu0 0
        %1188 = vmatpush1.bf16.msra.mxu0 0
        %1189 = vmatprep.subr.bf16.mxu0 0
        %1190 = vmatpush1.bf16.msra.mxu0 0
        %1191 = vmatprep.subr.bf16.mxu0 0
        %1192 = vmatpush1.bf16.msra.mxu0 0
        %1193 = vmatprep.subr.bf16.mxu0 0
        %1194 = vmatpush1.bf16.msra.mxu0 %v1177
        %1195 = vmatprep.subr.bf16.mxu0 0
        %1196 = vmatpush2.bf16.msra.mxu0 0
        %1197 = vmatprep.subr.bf16.mxu0 0
        %1198 = vmatpush2.bf16.msra.mxu0 0
        %1199 = vmatprep.subr.bf16.mxu0 0
        %1200 = vmatpush2.bf16.msra.mxu0 0
        %1201 = vmatprep.subr.bf16.mxu0 0
        %1202 = vmatpush2.bf16.msra.mxu0 0
        %1203 = vmatprep.subr.bf16.mxu0 0
        %1204 = vmatpush2.bf16.msra.mxu0 0
        %1205 = vmatprep.subr.bf16.mxu0 0
        %1206 = vmatpush2.bf16.msra.mxu0 0
        %1207 = vmatprep.subr.bf16.mxu0 0
        %1208 = vmatpush2.bf16.msra.mxu0 0
        %1209 = vmatprep.subr.bf16.mxu0 0
        %1210 = vmatpush2.bf16.msra.mxu0 0
        %1211 = vmatprep.mubr.bf16.mxu0 0
        %1212 = vmatmul.mubr.bf16.gmra.mxu0 %v1173
        %v1213 = vpop.f32.mrf.mxu0
        %v1214 = vadd.f32 0.0, %v1213
        %v1215 = vpop.f32.mrf.mxu0
        %v1216 = vpop.f32.mrf.mxu0
        %v1217 = vpop.f32.mrf.mxu0
        %1218 = vdwg.mxu0
        %v1220 = vsel %vm1171, %v746, 0
        %v1223 = vsel %vm1175, %v1164, 0
        %1225 = vmatprep.subr.bf16.mxu0 0
        %1226 = vmatpush1.bf16.msra.mxu0 0
        %1227 = vmatprep.subr.bf16.mxu0 0
        %1228 = vmatpush1.bf16.msra.mxu0 0
        %1229 = vmatprep.subr.bf16.mxu0 0
        %1230 = vmatpush1.bf16.msra.mxu0 0
        %1231 = vmatprep.subr.bf16.mxu0 0
        %1232 = vmatpush1.bf16.msra.mxu0 0
        %1233 = vmatprep.subr.bf16.mxu0 0
        %1234 = vmatpush1.bf16.msra.mxu0 0
        %1235 = vmatprep.subr.bf16.mxu0 0
        %1236 = vmatpush1.bf16.msra.mxu0 0
        %1237 = vmatprep.subr.bf16.mxu0 0
        %1238 = vmatpush1.bf16.msra.mxu0 0
        %1239 = vmatprep.subr.bf16.mxu0 0
        %1240 = vmatpush1.bf16.msra.mxu0 %v1223
        %1241 = vmatprep.subr.bf16.mxu0 0
        %1242 = vmatpush2.bf16.msra.mxu0 0
        %1243 = vmatprep.subr.bf16.mxu0 0
        %1244 = vmatpush2.bf16.msra.mxu0 0
        %1245 = vmatprep.subr.bf16.mxu0 0
        %1246 = vmatpush2.bf16.msra.mxu0 0
        %1247 = vmatprep.subr.bf16.mxu0 0
        %1248 = vmatpush2.bf16.msra.mxu0 0
        %1249 = vmatprep.subr.bf16.mxu0 0
        %1250 = vmatpush2.bf16.msra.mxu0 0
        %1251 = vmatprep.subr.bf16.mxu0 0
        %1252 = vmatpush2.bf16.msra.mxu0 0
        %1253 = vmatprep.subr.bf16.mxu0 0
        %1254 = vmatpush2.bf16.msra.mxu0 0
        %1255 = vmatprep.subr.bf16.mxu0 0
        %1256 = vmatpush2.bf16.msra.mxu0 0
        %1257 = vmatprep.mubr.bf16.mxu0 0
        %1258 = vmatmul.mubr.bf16.gmra.mxu0 %v1220
        %v1259 = vpop.f32.mrf.mxu0
        %v1260 = vadd.f32 0.0, %v1259
        %v1261 = vpop.f32.mrf.mxu0
        %v1262 = vpop.f32.mrf.mxu0
        %v1263 = vpop.f32.mrf.mxu0
        %1264 = vdwg.mxu0
        %v1266 = vsel %vm1171, %v749, 0
        %v1269 = vsel %vm1175, %v1167, 0
        %1271 = vmatprep.subr.bf16.mxu0 0
        %1272 = vmatpush1.bf16.msra.mxu0 0
        %1273 = vmatprep.subr.bf16.mxu0 0
        %1274 = vmatpush1.bf16.msra.mxu0 0
        %1275 = vmatprep.subr.bf16.mxu0 0
        %1276 = vmatpush1.bf16.msra.mxu0 0
        %1277 = vmatprep.subr.bf16.mxu0 0
        %1278 = vmatpush1.bf16.msra.mxu0 0
        %1279 = vmatprep.subr.bf16.mxu0 0
        %1280 = vmatpush1.bf16.msra.mxu0 0
        %1281 = vmatprep.subr.bf16.mxu0 0
        %1282 = vmatpush1.bf16.msra.mxu0 0
        %1283 = vmatprep.subr.bf16.mxu0 0
        %1284 = vmatpush1.bf16.msra.mxu0 0
        %1285 = vmatprep.subr.bf16.mxu0 0
        %1286 = vmatpush1.bf16.msra.mxu0 %v1269
        %1287 = vmatprep.subr.bf16.mxu0 0
        %1288 = vmatpush2.bf16.msra.mxu0 0
        %1289 = vmatprep.subr.bf16.mxu0 0
        %1290 = vmatpush2.bf16.msra.mxu0 0
        %1291 = vmatprep.subr.bf16.mxu0 0
        %1292 = vmatpush2.bf16.msra.mxu0 0
        %1293 = vmatprep.subr.bf16.mxu0 0
        %1294 = vmatpush2.bf16.msra.mxu0 0
        %1295 = vmatprep.subr.bf16.mxu0 0
        %1296 = vmatpush2.bf16.msra.mxu0 0
        %1297 = vmatprep.subr.bf16.mxu0 0
        %1298 = vmatpush2.bf16.msra.mxu0 0
        %1299 = vmatprep.subr.bf16.mxu0 0
        %1300 = vmatpush2.bf16.msra.mxu0 0
        %1301 = vmatprep.subr.bf16.mxu0 0
        %1302 = vmatpush2.bf16.msra.mxu0 0
        %1303 = vmatprep.mubr.bf16.mxu0 0
        %1304 = vmatmul.mubr.bf16.gmra.mxu0 %v1266
        %v1305 = vpop.f32.mrf.mxu0
        %v1306 = vadd.f32 0.0, %v1305
        %v1307 = vpop.f32.mrf.mxu0
        %v1308 = vpop.f32.mrf.mxu0
        %v1309 = vpop.f32.mrf.mxu0
        %1310 = vdwg.mxu0
        %v1312 = vsel %vm1171, %v752, 0
        %v1315 = vsel %vm1175, %v1170, 0
        %1317 = vmatprep.subr.bf16.mxu0 0
        %1318 = vmatpush1.bf16.msra.mxu0 0
        %1319 = vmatprep.subr.bf16.mxu0 0
        %1320 = vmatpush1.bf16.msra.mxu0 0
        %1321 = vmatprep.subr.bf16.mxu0 0
        %1322 = vmatpush1.bf16.msra.mxu0 0
        %1323 = vmatprep.subr.bf16.mxu0 0
        %1324 = vmatpush1.bf16.msra.mxu0 0
        %1325 = vmatprep.subr.bf16.mxu0 0
        %1326 = vmatpush1.bf16.msra.mxu0 0
        %1327 = vmatprep.subr.bf16.mxu0 0
        %1328 = vmatpush1.bf16.msra.mxu0 0
        %1329 = vmatprep.subr.bf16.mxu0 0
        %1330 = vmatpush1.bf16.msra.mxu0 0
        %1331 = vmatprep.subr.bf16.mxu0 0
        %1332 = vmatpush1.bf16.msra.mxu0 %v1315
        %1333 = vmatprep.subr.bf16.mxu0 0
        %1334 = vmatpush2.bf16.msra.mxu0 0
        %1335 = vmatprep.subr.bf16.mxu0 0
        %1336 = vmatpush2.bf16.msra.mxu0 0
        %1337 = vmatprep.subr.bf16.mxu0 0
        %1338 = vmatpush2.bf16.msra.mxu0 0
        %1339 = vmatprep.subr.bf16.mxu0 0
        %1340 = vmatpush2.bf16.msra.mxu0 0
        %1341 = vmatprep.subr.bf16.mxu0 0
        %1342 = vmatpush2.bf16.msra.mxu0 0
        %1343 = vmatprep.subr.bf16.mxu0 0
        %1344 = vmatpush2.bf16.msra.mxu0 0
        %1345 = vmatprep.subr.bf16.mxu0 0
        %1346 = vmatpush2.bf16.msra.mxu0 0
        %1347 = vmatprep.subr.bf16.mxu0 0
        %1348 = vmatpush2.bf16.msra.mxu0 0
        %1349 = vmatprep.mubr.bf16.mxu0 0
        %1350 = vmatmul.mubr.bf16.gmra.mxu0 %v1312
        %v1351 = vpop.f32.mrf.mxu0
        %v1352 = vadd.f32 0.0, %v1351
        %v1353 = vpop.f32.mrf.mxu0
        %v1354 = vpop.f32.mrf.mxu0
        %v1355 = vpop.f32.mrf.mxu0
        %1356 = vdwg.mxu0
        %v1357 = vsel %vm302, 1, 0
        %vm1358 = vcmp.eq.s32.totalorder %v1357, 1
        %v1359 = vsel %vm1358, %v1214, -1e+30
        %v1360 = vsel %vm1358, %v1260, -1e+30
        %v1361 = vsel %vm1358, %v1306, -1e+30
        %v1362 = vsel %vm1358, %v1352, -1e+30
        %v1363 = vsel %vm1171, %v1359, -inf
        %1364 = vmax.xlane.f32.xlu0 %v1363
        %v1365 = vpop.xlane.xlu0 %1364
        %v1366 = vsel %vm1171, %v1360, -inf
        %1367 = vmax.xlane.f32.xlu0 %v1366
        %v1368 = vpop.xlane.xlu0 %1367
        %v1369 = vsel %vm1171, %v1361, -inf
        %1370 = vmax.xlane.f32.xlu0 %v1369
        %v1371 = vpop.xlane.xlu0 %1370
        %v1372 = vsel %vm1171, %v1362, -inf
        %1373 = vmax.xlane.f32.xlu0 %v1372
        %v1374 = vpop.xlane.xlu0 %1373
        %v1375 = vsub.f32 %v1359, %v1365
        %v1376 = vsub.f32 %v1360, %v1368
        %v1377 = vsub.f32 %v1361, %v1371
        %v1378 = vsub.f32 %v1362, %v1374
        %v1379 = vmul.f32 %v1375, 1.442695
        %v1380 = vpow.pop %v1379
        %v1381 = vmul.f32 %v1376, 1.442695
        %v1382 = vpow.pop %v1381
        %v1383 = vmul.f32 %v1377, 1.442695
        %v1384 = vpow.pop %v1383
        %v1385 = vmul.f32 %v1378, 1.442695
        %v1386 = vpow.pop %v1385
        %v1387 = vsel %vm1171, %v1380, 0.0
        %1388 = vadd.xlane.f32.xlu0 %v1387
        %v1389 = vpop.xlane.xlu0 %1388
        %v1390 = vsel %vm1171, %v1382, 0.0
        %1391 = vadd.xlane.f32.xlu0 %v1390
        %v1392 = vpop.xlane.xlu0 %1391
        %v1393 = vsel %vm1171, %v1384, 0.0
        %1394 = vadd.xlane.f32.xlu0 %v1393
        %v1395 = vpop.xlane.xlu0 %1394
        %v1396 = vsel %vm1171, %v1386, 0.0
        %1397 = vadd.xlane.f32.xlu0 %v1396
        %v1398 = vpop.xlane.xlu0 %1397
        %v1399 = vrcp.pop %v1389
        %v1400 = vrcp.pop %v1392
        %v1401 = vrcp.pop %v1395
        %v1402 = vrcp.pop %v1398
        %v1403 = vmul.f32 %v1380, %v1399
        %v1404 = vmul.f32 %v1382, %v1400
        %v1405 = vmul.f32 %v1384, %v1401
        %v1406 = vmul.f32 %v1386, %v1402
        %v1407 = vpack.c.bf16 %v1403, %v1403
        %v1408 = vpack.c.bf16 %v1404, %v1404
        %v1409 = vpack.c.bf16 %v1405, %v1405
        %v1410 = vpack.c.bf16 %v1406, %v1406
        %1411 = vxpose.xlu0.c.b16.start [1/8] %v683, 128
        %1412 = vxpose.xlu0.c.b16.cont [2/8] 0, 128
        %1413 = vxpose.xlu0.c.b16.cont [3/8] 0, 128
        %1414 = vxpose.xlu0.c.b16.cont [4/8] 0, 128
        %1415 = vxpose.xlu0.c.b16.cont [5/8] 0, 128
        %1416 = vxpose.xlu0.c.b16.cont [6/8] 0, 128
        %1417 = vxpose.xlu0.c.b16.cont [7/8] 0, 128
        %1418 = vxpose.xlu0.c.b16.end [8/8] 0, 128
        %v1419 = vpop.trf.xlu0
        %v1420 = vpop.trf.xlu0
        %v1421 = vpop.trf.xlu0
        %v1422 = vpop.trf.xlu0
        %v1423 = vpop.trf.xlu0
        %v1424 = vpop.trf.xlu0
        %v1425 = vpop.trf.xlu0
        %v1426 = vpop.trf.xlu0
        %1427 = vxpose.xlu0.c.b16.start [1/8] %v684, 128
        %1428 = vxpose.xlu0.c.b16.cont [2/8] 0, 128
        %1429 = vxpose.xlu0.c.b16.cont [3/8] 0, 128
        %1430 = vxpose.xlu0.c.b16.cont [4/8] 0, 128
        %1431 = vxpose.xlu0.c.b16.cont [5/8] 0, 128
        %1432 = vxpose.xlu0.c.b16.cont [6/8] 0, 128
        %1433 = vxpose.xlu0.c.b16.cont [7/8] 0, 128
        %1434 = vxpose.xlu0.c.b16.end [8/8] 0, 128
        %v1435 = vpop.trf.xlu0
        %v1436 = vpop.trf.xlu0
        %v1437 = vpop.trf.xlu0
        %v1438 = vpop.trf.xlu0
        %v1439 = vpop.trf.xlu0
        %v1440 = vpop.trf.xlu0
        %v1441 = vpop.trf.xlu0
        %v1442 = vpop.trf.xlu0
        %1443 = vxpose.xlu0.c.b16.start [1/8] %v685, 128
        %1444 = vxpose.xlu0.c.b16.cont [2/8] 0, 128
        %1445 = vxpose.xlu0.c.b16.cont [3/8] 0, 128
        %1446 = vxpose.xlu0.c.b16.cont [4/8] 0, 128
        %1447 = vxpose.xlu0.c.b16.cont [5/8] 0, 128
        %1448 = vxpose.xlu0.c.b16.cont [6/8] 0, 128
        %1449 = vxpose.xlu0.c.b16.cont [7/8] 0, 128
        %1450 = vxpose.xlu0.c.b16.end [8/8] 0, 128
        %v1451 = vpop.trf.xlu0
        %v1452 = vpop.trf.xlu0
        %v1453 = vpop.trf.xlu0
        %v1454 = vpop.trf.xlu0
        %v1455 = vpop.trf.xlu0
        %v1456 = vpop.trf.xlu0
        %v1457 = vpop.trf.xlu0
        %v1458 = vpop.trf.xlu0
        %1459 = vxpose.xlu0.c.b16.start [1/8] %v686, 128
        %1460 = vxpose.xlu0.c.b16.cont [2/8] 0, 128
        %1461 = vxpose.xlu0.c.b16.cont [3/8] 0, 128
        %1462 = vxpose.xlu0.c.b16.cont [4/8] 0, 128
        %1463 = vxpose.xlu0.c.b16.cont [5/8] 0, 128
        %1464 = vxpose.xlu0.c.b16.cont [6/8] 0, 128
        %1465 = vxpose.xlu0.c.b16.cont [7/8] 0, 128
        %1466 = vxpose.xlu0.c.b16.end [8/8] 0, 128
        %v1467 = vpop.trf.xlu0
        %v1468 = vpop.trf.xlu0
        %v1469 = vpop.trf.xlu0
        %v1470 = vpop.trf.xlu0
        %v1471 = vpop.trf.xlu0
        %v1472 = vpop.trf.xlu0
        %v1473 = vpop.trf.xlu0
        %v1474 = vpop.trf.xlu0
        %1475 = vxpose.xlu0.c.b16.start [1/8] %v687, 128
        %1476 = vxpose.xlu0.c.b16.cont [2/8] 0, 128
        %1477 = vxpose.xlu0.c.b16.cont [3/8] 0, 128
        %1478 = vxpose.xlu0.c.b16.cont [4/8] 0, 128
        %1479 = vxpose.xlu0.c.b16.cont [5/8] 0, 128
        %1480 = vxpose.xlu0.c.b16.cont [6/8] 0, 128
        %1481 = vxpose.xlu0.c.b16.cont [7/8] 0, 128
        %1482 = vxpose.xlu0.c.b16.end [8/8] 0, 128
        %v1483 = vpop.trf.xlu0
        %v1484 = vpop.trf.xlu0
        %v1485 = vpop.trf.xlu0
        %v1486 = vpop.trf.xlu0
        %v1487 = vpop.trf.xlu0
        %v1488 = vpop.trf.xlu0
        %v1489 = vpop.trf.xlu0
        %v1490 = vpop.trf.xlu0
        %1491 = vxpose.xlu0.c.b16.start [1/8] %v688, 128
        %1492 = vxpose.xlu0.c.b16.cont [2/8] 0, 128
        %1493 = vxpose.xlu0.c.b16.cont [3/8] 0, 128
        %1494 = vxpose.xlu0.c.b16.cont [4/8] 0, 128
        %1495 = vxpose.xlu0.c.b16.cont [5/8] 0, 128
        %1496 = vxpose.xlu0.c.b16.cont [6/8] 0, 128
        %1497 = vxpose.xlu0.c.b16.cont [7/8] 0, 128
        %1498 = vxpose.xlu0.c.b16.end [8/8] 0, 128
        %v1499 = vpop.trf.xlu0
        %v1500 = vpop.trf.xlu0
        %v1501 = vpop.trf.xlu0
        %v1502 = vpop.trf.xlu0
        %v1503 = vpop.trf.xlu0
        %v1504 = vpop.trf.xlu0
        %v1505 = vpop.trf.xlu0
        %v1506 = vpop.trf.xlu0
        %1507 = vxpose.xlu0.c.b16.start [1/8] %v689, 128
        %1508 = vxpose.xlu0.c.b16.cont [2/8] 0, 128
        %1509 = vxpose.xlu0.c.b16.cont [3/8] 0, 128
        %1510 = vxpose.xlu0.c.b16.cont [4/8] 0, 128
        %1511 = vxpose.xlu0.c.b16.cont [5/8] 0, 128
        %1512 = vxpose.xlu0.c.b16.cont [6/8] 0, 128
        %1513 = vxpose.xlu0.c.b16.cont [7/8] 0, 128
        %1514 = vxpose.xlu0.c.b16.end [8/8] 0, 128
        %v1515 = vpop.trf.xlu0
        %v1516 = vpop.trf.xlu0
        %v1517 = vpop.trf.xlu0
        %v1518 = vpop.trf.xlu0
        %v1519 = vpop.trf.xlu0
        %v1520 = vpop.trf.xlu0
        %v1521 = vpop.trf.xlu0
        %v1522 = vpop.trf.xlu0
        %1523 = vxpose.xlu0.c.b16.start [1/8] %v690, 128
        %1524 = vxpose.xlu0.c.b16.cont [2/8] 0, 128
        %1525 = vxpose.xlu0.c.b16.cont [3/8] 0, 128
        %1526 = vxpose.xlu0.c.b16.cont [4/8] 0, 128
        %1527 = vxpose.xlu0.c.b16.cont [5/8] 0, 128
        %1528 = vxpose.xlu0.c.b16.cont [6/8] 0, 128
        %1529 = vxpose.xlu0.c.b16.cont [7/8] 0, 128
        %1530 = vxpose.xlu0.c.b16.end [8/8] 0, 128
        %v1531 = vpop.trf.xlu0
        %v1532 = vpop.trf.xlu0
        %v1533 = vpop.trf.xlu0
        %v1534 = vpop.trf.xlu0
        %v1535 = vpop.trf.xlu0
        %v1536 = vpop.trf.xlu0
        %v1537 = vpop.trf.xlu0
        %v1538 = vpop.trf.xlu0
        %v1539 = vcombine.low %v1419, %v1483
        %v1541 = vunpack.c.l.s4 1983009808
        %v1542 = vunpack.c.0.s8 %v1541
        %v1543 = vlaneseq
        %v1544 = vshrl.u32 %v1543, 7
        %v1545 = vsub.s32 %v1542, %v1544
        %v1546 = vrot.slane %v1539, %v1545
        %v1547 = vcombine.low %v1451, %v1515
        %v1549 = vunpack.c.l.s4 1983009808
        %v1550 = vunpack.c.0.s8 %v1549
        %v1551 = vlaneseq
        %v1552 = vshrl.u32 %v1551, 7
        %v1553 = vsub.s32 %v1550, %v1552
        %v1554 = vrot.slane %v1547, %v1553
        %v1555 = vcombine.low %v1546, %v1554
        %v1556 = vcombine.high %v1546, %v1554
        %v1558 = vunpack.c.l.s4 1934713408
        %v1559 = vunpack.c.0.s8 %v1558
        %v1560 = vlaneseq
        %v1561 = vshrl.u32 %v1560, 7
        %v1562 = vsub.s32 %v1559, %v1561
        %v1563 = vrot.slane %v1555, %v1562
        %v1565 = vunpack.c.l.s4 1934713408
        %v1566 = vunpack.c.0.s8 %v1565
        %v1567 = vlaneseq
        %v1568 = vshrl.u32 %v1567, 7
        %v1569 = vsub.s32 %v1566, %v1568
        %v1570 = vrot.slane %v1556, %v1569
        %v1571 = vcombine.high %v1563, 0
        %v1572 = vcombine.high %v1570, 0
        %v1573 = vcombine.low %v1435, %v1499
        %v1575 = vunpack.c.l.s4 1983009808
        %v1576 = vunpack.c.0.s8 %v1575
        %v1577 = vlaneseq
        %v1578 = vshrl.u32 %v1577, 7
        %v1579 = vsub.s32 %v1576, %v1578
        %v1580 = vrot.slane %v1573, %v1579
        %v1581 = vcombine.low %v1467, %v1531
        %v1583 = vunpack.c.l.s4 1983009808
        %v1584 = vunpack.c.0.s8 %v1583
        %v1585 = vlaneseq
        %v1586 = vshrl.u32 %v1585, 7
        %v1587 = vsub.s32 %v1584, %v1586
        %v1588 = vrot.slane %v1581, %v1587
        %v1589 = vcombine.low %v1580, %v1588
        %v1590 = vcombine.high %v1580, %v1588
        %v1592 = vunpack.c.l.s4 1934713408
        %v1593 = vunpack.c.0.s8 %v1592
        %v1594 = vlaneseq
        %v1595 = vshrl.u32 %v1594, 7
        %v1596 = vsub.s32 %v1593, %v1595
        %v1597 = vrot.slane %v1589, %v1596
        %v1599 = vunpack.c.l.s4 1934713408
        %v1600 = vunpack.c.0.s8 %v1599
        %v1601 = vlaneseq
        %v1602 = vshrl.u32 %v1601, 7
        %v1603 = vsub.s32 %v1600, %v1602
        %v1604 = vrot.slane %v1590, %v1603
        %v1605 = vcombine.high %v1597, 0
        %v1606 = vcombine.high %v1604, 0
        %v1609 = vpack.i.b16 %v1597, %v1563
        %v1611 = vshrl.u32 %v1563, 16
        %v1612 = vshrl.u32 %v1597, 16
        %v1613 = vpack.i.b16 %v1612, %v1611
        %v1617 = vpack.i.b16 %v1605, %v1571
        %v1619 = vshrl.u32 %v1571, 16
        %v1620 = vshrl.u32 %v1605, 16
        %v1621 = vpack.i.b16 %v1620, %v1619
        %v1625 = vpack.i.b16 %v1604, %v1570
        %v1627 = vshrl.u32 %v1570, 16
        %v1628 = vshrl.u32 %v1604, 16
        %v1629 = vpack.i.b16 %v1628, %v1627
        %v1633 = vpack.i.b16 %v1606, %v1572
        %v1635 = vshrl.u32 %v1572, 16
        %v1636 = vshrl.u32 %v1606, 16
        %v1637 = vpack.i.b16 %v1636, %v1635
        %1639 = vxpose.xlu0.c.b16.start [1/8] %v1609, 128
        %1640 = vxpose.xlu0.c.b16.cont [2/8] 0, 128
        %1641 = vxpose.xlu0.c.b16.cont [3/8] 0, 128
        %1642 = vxpose.xlu0.c.b16.cont [4/8] 0, 128
        %1643 = vxpose.xlu0.c.b16.cont [5/8] 0, 128
        %1644 = vxpose.xlu0.c.b16.cont [6/8] 0, 128
        %1645 = vxpose.xlu0.c.b16.cont [7/8] 0, 128
        %1646 = vxpose.xlu0.c.b16.end [8/8] 0, 128
        %v1647 = vpop.trf.xlu0
        %v1648 = vpop.trf.xlu0
        %v1649 = vpop.trf.xlu0
        %v1650 = vpop.trf.xlu0
        %v1651 = vpop.trf.xlu0
        %v1652 = vpop.trf.xlu0
        %v1653 = vpop.trf.xlu0
        %v1654 = vpop.trf.xlu0
        %1655 = vxpose.xlu0.c.b16.start [1/8] %v1613, 128
        %1656 = vxpose.xlu0.c.b16.cont [2/8] 0, 128
        %1657 = vxpose.xlu0.c.b16.cont [3/8] 0, 128
        %1658 = vxpose.xlu0.c.b16.cont [4/8] 0, 128
        %1659 = vxpose.xlu0.c.b16.cont [5/8] 0, 128
        %1660 = vxpose.xlu0.c.b16.cont [6/8] 0, 128
        %1661 = vxpose.xlu0.c.b16.cont [7/8] 0, 128
        %1662 = vxpose.xlu0.c.b16.end [8/8] 0, 128
        %v1663 = vpop.trf.xlu0
        %v1664 = vpop.trf.xlu0
        %v1665 = vpop.trf.xlu0
        %v1666 = vpop.trf.xlu0
        %v1667 = vpop.trf.xlu0
        %v1668 = vpop.trf.xlu0
        %v1669 = vpop.trf.xlu0
        %v1670 = vpop.trf.xlu0
        %1671 = vxpose.xlu0.c.b16.start [1/8] %v1617, 128
        %1672 = vxpose.xlu0.c.b16.cont [2/8] 0, 128
        %1673 = vxpose.xlu0.c.b16.cont [3/8] 0, 128
        %1674 = vxpose.xlu0.c.b16.cont [4/8] 0, 128
        %1675 = vxpose.xlu0.c.b16.cont [5/8] 0, 128
        %1676 = vxpose.xlu0.c.b16.cont [6/8] 0, 128
        %1677 = vxpose.xlu0.c.b16.cont [7/8] 0, 128
        %1678 = vxpose.xlu0.c.b16.end [8/8] 0, 128
        %v1679 = vpop.trf.xlu0
        %v1680 = vpop.trf.xlu0
        %v1681 = vpop.trf.xlu0
        %v1682 = vpop.trf.xlu0
        %v1683 = vpop.trf.xlu0
        %v1684 = vpop.trf.xlu0
        %v1685 = vpop.trf.xlu0
        %v1686 = vpop.trf.xlu0
        %1687 = vxpose.xlu0.c.b16.start [1/8] %v1621, 128
        %1688 = vxpose.xlu0.c.b16.cont [2/8] 0, 128
        %1689 = vxpose.xlu0.c.b16.cont [3/8] 0, 128
        %1690 = vxpose.xlu0.c.b16.cont [4/8] 0, 128
        %1691 = vxpose.xlu0.c.b16.cont [5/8] 0, 128
        %1692 = vxpose.xlu0.c.b16.cont [6/8] 0, 128
        %1693 = vxpose.xlu0.c.b16.cont [7/8] 0, 128
        %1694 = vxpose.xlu0.c.b16.end [8/8] 0, 128
        %v1695 = vpop.trf.xlu0
        %v1696 = vpop.trf.xlu0
        %v1697 = vpop.trf.xlu0
        %v1698 = vpop.trf.xlu0
        %v1699 = vpop.trf.xlu0
        %v1700 = vpop.trf.xlu0
        %v1701 = vpop.trf.xlu0
        %v1702 = vpop.trf.xlu0
        %1703 = vxpose.xlu0.c.b16.start [1/8] %v1625, 128
        %1704 = vxpose.xlu0.c.b16.cont [2/8] 0, 128
        %1705 = vxpose.xlu0.c.b16.cont [3/8] 0, 128
        %1706 = vxpose.xlu0.c.b16.cont [4/8] 0, 128
        %1707 = vxpose.xlu0.c.b16.cont [5/8] 0, 128
        %1708 = vxpose.xlu0.c.b16.cont [6/8] 0, 128
        %1709 = vxpose.xlu0.c.b16.cont [7/8] 0, 128
        %1710 = vxpose.xlu0.c.b16.end [8/8] 0, 128
        %v1711 = vpop.trf.xlu0
        %v1712 = vpop.trf.xlu0
        %v1713 = vpop.trf.xlu0
        %v1714 = vpop.trf.xlu0
        %v1715 = vpop.trf.xlu0
        %v1716 = vpop.trf.xlu0
        %v1717 = vpop.trf.xlu0
        %v1718 = vpop.trf.xlu0
        %1719 = vxpose.xlu0.c.b16.start [1/8] %v1629, 128
        %1720 = vxpose.xlu0.c.b16.cont [2/8] 0, 128
        %1721 = vxpose.xlu0.c.b16.cont [3/8] 0, 128
        %1722 = vxpose.xlu0.c.b16.cont [4/8] 0, 128
        %1723 = vxpose.xlu0.c.b16.cont [5/8] 0, 128
        %1724 = vxpose.xlu0.c.b16.cont [6/8] 0, 128
        %1725 = vxpose.xlu0.c.b16.cont [7/8] 0, 128
        %1726 = vxpose.xlu0.c.b16.end [8/8] 0, 128
        %v1727 = vpop.trf.xlu0
        %v1728 = vpop.trf.xlu0
        %v1729 = vpop.trf.xlu0
        %v1730 = vpop.trf.xlu0
        %v1731 = vpop.trf.xlu0
        %v1732 = vpop.trf.xlu0
        %v1733 = vpop.trf.xlu0
        %v1734 = vpop.trf.xlu0
        %1735 = vxpose.xlu0.c.b16.start [1/8] %v1633, 128
        %1736 = vxpose.xlu0.c.b16.cont [2/8] 0, 128
        %1737 = vxpose.xlu0.c.b16.cont [3/8] 0, 128
        %1738 = vxpose.xlu0.c.b16.cont [4/8] 0, 128
        %1739 = vxpose.xlu0.c.b16.cont [5/8] 0, 128
        %1740 = vxpose.xlu0.c.b16.cont [6/8] 0, 128
        %1741 = vxpose.xlu0.c.b16.cont [7/8] 0, 128
        %1742 = vxpose.xlu0.c.b16.end [8/8] 0, 128
        %v1743 = vpop.trf.xlu0
        %v1744 = vpop.trf.xlu0
        %v1745 = vpop.trf.xlu0
        %v1746 = vpop.trf.xlu0
        %v1747 = vpop.trf.xlu0
        %v1748 = vpop.trf.xlu0
        %v1749 = vpop.trf.xlu0
        %v1750 = vpop.trf.xlu0
        %1751 = vxpose.xlu0.c.b16.start [1/8] %v1637, 128
        %1752 = vxpose.xlu0.c.b16.cont [2/8] 0, 128
        %1753 = vxpose.xlu0.c.b16.cont [3/8] 0, 128
        %1754 = vxpose.xlu0.c.b16.cont [4/8] 0, 128
        %1755 = vxpose.xlu0.c.b16.cont [5/8] 0, 128
        %1756 = vxpose.xlu0.c.b16.cont [6/8] 0, 128
        %1757 = vxpose.xlu0.c.b16.cont [7/8] 0, 128
        %1758 = vxpose.xlu0.c.b16.end [8/8] 0, 128
        %v1759 = vpop.trf.xlu0
        %v1760 = vpop.trf.xlu0
        %v1761 = vpop.trf.xlu0
        %v1762 = vpop.trf.xlu0
        %v1763 = vpop.trf.xlu0
        %v1764 = vpop.trf.xlu0
        %v1765 = vpop.trf.xlu0
        %v1766 = vpop.trf.xlu0
        %v1767 = vcombine.low %v1647, %v1711
        %v1769 = vunpack.c.l.s4 1983009808
        %v1770 = vunpack.c.0.s8 %v1769
        %v1771 = vlaneseq
        %v1772 = vshrl.u32 %v1771, 7
        %v1773 = vsub.s32 %v1770, %v1772
        %v1774 = vrot.slane %v1767, %v1773
        %v1775 = vcombine.low %v1679, %v1743
        %v1777 = vunpack.c.l.s4 1983009808
        %v1778 = vunpack.c.0.s8 %v1777
        %v1779 = vlaneseq
        %v1780 = vshrl.u32 %v1779, 7
        %v1781 = vsub.s32 %v1778, %v1780
        %v1782 = vrot.slane %v1775, %v1781
        %v1783 = vcombine.low %v1774, %v1782
        %v1785 = vunpack.c.l.s4 1934713408
        %v1786 = vunpack.c.0.s8 %v1785
        %v1787 = vlaneseq
        %v1788 = vshrl.u32 %v1787, 7
        %v1789 = vsub.s32 %v1786, %v1788
        %v1790 = vrot.slane %v1783, %v1789
        %v1791 = vcombine.high %v1790, 0
        %v1792 = vcombine.low %v1663, %v1727
        %v1794 = vunpack.c.l.s4 1983009808
        %v1795 = vunpack.c.0.s8 %v1794
        %v1796 = vlaneseq
        %v1797 = vshrl.u32 %v1796, 7
        %v1798 = vsub.s32 %v1795, %v1797
        %v1799 = vrot.slane %v1792, %v1798
        %v1800 = vcombine.low %v1695, %v1759
        %v1802 = vunpack.c.l.s4 1983009808
        %v1803 = vunpack.c.0.s8 %v1802
        %v1804 = vlaneseq
        %v1805 = vshrl.u32 %v1804, 7
        %v1806 = vsub.s32 %v1803, %v1805
        %v1807 = vrot.slane %v1800, %v1806
        %v1808 = vcombine.low %v1799, %v1807
        %v1810 = vunpack.c.l.s4 1934713408
        %v1811 = vunpack.c.0.s8 %v1810
        %v1812 = vlaneseq
        %v1813 = vshrl.u32 %v1812, 7
        %v1814 = vsub.s32 %v1811, %v1813
        %v1815 = vrot.slane %v1808, %v1814
        %v1816 = vcombine.high %v1815, 0
        %v1819 = vpack.i.b16 %v1815, %v1790
        %v1820 = vshrl.u32 %v1790, 16
        %v1821 = vshrl.u32 %v1815, 16
        %v1822 = vpack.i.b16 %v1821, %v1820
        %v1825 = vpack.i.b16 %v1816, %v1791
        %v1826 = vshrl.u32 %v1791, 16
        %v1827 = vshrl.u32 %v1816, 16
        %v1828 = vpack.i.b16 %v1827, %v1826
        %v1830 = vsel %vm1171, %v1819, 0
        %v1833 = vsel %vm1171, %v1407, 0
        %1835 = vmatprep.subr.bf16.mxu0 0
        %1836 = vmatpush1.bf16.xpose.msra.mxu0 0
        %1837 = vmatprep.subr.bf16.mxu0 0
        %1838 = vmatpush1.bf16.xpose.msra.mxu0 0
        %1839 = vmatprep.subr.bf16.mxu0 0
        %1840 = vmatpush1.bf16.xpose.msra.mxu0 0
        %1841 = vmatprep.subr.bf16.mxu0 0
        %1842 = vmatpush1.bf16.xpose.msra.mxu0 0
        %1843 = vmatprep.subr.bf16.mxu0 0
        %1844 = vmatpush1.bf16.xpose.msra.mxu0 0
        %1845 = vmatprep.subr.bf16.mxu0 0
        %1846 = vmatpush1.bf16.xpose.msra.mxu0 0
        %1847 = vmatprep.subr.bf16.mxu0 0
        %1848 = vmatpush1.bf16.xpose.msra.mxu0 0
        %1849 = vmatprep.subr.bf16.mxu0 0
        %1850 = vmatpush1.bf16.xpose.msra.mxu0 %v1833
        %1851 = vmatprep.subr.bf16.mxu0 0
        %1852 = vmatpush2.bf16.xpose.msra.mxu0 0
        %1853 = vmatprep.subr.bf16.mxu0 0
        %1854 = vmatpush2.bf16.xpose.msra.mxu0 0
        %1855 = vmatprep.subr.bf16.mxu0 0
        %1856 = vmatpush2.bf16.xpose.msra.mxu0 0
        %1857 = vmatprep.subr.bf16.mxu0 0
        %1858 = vmatpush2.bf16.xpose.msra.mxu0 0
        %1859 = vmatprep.subr.bf16.mxu0 0
        %1860 = vmatpush2.bf16.xpose.msra.mxu0 0
        %1861 = vmatprep.subr.bf16.mxu0 0
        %1862 = vmatpush2.bf16.xpose.msra.mxu0 0
        %1863 = vmatprep.subr.bf16.mxu0 0
        %1864 = vmatpush2.bf16.xpose.msra.mxu0 0
        %1865 = vmatprep.subr.bf16.mxu0 0
        %1866 = vmatpush2.bf16.xpose.msra.mxu0 0
        %1867 = vmatprep.mubr.bf16.mxu0 0
        %1868 = vmatmul.mubr.bf16.gmra.mxu0 %v1830
        %v1869 = vpop.f32.mrf.mxu0
        %v1870 = vadd.f32 0.0, %v1869
        %v1871 = vpop.f32.mrf.mxu0
        %v1872 = vpop.f32.mrf.mxu0
        %v1873 = vpop.f32.mrf.mxu0
        %1874 = vdwg.mxu0
        %v1876 = vsel %vm1171, %v1822, 0
        %v1879 = vsel %vm1171, %v1408, 0
        %1881 = vmatprep.subr.bf16.mxu0 0
        %1882 = vmatpush1.bf16.xpose.msra.mxu0 0
        %1883 = vmatprep.subr.bf16.mxu0 0
        %1884 = vmatpush1.bf16.xpose.msra.mxu0 0
        %1885 = vmatprep.subr.bf16.mxu0 0
        %1886 = vmatpush1.bf16.xpose.msra.mxu0 0
        %1887 = vmatprep.subr.bf16.mxu0 0
        %1888 = vmatpush1.bf16.xpose.msra.mxu0 0
        %1889 = vmatprep.subr.bf16.mxu0 0
        %1890 = vmatpush1.bf16.xpose.msra.mxu0 0
        %1891 = vmatprep.subr.bf16.mxu0 0
        %1892 = vmatpush1.bf16.xpose.msra.mxu0 0
        %1893 = vmatprep.subr.bf16.mxu0 0
        %1894 = vmatpush1.bf16.xpose.msra.mxu0 0
        %1895 = vmatprep.subr.bf16.mxu0 0
        %1896 = vmatpush1.bf16.xpose.msra.mxu0 %v1879
        %1897 = vmatprep.subr.bf16.mxu0 0
        %1898 = vmatpush2.bf16.xpose.msra.mxu0 0
        %1899 = vmatprep.subr.bf16.mxu0 0
        %1900 = vmatpush2.bf16.xpose.msra.mxu0 0
        %1901 = vmatprep.subr.bf16.mxu0 0
        %1902 = vmatpush2.bf16.xpose.msra.mxu0 0
        %1903 = vmatprep.subr.bf16.mxu0 0
        %1904 = vmatpush2.bf16.xpose.msra.mxu0 0
        %1905 = vmatprep.subr.bf16.mxu0 0
        %1906 = vmatpush2.bf16.xpose.msra.mxu0 0
        %1907 = vmatprep.subr.bf16.mxu0 0
        %1908 = vmatpush2.bf16.xpose.msra.mxu0 0
        %1909 = vmatprep.subr.bf16.mxu0 0
        %1910 = vmatpush2.bf16.xpose.msra.mxu0 0
        %1911 = vmatprep.subr.bf16.mxu0 0
        %1912 = vmatpush2.bf16.xpose.msra.mxu0 0
        %1913 = vmatprep.mubr.bf16.mxu0 0
        %1914 = vmatmul.mubr.bf16.gmra.mxu0 %v1876
        %v1915 = vpop.f32.mrf.mxu0
        %v1916 = vadd.f32 0.0, %v1915
        %v1917 = vpop.f32.mrf.mxu0
        %v1918 = vpop.f32.mrf.mxu0
        %v1919 = vpop.f32.mrf.mxu0
        %1920 = vdwg.mxu0
        %v1922 = vsel %vm1171, %v1825, 0
        %v1925 = vsel %vm1171, %v1409, 0
        %1927 = vmatprep.subr.bf16.mxu0 0
        %1928 = vmatpush1.bf16.xpose.msra.mxu0 0
        %1929 = vmatprep.subr.bf16.mxu0 0
        %1930 = vmatpush1.bf16.xpose.msra.mxu0 0
        %1931 = vmatprep.subr.bf16.mxu0 0
        %1932 = vmatpush1.bf16.xpose.msra.mxu0 0
        %1933 = vmatprep.subr.bf16.mxu0 0
        %1934 = vmatpush1.bf16.xpose.msra.mxu0 0
        %1935 = vmatprep.subr.bf16.mxu0 0
        %1936 = vmatpush1.bf16.xpose.msra.mxu0 0
        %1937 = vmatprep.subr.bf16.mxu0 0
        %1938 = vmatpush1.bf16.xpose.msra.mxu0 0
        %1939 = vmatprep.subr.bf16.mxu0 0
        %1940 = vmatpush1.bf16.xpose.msra.mxu0 0
        %1941 = vmatprep.subr.bf16.mxu0 0
        %1942 = vmatpush1.bf16.xpose.msra.mxu0 %v1925
        %1943 = vmatprep.subr.bf16.mxu0 0
        %1944 = vmatpush2.bf16.xpose.msra.mxu0 0
        %1945 = vmatprep.subr.bf16.mxu0 0
        %1946 = vmatpush2.bf16.xpose.msra.mxu0 0
        %1947 = vmatprep.subr.bf16.mxu0 0
        %1948 = vmatpush2.bf16.xpose.msra.mxu0 0
        %1949 = vmatprep.subr.bf16.mxu0 0
        %1950 = vmatpush2.bf16.xpose.msra.mxu0 0
        %1951 = vmatprep.subr.bf16.mxu0 0
        %1952 = vmatpush2.bf16.xpose.msra.mxu0 0
        %1953 = vmatprep.subr.bf16.mxu0 0
        %1954 = vmatpush2.bf16.xpose.msra.mxu0 0
        %1955 = vmatprep.subr.bf16.mxu0 0
        %1956 = vmatpush2.bf16.xpose.msra.mxu0 0
        %1957 = vmatprep.subr.bf16.mxu0 0
        %1958 = vmatpush2.bf16.xpose.msra.mxu0 0
        %1959 = vmatprep.mubr.bf16.mxu0 0
        %1960 = vmatmul.mubr.bf16.gmra.mxu0 %v1922
        %v1961 = vpop.f32.mrf.mxu0
        %v1962 = vadd.f32 0.0, %v1961
        %v1963 = vpop.f32.mrf.mxu0
        %v1964 = vpop.f32.mrf.mxu0
        %v1965 = vpop.f32.mrf.mxu0
        %1966 = vdwg.mxu0
        %v1968 = vsel %vm1171, %v1828, 0
        %v1971 = vsel %vm1171, %v1410, 0
        %1973 = vmatprep.subr.bf16.mxu0 0
        %1974 = vmatpush1.bf16.xpose.msra.mxu0 0
        %1975 = vmatprep.subr.bf16.mxu0 0
        %1976 = vmatpush1.bf16.xpose.msra.mxu0 0
        %1977 = vmatprep.subr.bf16.mxu0 0
        %1978 = vmatpush1.bf16.xpose.msra.mxu0 0
        %1979 = vmatprep.subr.bf16.mxu0 0
        %1980 = vmatpush1.bf16.xpose.msra.mxu0 0
        %1981 = vmatprep.subr.bf16.mxu0 0
        %1982 = vmatpush1.bf16.xpose.msra.mxu0 0
        %1983 = vmatprep.subr.bf16.mxu0 0
        %1984 = vmatpush1.bf16.xpose.msra.mxu0 0
        %1985 = vmatprep.subr.bf16.mxu0 0
        %1986 = vmatpush1.bf16.xpose.msra.mxu0 0
        %1987 = vmatprep.subr.bf16.mxu0 0
        %1988 = vmatpush1.bf16.xpose.msra.mxu0 %v1971
        %1989 = vmatprep.subr.bf16.mxu0 0
        %1990 = vmatpush2.bf16.xpose.msra.mxu0 0
        %1991 = vmatprep.subr.bf16.mxu0 0
        %1992 = vmatpush2.bf16.xpose.msra.mxu0 0
        %1993 = vmatprep.subr.bf16.mxu0 0
        %1994 = vmatpush2.bf16.xpose.msra.mxu0 0
        %1995 = vmatprep.subr.bf16.mxu0 0
        %1996 = vmatpush2.bf16.xpose.msra.mxu0 0
        %1997 = vmatprep.subr.bf16.mxu0 0
        %1998 = vmatpush2.bf16.xpose.msra.mxu0 0
        %1999 = vmatprep.subr.bf16.mxu0 0
        %2000 = vmatpush2.bf16.xpose.msra.mxu0 0
        %2001 = vmatprep.subr.bf16.mxu0 0
        %2002 = vmatpush2.bf16.xpose.msra.mxu0 0
        %2003 = vmatprep.subr.bf16.mxu0 0
        %2004 = vmatpush2.bf16.xpose.msra.mxu0 0
        %2005 = vmatprep.mubr.bf16.mxu0 0
        %2006 = vmatmul.mubr.bf16.gmra.mxu0 %v1968
        %v2007 = vpop.f32.mrf.mxu0
        %v2008 = vadd.f32 0.0, %v2007
        %v2009 = vpop.f32.mrf.mxu0
        %v2010 = vpop.f32.mrf.mxu0
        %v2011 = vpop.f32.mrf.mxu0
        %2012 = vdwg.mxu0
        %2013 = vxpose.xlu0.b32.start [1/16] %v1870, 128
        %2014 = vxpose.xlu0.b32.cont [2/16] 0.0, 128
        %2015 = vxpose.xlu0.b32.cont [3/16] 0.0, 128
        %2016 = vxpose.xlu0.b32.cont [4/16] 0.0, 128
        %2017 = vxpose.xlu0.b32.cont [5/16] 0.0, 128
        %2018 = vxpose.xlu0.b32.cont [6/16] 0.0, 128
        %2019 = vxpose.xlu0.b32.cont [7/16] 0.0, 128
        %2020 = vxpose.xlu0.b32.cont [8/16] 0.0, 128
        %2021 = vxpose.xlu0.b32.cont [9/16] 0.0, 128
        %2022 = vxpose.xlu0.b32.cont [10/16] 0.0, 128
        %2023 = vxpose.xlu0.b32.cont [11/16] 0.0, 128
        %2024 = vxpose.xlu0.b32.cont [12/16] 0.0, 128
        %2025 = vxpose.xlu0.b32.cont [13/16] 0.0, 128
        %2026 = vxpose.xlu0.b32.cont [14/16] 0.0, 128
        %2027 = vxpose.xlu0.b32.cont [15/16] 0.0, 128
        %2028 = vxpose.xlu0.b32.end [16/16] 0.0, 128
        %v2029 = vpop.trf.xlu0
        %v2030 = vpop.trf.xlu0
        %v2031 = vpop.trf.xlu0
        %v2032 = vpop.trf.xlu0
        %v2033 = vpop.trf.xlu0
        %v2034 = vpop.trf.xlu0
        %v2035 = vpop.trf.xlu0
        %v2036 = vpop.trf.xlu0
        %v2037 = vpop.trf.xlu0
        %v2038 = vpop.trf.xlu0
        %v2039 = vpop.trf.xlu0
        %v2040 = vpop.trf.xlu0
        %v2041 = vpop.trf.xlu0
        %v2042 = vpop.trf.xlu0
        %v2043 = vpop.trf.xlu0
        %v2044 = vpop.trf.xlu0
        %2045 = vxpose.xlu0.b32.start [1/16] %v1916, 128
        %2046 = vxpose.xlu0.b32.cont [2/16] 0.0, 128
        %2047 = vxpose.xlu0.b32.cont [3/16] 0.0, 128
        %2048 = vxpose.xlu0.b32.cont [4/16] 0.0, 128
        %2049 = vxpose.xlu0.b32.cont [5/16] 0.0, 128
        %2050 = vxpose.xlu0.b32.cont [6/16] 0.0, 128
        %2051 = vxpose.xlu0.b32.cont [7/16] 0.0, 128
        %2052 = vxpose.xlu0.b32.cont [8/16] 0.0, 128
        %2053 = vxpose.xlu0.b32.cont [9/16] 0.0, 128
        %2054 = vxpose.xlu0.b32.cont [10/16] 0.0, 128
        %2055 = vxpose.xlu0.b32.cont [11/16] 0.0, 128
        %2056 = vxpose.xlu0.b32.cont [12/16] 0.0, 128
        %2057 = vxpose.xlu0.b32.cont [13/16] 0.0, 128
        %2058 = vxpose.xlu0.b32.cont [14/16] 0.0, 128
        %2059 = vxpose.xlu0.b32.cont [15/16] 0.0, 128
        %2060 = vxpose.xlu0.b32.end [16/16] 0.0, 128
        %v2061 = vpop.trf.xlu0
        %v2062 = vpop.trf.xlu0
        %v2063 = vpop.trf.xlu0
        %v2064 = vpop.trf.xlu0
        %v2065 = vpop.trf.xlu0
        %v2066 = vpop.trf.xlu0
        %v2067 = vpop.trf.xlu0
        %v2068 = vpop.trf.xlu0
        %v2069 = vpop.trf.xlu0
        %v2070 = vpop.trf.xlu0
        %v2071 = vpop.trf.xlu0
        %v2072 = vpop.trf.xlu0
        %v2073 = vpop.trf.xlu0
        %v2074 = vpop.trf.xlu0
        %v2075 = vpop.trf.xlu0
        %v2076 = vpop.trf.xlu0
        %2077 = vxpose.xlu0.b32.start [1/16] %v1962, 128
        %2078 = vxpose.xlu0.b32.cont [2/16] 0.0, 128
        %2079 = vxpose.xlu0.b32.cont [3/16] 0.0, 128
        %2080 = vxpose.xlu0.b32.cont [4/16] 0.0, 128
        %2081 = vxpose.xlu0.b32.cont [5/16] 0.0, 128
        %2082 = vxpose.xlu0.b32.cont [6/16] 0.0, 128
        %2083 = vxpose.xlu0.b32.cont [7/16] 0.0, 128
        %2084 = vxpose.xlu0.b32.cont [8/16] 0.0, 128
        %2085 = vxpose.xlu0.b32.cont [9/16] 0.0, 128
        %2086 = vxpose.xlu0.b32.cont [10/16] 0.0, 128
        %2087 = vxpose.xlu0.b32.cont [11/16] 0.0, 128
        %2088 = vxpose.xlu0.b32.cont [12/16] 0.0, 128
        %2089 = vxpose.xlu0.b32.cont [13/16] 0.0, 128
        %2090 = vxpose.xlu0.b32.cont [14/16] 0.0, 128
        %2091 = vxpose.xlu0.b32.cont [15/16] 0.0, 128
        %2092 = vxpose.xlu0.b32.end [16/16] 0.0, 128
        %v2093 = vpop.trf.xlu0
        %v2094 = vpop.trf.xlu0
        %v2095 = vpop.trf.xlu0
        %v2096 = vpop.trf.xlu0
        %v2097 = vpop.trf.xlu0
        %v2098 = vpop.trf.xlu0
        %v2099 = vpop.trf.xlu0
        %v2100 = vpop.trf.xlu0
        %v2101 = vpop.trf.xlu0
        %v2102 = vpop.trf.xlu0
        %v2103 = vpop.trf.xlu0
        %v2104 = vpop.trf.xlu0
        %v2105 = vpop.trf.xlu0
        %v2106 = vpop.trf.xlu0
        %v2107 = vpop.trf.xlu0
        %v2108 = vpop.trf.xlu0
        %2109 = vxpose.xlu0.b32.start [1/16] %v2008, 128
        %2110 = vxpose.xlu0.b32.cont [2/16] 0.0, 128
        %2111 = vxpose.xlu0.b32.cont [3/16] 0.0, 128
        %2112 = vxpose.xlu0.b32.cont [4/16] 0.0, 128
        %2113 = vxpose.xlu0.b32.cont [5/16] 0.0, 128
        %2114 = vxpose.xlu0.b32.cont [6/16] 0.0, 128
        %2115 = vxpose.xlu0.b32.cont [7/16] 0.0, 128
        %2116 = vxpose.xlu0.b32.cont [8/16] 0.0, 128
        %2117 = vxpose.xlu0.b32.cont [9/16] 0.0, 128
        %2118 = vxpose.xlu0.b32.cont [10/16] 0.0, 128
        %2119 = vxpose.xlu0.b32.cont [11/16] 0.0, 128
        %2120 = vxpose.xlu0.b32.cont [12/16] 0.0, 128
        %2121 = vxpose.xlu0.b32.cont [13/16] 0.0, 128
        %2122 = vxpose.xlu0.b32.cont [14/16] 0.0, 128
        %2123 = vxpose.xlu0.b32.cont [15/16] 0.0, 128
        %2124 = vxpose.xlu0.b32.end [16/16] 0.0, 128
        %v2125 = vpop.trf.xlu0
        %v2126 = vpop.trf.xlu0
        %v2127 = vpop.trf.xlu0
        %v2128 = vpop.trf.xlu0
        %v2129 = vpop.trf.xlu0
        %v2130 = vpop.trf.xlu0
        %v2131 = vpop.trf.xlu0
        %v2132 = vpop.trf.xlu0
        %v2133 = vpop.trf.xlu0
        %v2134 = vpop.trf.xlu0
        %v2135 = vpop.trf.xlu0
        %v2136 = vpop.trf.xlu0
        %v2137 = vpop.trf.xlu0
        %v2138 = vpop.trf.xlu0
        %v2139 = vpop.trf.xlu0
        %v2140 = vpop.trf.xlu0
        %v2141 = vcombine.low %v2029, %v2093
        %v2142 = vcombine.high %v2029, %v2093
        %v2144 = vunpack.c.l.s4 1983009808
        %v2145 = vunpack.c.0.s8 %v2144
        %v2146 = vlaneseq
        %v2147 = vshrl.u32 %v2146, 7
        %v2148 = vsub.s32 %v2145, %v2147
        %v2149 = vrot.slane %v2141, %v2148
        %v2151 = vunpack.c.l.s4 1983009808
        %v2152 = vunpack.c.0.s8 %v2151
        %v2153 = vlaneseq
        %v2154 = vshrl.u32 %v2153, 7
        %v2155 = vsub.s32 %v2152, %v2154
        %v2156 = vrot.slane %v2142, %v2155
        %v2157 = vcombine.low %v2061, %v2125
        %v2158 = vcombine.high %v2061, %v2125
        %v2160 = vunpack.c.l.s4 1983009808
        %v2161 = vunpack.c.0.s8 %v2160
        %v2162 = vlaneseq
        %v2163 = vshrl.u32 %v2162, 7
        %v2164 = vsub.s32 %v2161, %v2163
        %v2165 = vrot.slane %v2157, %v2164
        %v2167 = vunpack.c.l.s4 1983009808
        %v2168 = vunpack.c.0.s8 %v2167
        %v2169 = vlaneseq
        %v2170 = vshrl.u32 %v2169, 7
        %v2171 = vsub.s32 %v2168, %v2170
        %v2172 = vrot.slane %v2158, %v2171
        %v2173 = vcombine.low %v2149, %v2165
        %v2174 = vcombine.high %v2149, %v2165
        %v2176 = vunpack.c.l.s4 1934713408
        %v2177 = vunpack.c.0.s8 %v2176
        %v2178 = vlaneseq
        %v2179 = vshrl.u32 %v2178, 7
        %v2180 = vsub.s32 %v2177, %v2179
        %v2181 = vrot.slane %v2173, %v2180
        %v2183 = vunpack.c.l.s4 1934713408
        %v2184 = vunpack.c.0.s8 %v2183
        %v2185 = vlaneseq
        %v2186 = vshrl.u32 %v2185, 7
        %v2187 = vsub.s32 %v2184, %v2186
        %v2188 = vrot.slane %v2174, %v2187
        %v2189 = vcombine.low %v2156, %v2172
        %v2190 = vcombine.high %v2156, %v2172
        %v2192 = vunpack.c.l.s4 1934713408
        %v2193 = vunpack.c.0.s8 %v2192
        %v2194 = vlaneseq
        %v2195 = vshrl.u32 %v2194, 7
        %v2196 = vsub.s32 %v2193, %v2195
        %v2197 = vrot.slane %v2189, %v2196
        %v2199 = vunpack.c.l.s4 1934713408
        %v2200 = vunpack.c.0.s8 %v2199
        %v2201 = vlaneseq
        %v2202 = vshrl.u32 %v2201, 7
        %v2203 = vsub.s32 %v2200, %v2202
        %v2204 = vrot.slane %v2190, %v2203
        %v2205 = vcombine.high %v2181, 0.0
        %v2206 = vcombine.high %v2188, 0.0
        %v2207 = vcombine.high %v2197, 0.0
        %v2208 = vcombine.high %v2204, 0.0
        %v2209 = vcombine.low %v2181, %v2188
        %v2211 = vunpack.c.l.s4 1983009808
        %v2212 = vunpack.c.0.s8 %v2211
        %v2213 = vlaneseq
        %v2214 = vshrl.u32 %v2213, 7
        %v2215 = vsub.s32 %v2212, %v2214
        %v2216 = vrot.slane %v2209, %v2215
        %v2217 = vcombine.low %v2205, %v2206
        %v2219 = vunpack.c.l.s4 1983009808
        %v2220 = vunpack.c.0.s8 %v2219
        %v2221 = vlaneseq
        %v2222 = vshrl.u32 %v2221, 7
        %v2223 = vsub.s32 %v2220, %v2222
        %v2224 = vrot.slane %v2217, %v2223
        %v2225 = vcombine.low %v2197, %v2204
        %v2227 = vunpack.c.l.s4 1983009808
        %v2228 = vunpack.c.0.s8 %v2227
        %v2229 = vlaneseq
        %v2230 = vshrl.u32 %v2229, 7
        %v2231 = vsub.s32 %v2228, %v2230
        %v2232 = vrot.slane %v2225, %v2231
        %v2233 = vcombine.low %v2207, %v2208
        %v2235 = vunpack.c.l.s4 1983009808
        %v2236 = vunpack.c.0.s8 %v2235
        %v2237 = vlaneseq
        %v2238 = vshrl.u32 %v2237, 7
        %v2239 = vsub.s32 %v2236, %v2238
        %v2240 = vrot.slane %v2233, %v2239
        %v2241 = vcombine.low %v2216, %v2224
        %v2242 = vcombine.high %v2216, %v2224
        %v2244 = vunpack.c.l.s4 1934713408
        %v2245 = vunpack.c.0.s8 %v2244
        %v2246 = vlaneseq
        %v2247 = vshrl.u32 %v2246, 7
        %v2248 = vsub.s32 %v2245, %v2247
        %v2249 = vrot.slane %v2241, %v2248
        %v2251 = vunpack.c.l.s4 1934713408
        %v2252 = vunpack.c.0.s8 %v2251
        %v2253 = vlaneseq
        %v2254 = vshrl.u32 %v2253, 7
        %v2255 = vsub.s32 %v2252, %v2254
        %v2256 = vrot.slane %v2242, %v2255
        %v2257 = vcombine.low %v2232, %v2240
        %v2258 = vcombine.high %v2232, %v2240
        %v2260 = vunpack.c.l.s4 1934713408
        %v2261 = vunpack.c.0.s8 %v2260
        %v2262 = vlaneseq
        %v2263 = vshrl.u32 %v2262, 7
        %v2264 = vsub.s32 %v2261, %v2263
        %v2265 = vrot.slane %v2257, %v2264
        %v2267 = vunpack.c.l.s4 1934713408
        %v2268 = vunpack.c.0.s8 %v2267
        %v2269 = vlaneseq
        %v2270 = vshrl.u32 %v2269, 7
        %v2271 = vsub.s32 %v2268, %v2270
        %v2272 = vrot.slane %v2258, %v2271
        %v2273 = vcombine.low %v2249, %v2265
        %v2274 = vcombine.high %v2249, %v2265
        %v2275 = vcombine.low %v2256, %v2272
        %v2276 = vcombine.high %v2256, %v2272
        %2278 = vrot.lane.b32.xlu0 %v2274, 8
        %v2279 = vpop.permute.xlu0 %2278
        %2282 = vrot.lane.b32.xlu0 %v2275, 16
        %v2283 = vpop.permute.xlu0 %2282
        %2286 = vrot.lane.b32.xlu0 %v2276, 24
        %v2287 = vpop.permute.xlu0 %2286
        %v2289 = vsel %vm1171, %v2273, %v2279
        %vm2290 = vcmask 130048
        %v2291 = vsel %vm2290, %v2289, %v2283
        %vm2292 = vcmask 195584
        %v2293 = vsel %vm2292, %v2291, %v2287
        %v2294 = vpack.c.bf16 %v2293, %v2293
        %v2295 = vld [vmem:[#allocation3] sm:$0xf]
        %v2296 = vld [vmem:[#allocation3 + $0x8] sm:$0xf]
        %v2297 = vld [vmem:[#allocation3 + $0x10] sm:$0xf]
        %v2298 = vld [vmem:[#allocation3 + $0x18] sm:$0xf]
        %v2299 = vlaneseq
        %v2300 = vshrl.u32 %v2299, 7
        %v2301 = vsub.s32 7, %v2300
        %v2302 = vrot.slane %v303, %v2301
        %v2307 = vunpack.c.l.b16 %v2295
        %v2308 = vunpack.c.l.b16 %v2296
        %v2309 = vunpack.c.l.b16 %v2297
        %v2310 = vunpack.c.l.b16 %v2298
        %v2311 = vpack.c.b16 %v2308, %v2307
        %v2312 = vpack.c.b16 %v2310, %v2309
        %2313 = vrot.lane.b32.xlu0 %v2311, 32
        %v2314 = vpop.permute.xlu0 %2313
        %2315 = vrot.lane.b32.xlu0 %v2312, 32
        %v2316 = vpop.permute.xlu0 %2315
        %v2320 = vsel %vm306, %v2294, 0
        %2322 = vmatprep.subr.bf16.mxu0 0
        %2323 = vmatpush1.bf16.msra.mxu0 0
        %2324 = vmatprep.subr.bf16.mxu0 0
        %2325 = vmatpush1.bf16.msra.mxu0 0
        %2326 = vmatprep.subr.bf16.mxu0 0
        %2327 = vmatpush1.bf16.msra.mxu0 0
        %2328 = vmatprep.subr.bf16.mxu0 0
        %2329 = vmatpush1.bf16.msra.mxu0 0
        %2330 = vmatprep.subr.bf16.mxu0 0
        %2331 = vmatpush1.bf16.msra.mxu0 0
        %2332 = vmatprep.subr.bf16.mxu0 0
        %2333 = vmatpush1.bf16.msra.mxu0 0
        %2334 = vmatprep.subr.bf16.mxu0 0
        %2335 = vmatpush1.bf16.msra.mxu0 %v2316
        %2336 = vmatprep.subr.bf16.mxu0 0
        %2337 = vmatpush1.bf16.msra.mxu0 %v2314
        %2338 = vmatprep.subr.bf16.mxu0 0
        %2339 = vmatpush2.bf16.msra.mxu0 0
        %2340 = vmatprep.subr.bf16.mxu0 0
        %2341 = vmatpush2.bf16.msra.mxu0 0
        %2342 = vmatprep.subr.bf16.mxu0 0
        %2343 = vmatpush2.bf16.msra.mxu0 0
        %2344 = vmatprep.subr.bf16.mxu0 0
        %2345 = vmatpush2.bf16.msra.mxu0 0
        %2346 = vmatprep.subr.bf16.mxu0 0
        %2347 = vmatpush2.bf16.msra.mxu0 0
        %2348 = vmatprep.subr.bf16.mxu0 0
        %2349 = vmatpush2.bf16.msra.mxu0 0
        %2350 = vmatprep.subr.bf16.mxu0 0
        %2351 = vmatpush2.bf16.msra.mxu0 0
        %2352 = vmatprep.subr.bf16.mxu0 0
        %2353 = vmatpush2.bf16.msra.mxu0 0
        %2354 = vmatprep.mubr.bf16.mxu0 0
        %2355 = vmatmul.mubr.bf16.gmra.mxu0 %v2320
        %v2356 = vpop.f32.mrf.mxu0
        %v2357 = vadd.f32 %v2302, %v2356
        %v2358 = vpop.f32.mrf.mxu0
        %v2359 = vpop.f32.mrf.mxu0
        %v2360 = vpop.f32.mrf.mxu0
        %2361 = vdwg.mxu0
        %v2362 = vadd.f32 %v305, %v2357
        %v2363 = vsel %vm306, %v2362, 0.0
        %2364 = vadd.xlane.f32.xlu0 %v2363
        %v2365 = vpop.xlane.xlu0 %2364
        %v2366 = vmul.f32 %v2365, %v310
        %v2367 = vsub.f32 %v2362, %v2366
        %v2368 = vmul.f32 %v2367, %v2367
        %v2369 = vsel %vm306, %v2368, 0.0
        %2370 = vadd.xlane.f32.xlu0 %v2369
        %v2371 = vpop.xlane.xlu0 %2370
        %v2372 = vmul.f32 %v2371, %v310
        %v2373 = vadd.f32 %v2372, 1e-05
        %v2374 = vrsqrt.pop %v2373
        %v2375 = vmul.f32 %v2367, %v2374
        %v2376 = vlaneseq
        %v2377 = vshrl.u32 %v2376, 7
        %v2378 = vsub.s32 2, %v2377
        %v2379 = vrot.slane %v303, %v2378
        %v2380 = vmul.f32 %v2375, %v2379
        %v2381 = vlaneseq
        %v2382 = vshrl.u32 %v2381, 7
        %v2383 = vsub.s32 3, %v2382
        %v2384 = vrot.slane %v303, %v2383
        %v2385 = vadd.f32 %v2380, %v2384
        %v2386 = vpack.c.bf16 %v2385, %v2385
        %v2387 = vld [vmem:[#allocation3 + $0x4] sm:$0xf]
        %v2388 = vld [vmem:[#allocation3 + $0xc] sm:$0xf]
        %v2389 = vld [vmem:[#allocation3 + $0x14] sm:$0xf]
        %v2390 = vld [vmem:[#allocation3 + $0x1c] sm:$0xf]
        %v2391 = vlaneseq
        %v2392 = vshrl.u32 %v2391, 7
        %v2393 = vsub.s32 0, %v2392
        %v2394 = vrot.slane %v304, %v2393
        %v2399 = vunpack.c.l.b16 %v2387
        %v2400 = vunpack.c.l.b16 %v2388
        %v2401 = vunpack.c.l.b16 %v2389
        %v2402 = vunpack.c.l.b16 %v2390
        %v2403 = vpack.c.b16 %v2400, %v2399
        %v2404 = vpack.c.b16 %v2402, %v2401
        %v2408 = vsel %vm306, %v2386, 0
        %2410 = vmatprep.subr.bf16.mxu0 0
        %2411 = vmatpush1.bf16.msra.mxu0 0
        %2412 = vmatprep.subr.bf16.mxu0 0
        %2413 = vmatpush1.bf16.msra.mxu0 0
        %2414 = vmatprep.subr.bf16.mxu0 0
        %2415 = vmatpush1.bf16.msra.mxu0 0
        %2416 = vmatprep.subr.bf16.mxu0 0
        %2417 = vmatpush1.bf16.msra.mxu0 0
        %2418 = vmatprep.subr.bf16.mxu0 0
        %2419 = vmatpush1.bf16.msra.mxu0 0
        %2420 = vmatprep.subr.bf16.mxu0 0
        %2421 = vmatpush1.bf16.msra.mxu0 0
        %2422 = vmatprep.subr.bf16.mxu0 0
        %2423 = vmatpush1.bf16.msra.mxu0 %v2404
        %2424 = vmatprep.subr.bf16.mxu0 0
        %2425 = vmatpush1.bf16.msra.mxu0 %v2403
        %2426 = vmatprep.subr.bf16.mxu0 0
        %2427 = vmatpush2.bf16.msra.mxu0 0
        %2428 = vmatprep.subr.bf16.mxu0 0
        %2429 = vmatpush2.bf16.msra.mxu0 0
        %2430 = vmatprep.subr.bf16.mxu0 0
        %2431 = vmatpush2.bf16.msra.mxu0 0
        %2432 = vmatprep.subr.bf16.mxu0 0
        %2433 = vmatpush2.bf16.msra.mxu0 0
        %2434 = vmatprep.subr.bf16.mxu0 0
        %2435 = vmatpush2.bf16.msra.mxu0 0
        %2436 = vmatprep.subr.bf16.mxu0 0
        %2437 = vmatpush2.bf16.msra.mxu0 0
        %2438 = vmatprep.subr.bf16.mxu0 0
        %2439 = vmatpush2.bf16.msra.mxu0 0
        %2440 = vmatprep.subr.bf16.mxu0 0
        %2441 = vmatpush2.bf16.msra.mxu0 0
        %2442 = vmatprep.mubr.bf16.mxu0 0
        %2443 = vmatmul.mubr.bf16.gmra.mxu0 %v2408
        %v2444 = vpop.f32.mrf.mxu0
        %v2445 = vadd.f32 %v2394, %v2444
        %v2446 = vpop.f32.mrf.mxu0
        %v2447 = vpop.f32.mrf.mxu0
        %v2448 = vpop.f32.mrf.mxu0
        %2449 = vdwg.mxu0
        %v2450 = vmax.f32 %v2445, 0.0
        %v2451 = vpack.c.bf16 %v2450, %v2450
        %v2452 = vlaneseq
        %v2453 = vshrl.u32 %v2452, 7
        %v2454 = vsub.s32 1, %v2453
        %v2455 = vrot.slane %v304, %v2454
        %2456 = vrot.lane.b32.xlu0 %v2403, 96
        %v2457 = vpop.permute.xlu0 %2456
        %2458 = vrot.lane.b32.xlu0 %v2404, 96
        %v2459 = vpop.permute.xlu0 %2458
        %v2463 = vsel %vm306, %v2451, 0
        %2465 = vmatprep.subr.bf16.mxu0 0
        %2466 = vmatpush1.bf16.msra.mxu0 0
        %2467 = vmatprep.subr.bf16.mxu0 0
        %2468 = vmatpush1.bf16.msra.mxu0 0
        %2469 = vmatprep.subr.bf16.mxu0 0
        %2470 = vmatpush1.bf16.msra.mxu0 0
        %2471 = vmatprep.subr.bf16.mxu0 0
        %2472 = vmatpush1.bf16.msra.mxu0 0
        %2473 = vmatprep.subr.bf16.mxu0 0
        %2474 = vmatpush1.bf16.msra.mxu0 0
        %2475 = vmatprep.subr.bf16.mxu0 0
        %2476 = vmatpush1.bf16.msra.mxu0 0
        %2477 = vmatprep.subr.bf16.mxu0 0
        %2478 = vmatpush1.bf16.msra.mxu0 %v2459
        %2479 = vmatprep.subr.bf16.mxu0 0
        %2480 = vmatpush1.bf16.msra.mxu0 %v2457
        %2481 = vmatprep.subr.bf16.mxu0 0
        %2482 = vmatpush2.bf16.msra.mxu0 0
        %2483 = vmatprep.subr.bf16.mxu0 0
        %2484 = vmatpush2.bf16.msra.mxu0 0
        %2485 = vmatprep.subr.bf16.mxu0 0
        %2486 = vmatpush2.bf16.msra.mxu0 0
        %2487 = vmatprep.subr.bf16.mxu0 0
        %2488 = vmatpush2.bf16.msra.mxu0 0
        %2489 = vmatprep.subr.bf16.mxu0 0
        %2490 = vmatpush2.bf16.msra.mxu0 0
        %2491 = vmatprep.subr.bf16.mxu0 0
        %2492 = vmatpush2.bf16.msra.mxu0 0
        %2493 = vmatprep.subr.bf16.mxu0 0
        %2494 = vmatpush2.bf16.msra.mxu0 0
        %2495 = vmatprep.subr.bf16.mxu0 0
        %2496 = vmatpush2.bf16.msra.mxu0 0
        %2497 = vmatprep.mubr.bf16.mxu0 0
        %2498 = vmatmul.mubr.bf16.gmra.mxu0 %v2463
        %v2499 = vpop.f32.mrf.mxu0
        %v2500 = vadd.f32 %v2455, %v2499
        %v2501 = vpop.f32.mrf.mxu0
        %v2502 = vpop.f32.mrf.mxu0
        %v2503 = vpop.f32.mrf.mxu0
        %2504 = vdwg.mxu0
        %v2505 = vadd.f32 %v2500, %v2362
        %2506 = vst.msk [vmem:[#allocation2] sm:$0xff] %vm306, %v2505
        %s2507 = scalar_lea.vmem [#allocation2], 8
        %v2508 = vld [vmem:[%s2507] sm:$0xff]
        %v2509 = vsel %vm306, %v2508, 0.0
        %2510 = vadd.xlane.f32.xlu0 %v2509
        %v2511 = vpop.xlane.xlu0 %2510
        %v2512 = vmul.f32 %v2511, %v310
        %v2513 = vsub.f32 %v2508, %v2512
        %v2514 = vmul.f32 %v2513, %v2513
        %v2515 = vsel %vm306, %v2514, 0.0
        %2516 = vadd.xlane.f32.xlu0 %v2515
        %v2517 = vpop.xlane.xlu0 %2516
        %v2518 = vmul.f32 %v2517, %v310
        %v2519 = vadd.f32 %v2518, 1e-05
        %v2520 = vrsqrt.pop %v2519
        %v2521 = vmul.f32 %v2513, %v2520
        %v2522 = vmul.f32 %v2521, %v324
        %v2523 = vadd.f32 %v2522, %v329
        %v2524 = vpack.c.bf16 %v2523, %v2523
        %v2525 = vld [vmem:[#allocation3] sm:$0xf]
        %v2526 = vld [vmem:[#allocation3 + $0x8] sm:$0xf]
        %v2527 = vld [vmem:[#allocation3 + $0x10] sm:$0xf]
        %v2528 = vld [vmem:[#allocation3 + $0x18] sm:$0xf]
        %v2533 = vunpack.c.l.b16 %v2525
        %v2534 = vunpack.c.l.b16 %v2526
        %v2535 = vunpack.c.l.b16 %v2527
        %v2536 = vunpack.c.l.b16 %v2528
        %v2537 = vpack.c.b16 %v2534, %v2533
        %v2538 = vpack.c.b16 %v2536, %v2535
        %v2542 = vsel %vm306, %v2524, 0
        %2544 = vmatprep.subr.bf16.mxu0 0
        %2545 = vmatpush1.bf16.msra.mxu0 0
        %2546 = vmatprep.subr.bf16.mxu0 0
        %2547 = vmatpush1.bf16.msra.mxu0 0
        %2548 = vmatprep.subr.bf16.mxu0 0
        %2549 = vmatpush1.bf16.msra.mxu0 0
        %2550 = vmatprep.subr.bf16.mxu0 0
        %2551 = vmatpush1.bf16.msra.mxu0 0
        %2552 = vmatprep.subr.bf16.mxu0 0
        %2553 = vmatpush1.bf16.msra.mxu0 0
        %2554 = vmatprep.subr.bf16.mxu0 0
        %2555 = vmatpush1.bf16.msra.mxu0 0
        %2556 = vmatprep.subr.bf16.mxu0 0
        %2557 = vmatpush1.bf16.msra.mxu0 %v2538
        %2558 = vmatprep.subr.bf16.mxu0 0
        %2559 = vmatpush1.bf16.msra.mxu0 %v2537
        %2560 = vmatprep.subr.bf16.mxu0 0
        %2561 = vmatpush2.bf16.msra.mxu0 0
        %2562 = vmatprep.subr.bf16.mxu0 0
        %2563 = vmatpush2.bf16.msra.mxu0 0
        %2564 = vmatprep.subr.bf16.mxu0 0
        %2565 = vmatpush2.bf16.msra.mxu0 0
        %2566 = vmatprep.subr.bf16.mxu0 0
        %2567 = vmatpush2.bf16.msra.mxu0 0
        %2568 = vmatprep.subr.bf16.mxu0 0
        %2569 = vmatpush2.bf16.msra.mxu0 0
        %2570 = vmatprep.subr.bf16.mxu0 0
        %2571 = vmatpush2.bf16.msra.mxu0 0
        %2572 = vmatprep.subr.bf16.mxu0 0
        %2573 = vmatpush2.bf16.msra.mxu0 0
        %2574 = vmatprep.subr.bf16.mxu0 0
        %2575 = vmatpush2.bf16.msra.mxu0 0
        %2576 = vmatprep.mubr.bf16.mxu0 0
        %2577 = vmatmul.mubr.bf16.gmra.mxu0 %v2542
        %v2578 = vpop.f32.mrf.mxu0
        %v2579 = vadd.f32 0.0, %v2578
        %v2580 = vpop.f32.mrf.mxu0
        %v2581 = vpop.f32.mrf.mxu0
        %v2582 = vpop.f32.mrf.mxu0
        %2583 = vdwg.mxu0
        %v2584 = vadd.f32 %v2579, %v394
        %v2585 = vmul.f32 %v2584, 0.17677669
        %v2586 = vadd.f32 %v2579, %v403
        %v2587 = vadd.f32 %v2579, %v412
        %2589 = vrot.lane.b32.xlu0 %v2585, 120
        %v2590 = vpop.permute.xlu0 %2589
        %2592 = vrot.lane.b32.xlu0 %v2585, 112
        %v2593 = vpop.permute.xlu0 %2592
        %2595 = vrot.lane.b32.xlu0 %v2585, 104
        %v2596 = vpop.permute.xlu0 %2595
        %v2598 = vcombine.low %v2585, %v2593
        %v2599 = vcombine.high %v2585, %v2593
        %v2601 = vunpack.c.l.s4 1983009808
        %v2602 = vunpack.c.0.s8 %v2601
        %v2603 = vlaneseq
        %v2604 = vshrl.u32 %v2603, 7
        %v2605 = vsub.s32 %v2602, %v2604
        %v2606 = vrot.slane %v2598, %v2605
        %v2608 = vunpack.c.l.s4 1983009808
        %v2609 = vunpack.c.0.s8 %v2608
        %v2610 = vlaneseq
        %v2611 = vshrl.u32 %v2610, 7
        %v2612 = vsub.s32 %v2609, %v2611
        %v2613 = vrot.slane %v2599, %v2612
        %v2614 = vcombine.low %v2590, %v2596
        %v2615 = vcombine.high %v2590, %v2596
        %v2617 = vunpack.c.l.s4 1983009808
        %v2618 = vunpack.c.0.s8 %v2617
        %v2619 = vlaneseq
        %v2620 = vshrl.u32 %v2619, 7
        %v2621 = vsub.s32 %v2618, %v2620
        %v2622 = vrot.slane %v2614, %v2621
        %v2624 = vunpack.c.l.s4 1983009808
        %v2625 = vunpack.c.0.s8 %v2624
        %v2626 = vlaneseq
        %v2627 = vshrl.u32 %v2626, 7
        %v2628 = vsub.s32 %v2625, %v2627
        %v2629 = vrot.slane %v2615, %v2628
        %v2630 = vcombine.low %v2606, %v2622
        %v2631 = vcombine.high %v2606, %v2622
        %v2633 = vunpack.c.l.s4 1934713408
        %v2634 = vunpack.c.0.s8 %v2633
        %v2635 = vlaneseq
        %v2636 = vshrl.u32 %v2635, 7
        %v2637 = vsub.s32 %v2634, %v2636
        %v2638 = vrot.slane %v2630, %v2637
        %v2640 = vunpack.c.l.s4 1934713408
        %v2641 = vunpack.c.0.s8 %v2640
        %v2642 = vlaneseq
        %v2643 = vshrl.u32 %v2642, 7
        %v2644 = vsub.s32 %v2641, %v2643
        %v2645 = vrot.slane %v2631, %v2644
        %v2646 = vcombine.low %v2613, %v2629
        %v2647 = vcombine.high %v2613, %v2629
        %v2649 = vunpack.c.l.s4 1934713408
        %v2650 = vunpack.c.0.s8 %v2649
        %v2651 = vlaneseq
        %v2652 = vshrl.u32 %v2651, 7
        %v2653 = vsub.s32 %v2650, %v2652
        %v2654 = vrot.slane %v2646, %v2653
        %v2656 = vunpack.c.l.s4 1934713408
        %v2657 = vunpack.c.0.s8 %v2656
        %v2658 = vlaneseq
        %v2659 = vshrl.u32 %v2658, 7
        %v2660 = vsub.s32 %v2657, %v2659
        %v2661 = vrot.slane %v2647, %v2660
        %v2662 = vcombine.high %v2638, 0.0
        %v2663 = vcombine.high %v2645, 0.0
        %v2664 = vcombine.high %v2654, 0.0
        %v2665 = vcombine.high %v2661, 0.0
        %v2666 = vpack.c.bf16 %v2638, %v2638
        %v2667 = vpack.c.bf16 %v2662, %v2662
        %v2668 = vpack.c.bf16 %v2645, %v2645
        %v2669 = vpack.c.bf16 %v2663, %v2663
        %v2670 = vpack.c.bf16 %v2654, %v2654
        %v2671 = vpack.c.bf16 %v2664, %v2664
        %v2672 = vpack.c.bf16 %v2661, %v2661
        %v2673 = vpack.c.bf16 %v2665, %v2665
        %2675 = vrot.lane.b32.xlu0 %v2586, 120
        %v2676 = vpop.permute.xlu0 %2675
        %2677 = vrot.lane.b32.xlu0 %v2586, 112
        %v2678 = vpop.permute.xlu0 %2677
        %2679 = vrot.lane.b32.xlu0 %v2586, 104
        %v2680 = vpop.permute.xlu0 %2679
        %2681 = vrot.lane.b32.xlu0 %v2586, 96
        %v2682 = vpop.permute.xlu0 %2681
        %2683 = vrot.lane.b32.xlu0 %v2676, 96
        %v2684 = vpop.permute.xlu0 %2683
        %2685 = vrot.lane.b32.xlu0 %v2678, 96
        %v2686 = vpop.permute.xlu0 %2685
        %2687 = vrot.lane.b32.xlu0 %v2680, 96
        %v2688 = vpop.permute.xlu0 %2687
        %v2693 = vcombine.low %v2682, %v2686
        %v2694 = vcombine.high %v2682, %v2686
        %v2696 = vunpack.c.l.s4 1983009808
        %v2697 = vunpack.c.0.s8 %v2696
        %v2698 = vlaneseq
        %v2699 = vshrl.u32 %v2698, 7
        %v2700 = vsub.s32 %v2697, %v2699
        %v2701 = vrot.slane %v2693, %v2700
        %v2703 = vunpack.c.l.s4 1983009808
        %v2704 = vunpack.c.0.s8 %v2703
        %v2705 = vlaneseq
        %v2706 = vshrl.u32 %v2705, 7
        %v2707 = vsub.s32 %v2704, %v2706
        %v2708 = vrot.slane %v2694, %v2707
        %v2709 = vcombine.low %v2684, %v2688
        %v2710 = vcombine.high %v2684, %v2688
        %v2712 = vunpack.c.l.s4 1983009808
        %v2713 = vunpack.c.0.s8 %v2712
        %v2714 = vlaneseq
        %v2715 = vshrl.u32 %v2714, 7
        %v2716 = vsub.s32 %v2713, %v2715
        %v2717 = vrot.slane %v2709, %v2716
        %v2719 = vunpack.c.l.s4 1983009808
        %v2720 = vunpack.c.0.s8 %v2719
        %v2721 = vlaneseq
        %v2722 = vshrl.u32 %v2721, 7
        %v2723 = vsub.s32 %v2720, %v2722
        %v2724 = vrot.slane %v2710, %v2723
        %v2725 = vcombine.low %v2701, %v2717
        %v2726 = vcombine.high %v2701, %v2717
        %v2728 = vunpack.c.l.s4 1934713408
        %v2729 = vunpack.c.0.s8 %v2728
        %v2730 = vlaneseq
        %v2731 = vshrl.u32 %v2730, 7
        %v2732 = vsub.s32 %v2729, %v2731
        %v2733 = vrot.slane %v2725, %v2732
        %v2735 = vunpack.c.l.s4 1934713408
        %v2736 = vunpack.c.0.s8 %v2735
        %v2737 = vlaneseq
        %v2738 = vshrl.u32 %v2737, 7
        %v2739 = vsub.s32 %v2736, %v2738
        %v2740 = vrot.slane %v2726, %v2739
        %v2741 = vcombine.low %v2708, %v2724
        %v2742 = vcombine.high %v2708, %v2724
        %v2744 = vunpack.c.l.s4 1934713408
        %v2745 = vunpack.c.0.s8 %v2744
        %v2746 = vlaneseq
        %v2747 = vshrl.u32 %v2746, 7
        %v2748 = vsub.s32 %v2745, %v2747
        %v2749 = vrot.slane %v2741, %v2748
        %v2751 = vunpack.c.l.s4 1934713408
        %v2752 = vunpack.c.0.s8 %v2751
        %v2753 = vlaneseq
        %v2754 = vshrl.u32 %v2753, 7
        %v2755 = vsub.s32 %v2752, %v2754
        %v2756 = vrot.slane %v2742, %v2755
        %v2757 = vcombine.high %v2733, 0.0
        %v2758 = vcombine.high %v2740, 0.0
        %v2759 = vcombine.high %v2749, 0.0
        %v2760 = vcombine.high %v2756, 0.0
        %v2761 = vpack.c.bf16 %v2733, %v2733
        %v2762 = vpack.c.bf16 %v2757, %v2757
        %v2763 = vpack.c.bf16 %v2740, %v2740
        %v2764 = vpack.c.bf16 %v2758, %v2758
        %v2765 = vpack.c.bf16 %v2749, %v2749
        %v2766 = vpack.c.bf16 %v2759, %v2759
        %v2767 = vpack.c.bf16 %v2756, %v2756
        %v2768 = vpack.c.bf16 %v2760, %v2760
        %2770 = vrot.lane.b32.xlu0 %v2587, 120
        %v2771 = vpop.permute.xlu0 %2770
        %2772 = vrot.lane.b32.xlu0 %v2587, 112
        %v2773 = vpop.permute.xlu0 %2772
        %2774 = vrot.lane.b32.xlu0 %v2587, 104
        %v2775 = vpop.permute.xlu0 %2774
        %2776 = vrot.lane.b32.xlu0 %v2587, 64
        %v2777 = vpop.permute.xlu0 %2776
        %2778 = vrot.lane.b32.xlu0 %v2771, 64
        %v2779 = vpop.permute.xlu0 %2778
        %2780 = vrot.lane.b32.xlu0 %v2773, 64
        %v2781 = vpop.permute.xlu0 %2780
        %2782 = vrot.lane.b32.xlu0 %v2775, 64
        %v2783 = vpop.permute.xlu0 %2782
        %v2788 = vcombine.low %v2777, %v2781
        %v2789 = vcombine.high %v2777, %v2781
        %v2791 = vunpack.c.l.s4 1983009808
        %v2792 = vunpack.c.0.s8 %v2791
        %v2793 = vlaneseq
        %v2794 = vshrl.u32 %v2793, 7
        %v2795 = vsub.s32 %v2792, %v2794
        %v2796 = vrot.slane %v2788, %v2795
        %v2798 = vunpack.c.l.s4 1983009808
        %v2799 = vunpack.c.0.s8 %v2798
        %v2800 = vlaneseq
        %v2801 = vshrl.u32 %v2800, 7
        %v2802 = vsub.s32 %v2799, %v2801
        %v2803 = vrot.slane %v2789, %v2802
        %v2804 = vcombine.low %v2779, %v2783
        %v2805 = vcombine.high %v2779, %v2783
        %v2807 = vunpack.c.l.s4 1983009808
        %v2808 = vunpack.c.0.s8 %v2807
        %v2809 = vlaneseq
        %v2810 = vshrl.u32 %v2809, 7
        %v2811 = vsub.s32 %v2808, %v2810
        %v2812 = vrot.slane %v2804, %v2811
        %v2814 = vunpack.c.l.s4 1983009808
        %v2815 = vunpack.c.0.s8 %v2814
        %v2816 = vlaneseq
        %v2817 = vshrl.u32 %v2816, 7
        %v2818 = vsub.s32 %v2815, %v2817
        %v2819 = vrot.slane %v2805, %v2818
        %v2820 = vcombine.low %v2796, %v2812
        %v2821 = vcombine.high %v2796, %v2812
        %v2823 = vunpack.c.l.s4 1934713408
        %v2824 = vunpack.c.0.s8 %v2823
        %v2825 = vlaneseq
        %v2826 = vshrl.u32 %v2825, 7
        %v2827 = vsub.s32 %v2824, %v2826
        %v2828 = vrot.slane %v2820, %v2827
        %v2830 = vunpack.c.l.s4 1934713408
        %v2831 = vunpack.c.0.s8 %v2830
        %v2832 = vlaneseq
        %v2833 = vshrl.u32 %v2832, 7
        %v2834 = vsub.s32 %v2831, %v2833
        %v2835 = vrot.slane %v2821, %v2834
        %v2836 = vcombine.low %v2803, %v2819
        %v2837 = vcombine.high %v2803, %v2819
        %v2839 = vunpack.c.l.s4 1934713408
        %v2840 = vunpack.c.0.s8 %v2839
        %v2841 = vlaneseq
        %v2842 = vshrl.u32 %v2841, 7
        %v2843 = vsub.s32 %v2840, %v2842
        %v2844 = vrot.slane %v2836, %v2843
        %v2846 = vunpack.c.l.s4 1934713408
        %v2847 = vunpack.c.0.s8 %v2846
        %v2848 = vlaneseq
        %v2849 = vshrl.u32 %v2848, 7
        %v2850 = vsub.s32 %v2847, %v2849
        %v2851 = vrot.slane %v2837, %v2850
        %v2852 = vcombine.high %v2828, 0.0
        %v2853 = vcombine.high %v2835, 0.0
        %v2854 = vcombine.high %v2844, 0.0
        %v2855 = vcombine.high %v2851, 0.0
        %v2856 = vpack.c.bf16 %v2828, %v2828
        %v2857 = vpack.c.bf16 %v2852, %v2852
        %v2858 = vpack.c.bf16 %v2835, %v2835
        %v2859 = vpack.c.bf16 %v2853, %v2853
        %v2860 = vpack.c.bf16 %v2844, %v2844
        %v2861 = vpack.c.bf16 %v2854, %v2854
        %v2862 = vpack.c.bf16 %v2851, %v2851
        %v2863 = vpack.c.bf16 %v2855, %v2855
        %v2864 = vcombine.low %v2666, %v2670
        %v2866 = vunpack.c.l.s4 1983009808
        %v2867 = vunpack.c.0.s8 %v2866
        %v2868 = vlaneseq
        %v2869 = vshrl.u32 %v2868, 7
        %v2870 = vsub.s32 %v2867, %v2869
        %v2871 = vrot.slane %v2864, %v2870
        %v2872 = vcombine.low %v2668, %v2672
        %v2874 = vunpack.c.l.s4 1983009808
        %v2875 = vunpack.c.0.s8 %v2874
        %v2876 = vlaneseq
        %v2877 = vshrl.u32 %v2876, 7
        %v2878 = vsub.s32 %v2875, %v2877
        %v2879 = vrot.slane %v2872, %v2878
        %v2880 = vcombine.low %v2871, %v2879
        %v2882 = vunpack.c.l.s4 1934713408
        %v2883 = vunpack.c.0.s8 %v2882
        %v2884 = vlaneseq
        %v2885 = vshrl.u32 %v2884, 7
        %v2886 = vsub.s32 %v2883, %v2885
        %v2887 = vrot.slane %v2880, %v2886
        %v2888 = vcombine.high %v2887, 0
        %v2889 = vcombine.low %v2667, %v2671
        %v2891 = vunpack.c.l.s4 1983009808
        %v2892 = vunpack.c.0.s8 %v2891
        %v2893 = vlaneseq
        %v2894 = vshrl.u32 %v2893, 7
        %v2895 = vsub.s32 %v2892, %v2894
        %v2896 = vrot.slane %v2889, %v2895
        %v2897 = vcombine.low %v2669, %v2673
        %v2899 = vunpack.c.l.s4 1983009808
        %v2900 = vunpack.c.0.s8 %v2899
        %v2901 = vlaneseq
        %v2902 = vshrl.u32 %v2901, 7
        %v2903 = vsub.s32 %v2900, %v2902
        %v2904 = vrot.slane %v2897, %v2903
        %v2905 = vcombine.low %v2896, %v2904
        %v2907 = vunpack.c.l.s4 1934713408
        %v2908 = vunpack.c.0.s8 %v2907
        %v2909 = vlaneseq
        %v2910 = vshrl.u32 %v2909, 7
        %v2911 = vsub.s32 %v2908, %v2910
        %v2912 = vrot.slane %v2905, %v2911
        %v2913 = vcombine.high %v2912, 0
        %v2916 = vpack.i.b16 %v2912, %v2887
        %v2917 = vshrl.u32 %v2887, 16
        %v2918 = vshrl.u32 %v2912, 16
        %v2919 = vpack.i.b16 %v2918, %v2917
        %v2922 = vpack.i.b16 %v2913, %v2888
        %v2923 = vshrl.u32 %v2888, 16
        %v2924 = vshrl.u32 %v2913, 16
        %v2925 = vpack.i.b16 %v2924, %v2923
        %2926 = vxpose.xlu0.c.b16.start [1/8] %v2761, 128
        %2927 = vxpose.xlu0.c.b16.cont [2/8] 0, 128
        %2928 = vxpose.xlu0.c.b16.cont [3/8] 0, 128
        %2929 = vxpose.xlu0.c.b16.cont [4/8] 0, 128
        %2930 = vxpose.xlu0.c.b16.cont [5/8] 0, 128
        %2931 = vxpose.xlu0.c.b16.cont [6/8] 0, 128
        %2932 = vxpose.xlu0.c.b16.cont [7/8] 0, 128
        %2933 = vxpose.xlu0.c.b16.end [8/8] 0, 128
        %v2934 = vpop.trf.xlu0
        %v2935 = vpop.trf.xlu0
        %v2936 = vpop.trf.xlu0
        %v2937 = vpop.trf.xlu0
        %v2938 = vpop.trf.xlu0
        %v2939 = vpop.trf.xlu0
        %v2940 = vpop.trf.xlu0
        %v2941 = vpop.trf.xlu0
        %2942 = vxpose.xlu0.c.b16.start [1/8] %v2762, 128
        %2943 = vxpose.xlu0.c.b16.cont [2/8] 0, 128
        %2944 = vxpose.xlu0.c.b16.cont [3/8] 0, 128
        %2945 = vxpose.xlu0.c.b16.cont [4/8] 0, 128
        %2946 = vxpose.xlu0.c.b16.cont [5/8] 0, 128
        %2947 = vxpose.xlu0.c.b16.cont [6/8] 0, 128
        %2948 = vxpose.xlu0.c.b16.cont [7/8] 0, 128
        %2949 = vxpose.xlu0.c.b16.end [8/8] 0, 128
        %v2950 = vpop.trf.xlu0
        %v2951 = vpop.trf.xlu0
        %v2952 = vpop.trf.xlu0
        %v2953 = vpop.trf.xlu0
        %v2954 = vpop.trf.xlu0
        %v2955 = vpop.trf.xlu0
        %v2956 = vpop.trf.xlu0
        %v2957 = vpop.trf.xlu0
        %2958 = vxpose.xlu0.c.b16.start [1/8] %v2763, 128
        %2959 = vxpose.xlu0.c.b16.cont [2/8] 0, 128
        %2960 = vxpose.xlu0.c.b16.cont [3/8] 0, 128
        %2961 = vxpose.xlu0.c.b16.cont [4/8] 0, 128
        %2962 = vxpose.xlu0.c.b16.cont [5/8] 0, 128
        %2963 = vxpose.xlu0.c.b16.cont [6/8] 0, 128
        %2964 = vxpose.xlu0.c.b16.cont [7/8] 0, 128
        %2965 = vxpose.xlu0.c.b16.end [8/8] 0, 128
        %v2966 = vpop.trf.xlu0
        %v2967 = vpop.trf.xlu0
        %v2968 = vpop.trf.xlu0
        %v2969 = vpop.trf.xlu0
        %v2970 = vpop.trf.xlu0
        %v2971 = vpop.trf.xlu0
        %v2972 = vpop.trf.xlu0
        %v2973 = vpop.trf.xlu0
        %2974 = vxpose.xlu0.c.b16.start [1/8] %v2764, 128
        %2975 = vxpose.xlu0.c.b16.cont [2/8] 0, 128
        %2976 = vxpose.xlu0.c.b16.cont [3/8] 0, 128
        %2977 = vxpose.xlu0.c.b16.cont [4/8] 0, 128
        %2978 = vxpose.xlu0.c.b16.cont [5/8] 0, 128
        %2979 = vxpose.xlu0.c.b16.cont [6/8] 0, 128
        %2980 = vxpose.xlu0.c.b16.cont [7/8] 0, 128
        %2981 = vxpose.xlu0.c.b16.end [8/8] 0, 128
        %v2982 = vpop.trf.xlu0
        %v2983 = vpop.trf.xlu0
        %v2984 = vpop.trf.xlu0
        %v2985 = vpop.trf.xlu0
        %v2986 = vpop.trf.xlu0
        %v2987 = vpop.trf.xlu0
        %v2988 = vpop.trf.xlu0
        %v2989 = vpop.trf.xlu0
        %2990 = vxpose.xlu0.c.b16.start [1/8] %v2765, 128
        %2991 = vxpose.xlu0.c.b16.cont [2/8] 0, 128
        %2992 = vxpose.xlu0.c.b16.cont [3/8] 0, 128
        %2993 = vxpose.xlu0.c.b16.cont [4/8] 0, 128
        %2994 = vxpose.xlu0.c.b16.cont [5/8] 0, 128
        %2995 = vxpose.xlu0.c.b16.cont [6/8] 0, 128
        %2996 = vxpose.xlu0.c.b16.cont [7/8] 0, 128
        %2997 = vxpose.xlu0.c.b16.end [8/8] 0, 128
        %v2998 = vpop.trf.xlu0
        %v2999 = vpop.trf.xlu0
        %v3000 = vpop.trf.xlu0
        %v3001 = vpop.trf.xlu0
        %v3002 = vpop.trf.xlu0
        %v3003 = vpop.trf.xlu0
        %v3004 = vpop.trf.xlu0
        %v3005 = vpop.trf.xlu0
        %3006 = vxpose.xlu0.c.b16.start [1/8] %v2766, 128
        %3007 = vxpose.xlu0.c.b16.cont [2/8] 0, 128
        %3008 = vxpose.xlu0.c.b16.cont [3/8] 0, 128
        %3009 = vxpose.xlu0.c.b16.cont [4/8] 0, 128
        %3010 = vxpose.xlu0.c.b16.cont [5/8] 0, 128
        %3011 = vxpose.xlu0.c.b16.cont [6/8] 0, 128
        %3012 = vxpose.xlu0.c.b16.cont [7/8] 0, 128
        %3013 = vxpose.xlu0.c.b16.end [8/8] 0, 128
        %v3014 = vpop.trf.xlu0
        %v3015 = vpop.trf.xlu0
        %v3016 = vpop.trf.xlu0
        %v3017 = vpop.trf.xlu0
        %v3018 = vpop.trf.xlu0
        %v3019 = vpop.trf.xlu0
        %v3020 = vpop.trf.xlu0
        %v3021 = vpop.trf.xlu0
        %3022 = vxpose.xlu0.c.b16.start [1/8] %v2767, 128
        %3023 = vxpose.xlu0.c.b16.cont [2/8] 0, 128
        %3024 = vxpose.xlu0.c.b16.cont [3/8] 0, 128
        %3025 = vxpose.xlu0.c.b16.cont [4/8] 0, 128
        %3026 = vxpose.xlu0.c.b16.cont [5/8] 0, 128
        %3027 = vxpose.xlu0.c.b16.cont [6/8] 0, 128
        %3028 = vxpose.xlu0.c.b16.cont [7/8] 0, 128
        %3029 = vxpose.xlu0.c.b16.end [8/8] 0, 128
        %v3030 = vpop.trf.xlu0
        %v3031 = vpop.trf.xlu0
        %v3032 = vpop.trf.xlu0
        %v3033 = vpop.trf.xlu0
        %v3034 = vpop.trf.xlu0
        %v3035 = vpop.trf.xlu0
        %v3036 = vpop.trf.xlu0
        %v3037 = vpop.trf.xlu0
        %3038 = vxpose.xlu0.c.b16.start [1/8] %v2768, 128
        %3039 = vxpose.xlu0.c.b16.cont [2/8] 0, 128
        %3040 = vxpose.xlu0.c.b16.cont [3/8] 0, 128
        %3041 = vxpose.xlu0.c.b16.cont [4/8] 0, 128
        %3042 = vxpose.xlu0.c.b16.cont [5/8] 0, 128
        %3043 = vxpose.xlu0.c.b16.cont [6/8] 0, 128
        %3044 = vxpose.xlu0.c.b16.cont [7/8] 0, 128
        %3045 = vxpose.xlu0.c.b16.end [8/8] 0, 128
        %v3046 = vpop.trf.xlu0
        %v3047 = vpop.trf.xlu0
        %v3048 = vpop.trf.xlu0
        %v3049 = vpop.trf.xlu0
        %v3050 = vpop.trf.xlu0
        %v3051 = vpop.trf.xlu0
        %v3052 = vpop.trf.xlu0
        %v3053 = vpop.trf.xlu0
        %v3054 = vcombine.low %v2934, %v2998
        %v3056 = vunpack.c.l.s4 1983009808
        %v3057 = vunpack.c.0.s8 %v3056
        %v3058 = vlaneseq
        %v3059 = vshrl.u32 %v3058, 7
        %v3060 = vsub.s32 %v3057, %v3059
        %v3061 = vrot.slane %v3054, %v3060
        %v3062 = vcombine.low %v2966, %v3030
        %v3064 = vunpack.c.l.s4 1983009808
        %v3065 = vunpack.c.0.s8 %v3064
        %v3066 = vlaneseq
        %v3067 = vshrl.u32 %v3066, 7
        %v3068 = vsub.s32 %v3065, %v3067
        %v3069 = vrot.slane %v3062, %v3068
        %v3070 = vcombine.low %v3061, %v3069
        %v3071 = vcombine.high %v3061, %v3069
        %v3073 = vunpack.c.l.s4 1934713408
        %v3074 = vunpack.c.0.s8 %v3073
        %v3075 = vlaneseq
        %v3076 = vshrl.u32 %v3075, 7
        %v3077 = vsub.s32 %v3074, %v3076
        %v3078 = vrot.slane %v3070, %v3077
        %v3080 = vunpack.c.l.s4 1934713408
        %v3081 = vunpack.c.0.s8 %v3080
        %v3082 = vlaneseq
        %v3083 = vshrl.u32 %v3082, 7
        %v3084 = vsub.s32 %v3081, %v3083
        %v3085 = vrot.slane %v3071, %v3084
        %v3086 = vcombine.high %v3078, 0
        %v3087 = vcombine.high %v3085, 0
        %v3088 = vcombine.low %v2950, %v3014
        %v3090 = vunpack.c.l.s4 1983009808
        %v3091 = vunpack.c.0.s8 %v3090
        %v3092 = vlaneseq
        %v3093 = vshrl.u32 %v3092, 7
        %v3094 = vsub.s32 %v3091, %v3093
        %v3095 = vrot.slane %v3088, %v3094
        %v3096 = vcombine.low %v2982, %v3046
        %v3098 = vunpack.c.l.s4 1983009808
        %v3099 = vunpack.c.0.s8 %v3098
        %v3100 = vlaneseq
        %v3101 = vshrl.u32 %v3100, 7
        %v3102 = vsub.s32 %v3099, %v3101
        %v3103 = vrot.slane %v3096, %v3102
        %v3104 = vcombine.low %v3095, %v3103
        %v3105 = vcombine.high %v3095, %v3103
        %v3107 = vunpack.c.l.s4 1934713408
        %v3108 = vunpack.c.0.s8 %v3107
        %v3109 = vlaneseq
        %v3110 = vshrl.u32 %v3109, 7
        %v3111 = vsub.s32 %v3108, %v3110
        %v3112 = vrot.slane %v3104, %v3111
        %v3114 = vunpack.c.l.s4 1934713408
        %v3115 = vunpack.c.0.s8 %v3114
        %v3116 = vlaneseq
        %v3117 = vshrl.u32 %v3116, 7
        %v3118 = vsub.s32 %v3115, %v3117
        %v3119 = vrot.slane %v3105, %v3118
        %v3120 = vcombine.high %v3112, 0
        %v3121 = vcombine.high %v3119, 0
        %v3124 = vpack.i.b16 %v3112, %v3078
        %v3126 = vshrl.u32 %v3078, 16
        %v3127 = vshrl.u32 %v3112, 16
        %v3128 = vpack.i.b16 %v3127, %v3126
        %v3132 = vpack.i.b16 %v3120, %v3086
        %v3134 = vshrl.u32 %v3086, 16
        %v3135 = vshrl.u32 %v3120, 16
        %v3136 = vpack.i.b16 %v3135, %v3134
        %v3140 = vpack.i.b16 %v3119, %v3085
        %v3142 = vshrl.u32 %v3085, 16
        %v3143 = vshrl.u32 %v3119, 16
        %v3144 = vpack.i.b16 %v3143, %v3142
        %v3148 = vpack.i.b16 %v3121, %v3087
        %v3150 = vshrl.u32 %v3087, 16
        %v3151 = vshrl.u32 %v3121, 16
        %v3152 = vpack.i.b16 %v3151, %v3150
        %3154 = vxpose.xlu0.c.b16.start [1/8] %v3124, 128
        %3155 = vxpose.xlu0.c.b16.cont [2/8] 0, 128
        %3156 = vxpose.xlu0.c.b16.cont [3/8] 0, 128
        %3157 = vxpose.xlu0.c.b16.cont [4/8] 0, 128
        %3158 = vxpose.xlu0.c.b16.cont [5/8] 0, 128
        %3159 = vxpose.xlu0.c.b16.cont [6/8] 0, 128
        %3160 = vxpose.xlu0.c.b16.cont [7/8] 0, 128
        %3161 = vxpose.xlu0.c.b16.end [8/8] 0, 128
        %v3162 = vpop.trf.xlu0
        %v3163 = vpop.trf.xlu0
        %v3164 = vpop.trf.xlu0
        %v3165 = vpop.trf.xlu0
        %v3166 = vpop.trf.xlu0
        %v3167 = vpop.trf.xlu0
        %v3168 = vpop.trf.xlu0
        %v3169 = vpop.trf.xlu0
        %3170 = vxpose.xlu0.c.b16.start [1/8] %v3128, 128
        %3171 = vxpose.xlu0.c.b16.cont [2/8] 0, 128
        %3172 = vxpose.xlu0.c.b16.cont [3/8] 0, 128
        %3173 = vxpose.xlu0.c.b16.cont [4/8] 0, 128
        %3174 = vxpose.xlu0.c.b16.cont [5/8] 0, 128
        %3175 = vxpose.xlu0.c.b16.cont [6/8] 0, 128
        %3176 = vxpose.xlu0.c.b16.cont [7/8] 0, 128
        %3177 = vxpose.xlu0.c.b16.end [8/8] 0, 128
        %v3178 = vpop.trf.xlu0
        %v3179 = vpop.trf.xlu0
        %v3180 = vpop.trf.xlu0
        %v3181 = vpop.trf.xlu0
        %v3182 = vpop.trf.xlu0
        %v3183 = vpop.trf.xlu0
        %v3184 = vpop.trf.xlu0
        %v3185 = vpop.trf.xlu0
        %3186 = vxpose.xlu0.c.b16.start [1/8] %v3132, 128
        %3187 = vxpose.xlu0.c.b16.cont [2/8] 0, 128
        %3188 = vxpose.xlu0.c.b16.cont [3/8] 0, 128
        %3189 = vxpose.xlu0.c.b16.cont [4/8] 0, 128
        %3190 = vxpose.xlu0.c.b16.cont [5/8] 0, 128
        %3191 = vxpose.xlu0.c.b16.cont [6/8] 0, 128
        %3192 = vxpose.xlu0.c.b16.cont [7/8] 0, 128
        %3193 = vxpose.xlu0.c.b16.end [8/8] 0, 128
        %v3194 = vpop.trf.xlu0
        %v3195 = vpop.trf.xlu0
        %v3196 = vpop.trf.xlu0
        %v3197 = vpop.trf.xlu0
        %v3198 = vpop.trf.xlu0
        %v3199 = vpop.trf.xlu0
        %v3200 = vpop.trf.xlu0
        %v3201 = vpop.trf.xlu0
        %3202 = vxpose.xlu0.c.b16.start [1/8] %v3136, 128
        %3203 = vxpose.xlu0.c.b16.cont [2/8] 0, 128
        %3204 = vxpose.xlu0.c.b16.cont [3/8] 0, 128
        %3205 = vxpose.xlu0.c.b16.cont [4/8] 0, 128
        %3206 = vxpose.xlu0.c.b16.cont [5/8] 0, 128
        %3207 = vxpose.xlu0.c.b16.cont [6/8] 0, 128
        %3208 = vxpose.xlu0.c.b16.cont [7/8] 0, 128
        %3209 = vxpose.xlu0.c.b16.end [8/8] 0, 128
        %v3210 = vpop.trf.xlu0
        %v3211 = vpop.trf.xlu0
        %v3212 = vpop.trf.xlu0
        %v3213 = vpop.trf.xlu0
        %v3214 = vpop.trf.xlu0
        %v3215 = vpop.trf.xlu0
        %v3216 = vpop.trf.xlu0
        %v3217 = vpop.trf.xlu0
        %3218 = vxpose.xlu0.c.b16.start [1/8] %v3140, 128
        %3219 = vxpose.xlu0.c.b16.cont [2/8] 0, 128
        %3220 = vxpose.xlu0.c.b16.cont [3/8] 0, 128
        %3221 = vxpose.xlu0.c.b16.cont [4/8] 0, 128
        %3222 = vxpose.xlu0.c.b16.cont [5/8] 0, 128
        %3223 = vxpose.xlu0.c.b16.cont [6/8] 0, 128
        %3224 = vxpose.xlu0.c.b16.cont [7/8] 0, 128
        %3225 = vxpose.xlu0.c.b16.end [8/8] 0, 128
        %v3226 = vpop.trf.xlu0
        %v3227 = vpop.trf.xlu0
        %v3228 = vpop.trf.xlu0
        %v3229 = vpop.trf.xlu0
        %v3230 = vpop.trf.xlu0
        %v3231 = vpop.trf.xlu0
        %v3232 = vpop.trf.xlu0
        %v3233 = vpop.trf.xlu0
        %3234 = vxpose.xlu0.c.b16.start [1/8] %v3144, 128
        %3235 = vxpose.xlu0.c.b16.cont [2/8] 0, 128
        %3236 = vxpose.xlu0.c.b16.cont [3/8] 0, 128
        %3237 = vxpose.xlu0.c.b16.cont [4/8] 0, 128
        %3238 = vxpose.xlu0.c.b16.cont [5/8] 0, 128
        %3239 = vxpose.xlu0.c.b16.cont [6/8] 0, 128
        %3240 = vxpose.xlu0.c.b16.cont [7/8] 0, 128
        %3241 = vxpose.xlu0.c.b16.end [8/8] 0, 128
        %v3242 = vpop.trf.xlu0
        %v3243 = vpop.trf.xlu0
        %v3244 = vpop.trf.xlu0
        %v3245 = vpop.trf.xlu0
        %v3246 = vpop.trf.xlu0
        %v3247 = vpop.trf.xlu0
        %v3248 = vpop.trf.xlu0
        %v3249 = vpop.trf.xlu0
        %3250 = vxpose.xlu0.c.b16.start [1/8] %v3148, 128
        %3251 = vxpose.xlu0.c.b16.cont [2/8] 0, 128
        %3252 = vxpose.xlu0.c.b16.cont [3/8] 0, 128
        %3253 = vxpose.xlu0.c.b16.cont [4/8] 0, 128
        %3254 = vxpose.xlu0.c.b16.cont [5/8] 0, 128
        %3255 = vxpose.xlu0.c.b16.cont [6/8] 0, 128
        %3256 = vxpose.xlu0.c.b16.cont [7/8] 0, 128
        %3257 = vxpose.xlu0.c.b16.end [8/8] 0, 128
        %v3258 = vpop.trf.xlu0
        %v3259 = vpop.trf.xlu0
        %v3260 = vpop.trf.xlu0
        %v3261 = vpop.trf.xlu0
        %v3262 = vpop.trf.xlu0
        %v3263 = vpop.trf.xlu0
        %v3264 = vpop.trf.xlu0
        %v3265 = vpop.trf.xlu0
        %3266 = vxpose.xlu0.c.b16.start [1/8] %v3152, 128
        %3267 = vxpose.xlu0.c.b16.cont [2/8] 0, 128
        %3268 = vxpose.xlu0.c.b16.cont [3/8] 0, 128
        %3269 = vxpose.xlu0.c.b16.cont [4/8] 0, 128
        %3270 = vxpose.xlu0.c.b16.cont [5/8] 0, 128
        %3271 = vxpose.xlu0.c.b16.cont [6/8] 0, 128
        %3272 = vxpose.xlu0.c.b16.cont [7/8] 0, 128
        %3273 = vxpose.xlu0.c.b16.end [8/8] 0, 128
        %v3274 = vpop.trf.xlu0
        %v3275 = vpop.trf.xlu0
        %v3276 = vpop.trf.xlu0
        %v3277 = vpop.trf.xlu0
        %v3278 = vpop.trf.xlu0
        %v3279 = vpop.trf.xlu0
        %v3280 = vpop.trf.xlu0
        %v3281 = vpop.trf.xlu0
        %v3282 = vcombine.low %v3162, %v3226
        %v3284 = vunpack.c.l.s4 1983009808
        %v3285 = vunpack.c.0.s8 %v3284
        %v3286 = vlaneseq
        %v3287 = vshrl.u32 %v3286, 7
        %v3288 = vsub.s32 %v3285, %v3287
        %v3289 = vrot.slane %v3282, %v3288
        %v3290 = vcombine.low %v3194, %v3258
        %v3292 = vunpack.c.l.s4 1983009808
        %v3293 = vunpack.c.0.s8 %v3292
        %v3294 = vlaneseq
        %v3295 = vshrl.u32 %v3294, 7
        %v3296 = vsub.s32 %v3293, %v3295
        %v3297 = vrot.slane %v3290, %v3296
        %v3298 = vcombine.low %v3289, %v3297
        %v3300 = vunpack.c.l.s4 1934713408
        %v3301 = vunpack.c.0.s8 %v3300
        %v3302 = vlaneseq
        %v3303 = vshrl.u32 %v3302, 7
        %v3304 = vsub.s32 %v3301, %v3303
        %v3305 = vrot.slane %v3298, %v3304
        %v3306 = vcombine.high %v3305, 0
        %v3307 = vcombine.low %v3178, %v3242
        %v3309 = vunpack.c.l.s4 1983009808
        %v3310 = vunpack.c.0.s8 %v3309
        %v3311 = vlaneseq
        %v3312 = vshrl.u32 %v3311, 7
        %v3313 = vsub.s32 %v3310, %v3312
        %v3314 = vrot.slane %v3307, %v3313
        %v3315 = vcombine.low %v3210, %v3274
        %v3317 = vunpack.c.l.s4 1983009808
        %v3318 = vunpack.c.0.s8 %v3317
        %v3319 = vlaneseq
        %v3320 = vshrl.u32 %v3319, 7
        %v3321 = vsub.s32 %v3318, %v3320
        %v3322 = vrot.slane %v3315, %v3321
        %v3323 = vcombine.low %v3314, %v3322
        %v3325 = vunpack.c.l.s4 1934713408
        %v3326 = vunpack.c.0.s8 %v3325
        %v3327 = vlaneseq
        %v3328 = vshrl.u32 %v3327, 7
        %v3329 = vsub.s32 %v3326, %v3328
        %v3330 = vrot.slane %v3323, %v3329
        %v3331 = vcombine.high %v3330, 0
        %v3334 = vpack.i.b16 %v3330, %v3305
        %v3335 = vshrl.u32 %v3305, 16
        %v3336 = vshrl.u32 %v3330, 16
        %v3337 = vpack.i.b16 %v3336, %v3335
        %v3340 = vpack.i.b16 %v3331, %v3306
        %v3341 = vshrl.u32 %v3306, 16
        %v3342 = vshrl.u32 %v3331, 16
        %v3343 = vpack.i.b16 %v3342, %v3341
        %v3345 = vsel %vm1171, %v2916, 0
        %v3348 = vsel %vm1175, %v3334, 0
        %3350 = vmatprep.subr.bf16.mxu0 0
        %3351 = vmatpush1.bf16.msra.mxu0 0
        %3352 = vmatprep.subr.bf16.mxu0 0
        %3353 = vmatpush1.bf16.msra.mxu0 0
        %3354 = vmatprep.subr.bf16.mxu0 0
        %3355 = vmatpush1.bf16.msra.mxu0 0
        %3356 = vmatprep.subr.bf16.mxu0 0
        %3357 = vmatpush1.bf16.msra.mxu0 0
        %3358 = vmatprep.subr.bf16.mxu0 0
        %3359 = vmatpush1.bf16.msra.mxu0 0
        %3360 = vmatprep.subr.bf16.mxu0 0
        %3361 = vmatpush1.bf16.msra.mxu0 0
        %3362 = vmatprep.subr.bf16.mxu0 0
        %3363 = vmatpush1.bf16.msra.mxu0 0
        %3364 = vmatprep.subr.bf16.mxu0 0
        %3365 = vmatpush1.bf16.msra.mxu0 %v3348
        %3366 = vmatprep.subr.bf16.mxu0 0
        %3367 = vmatpush2.bf16.msra.mxu0 0
        %3368 = vmatprep.subr.bf16.mxu0 0
        %3369 = vmatpush2.bf16.msra.mxu0 0
        %3370 = vmatprep.subr.bf16.mxu0 0
        %3371 = vmatpush2.bf16.msra.mxu0 0
        %3372 = vmatprep.subr.bf16.mxu0 0
        %3373 = vmatpush2.bf16.msra.mxu0 0
        %3374 = vmatprep.subr.bf16.mxu0 0
        %3375 = vmatpush2.bf16.msra.mxu0 0
        %3376 = vmatprep.subr.bf16.mxu0 0
        %3377 = vmatpush2.bf16.msra.mxu0 0
        %3378 = vmatprep.subr.bf16.mxu0 0
        %3379 = vmatpush2.bf16.msra.mxu0 0
        %3380 = vmatprep.subr.bf16.mxu0 0
        %3381 = vmatpush2.bf16.msra.mxu0 0
        %3382 = vmatprep.mubr.bf16.mxu0 0
        %3383 = vmatmul.mubr.bf16.gmra.mxu0 %v3345
        %v3384 = vpop.f32.mrf.mxu0
        %v3385 = vadd.f32 0.0, %v3384
        %v3386 = vpop.f32.mrf.mxu0
        %v3387 = vpop.f32.mrf.mxu0
        %v3388 = vpop.f32.mrf.mxu0
        %3389 = vdwg.mxu0
        %v3391 = vsel %vm1171, %v2919, 0
        %v3394 = vsel %vm1175, %v3337, 0
        %3396 = vmatprep.subr.bf16.mxu0 0
        %3397 = vmatpush1.bf16.msra.mxu0 0
        %3398 = vmatprep.subr.bf16.mxu0 0
        %3399 = vmatpush1.bf16.msra.mxu0 0
        %3400 = vmatprep.subr.bf16.mxu0 0
        %3401 = vmatpush1.bf16.msra.mxu0 0
        %3402 = vmatprep.subr.bf16.mxu0 0
        %3403 = vmatpush1.bf16.msra.mxu0 0
        %3404 = vmatprep.subr.bf16.mxu0 0
        %3405 = vmatpush1.bf16.msra.mxu0 0
        %3406 = vmatprep.subr.bf16.mxu0 0
        %3407 = vmatpush1.bf16.msra.mxu0 0
        %3408 = vmatprep.subr.bf16.mxu0 0
        %3409 = vmatpush1.bf16.msra.mxu0 0
        %3410 = vmatprep.subr.bf16.mxu0 0
        %3411 = vmatpush1.bf16.msra.mxu0 %v3394
        %3412 = vmatprep.subr.bf16.mxu0 0
        %3413 = vmatpush2.bf16.msra.mxu0 0
        %3414 = vmatprep.subr.bf16.mxu0 0
        %3415 = vmatpush2.bf16.msra.mxu0 0
        %3416 = vmatprep.subr.bf16.mxu0 0
        %3417 = vmatpush2.bf16.msra.mxu0 0
        %3418 = vmatprep.subr.bf16.mxu0 0
        %3419 = vmatpush2.bf16.msra.mxu0 0
        %3420 = vmatprep.subr.bf16.mxu0 0
        %3421 = vmatpush2.bf16.msra.mxu0 0
        %3422 = vmatprep.subr.bf16.mxu0 0
        %3423 = vmatpush2.bf16.msra.mxu0 0
        %3424 = vmatprep.subr.bf16.mxu0 0
        %3425 = vmatpush2.bf16.msra.mxu0 0
        %3426 = vmatprep.subr.bf16.mxu0 0
        %3427 = vmatpush2.bf16.msra.mxu0 0
        %3428 = vmatprep.mubr.bf16.mxu0 0
        %3429 = vmatmul.mubr.bf16.gmra.mxu0 %v3391
        %v3430 = vpop.f32.mrf.mxu0
        %v3431 = vadd.f32 0.0, %v3430
        %v3432 = vpop.f32.mrf.mxu0
        %v3433 = vpop.f32.mrf.mxu0
        %v3434 = vpop.f32.mrf.mxu0
        %3435 = vdwg.mxu0
        %v3437 = vsel %vm1171, %v2922, 0
        %v3440 = vsel %vm1175, %v3340, 0
        %3442 = vmatprep.subr.bf16.mxu0 0
        %3443 = vmatpush1.bf16.msra.mxu0 0
        %3444 = vmatprep.subr.bf16.mxu0 0
        %3445 = vmatpush1.bf16.msra.mxu0 0
        %3446 = vmatprep.subr.bf16.mxu0 0
        %3447 = vmatpush1.bf16.msra.mxu0 0
        %3448 = vmatprep.subr.bf16.mxu0 0
        %3449 = vmatpush1.bf16.msra.mxu0 0
        %3450 = vmatprep.subr.bf16.mxu0 0
        %3451 = vmatpush1.bf16.msra.mxu0 0
        %3452 = vmatprep.subr.bf16.mxu0 0
        %3453 = vmatpush1.bf16.msra.mxu0 0
        %3454 = vmatprep.subr.bf16.mxu0 0
        %3455 = vmatpush1.bf16.msra.mxu0 0
        %3456 = vmatprep.subr.bf16.mxu0 0
        %3457 = vmatpush1.bf16.msra.mxu0 %v3440
        %3458 = vmatprep.subr.bf16.mxu0 0
        %3459 = vmatpush2.bf16.msra.mxu0 0
        %3460 = vmatprep.subr.bf16.mxu0 0
        %3461 = vmatpush2.bf16.msra.mxu0 0
        %3462 = vmatprep.subr.bf16.mxu0 0
        %3463 = vmatpush2.bf16.msra.mxu0 0
        %3464 = vmatprep.subr.bf16.mxu0 0
        %3465 = vmatpush2.bf16.msra.mxu0 0
        %3466 = vmatprep.subr.bf16.mxu0 0
        %3467 = vmatpush2.bf16.msra.mxu0 0
        %3468 = vmatprep.subr.bf16.mxu0 0
        %3469 = vmatpush2.bf16.msra.mxu0 0
        %3470 = vmatprep.subr.bf16.mxu0 0
        %3471 = vmatpush2.bf16.msra.mxu0 0
        %3472 = vmatprep.subr.bf16.mxu0 0
        %3473 = vmatpush2.bf16.msra.mxu0 0
        %3474 = vmatprep.mubr.bf16.mxu0 0
        %3475 = vmatmul.mubr.bf16.gmra.mxu0 %v3437
        %v3476 = vpop.f32.mrf.mxu0
        %v3477 = vadd.f32 0.0, %v3476
        %v3478 = vpop.f32.mrf.mxu0
        %v3479 = vpop.f32.mrf.mxu0
        %v3480 = vpop.f32.mrf.mxu0
        %3481 = vdwg.mxu0
        %v3483 = vsel %vm1171, %v2925, 0
        %v3486 = vsel %vm1175, %v3343, 0
        %3488 = vmatprep.subr.bf16.mxu0 0
        %3489 = vmatpush1.bf16.msra.mxu0 0
        %3490 = vmatprep.subr.bf16.mxu0 0
        %3491 = vmatpush1.bf16.msra.mxu0 0
        %3492 = vmatprep.subr.bf16.mxu0 0
        %3493 = vmatpush1.bf16.msra.mxu0 0
        %3494 = vmatprep.subr.bf16.mxu0 0
        %3495 = vmatpush1.bf16.msra.mxu0 0
        %3496 = vmatprep.subr.bf16.mxu0 0
        %3497 = vmatpush1.bf16.msra.mxu0 0
        %3498 = vmatprep.subr.bf16.mxu0 0
        %3499 = vmatpush1.bf16.msra.mxu0 0
        %3500 = vmatprep.subr.bf16.mxu0 0
        %3501 = vmatpush1.bf16.msra.mxu0 0
        %3502 = vmatprep.subr.bf16.mxu0 0
        %3503 = vmatpush1.bf16.msra.mxu0 %v3486
        %3504 = vmatprep.subr.bf16.mxu0 0
        %3505 = vmatpush2.bf16.msra.mxu0 0
        %3506 = vmatprep.subr.bf16.mxu0 0
        %3507 = vmatpush2.bf16.msra.mxu0 0
        %3508 = vmatprep.subr.bf16.mxu0 0
        %3509 = vmatpush2.bf16.msra.mxu0 0
        %3510 = vmatprep.subr.bf16.mxu0 0
        %3511 = vmatpush2.bf16.msra.mxu0 0
        %3512 = vmatprep.subr.bf16.mxu0 0
        %3513 = vmatpush2.bf16.msra.mxu0 0
        %3514 = vmatprep.subr.bf16.mxu0 0
        %3515 = vmatpush2.bf16.msra.mxu0 0
        %3516 = vmatprep.subr.bf16.mxu0 0
        %3517 = vmatpush2.bf16.msra.mxu0 0
        %3518 = vmatprep.subr.bf16.mxu0 0
        %3519 = vmatpush2.bf16.msra.mxu0 0
        %3520 = vmatprep.mubr.bf16.mxu0 0
        %3521 = vmatmul.mubr.bf16.gmra.mxu0 %v3483
        %v3522 = vpop.f32.mrf.mxu0
        %v3523 = vadd.f32 0.0, %v3522
        %v3524 = vpop.f32.mrf.mxu0
        %v3525 = vpop.f32.mrf.mxu0
        %v3526 = vpop.f32.mrf.mxu0
        %3527 = vdwg.mxu0
        %v3528 = vsel %vm1358, %v3385, -1e+30
        %v3529 = vsel %vm1358, %v3431, -1e+30
        %v3530 = vsel %vm1358, %v3477, -1e+30
        %v3531 = vsel %vm1358, %v3523, -1e+30
        %v3532 = vsel %vm1171, %v3528, -inf
        %3533 = vmax.xlane.f32.xlu0 %v3532
        %v3534 = vpop.xlane.xlu0 %3533
        %v3535 = vsel %vm1171, %v3529, -inf
        %3536 = vmax.xlane.f32.xlu0 %v3535
        %v3537 = vpop.xlane.xlu0 %3536
        %v3538 = vsel %vm1171, %v3530, -inf
        %3539 = vmax.xlane.f32.xlu0 %v3538
        %v3540 = vpop.xlane.xlu0 %3539
        %v3541 = vsel %vm1171, %v3531, -inf
        %3542 = vmax.xlane.f32.xlu0 %v3541
        %v3543 = vpop.xlane.xlu0 %3542
        %v3544 = vsub.f32 %v3528, %v3534
        %v3545 = vsub.f32 %v3529, %v3537
        %v3546 = vsub.f32 %v3530, %v3540
        %v3547 = vsub.f32 %v3531, %v3543
        %v3548 = vmul.f32 %v3544, 1.442695
        %v3549 = vpow.pop %v3548
        %v3550 = vmul.f32 %v3545, 1.442695
        %v3551 = vpow.pop %v3550
        %v3552 = vmul.f32 %v3546, 1.442695
        %v3553 = vpow.pop %v3552
        %v3554 = vmul.f32 %v3547, 1.442695
        %v3555 = vpow.pop %v3554
        %v3556 = vsel %vm1171, %v3549, 0.0
        %3557 = vadd.xlane.f32.xlu0 %v3556
        %v3558 = vpop.xlane.xlu0 %3557
        %v3559 = vsel %vm1171, %v3551, 0.0
        %3560 = vadd.xlane.f32.xlu0 %v3559
        %v3561 = vpop.xlane.xlu0 %3560
        %v3562 = vsel %vm1171, %v3553, 0.0
        %3563 = vadd.xlane.f32.xlu0 %v3562
        %v3564 = vpop.xlane.xlu0 %3563
        %v3565 = vsel %vm1171, %v3555, 0.0
        %3566 = vadd.xlane.f32.xlu0 %v3565
        %v3567 = vpop.xlane.xlu0 %3566
        %v3568 = vrcp.pop %v3558
        %v3569 = vrcp.pop %v3561
        %v3570 = vrcp.pop %v3564
        %v3571 = vrcp.pop %v3567
        %v3572 = vmul.f32 %v3549, %v3568
        %v3573 = vmul.f32 %v3551, %v3569
        %v3574 = vmul.f32 %v3553, %v3570
        %v3575 = vmul.f32 %v3555, %v3571
        %v3576 = vpack.c.bf16 %v3572, %v3572
        %v3577 = vpack.c.bf16 %v3573, %v3573
        %v3578 = vpack.c.bf16 %v3574, %v3574
        %v3579 = vpack.c.bf16 %v3575, %v3575
        %3580 = vxpose.xlu0.c.b16.start [1/8] %v2856, 128
        %3581 = vxpose.xlu0.c.b16.cont [2/8] 0, 128
        %3582 = vxpose.xlu0.c.b16.cont [3/8] 0, 128
        %3583 = vxpose.xlu0.c.b16.cont [4/8] 0, 128
        %3584 = vxpose.xlu0.c.b16.cont [5/8] 0, 128
        %3585 = vxpose.xlu0.c.b16.cont [6/8] 0, 128
        %3586 = vxpose.xlu0.c.b16.cont [7/8] 0, 128
        %3587 = vxpose.xlu0.c.b16.end [8/8] 0, 128
        %v3588 = vpop.trf.xlu0
        %v3589 = vpop.trf.xlu0
        %v3590 = vpop.trf.xlu0
        %v3591 = vpop.trf.xlu0
        %v3592 = vpop.trf.xlu0
        %v3593 = vpop.trf.xlu0
        %v3594 = vpop.trf.xlu0
        %v3595 = vpop.trf.xlu0
        %3596 = vxpose.xlu0.c.b16.start [1/8] %v2857, 128
        %3597 = vxpose.xlu0.c.b16.cont [2/8] 0, 128
        %3598 = vxpose.xlu0.c.b16.cont [3/8] 0, 128
        %3599 = vxpose.xlu0.c.b16.cont [4/8] 0, 128
        %3600 = vxpose.xlu0.c.b16.cont [5/8] 0, 128
        %3601 = vxpose.xlu0.c.b16.cont [6/8] 0, 128
        %3602 = vxpose.xlu0.c.b16.cont [7/8] 0, 128
        %3603 = vxpose.xlu0.c.b16.end [8/8] 0, 128
        %v3604 = vpop.trf.xlu0
        %v3605 = vpop.trf.xlu0
        %v3606 = vpop.trf.xlu0
        %v3607 = vpop.trf.xlu0
        %v3608 = vpop.trf.xlu0
        %v3609 = vpop.trf.xlu0
        %v3610 = vpop.trf.xlu0
        %v3611 = vpop.trf.xlu0
        %3612 = vxpose.xlu0.c.b16.start [1/8] %v2858, 128
        %3613 = vxpose.xlu0.c.b16.cont [2/8] 0, 128
        %3614 = vxpose.xlu0.c.b16.cont [3/8] 0, 128
        %3615 = vxpose.xlu0.c.b16.cont [4/8] 0, 128
        %3616 = vxpose.xlu0.c.b16.cont [5/8] 0, 128
        %3617 = vxpose.xlu0.c.b16.cont [6/8] 0, 128
        %3618 = vxpose.xlu0.c.b16.cont [7/8] 0, 128
        %3619 = vxpose.xlu0.c.b16.end [8/8] 0, 128
        %v3620 = vpop.trf.xlu0
        %v3621 = vpop.trf.xlu0
        %v3622 = vpop.trf.xlu0
        %v3623 = vpop.trf.xlu0
        %v3624 = vpop.trf.xlu0
        %v3625 = vpop.trf.xlu0
        %v3626 = vpop.trf.xlu0
        %v3627 = vpop.trf.xlu0
        %3628 = vxpose.xlu0.c.b16.start [1/8] %v2859, 128
        %3629 = vxpose.xlu0.c.b16.cont [2/8] 0, 128
        %3630 = vxpose.xlu0.c.b16.cont [3/8] 0, 128
        %3631 = vxpose.xlu0.c.b16.cont [4/8] 0, 128
        %3632 = vxpose.xlu0.c.b16.cont [5/8] 0, 128
        %3633 = vxpose.xlu0.c.b16.cont [6/8] 0, 128
        %3634 = vxpose.xlu0.c.b16.cont [7/8] 0, 128
        %3635 = vxpose.xlu0.c.b16.end [8/8] 0, 128
        %v3636 = vpop.trf.xlu0
        %v3637 = vpop.trf.xlu0
        %v3638 = vpop.trf.xlu0
        %v3639 = vpop.trf.xlu0
        %v3640 = vpop.trf.xlu0
        %v3641 = vpop.trf.xlu0
        %v3642 = vpop.trf.xlu0
        %v3643 = vpop.trf.xlu0
        %3644 = vxpose.xlu0.c.b16.start [1/8] %v2860, 128
        %3645 = vxpose.xlu0.c.b16.cont [2/8] 0, 128
        %3646 = vxpose.xlu0.c.b16.cont [3/8] 0, 128
        %3647 = vxpose.xlu0.c.b16.cont [4/8] 0, 128
        %3648 = vxpose.xlu0.c.b16.cont [5/8] 0, 128
        %3649 = vxpose.xlu0.c.b16.cont [6/8] 0, 128
        %3650 = vxpose.xlu0.c.b16.cont [7/8] 0, 128
        %3651 = vxpose.xlu0.c.b16.end [8/8] 0, 128
        %v3652 = vpop.trf.xlu0
        %v3653 = vpop.trf.xlu0
        %v3654 = vpop.trf.xlu0
        %v3655 = vpop.trf.xlu0
        %v3656 = vpop.trf.xlu0
        %v3657 = vpop.trf.xlu0
        %v3658 = vpop.trf.xlu0
        %v3659 = vpop.trf.xlu0
        %3660 = vxpose.xlu0.c.b16.start [1/8] %v2861, 128
        %3661 = vxpose.xlu0.c.b16.cont [2/8] 0, 128
        %3662 = vxpose.xlu0.c.b16.cont [3/8] 0, 128
        %3663 = vxpose.xlu0.c.b16.cont [4/8] 0, 128
        %3664 = vxpose.xlu0.c.b16.cont [5/8] 0, 128
        %3665 = vxpose.xlu0.c.b16.cont [6/8] 0, 128
        %3666 = vxpose.xlu0.c.b16.cont [7/8] 0, 128
        %3667 = vxpose.xlu0.c.b16.end [8/8] 0, 128
        %v3668 = vpop.trf.xlu0
        %v3669 = vpop.trf.xlu0
        %v3670 = vpop.trf.xlu0
        %v3671 = vpop.trf.xlu0
        %v3672 = vpop.trf.xlu0
        %v3673 = vpop.trf.xlu0
        %v3674 = vpop.trf.xlu0
        %v3675 = vpop.trf.xlu0
        %3676 = vxpose.xlu0.c.b16.start [1/8] %v2862, 128
        %3677 = vxpose.xlu0.c.b16.cont [2/8] 0, 128
        %3678 = vxpose.xlu0.c.b16.cont [3/8] 0, 128
        %3679 = vxpose.xlu0.c.b16.cont [4/8] 0, 128
        %3680 = vxpose.xlu0.c.b16.cont [5/8] 0, 128
        %3681 = vxpose.xlu0.c.b16.cont [6/8] 0, 128
        %3682 = vxpose.xlu0.c.b16.cont [7/8] 0, 128
        %3683 = vxpose.xlu0.c.b16.end [8/8] 0, 128
        %v3684 = vpop.trf.xlu0
        %v3685 = vpop.trf.xlu0
        %v3686 = vpop.trf.xlu0
        %v3687 = vpop.trf.xlu0
        %v3688 = vpop.trf.xlu0
        %v3689 = vpop.trf.xlu0
        %v3690 = vpop.trf.xlu0
        %v3691 = vpop.trf.xlu0
        %3692 = vxpose.xlu0.c.b16.start [1/8] %v2863, 128
        %3693 = vxpose.xlu0.c.b16.cont [2/8] 0, 128
        %3694 = vxpose.xlu0.c.b16.cont [3/8] 0, 128
        %3695 = vxpose.xlu0.c.b16.cont [4/8] 0, 128
        %3696 = vxpose.xlu0.c.b16.cont [5/8] 0, 128
        %3697 = vxpose.xlu0.c.b16.cont [6/8] 0, 128
        %3698 = vxpose.xlu0.c.b16.cont [7/8] 0, 128
        %3699 = vxpose.xlu0.c.b16.end [8/8] 0, 128
        %v3700 = vpop.trf.xlu0
        %v3701 = vpop.trf.xlu0
        %v3702 = vpop.trf.xlu0
        %v3703 = vpop.trf.xlu0
        %v3704 = vpop.trf.xlu0
        %v3705 = vpop.trf.xlu0
        %v3706 = vpop.trf.xlu0
        %v3707 = vpop.trf.xlu0
        %v3708 = vcombine.low %v3588, %v3652
        %v3710 = vunpack.c.l.s4 1983009808
        %v3711 = vunpack.c.0.s8 %v3710
        %v3712 = vlaneseq
        %v3713 = vshrl.u32 %v3712, 7
        %v3714 = vsub.s32 %v3711, %v3713
        %v3715 = vrot.slane %v3708, %v3714
        %v3716 = vcombine.low %v3620, %v3684
        %v3718 = vunpack.c.l.s4 1983009808
        %v3719 = vunpack.c.0.s8 %v3718
        %v3720 = vlaneseq
        %v3721 = vshrl.u32 %v3720, 7
        %v3722 = vsub.s32 %v3719, %v3721
        %v3723 = vrot.slane %v3716, %v3722
        %v3724 = vcombine.low %v3715, %v3723
        %v3725 = vcombine.high %v3715, %v3723
        %v3727 = vunpack.c.l.s4 1934713408
        %v3728 = vunpack.c.0.s8 %v3727
        %v3729 = vlaneseq
        %v3730 = vshrl.u32 %v3729, 7
        %v3731 = vsub.s32 %v3728, %v3730
        %v3732 = vrot.slane %v3724, %v3731
        %v3734 = vunpack.c.l.s4 1934713408
        %v3735 = vunpack.c.0.s8 %v3734
        %v3736 = vlaneseq
        %v3737 = vshrl.u32 %v3736, 7
        %v3738 = vsub.s32 %v3735, %v3737
        %v3739 = vrot.slane %v3725, %v3738
        %v3740 = vcombine.high %v3732, 0
        %v3741 = vcombine.high %v3739, 0
        %v3742 = vcombine.low %v3604, %v3668
        %v3744 = vunpack.c.l.s4 1983009808
        %v3745 = vunpack.c.0.s8 %v3744
        %v3746 = vlaneseq
        %v3747 = vshrl.u32 %v3746, 7
        %v3748 = vsub.s32 %v3745, %v3747
        %v3749 = vrot.slane %v3742, %v3748
        %v3750 = vcombine.low %v3636, %v3700
        %v3752 = vunpack.c.l.s4 1983009808
        %v3753 = vunpack.c.0.s8 %v3752
        %v3754 = vlaneseq
        %v3755 = vshrl.u32 %v3754, 7
        %v3756 = vsub.s32 %v3753, %v3755
        %v3757 = vrot.slane %v3750, %v3756
        %v3758 = vcombine.low %v3749, %v3757
        %v3759 = vcombine.high %v3749, %v3757
        %v3761 = vunpack.c.l.s4 1934713408
        %v3762 = vunpack.c.0.s8 %v3761
        %v3763 = vlaneseq
        %v3764 = vshrl.u32 %v3763, 7
        %v3765 = vsub.s32 %v3762, %v3764
        %v3766 = vrot.slane %v3758, %v3765
        %v3768 = vunpack.c.l.s4 1934713408
        %v3769 = vunpack.c.0.s8 %v3768
        %v3770 = vlaneseq
        %v3771 = vshrl.u32 %v3770, 7
        %v3772 = vsub.s32 %v3769, %v3771
        %v3773 = vrot.slane %v3759, %v3772
        %v3774 = vcombine.high %v3766, 0
        %v3775 = vcombine.high %v3773, 0
        %v3778 = vpack.i.b16 %v3766, %v3732
        %v3780 = vshrl.u32 %v3732, 16
        %v3781 = vshrl.u32 %v3766, 16
        %v3782 = vpack.i.b16 %v3781, %v3780
        %v3786 = vpack.i.b16 %v3774, %v3740
        %v3788 = vshrl.u32 %v3740, 16
        %v3789 = vshrl.u32 %v3774, 16
        %v3790 = vpack.i.b16 %v3789, %v3788
        %v3794 = vpack.i.b16 %v3773, %v3739
        %v3796 = vshrl.u32 %v3739, 16
        %v3797 = vshrl.u32 %v3773, 16
        %v3798 = vpack.i.b16 %v3797, %v3796
        %v3802 = vpack.i.b16 %v3775, %v3741
        %v3804 = vshrl.u32 %v3741, 16
        %v3805 = vshrl.u32 %v3775, 16
        %v3806 = vpack.i.b16 %v3805, %v3804
        %3808 = vxpose.xlu0.c.b16.start [1/8] %v3778, 128
        %3809 = vxpose.xlu0.c.b16.cont [2/8] 0, 128
        %3810 = vxpose.xlu0.c.b16.cont [3/8] 0, 128
        %3811 = vxpose.xlu0.c.b16.cont [4/8] 0, 128
        %3812 = vxpose.xlu0.c.b16.cont [5/8] 0, 128
        %3813 = vxpose.xlu0.c.b16.cont [6/8] 0, 128
        %3814 = vxpose.xlu0.c.b16.cont [7/8] 0, 128
        %3815 = vxpose.xlu0.c.b16.end [8/8] 0, 128
        %v3816 = vpop.trf.xlu0
        %v3817 = vpop.trf.xlu0
        %v3818 = vpop.trf.xlu0
        %v3819 = vpop.trf.xlu0
        %v3820 = vpop.trf.xlu0
        %v3821 = vpop.trf.xlu0
        %v3822 = vpop.trf.xlu0
        %v3823 = vpop.trf.xlu0
        %3824 = vxpose.xlu0.c.b16.start [1/8] %v3782, 128
        %3825 = vxpose.xlu0.c.b16.cont [2/8] 0, 128
        %3826 = vxpose.xlu0.c.b16.cont [3/8] 0, 128
        %3827 = vxpose.xlu0.c.b16.cont [4/8] 0, 128
        %3828 = vxpose.xlu0.c.b16.cont [5/8] 0, 128
        %3829 = vxpose.xlu0.c.b16.cont [6/8] 0, 128
        %3830 = vxpose.xlu0.c.b16.cont [7/8] 0, 128
        %3831 = vxpose.xlu0.c.b16.end [8/8] 0, 128
        %v3832 = vpop.trf.xlu0
        %v3833 = vpop.trf.xlu0
        %v3834 = vpop.trf.xlu0
        %v3835 = vpop.trf.xlu0
        %v3836 = vpop.trf.xlu0
        %v3837 = vpop.trf.xlu0
        %v3838 = vpop.trf.xlu0
        %v3839 = vpop.trf.xlu0
        %3840 = vxpose.xlu0.c.b16.start [1/8] %v3786, 128
        %3841 = vxpose.xlu0.c.b16.cont [2/8] 0, 128
        %3842 = vxpose.xlu0.c.b16.cont [3/8] 0, 128
        %3843 = vxpose.xlu0.c.b16.cont [4/8] 0, 128
        %3844 = vxpose.xlu0.c.b16.cont [5/8] 0, 128
        %3845 = vxpose.xlu0.c.b16.cont [6/8] 0, 128
        %3846 = vxpose.xlu0.c.b16.cont [7/8] 0, 128
        %3847 = vxpose.xlu0.c.b16.end [8/8] 0, 128
        %v3848 = vpop.trf.xlu0
        %v3849 = vpop.trf.xlu0
        %v3850 = vpop.trf.xlu0
        %v3851 = vpop.trf.xlu0
        %v3852 = vpop.trf.xlu0
        %v3853 = vpop.trf.xlu0
        %v3854 = vpop.trf.xlu0
        %v3855 = vpop.trf.xlu0
        %3856 = vxpose.xlu0.c.b16.start [1/8] %v3790, 128
        %3857 = vxpose.xlu0.c.b16.cont [2/8] 0, 128
        %3858 = vxpose.xlu0.c.b16.cont [3/8] 0, 128
        %3859 = vxpose.xlu0.c.b16.cont [4/8] 0, 128
        %3860 = vxpose.xlu0.c.b16.cont [5/8] 0, 128
        %3861 = vxpose.xlu0.c.b16.cont [6/8] 0, 128
        %3862 = vxpose.xlu0.c.b16.cont [7/8] 0, 128
        %3863 = vxpose.xlu0.c.b16.end [8/8] 0, 128
        %v3864 = vpop.trf.xlu0
        %v3865 = vpop.trf.xlu0
        %v3866 = vpop.trf.xlu0
        %v3867 = vpop.trf.xlu0
        %v3868 = vpop.trf.xlu0
        %v3869 = vpop.trf.xlu0
        %v3870 = vpop.trf.xlu0
        %v3871 = vpop.trf.xlu0
        %3872 = vxpose.xlu0.c.b16.start [1/8] %v3794, 128
        %3873 = vxpose.xlu0.c.b16.cont [2/8] 0, 128
        %3874 = vxpose.xlu0.c.b16.cont [3/8] 0, 128
        %3875 = vxpose.xlu0.c.b16.cont [4/8] 0, 128
        %3876 = vxpose.xlu0.c.b16.cont [5/8] 0, 128
        %3877 = vxpose.xlu0.c.b16.cont [6/8] 0, 128
        %3878 = vxpose.xlu0.c.b16.cont [7/8] 0, 128
        %3879 = vxpose.xlu0.c.b16.end [8/8] 0, 128
        %v3880 = vpop.trf.xlu0
        %v3881 = vpop.trf.xlu0
        %v3882 = vpop.trf.xlu0
        %v3883 = vpop.trf.xlu0
        %v3884 = vpop.trf.xlu0
        %v3885 = vpop.trf.xlu0
        %v3886 = vpop.trf.xlu0
        %v3887 = vpop.trf.xlu0
        %3888 = vxpose.xlu0.c.b16.start [1/8] %v3798, 128
        %3889 = vxpose.xlu0.c.b16.cont [2/8] 0, 128
        %3890 = vxpose.xlu0.c.b16.cont [3/8] 0, 128
        %3891 = vxpose.xlu0.c.b16.cont [4/8] 0, 128
        %3892 = vxpose.xlu0.c.b16.cont [5/8] 0, 128
        %3893 = vxpose.xlu0.c.b16.cont [6/8] 0, 128
        %3894 = vxpose.xlu0.c.b16.cont [7/8] 0, 128
        %3895 = vxpose.xlu0.c.b16.end [8/8] 0, 128
        %v3896 = vpop.trf.xlu0
        %v3897 = vpop.trf.xlu0
        %v3898 = vpop.trf.xlu0
        %v3899 = vpop.trf.xlu0
        %v3900 = vpop.trf.xlu0
        %v3901 = vpop.trf.xlu0
        %v3902 = vpop.trf.xlu0
        %v3903 = vpop.trf.xlu0
        %3904 = vxpose.xlu0.c.b16.start [1/8] %v3802, 128
        %3905 = vxpose.xlu0.c.b16.cont [2/8] 0, 128
        %3906 = vxpose.xlu0.c.b16.cont [3/8] 0, 128
        %3907 = vxpose.xlu0.c.b16.cont [4/8] 0, 128
        %3908 = vxpose.xlu0.c.b16.cont [5/8] 0, 128
        %3909 = vxpose.xlu0.c.b16.cont [6/8] 0, 128
        %3910 = vxpose.xlu0.c.b16.cont [7/8] 0, 128
        %3911 = vxpose.xlu0.c.b16.end [8/8] 0, 128
        %v3912 = vpop.trf.xlu0
        %v3913 = vpop.trf.xlu0
        %v3914 = vpop.trf.xlu0
        %v3915 = vpop.trf.xlu0
        %v3916 = vpop.trf.xlu0
        %v3917 = vpop.trf.xlu0
        %v3918 = vpop.trf.xlu0
        %v3919 = vpop.trf.xlu0
        %3920 = vxpose.xlu0.c.b16.start [1/8] %v3806, 128
        %3921 = vxpose.xlu0.c.b16.cont [2/8] 0, 128
        %3922 = vxpose.xlu0.c.b16.cont [3/8] 0, 128
        %3923 = vxpose.xlu0.c.b16.cont [4/8] 0, 128
        %3924 = vxpose.xlu0.c.b16.cont [5/8] 0, 128
        %3925 = vxpose.xlu0.c.b16.cont [6/8] 0, 128
        %3926 = vxpose.xlu0.c.b16.cont [7/8] 0, 128
        %3927 = vxpose.xlu0.c.b16.end [8/8] 0, 128
        %v3928 = vpop.trf.xlu0
        %v3929 = vpop.trf.xlu0
        %v3930 = vpop.trf.xlu0
        %v3931 = vpop.trf.xlu0
        %v3932 = vpop.trf.xlu0
        %v3933 = vpop.trf.xlu0
        %v3934 = vpop.trf.xlu0
        %v3935 = vpop.trf.xlu0
        %v3936 = vcombine.low %v3816, %v3880
        %v3938 = vunpack.c.l.s4 1983009808
        %v3939 = vunpack.c.0.s8 %v3938
        %v3940 = vlaneseq
        %v3941 = vshrl.u32 %v3940, 7
        %v3942 = vsub.s32 %v3939, %v3941
        %v3943 = vrot.slane %v3936, %v3942
        %v3944 = vcombine.low %v3848, %v3912
        %v3946 = vunpack.c.l.s4 1983009808
        %v3947 = vunpack.c.0.s8 %v3946
        %v3948 = vlaneseq
        %v3949 = vshrl.u32 %v3948, 7
        %v3950 = vsub.s32 %v3947, %v3949
        %v3951 = vrot.slane %v3944, %v3950
        %v3952 = vcombine.low %v3943, %v3951
        %v3954 = vunpack.c.l.s4 1934713408
        %v3955 = vunpack.c.0.s8 %v3954
        %v3956 = vlaneseq
        %v3957 = vshrl.u32 %v3956, 7
        %v3958 = vsub.s32 %v3955, %v3957
        %v3959 = vrot.slane %v3952, %v3958
        %v3960 = vcombine.high %v3959, 0
        %v3961 = vcombine.low %v3832, %v3896
        %v3963 = vunpack.c.l.s4 1983009808
        %v3964 = vunpack.c.0.s8 %v3963
        %v3965 = vlaneseq
        %v3966 = vshrl.u32 %v3965, 7
        %v3967 = vsub.s32 %v3964, %v3966
        %v3968 = vrot.slane %v3961, %v3967
        %v3969 = vcombine.low %v3864, %v3928
        %v3971 = vunpack.c.l.s4 1983009808
        %v3972 = vunpack.c.0.s8 %v3971
        %v3973 = vlaneseq
        %v3974 = vshrl.u32 %v3973, 7
        %v3975 = vsub.s32 %v3972, %v3974
        %v3976 = vrot.slane %v3969, %v3975
        %v3977 = vcombine.low %v3968, %v3976
        %v3979 = vunpack.c.l.s4 1934713408
        %v3980 = vunpack.c.0.s8 %v3979
        %v3981 = vlaneseq
        %v3982 = vshrl.u32 %v3981, 7
        %v3983 = vsub.s32 %v3980, %v3982
        %v3984 = vrot.slane %v3977, %v3983
        %v3985 = vcombine.high %v3984, 0
        %v3988 = vpack.i.b16 %v3984, %v3959
        %v3989 = vshrl.u32 %v3959, 16
        %v3990 = vshrl.u32 %v3984, 16
        %v3991 = vpack.i.b16 %v3990, %v3989
        %v3994 = vpack.i.b16 %v3985, %v3960
        %v3995 = vshrl.u32 %v3960, 16
        %v3996 = vshrl.u32 %v3985, 16
        %v3997 = vpack.i.b16 %v3996, %v3995
        %v3999 = vsel %vm1171, %v3988, 0
        %v4002 = vsel %vm1171, %v3576, 0
        %4004 = vmatprep.subr.bf16.mxu0 0
        %4005 = vmatpush1.bf16.xpose.msra.mxu0 0
        %4006 = vmatprep.subr.bf16.mxu0 0
        %4007 = vmatpush1.bf16.xpose.msra.mxu0 0
        %4008 = vmatprep.subr.bf16.mxu0 0
        %4009 = vmatpush1.bf16.xpose.msra.mxu0 0
        %4010 = vmatprep.subr.bf16.mxu0 0
        %4011 = vmatpush1.bf16.xpose.msra.mxu0 0
        %4012 = vmatprep.subr.bf16.mxu0 0
        %4013 = vmatpush1.bf16.xpose.msra.mxu0 0
        %4014 = vmatprep.subr.bf16.mxu0 0
        %4015 = vmatpush1.bf16.xpose.msra.mxu0 0
        %4016 = vmatprep.subr.bf16.mxu0 0
        %4017 = vmatpush1.bf16.xpose.msra.mxu0 0
        %4018 = vmatprep.subr.bf16.mxu0 0
        %4019 = vmatpush1.bf16.xpose.msra.mxu0 %v4002
        %4020 = vmatprep.subr.bf16.mxu0 0
        %4021 = vmatpush2.bf16.xpose.msra.mxu0 0
        %4022 = vmatprep.subr.bf16.mxu0 0
        %4023 = vmatpush2.bf16.xpose.msra.mxu0 0
        %4024 = vmatprep.subr.bf16.mxu0 0
        %4025 = vmatpush2.bf16.xpose.msra.mxu0 0
        %4026 = vmatprep.subr.bf16.mxu0 0
        %4027 = vmatpush2.bf16.xpose.msra.mxu0 0
        %4028 = vmatprep.subr.bf16.mxu0 0
        %4029 = vmatpush2.bf16.xpose.msra.mxu0 0
        %4030 = vmatprep.subr.bf16.mxu0 0
        %4031 = vmatpush2.bf16.xpose.msra.mxu0 0
        %4032 = vmatprep.subr.bf16.mxu0 0
        %4033 = vmatpush2.bf16.xpose.msra.mxu0 0
        %4034 = vmatprep.subr.bf16.mxu0 0
        %4035 = vmatpush2.bf16.xpose.msra.mxu0 0
        %4036 = vmatprep.mubr.bf16.mxu0 0
        %4037 = vmatmul.mubr.bf16.gmra.mxu0 %v3999
        %v4038 = vpop.f32.mrf.mxu0
        %v4039 = vadd.f32 0.0, %v4038
        %v4040 = vpop.f32.mrf.mxu0
        %v4041 = vpop.f32.mrf.mxu0
        %v4042 = vpop.f32.mrf.mxu0
        %4043 = vdwg.mxu0
        %v4045 = vsel %vm1171, %v3991, 0
        %v4048 = vsel %vm1171, %v3577, 0
        %4050 = vmatprep.subr.bf16.mxu0 0
        %4051 = vmatpush1.bf16.xpose.msra.mxu0 0
        %4052 = vmatprep.subr.bf16.mxu0 0
        %4053 = vmatpush1.bf16.xpose.msra.mxu0 0
        %4054 = vmatprep.subr.bf16.mxu0 0
        %4055 = vmatpush1.bf16.xpose.msra.mxu0 0
        %4056 = vmatprep.subr.bf16.mxu0 0
        %4057 = vmatpush1.bf16.xpose.msra.mxu0 0
        %4058 = vmatprep.subr.bf16.mxu0 0
        %4059 = vmatpush1.bf16.xpose.msra.mxu0 0
        %4060 = vmatprep.subr.bf16.mxu0 0
        %4061 = vmatpush1.bf16.xpose.msra.mxu0 0
        %4062 = vmatprep.subr.bf16.mxu0 0
        %4063 = vmatpush1.bf16.xpose.msra.mxu0 0
        %4064 = vmatprep.subr.bf16.mxu0 0
        %4065 = vmatpush1.bf16.xpose.msra.mxu0 %v4048
        %4066 = vmatprep.subr.bf16.mxu0 0
        %4067 = vmatpush2.bf16.xpose.msra.mxu0 0
        %4068 = vmatprep.subr.bf16.mxu0 0
        %4069 = vmatpush2.bf16.xpose.msra.mxu0 0
        %4070 = vmatprep.subr.bf16.mxu0 0
        %4071 = vmatpush2.bf16.xpose.msra.mxu0 0
        %4072 = vmatprep.subr.bf16.mxu0 0
        %4073 = vmatpush2.bf16.xpose.msra.mxu0 0
        %4074 = vmatprep.subr.bf16.mxu0 0
        %4075 = vmatpush2.bf16.xpose.msra.mxu0 0
        %4076 = vmatprep.subr.bf16.mxu0 0
        %4077 = vmatpush2.bf16.xpose.msra.mxu0 0
        %4078 = vmatprep.subr.bf16.mxu0 0
        %4079 = vmatpush2.bf16.xpose.msra.mxu0 0
        %4080 = vmatprep.subr.bf16.mxu0 0
        %4081 = vmatpush2.bf16.xpose.msra.mxu0 0
        %4082 = vmatprep.mubr.bf16.mxu0 0
        %4083 = vmatmul.mubr.bf16.gmra.mxu0 %v4045
        %v4084 = vpop.f32.mrf.mxu0
        %v4085 = vadd.f32 0.0, %v4084
        %v4086 = vpop.f32.mrf.mxu0
        %v4087 = vpop.f32.mrf.mxu0
        %v4088 = vpop.f32.mrf.mxu0
        %4089 = vdwg.mxu0
        %v4091 = vsel %vm1171, %v3994, 0
        %v4094 = vsel %vm1171, %v3578, 0
        %4096 = vmatprep.subr.bf16.mxu0 0
        %4097 = vmatpush1.bf16.xpose.msra.mxu0 0
        %4098 = vmatprep.subr.bf16.mxu0 0
        %4099 = vmatpush1.bf16.xpose.msra.mxu0 0
        %4100 = vmatprep.subr.bf16.mxu0 0
        %4101 = vmatpush1.bf16.xpose.msra.mxu0 0
        %4102 = vmatprep.subr.bf16.mxu0 0
        %4103 = vmatpush1.bf16.xpose.msra.mxu0 0
        %4104 = vmatprep.subr.bf16.mxu0 0
        %4105 = vmatpush1.bf16.xpose.msra.mxu0 0
        %4106 = vmatprep.subr.bf16.mxu0 0
        %4107 = vmatpush1.bf16.xpose.msra.mxu0 0
        %4108 = vmatprep.subr.bf16.mxu0 0
        %4109 = vmatpush1.bf16.xpose.msra.mxu0 0
        %4110 = vmatprep.subr.bf16.mxu0 0
        %4111 = vmatpush1.bf16.xpose.msra.mxu0 %v4094
        %4112 = vmatprep.subr.bf16.mxu0 0
        %4113 = vmatpush2.bf16.xpose.msra.mxu0 0
        %4114 = vmatprep.subr.bf16.mxu0 0
        %4115 = vmatpush2.bf16.xpose.msra.mxu0 0
        %4116 = vmatprep.subr.bf16.mxu0 0
        %4117 = vmatpush2.bf16.xpose.msra.mxu0 0
        %4118 = vmatprep.subr.bf16.mxu0 0
        %4119 = vmatpush2.bf16.xpose.msra.mxu0 0
        %4120 = vmatprep.subr.bf16.mxu0 0
        %4121 = vmatpush2.bf16.xpose.msra.mxu0 0
        %4122 = vmatprep.subr.bf16.mxu0 0
        %4123 = vmatpush2.bf16.xpose.msra.mxu0 0
        %4124 = vmatprep.subr.bf16.mxu0 0
        %4125 = vmatpush2.bf16.xpose.msra.mxu0 0
        %4126 = vmatprep.subr.bf16.mxu0 0
        %4127 = vmatpush2.bf16.xpose.msra.mxu0 0
        %4128 = vmatprep.mubr.bf16.mxu0 0
        %4129 = vmatmul.mubr.bf16.gmra.mxu0 %v4091
        %v4130 = vpop.f32.mrf.mxu0
        %v4131 = vadd.f32 0.0, %v4130
        %v4132 = vpop.f32.mrf.mxu0
        %v4133 = vpop.f32.mrf.mxu0
        %v4134 = vpop.f32.mrf.mxu0
        %4135 = vdwg.mxu0
        %v4137 = vsel %vm1171, %v3997, 0
        %v4140 = vsel %vm1171, %v3579, 0
        %4142 = vmatprep.subr.bf16.mxu0 0
        %4143 = vmatpush1.bf16.xpose.msra.mxu0 0
        %4144 = vmatprep.subr.bf16.mxu0 0
        %4145 = vmatpush1.bf16.xpose.msra.mxu0 0
        %4146 = vmatprep.subr.bf16.mxu0 0
        %4147 = vmatpush1.bf16.xpose.msra.mxu0 0
        %4148 = vmatprep.subr.bf16.mxu0 0
        %4149 = vmatpush1.bf16.xpose.msra.mxu0 0
        %4150 = vmatprep.subr.bf16.mxu0 0
        %4151 = vmatpush1.bf16.xpose.msra.mxu0 0
        %4152 = vmatprep.subr.bf16.mxu0 0
        %4153 = vmatpush1.bf16.xpose.msra.mxu0 0
        %4154 = vmatprep.subr.bf16.mxu0 0
        %4155 = vmatpush1.bf16.xpose.msra.mxu0 0
        %4156 = vmatprep.subr.bf16.mxu0 0
        %4157 = vmatpush1.bf16.xpose.msra.mxu0 %v4140
        %4158 = vmatprep.subr.bf16.mxu0 0
        %4159 = vmatpush2.bf16.xpose.msra.mxu0 0
        %4160 = vmatprep.subr.bf16.mxu0 0
        %4161 = vmatpush2.bf16.xpose.msra.mxu0 0
        %4162 = vmatprep.subr.bf16.mxu0 0
        %4163 = vmatpush2.bf16.xpose.msra.mxu0 0
        %4164 = vmatprep.subr.bf16.mxu0 0
        %4165 = vmatpush2.bf16.xpose.msra.mxu0 0
        %4166 = vmatprep.subr.bf16.mxu0 0
        %4167 = vmatpush2.bf16.xpose.msra.mxu0 0
        %4168 = vmatprep.subr.bf16.mxu0 0
        %4169 = vmatpush2.bf16.xpose.msra.mxu0 0
        %4170 = vmatprep.subr.bf16.mxu0 0
        %4171 = vmatpush2.bf16.xpose.msra.mxu0 0
        %4172 = vmatprep.subr.bf16.mxu0 0
        %4173 = vmatpush2.bf16.xpose.msra.mxu0 0
        %4174 = vmatprep.mubr.bf16.mxu0 0
        %4175 = vmatmul.mubr.bf16.gmra.mxu0 %v4137
        %v4176 = vpop.f32.mrf.mxu0
        %v4177 = vadd.f32 0.0, %v4176
        %v4178 = vpop.f32.mrf.mxu0
        %v4179 = vpop.f32.mrf.mxu0
        %v4180 = vpop.f32.mrf.mxu0
        %4181 = vdwg.mxu0
        %4182 = vxpose.xlu0.b32.start [1/16] %v4039, 128
        %4183 = vxpose.xlu0.b32.cont [2/16] 0.0, 128
        %4184 = vxpose.xlu0.b32.cont [3/16] 0.0, 128
        %4185 = vxpose.xlu0.b32.cont [4/16] 0.0, 128
        %4186 = vxpose.xlu0.b32.cont [5/16] 0.0, 128
        %4187 = vxpose.xlu0.b32.cont [6/16] 0.0, 128
        %4188 = vxpose.xlu0.b32.cont [7/16] 0.0, 128
        %4189 = vxpose.xlu0.b32.cont [8/16] 0.0, 128
        %4190 = vxpose.xlu0.b32.cont [9/16] 0.0, 128
        %4191 = vxpose.xlu0.b32.cont [10/16] 0.0, 128
        %4192 = vxpose.xlu0.b32.cont [11/16] 0.0, 128
        %4193 = vxpose.xlu0.b32.cont [12/16] 0.0, 128
        %4194 = vxpose.xlu0.b32.cont [13/16] 0.0, 128
        %4195 = vxpose.xlu0.b32.cont [14/16] 0.0, 128
        %4196 = vxpose.xlu0.b32.cont [15/16] 0.0, 128
        %4197 = vxpose.xlu0.b32.end [16/16] 0.0, 128
        %v4198 = vpop.trf.xlu0
        %v4199 = vpop.trf.xlu0
        %v4200 = vpop.trf.xlu0
        %v4201 = vpop.trf.xlu0
        %v4202 = vpop.trf.xlu0
        %v4203 = vpop.trf.xlu0
        %v4204 = vpop.trf.xlu0
        %v4205 = vpop.trf.xlu0
        %v4206 = vpop.trf.xlu0
        %v4207 = vpop.trf.xlu0
        %v4208 = vpop.trf.xlu0
        %v4209 = vpop.trf.xlu0
        %v4210 = vpop.trf.xlu0
        %v4211 = vpop.trf.xlu0
        %v4212 = vpop.trf.xlu0
        %v4213 = vpop.trf.xlu0
        %4214 = vxpose.xlu0.b32.start [1/16] %v4085, 128
        %4215 = vxpose.xlu0.b32.cont [2/16] 0.0, 128
        %4216 = vxpose.xlu0.b32.cont [3/16] 0.0, 128
        %4217 = vxpose.xlu0.b32.cont [4/16] 0.0, 128
        %4218 = vxpose.xlu0.b32.cont [5/16] 0.0, 128
        %4219 = vxpose.xlu0.b32.cont [6/16] 0.0, 128
        %4220 = vxpose.xlu0.b32.cont [7/16] 0.0, 128
        %4221 = vxpose.xlu0.b32.cont [8/16] 0.0, 128
        %4222 = vxpose.xlu0.b32.cont [9/16] 0.0, 128
        %4223 = vxpose.xlu0.b32.cont [10/16] 0.0, 128
        %4224 = vxpose.xlu0.b32.cont [11/16] 0.0, 128
        %4225 = vxpose.xlu0.b32.cont [12/16] 0.0, 128
        %4226 = vxpose.xlu0.b32.cont [13/16] 0.0, 128
        %4227 = vxpose.xlu0.b32.cont [14/16] 0.0, 128
        %4228 = vxpose.xlu0.b32.cont [15/16] 0.0, 128
        %4229 = vxpose.xlu0.b32.end [16/16] 0.0, 128
        %v4230 = vpop.trf.xlu0
        %v4231 = vpop.trf.xlu0
        %v4232 = vpop.trf.xlu0
        %v4233 = vpop.trf.xlu0
        %v4234 = vpop.trf.xlu0
        %v4235 = vpop.trf.xlu0
        %v4236 = vpop.trf.xlu0
        %v4237 = vpop.trf.xlu0
        %v4238 = vpop.trf.xlu0
        %v4239 = vpop.trf.xlu0
        %v4240 = vpop.trf.xlu0
        %v4241 = vpop.trf.xlu0
        %v4242 = vpop.trf.xlu0
        %v4243 = vpop.trf.xlu0
        %v4244 = vpop.trf.xlu0
        %v4245 = vpop.trf.xlu0
        %4246 = vxpose.xlu0.b32.start [1/16] %v4131, 128
        %4247 = vxpose.xlu0.b32.cont [2/16] 0.0, 128
        %4248 = vxpose.xlu0.b32.cont [3/16] 0.0, 128
        %4249 = vxpose.xlu0.b32.cont [4/16] 0.0, 128
        %4250 = vxpose.xlu0.b32.cont [5/16] 0.0, 128
        %4251 = vxpose.xlu0.b32.cont [6/16] 0.0, 128
        %4252 = vxpose.xlu0.b32.cont [7/16] 0.0, 128
        %4253 = vxpose.xlu0.b32.cont [8/16] 0.0, 128
        %4254 = vxpose.xlu0.b32.cont [9/16] 0.0, 128
        %4255 = vxpose.xlu0.b32.cont [10/16] 0.0, 128
        %4256 = vxpose.xlu0.b32.cont [11/16] 0.0, 128
        %4257 = vxpose.xlu0.b32.cont [12/16] 0.0, 128
        %4258 = vxpose.xlu0.b32.cont [13/16] 0.0, 128
        %4259 = vxpose.xlu0.b32.cont [14/16] 0.0, 128
        %4260 = vxpose.xlu0.b32.cont [15/16] 0.0, 128
        %4261 = vxpose.xlu0.b32.end [16/16] 0.0, 128
        %v4262 = vpop.trf.xlu0
        %v4263 = vpop.trf.xlu0
        %v4264 = vpop.trf.xlu0
        %v4265 = vpop.trf.xlu0
        %v4266 = vpop.trf.xlu0
        %v4267 = vpop.trf.xlu0
        %v4268 = vpop.trf.xlu0
        %v4269 = vpop.trf.xlu0
        %v4270 = vpop.trf.xlu0
        %v4271 = vpop.trf.xlu0
        %v4272 = vpop.trf.xlu0
        %v4273 = vpop.trf.xlu0
        %v4274 = vpop.trf.xlu0
        %v4275 = vpop.trf.xlu0
        %v4276 = vpop.trf.xlu0
        %v4277 = vpop.trf.xlu0
        %4278 = vxpose.xlu0.b32.start [1/16] %v4177, 128
        %4279 = vxpose.xlu0.b32.cont [2/16] 0.0, 128
        %4280 = vxpose.xlu0.b32.cont [3/16] 0.0, 128
        %4281 = vxpose.xlu0.b32.cont [4/16] 0.0, 128
        %4282 = vxpose.xlu0.b32.cont [5/16] 0.0, 128
        %4283 = vxpose.xlu0.b32.cont [6/16] 0.0, 128
        %4284 = vxpose.xlu0.b32.cont [7/16] 0.0, 128
        %4285 = vxpose.xlu0.b32.cont [8/16] 0.0, 128
        %4286 = vxpose.xlu0.b32.cont [9/16] 0.0, 128
        %4287 = vxpose.xlu0.b32.cont [10/16] 0.0, 128
        %4288 = vxpose.xlu0.b32.cont [11/16] 0.0, 128
        %4289 = vxpose.xlu0.b32.cont [12/16] 0.0, 128
        %4290 = vxpose.xlu0.b32.cont [13/16] 0.0, 128
        %4291 = vxpose.xlu0.b32.cont [14/16] 0.0, 128
        %4292 = vxpose.xlu0.b32.cont [15/16] 0.0, 128
        %4293 = vxpose.xlu0.b32.end [16/16] 0.0, 128
        %v4294 = vpop.trf.xlu0
        %v4295 = vpop.trf.xlu0
        %v4296 = vpop.trf.xlu0
        %v4297 = vpop.trf.xlu0
        %v4298 = vpop.trf.xlu0
        %v4299 = vpop.trf.xlu0
        %v4300 = vpop.trf.xlu0
        %v4301 = vpop.trf.xlu0
        %v4302 = vpop.trf.xlu0
        %v4303 = vpop.trf.xlu0
        %v4304 = vpop.trf.xlu0
        %v4305 = vpop.trf.xlu0
        %v4306 = vpop.trf.xlu0
        %v4307 = vpop.trf.xlu0
        %v4308 = vpop.trf.xlu0
        %v4309 = vpop.trf.xlu0
        %v4310 = vcombine.low %v4198, %v4262
        %v4311 = vcombine.high %v4198, %v4262
        %v4313 = vunpack.c.l.s4 1983009808
        %v4314 = vunpack.c.0.s8 %v4313
        %v4315 = vlaneseq
        %v4316 = vshrl.u32 %v4315, 7
        %v4317 = vsub.s32 %v4314, %v4316
        %v4318 = vrot.slane %v4310, %v4317
        %v4320 = vunpack.c.l.s4 1983009808
        %v4321 = vunpack.c.0.s8 %v4320
        %v4322 = vlaneseq
        %v4323 = vshrl.u32 %v4322, 7
        %v4324 = vsub.s32 %v4321, %v4323
        %v4325 = vrot.slane %v4311, %v4324
        %v4326 = vcombine.low %v4230, %v4294
        %v4327 = vcombine.high %v4230, %v4294
        %v4329 = vunpack.c.l.s4 1983009808
        %v4330 = vunpack.c.0.s8 %v4329
        %v4331 = vlaneseq
        %v4332 = vshrl.u32 %v4331, 7
        %v4333 = vsub.s32 %v4330, %v4332
        %v4334 = vrot.slane %v4326, %v4333
        %v4336 = vunpack.c.l.s4 1983009808
        %v4337 = vunpack.c.0.s8 %v4336
        %v4338 = vlaneseq
        %v4339 = vshrl.u32 %v4338, 7
        %v4340 = vsub.s32 %v4337, %v4339
        %v4341 = vrot.slane %v4327, %v4340
        %v4342 = vcombine.low %v4318, %v4334
        %v4343 = vcombine.high %v4318, %v4334
        %v4345 = vunpack.c.l.s4 1934713408
        %v4346 = vunpack.c.0.s8 %v4345
        %v4347 = vlaneseq
        %v4348 = vshrl.u32 %v4347, 7
        %v4349 = vsub.s32 %v4346, %v4348
        %v4350 = vrot.slane %v4342, %v4349
        %v4352 = vunpack.c.l.s4 1934713408
        %v4353 = vunpack.c.0.s8 %v4352
        %v4354 = vlaneseq
        %v4355 = vshrl.u32 %v4354, 7
        %v4356 = vsub.s32 %v4353, %v4355
        %v4357 = vrot.slane %v4343, %v4356
        %v4358 = vcombine.low %v4325, %v4341
        %v4359 = vcombine.high %v4325, %v4341
        %v4361 = vunpack.c.l.s4 1934713408
        %v4362 = vunpack.c.0.s8 %v4361
        %v4363 = vlaneseq
        %v4364 = vshrl.u32 %v4363, 7
        %v4365 = vsub.s32 %v4362, %v4364
        %v4366 = vrot.slane %v4358, %v4365
        %v4368 = vunpack.c.l.s4 1934713408
        %v4369 = vunpack.c.0.s8 %v4368
        %v4370 = vlaneseq
        %v4371 = vshrl.u32 %v4370, 7
        %v4372 = vsub.s32 %v4369, %v4371
        %v4373 = vrot.slane %v4359, %v4372
        %v4374 = vcombine.high %v4350, 0.0
        %v4375 = vcombine.high %v4357, 0.0
        %v4376 = vcombine.high %v4366, 0.0
        %v4377 = vcombine.high %v4373, 0.0
        %v4378 = vcombine.low %v4350, %v4357
        %v4380 = vunpack.c.l.s4 1983009808
        %v4381 = vunpack.c.0.s8 %v4380
        %v4382 = vlaneseq
        %v4383 = vshrl.u32 %v4382, 7
        %v4384 = vsub.s32 %v4381, %v4383
        %v4385 = vrot.slane %v4378, %v4384
        %v4386 = vcombine.low %v4374, %v4375
        %v4388 = vunpack.c.l.s4 1983009808
        %v4389 = vunpack.c.0.s8 %v4388
        %v4390 = vlaneseq
        %v4391 = vshrl.u32 %v4390, 7
        %v4392 = vsub.s32 %v4389, %v4391
        %v4393 = vrot.slane %v4386, %v4392
        %v4394 = vcombine.low %v4366, %v4373
        %v4396 = vunpack.c.l.s4 1983009808
        %v4397 = vunpack.c.0.s8 %v4396
        %v4398 = vlaneseq
        %v4399 = vshrl.u32 %v4398, 7
        %v4400 = vsub.s32 %v4397, %v4399
        %v4401 = vrot.slane %v4394, %v4400
        %v4402 = vcombine.low %v4376, %v4377
        %v4404 = vunpack.c.l.s4 1983009808
        %v4405 = vunpack.c.0.s8 %v4404
        %v4406 = vlaneseq
        %v4407 = vshrl.u32 %v4406, 7
        %v4408 = vsub.s32 %v4405, %v4407
        %v4409 = vrot.slane %v4402, %v4408
        %v4410 = vcombine.low %v4385, %v4393
        %v4411 = vcombine.high %v4385, %v4393
        %v4413 = vunpack.c.l.s4 1934713408
        %v4414 = vunpack.c.0.s8 %v4413
        %v4415 = vlaneseq
        %v4416 = vshrl.u32 %v4415, 7
        %v4417 = vsub.s32 %v4414, %v4416
        %v4418 = vrot.slane %v4410, %v4417
        %v4420 = vunpack.c.l.s4 1934713408
        %v4421 = vunpack.c.0.s8 %v4420
        %v4422 = vlaneseq
        %v4423 = vshrl.u32 %v4422, 7
        %v4424 = vsub.s32 %v4421, %v4423
        %v4425 = vrot.slane %v4411, %v4424
        %v4426 = vcombine.low %v4401, %v4409
        %v4427 = vcombine.high %v4401, %v4409
        %v4429 = vunpack.c.l.s4 1934713408
        %v4430 = vunpack.c.0.s8 %v4429
        %v4431 = vlaneseq
        %v4432 = vshrl.u32 %v4431, 7
        %v4433 = vsub.s32 %v4430, %v4432
        %v4434 = vrot.slane %v4426, %v4433
        %v4436 = vunpack.c.l.s4 1934713408
        %v4437 = vunpack.c.0.s8 %v4436
        %v4438 = vlaneseq
        %v4439 = vshrl.u32 %v4438, 7
        %v4440 = vsub.s32 %v4437, %v4439
        %v4441 = vrot.slane %v4427, %v4440
        %v4442 = vcombine.low %v4418, %v4434
        %v4443 = vcombine.high %v4418, %v4434
        %v4444 = vcombine.low %v4425, %v4441
        %v4445 = vcombine.high %v4425, %v4441
        %4447 = vrot.lane.b32.xlu0 %v4443, 8
        %v4448 = vpop.permute.xlu0 %4447
        %4451 = vrot.lane.b32.xlu0 %v4444, 16
        %v4452 = vpop.permute.xlu0 %4451
        %4455 = vrot.lane.b32.xlu0 %v4445, 24
        %v4456 = vpop.permute.xlu0 %4455
        %v4458 = vsel %vm1171, %v4442, %v4448
        %v4459 = vsel %vm2290, %v4458, %v4452
        %v4460 = vsel %vm2292, %v4459, %v4456
        %v4461 = vpack.c.bf16 %v4460, %v4460
        %v4462 = vld [vmem:[#allocation3] sm:$0xf]
        %v4463 = vld [vmem:[#allocation3 + $0x8] sm:$0xf]
        %v4464 = vld [vmem:[#allocation3 + $0x10] sm:$0xf]
        %v4465 = vld [vmem:[#allocation3 + $0x18] sm:$0xf]
        %v4470 = vunpack.c.l.b16 %v4462
        %v4471 = vunpack.c.l.b16 %v4463
        %v4472 = vunpack.c.l.b16 %v4464
        %v4473 = vunpack.c.l.b16 %v4465
        %v4474 = vpack.c.b16 %v4471, %v4470
        %v4475 = vpack.c.b16 %v4473, %v4472
        %4476 = vrot.lane.b32.xlu0 %v4474, 32
        %v4477 = vpop.permute.xlu0 %4476
        %4478 = vrot.lane.b32.xlu0 %v4475, 32
        %v4479 = vpop.permute.xlu0 %4478
        %v4483 = vsel %vm306, %v4461, 0
        %4485 = vmatprep.subr.bf16.mxu0 0
        %4486 = vmatpush1.bf16.msra.mxu0 0
        %4487 = vmatprep.subr.bf16.mxu0 0
        %4488 = vmatpush1.bf16.msra.mxu0 0
        %4489 = vmatprep.subr.bf16.mxu0 0
        %4490 = vmatpush1.bf16.msra.mxu0 0
        %4491 = vmatprep.subr.bf16.mxu0 0
        %4492 = vmatpush1.bf16.msra.mxu0 0
        %4493 = vmatprep.subr.bf16.mxu0 0
        %4494 = vmatpush1.bf16.msra.mxu0 0
        %4495 = vmatprep.subr.bf16.mxu0 0
        %4496 = vmatpush1.bf16.msra.mxu0 0
        %4497 = vmatprep.subr.bf16.mxu0 0
        %4498 = vmatpush1.bf16.msra.mxu0 %v4479
        %4499 = vmatprep.subr.bf16.mxu0 0
        %4500 = vmatpush1.bf16.msra.mxu0 %v4477
        %4501 = vmatprep.subr.bf16.mxu0 0
        %4502 = vmatpush2.bf16.msra.mxu0 0
        %4503 = vmatprep.subr.bf16.mxu0 0
        %4504 = vmatpush2.bf16.msra.mxu0 0
        %4505 = vmatprep.subr.bf16.mxu0 0
        %4506 = vmatpush2.bf16.msra.mxu0 0
        %4507 = vmatprep.subr.bf16.mxu0 0
        %4508 = vmatpush2.bf16.msra.mxu0 0
        %4509 = vmatprep.subr.bf16.mxu0 0
        %4510 = vmatpush2.bf16.msra.mxu0 0
        %4511 = vmatprep.subr.bf16.mxu0 0
        %4512 = vmatpush2.bf16.msra.mxu0 0
        %4513 = vmatprep.subr.bf16.mxu0 0
        %4514 = vmatpush2.bf16.msra.mxu0 0
        %4515 = vmatprep.subr.bf16.mxu0 0
        %4516 = vmatpush2.bf16.msra.mxu0 0
        %4517 = vmatprep.mubr.bf16.mxu0 0
        %4518 = vmatmul.mubr.bf16.gmra.mxu0 %v4483
        %v4519 = vpop.f32.mrf.mxu0
        %v4520 = vadd.f32 %v2302, %v4519
        %v4521 = vpop.f32.mrf.mxu0
        %v4522 = vpop.f32.mrf.mxu0
        %v4523 = vpop.f32.mrf.mxu0
        %4524 = vdwg.mxu0
        %v4525 = vadd.f32 %v2508, %v4520
        %v4526 = vsel %vm306, %v4525, 0.0
        %4527 = vadd.xlane.f32.xlu0 %v4526
        %v4528 = vpop.xlane.xlu0 %4527
        %v4529 = vmul.f32 %v4528, %v310
        %v4530 = vsub.f32 %v4525, %v4529
        %v4531 = vmul.f32 %v4530, %v4530
        %v4532 = vsel %vm306, %v4531, 0.0
        %4533 = vadd.xlane.f32.xlu0 %v4532
        %v4534 = vpop.xlane.xlu0 %4533
        %v4535 = vmul.f32 %v4534, %v310
        %v4536 = vadd.f32 %v4535, 1e-05
        %v4537 = vrsqrt.pop %v4536
        %v4538 = vmul.f32 %v4530, %v4537
        %v4539 = vmul.f32 %v4538, %v2379
        %v4540 = vadd.f32 %v4539, %v2384
        %v4541 = vpack.c.bf16 %v4540, %v4540
        %v4542 = vld [vmem:[#allocation3 + $0x4] sm:$0xf]
        %v4543 = vld [vmem:[#allocation3 + $0xc] sm:$0xf]
        %v4544 = vld [vmem:[#allocation3 + $0x14] sm:$0xf]
        %v4545 = vld [vmem:[#allocation3 + $0x1c] sm:$0xf]
        %v4550 = vunpack.c.l.b16 %v4542
        %v4551 = vunpack.c.l.b16 %v4543
        %v4552 = vunpack.c.l.b16 %v4544
        %v4553 = vunpack.c.l.b16 %v4545
        %v4554 = vpack.c.b16 %v4551, %v4550
        %v4555 = vpack.c.b16 %v4553, %v4552
        %v4559 = vsel %vm306, %v4541, 0
        %4561 = vmatprep.subr.bf16.mxu0 0
        %4562 = vmatpush1.bf16.msra.mxu0 0
        %4563 = vmatprep.subr.bf16.mxu0 0
        %4564 = vmatpush1.bf16.msra.mxu0 0
        %4565 = vmatprep.subr.bf16.mxu0 0
        %4566 = vmatpush1.bf16.msra.mxu0 0
        %4567 = vmatprep.subr.bf16.mxu0 0
        %4568 = vmatpush1.bf16.msra.mxu0 0
        %4569 = vmatprep.subr.bf16.mxu0 0
        %4570 = vmatpush1.bf16.msra.mxu0 0
        %4571 = vmatprep.subr.bf16.mxu0 0
        %4572 = vmatpush1.bf16.msra.mxu0 0
        %4573 = vmatprep.subr.bf16.mxu0 0
        %4574 = vmatpush1.bf16.msra.mxu0 %v4555
        %4575 = vmatprep.subr.bf16.mxu0 0
        %4576 = vmatpush1.bf16.msra.mxu0 %v4554
        %4577 = vmatprep.subr.bf16.mxu0 0
        %4578 = vmatpush2.bf16.msra.mxu0 0
        %4579 = vmatprep.subr.bf16.mxu0 0
        %4580 = vmatpush2.bf16.msra.mxu0 0
        %4581 = vmatprep.subr.bf16.mxu0 0
        %4582 = vmatpush2.bf16.msra.mxu0 0
        %4583 = vmatprep.subr.bf16.mxu0 0
        %4584 = vmatpush2.bf16.msra.mxu0 0
        %4585 = vmatprep.subr.bf16.mxu0 0
        %4586 = vmatpush2.bf16.msra.mxu0 0
        %4587 = vmatprep.subr.bf16.mxu0 0
        %4588 = vmatpush2.bf16.msra.mxu0 0
        %4589 = vmatprep.subr.bf16.mxu0 0
        %4590 = vmatpush2.bf16.msra.mxu0 0
        %4591 = vmatprep.subr.bf16.mxu0 0
        %4592 = vmatpush2.bf16.msra.mxu0 0
        %4593 = vmatprep.mubr.bf16.mxu0 0
        %4594 = vmatmul.mubr.bf16.gmra.mxu0 %v4559
        %v4595 = vpop.f32.mrf.mxu0
        %v4596 = vadd.f32 %v2394, %v4595
        %v4597 = vpop.f32.mrf.mxu0
        %v4598 = vpop.f32.mrf.mxu0
        %v4599 = vpop.f32.mrf.mxu0
        %4600 = vdwg.mxu0
        %v4601 = vmax.f32 %v4596, 0.0
        %v4602 = vpack.c.bf16 %v4601, %v4601
        %4603 = vrot.lane.b32.xlu0 %v4554, 96
        %v4604 = vpop.permute.xlu0 %4603
        %4605 = vrot.lane.b32.xlu0 %v4555, 96
        %v4606 = vpop.permute.xlu0 %4605
        %v4610 = vsel %vm306, %v4602, 0
        %4612 = vmatprep.subr.bf16.mxu0 0
        %4613 = vmatpush1.bf16.msra.mxu0 0
        %4614 = vmatprep.subr.bf16.mxu0 0
        %4615 = vmatpush1.bf16.msra.mxu0 0
        %4616 = vmatprep.subr.bf16.mxu0 0
        %4617 = vmatpush1.bf16.msra.mxu0 0
        %4618 = vmatprep.subr.bf16.mxu0 0
        %4619 = vmatpush1.bf16.msra.mxu0 0
        %4620 = vmatprep.subr.bf16.mxu0 0
        %4621 = vmatpush1.bf16.msra.mxu0 0
        %4622 = vmatprep.subr.bf16.mxu0 0
        %4623 = vmatpush1.bf16.msra.mxu0 0
        %4624 = vmatprep.subr.bf16.mxu0 0
        %4625 = vmatpush1.bf16.msra.mxu0 %v4606
        %4626 = vmatprep.subr.bf16.mxu0 0
        %4627 = vmatpush1.bf16.msra.mxu0 %v4604
        %4628 = vmatprep.subr.bf16.mxu0 0
        %4629 = vmatpush2.bf16.msra.mxu0 0
        %4630 = vmatprep.subr.bf16.mxu0 0
        %4631 = vmatpush2.bf16.msra.mxu0 0
        %4632 = vmatprep.subr.bf16.mxu0 0
        %4633 = vmatpush2.bf16.msra.mxu0 0
        %4634 = vmatprep.subr.bf16.mxu0 0
        %4635 = vmatpush2.bf16.msra.mxu0 0
        %4636 = vmatprep.subr.bf16.mxu0 0
        %4637 = vmatpush2.bf16.msra.mxu0 0
        %4638 = vmatprep.subr.bf16.mxu0 0
        %4639 = vmatpush2.bf16.msra.mxu0 0
        %4640 = vmatprep.subr.bf16.mxu0 0
        %4641 = vmatpush2.bf16.msra.mxu0 0
        %4642 = vmatprep.subr.bf16.mxu0 0
        %4643 = vmatpush2.bf16.msra.mxu0 0
        %4644 = vmatprep.mubr.bf16.mxu0 0
        %4645 = vmatmul.mubr.bf16.gmra.mxu0 %v4610
        %v4646 = vpop.f32.mrf.mxu0
        %v4647 = vadd.f32 %v2455, %v4646
        %v4648 = vpop.f32.mrf.mxu0
        %v4649 = vpop.f32.mrf.mxu0
        %v4650 = vpop.f32.mrf.mxu0
        %4651 = vdwg.mxu0
        %v4652 = vadd.f32 %v4647, %v4525
        %4653 = vst.msk [vmem:[%s2507] sm:$0xff] %vm306, %v4652
        %s4654 = scalar_lea.vmem %s285, 16
        %v4655 = vld [vmem:[%s4654] sm:$0xff]
        %v4656 = vld [vmem:[%s4654 + $0x8] sm:$0x3]
        %v4657 = vld [vmem:[#allocation2] sm:$0xff]
        %v4658 = vsel %vm306, %v4657, 0.0
        %4659 = vadd.xlane.f32.xlu0 %v4658
        %v4660 = vpop.xlane.xlu0 %4659
        %v4661 = vmul.f32 %v4660, %v310
        %v4662 = vsub.f32 %v4657, %v4661
        %v4663 = vmul.f32 %v4662, %v4662
        %v4664 = vsel %vm306, %v4663, 0.0
        %4665 = vadd.xlane.f32.xlu0 %v4664
        %v4666 = vpop.xlane.xlu0 %4665
        %v4667 = vmul.f32 %v4666, %v310
        %v4668 = vadd.f32 %v4667, 1e-05
        %v4669 = vrsqrt.pop %v4668
        %v4670 = vmul.f32 %v4662, %v4669
        %v4671 = vlaneseq
        %v4672 = vshrl.u32 %v4671, 7
        %v4673 = vsub.s32 0, %v4672
        %v4674 = vrot.slane %v4655, %v4673
        %v4675 = vmul.f32 %v4670, %v4674
        %v4676 = vlaneseq
        %v4677 = vshrl.u32 %v4676, 7
        %v4678 = vsub.s32 1, %v4677
        %v4679 = vrot.slane %v4655, %v4678
        %v4680 = vadd.f32 %v4675, %v4679
        %v4681 = vpack.c.bf16 %v4680, %v4680
        %s4682 = scalar_lea.vmem [#allocation3], 32
        %v4683 = vld [vmem:[%s4682] sm:$0xf]
        %v4684 = vld [vmem:[%s4682 + $0x8] sm:$0xf]
        %v4685 = vld [vmem:[%s4682 + $0x10] sm:$0xf]
        %v4686 = vld [vmem:[%s4682 + $0x18] sm:$0xf]
        %v4691 = vunpack.c.l.b16 %v4683
        %v4692 = vunpack.c.l.b16 %v4684
        %v4693 = vunpack.c.l.b16 %v4685
        %v4694 = vunpack.c.l.b16 %v4686
        %v4695 = vpack.c.b16 %v4692, %v4691
        %v4696 = vpack.c.b16 %v4694, %v4693
        %v4700 = vsel %vm306, %v4681, 0
        %4702 = vmatprep.subr.bf16.mxu0 0
        %4703 = vmatpush1.bf16.msra.mxu0 0
        %4704 = vmatprep.subr.bf16.mxu0 0
        %4705 = vmatpush1.bf16.msra.mxu0 0
        %4706 = vmatprep.subr.bf16.mxu0 0
        %4707 = vmatpush1.bf16.msra.mxu0 0
        %4708 = vmatprep.subr.bf16.mxu0 0
        %4709 = vmatpush1.bf16.msra.mxu0 0
        %4710 = vmatprep.subr.bf16.mxu0 0
        %4711 = vmatpush1.bf16.msra.mxu0 0
        %4712 = vmatprep.subr.bf16.mxu0 0
        %4713 = vmatpush1.bf16.msra.mxu0 0
        %4714 = vmatprep.subr.bf16.mxu0 0
        %4715 = vmatpush1.bf16.msra.mxu0 %v4696
        %4716 = vmatprep.subr.bf16.mxu0 0
        %4717 = vmatpush1.bf16.msra.mxu0 %v4695
        %4718 = vmatprep.subr.bf16.mxu0 0
        %4719 = vmatpush2.bf16.msra.mxu0 0
        %4720 = vmatprep.subr.bf16.mxu0 0
        %4721 = vmatpush2.bf16.msra.mxu0 0
        %4722 = vmatprep.subr.bf16.mxu0 0
        %4723 = vmatpush2.bf16.msra.mxu0 0
        %4724 = vmatprep.subr.bf16.mxu0 0
        %4725 = vmatpush2.bf16.msra.mxu0 0
        %4726 = vmatprep.subr.bf16.mxu0 0
        %4727 = vmatpush2.bf16.msra.mxu0 0
        %4728 = vmatprep.subr.bf16.mxu0 0
        %4729 = vmatpush2.bf16.msra.mxu0 0
        %4730 = vmatprep.subr.bf16.mxu0 0
        %4731 = vmatpush2.bf16.msra.mxu0 0
        %4732 = vmatprep.subr.bf16.mxu0 0
        %4733 = vmatpush2.bf16.msra.mxu0 0
        %4734 = vmatprep.mubr.bf16.mxu0 0
        %4735 = vmatmul.mubr.bf16.gmra.mxu0 %v4700
        %v4736 = vpop.f32.mrf.mxu0
        %v4737 = vadd.f32 0.0, %v4736
        %v4738 = vpop.f32.mrf.mxu0
        %v4739 = vpop.f32.mrf.mxu0
        %v4740 = vpop.f32.mrf.mxu0
        %4741 = vdwg.mxu0
        %v4742 = vlaneseq
        %v4743 = vshrl.u32 %v4742, 7
        %v4744 = vsub.s32 4, %v4743
        %v4745 = vrot.slane %v4655, %v4744
        %v4746 = vadd.f32 %v4737, %v4745
        %v4747 = vmul.f32 %v4746, 0.17677669
        %v4748 = vlaneseq
        %v4749 = vshrl.u32 %v4748, 7
        %v4750 = vsub.s32 5, %v4749
        %v4751 = vrot.slane %v4655, %v4750
        %4753 = vrot.lane.b32.xlu0 %v4751, 32
        %v4754 = vpop.permute.xlu0 %4753
        %v4756 = vadd.f32 %v4737, %v4754
        %v4757 = vlaneseq
        %v4758 = vshrl.u32 %v4757, 7
        %v4759 = vsub.s32 6, %v4758
        %v4760 = vrot.slane %v4655, %v4759
        %4762 = vrot.lane.b32.xlu0 %v4760, 64
        %v4763 = vpop.permute.xlu0 %4762
        %v4765 = vadd.f32 %v4737, %v4763
        %4767 = vrot.lane.b32.xlu0 %v4747, 120
        %v4768 = vpop.permute.xlu0 %4767
        %4770 = vrot.lane.b32.xlu0 %v4747, 112
        %v4771 = vpop.permute.xlu0 %4770
        %4773 = vrot.lane.b32.xlu0 %v4747, 104
        %v4774 = vpop.permute.xlu0 %4773
        %v4776 = vcombine.low %v4747, %v4771
        %v4777 = vcombine.high %v4747, %v4771
        %v4779 = vunpack.c.l.s4 1983009808
        %v4780 = vunpack.c.0.s8 %v4779
        %v4781 = vlaneseq
        %v4782 = vshrl.u32 %v4781, 7
        %v4783 = vsub.s32 %v4780, %v4782
        %v4784 = vrot.slane %v4776, %v4783
        %v4786 = vunpack.c.l.s4 1983009808
        %v4787 = vunpack.c.0.s8 %v4786
        %v4788 = vlaneseq
        %v4789 = vshrl.u32 %v4788, 7
        %v4790 = vsub.s32 %v4787, %v4789
        %v4791 = vrot.slane %v4777, %v4790
        %v4792 = vcombine.low %v4768, %v4774
        %v4793 = vcombine.high %v4768, %v4774
        %v4795 = vunpack.c.l.s4 1983009808
        %v4796 = vunpack.c.0.s8 %v4795
        %v4797 = vlaneseq
        %v4798 = vshrl.u32 %v4797, 7
        %v4799 = vsub.s32 %v4796, %v4798
        %v4800 = vrot.slane %v4792, %v4799
        %v4802 = vunpack.c.l.s4 1983009808
        %v4803 = vunpack.c.0.s8 %v4802
        %v4804 = vlaneseq
        %v4805 = vshrl.u32 %v4804, 7
        %v4806 = vsub.s32 %v4803, %v4805
        %v4807 = vrot.slane %v4793, %v4806
        %v4808 = vcombine.low %v4784, %v4800
        %v4809 = vcombine.high %v4784, %v4800
        %v4811 = vunpack.c.l.s4 1934713408
        %v4812 = vunpack.c.0.s8 %v4811
        %v4813 = vlaneseq
        %v4814 = vshrl.u32 %v4813, 7
        %v4815 = vsub.s32 %v4812, %v4814
        %v4816 = vrot.slane %v4808, %v4815
        %v4818 = vunpack.c.l.s4 1934713408
        %v4819 = vunpack.c.0.s8 %v4818
        %v4820 = vlaneseq
        %v4821 = vshrl.u32 %v4820, 7
        %v4822 = vsub.s32 %v4819, %v4821
        %v4823 = vrot.slane %v4809, %v4822
        %v4824 = vcombine.low %v4791, %v4807
        %v4825 = vcombine.high %v4791, %v4807
        %v4827 = vunpack.c.l.s4 1934713408
        %v4828 = vunpack.c.0.s8 %v4827
        %v4829 = vlaneseq
        %v4830 = vshrl.u32 %v4829, 7
        %v4831 = vsub.s32 %v4828, %v4830
        %v4832 = vrot.slane %v4824, %v4831
        %v4834 = vunpack.c.l.s4 1934713408
        %v4835 = vunpack.c.0.s8 %v4834
        %v4836 = vlaneseq
        %v4837 = vshrl.u32 %v4836, 7
        %v4838 = vsub.s32 %v4835, %v4837
        %v4839 = vrot.slane %v4825, %v4838
        %v4840 = vcombine.high %v4816, 0.0
        %v4841 = vcombine.high %v4823, 0.0
        %v4842 = vcombine.high %v4832, 0.0
        %v4843 = vcombine.high %v4839, 0.0
        %v4844 = vpack.c.bf16 %v4816, %v4816
        %v4845 = vpack.c.bf16 %v4840, %v4840
        %v4846 = vpack.c.bf16 %v4823, %v4823
        %v4847 = vpack.c.bf16 %v4841, %v4841
        %v4848 = vpack.c.bf16 %v4832, %v4832
        %v4849 = vpack.c.bf16 %v4842, %v4842
        %v4850 = vpack.c.bf16 %v4839, %v4839
        %v4851 = vpack.c.bf16 %v4843, %v4843
        %4853 = vrot.lane.b32.xlu0 %v4756, 120
        %v4854 = vpop.permute.xlu0 %4853
        %4855 = vrot.lane.b32.xlu0 %v4756, 112
        %v4856 = vpop.permute.xlu0 %4855
        %4857 = vrot.lane.b32.xlu0 %v4756, 104
        %v4858 = vpop.permute.xlu0 %4857
        %4859 = vrot.lane.b32.xlu0 %v4756, 96
        %v4860 = vpop.permute.xlu0 %4859
        %4861 = vrot.lane.b32.xlu0 %v4854, 96
        %v4862 = vpop.permute.xlu0 %4861
        %4863 = vrot.lane.b32.xlu0 %v4856, 96
        %v4864 = vpop.permute.xlu0 %4863
        %4865 = vrot.lane.b32.xlu0 %v4858, 96
        %v4866 = vpop.permute.xlu0 %4865
        %v4871 = vcombine.low %v4860, %v4864
        %v4872 = vcombine.high %v4860, %v4864
        %v4874 = vunpack.c.l.s4 1983009808
        %v4875 = vunpack.c.0.s8 %v4874
        %v4876 = vlaneseq
        %v4877 = vshrl.u32 %v4876, 7
        %v4878 = vsub.s32 %v4875, %v4877
        %v4879 = vrot.slane %v4871, %v4878
        %v4881 = vunpack.c.l.s4 1983009808
        %v4882 = vunpack.c.0.s8 %v4881
        %v4883 = vlaneseq
        %v4884 = vshrl.u32 %v4883, 7
        %v4885 = vsub.s32 %v4882, %v4884
        %v4886 = vrot.slane %v4872, %v4885
        %v4887 = vcombine.low %v4862, %v4866
        %v4888 = vcombine.high %v4862, %v4866
        %v4890 = vunpack.c.l.s4 1983009808
        %v4891 = vunpack.c.0.s8 %v4890
        %v4892 = vlaneseq
        %v4893 = vshrl.u32 %v4892, 7
        %v4894 = vsub.s32 %v4891, %v4893
        %v4895 = vrot.slane %v4887, %v4894
        %v4897 = vunpack.c.l.s4 1983009808
        %v4898 = vunpack.c.0.s8 %v4897
        %v4899 = vlaneseq
        %v4900 = vshrl.u32 %v4899, 7
        %v4901 = vsub.s32 %v4898, %v4900
        %v4902 = vrot.slane %v4888, %v4901
        %v4903 = vcombine.low %v4879, %v4895
        %v4904 = vcombine.high %v4879, %v4895
        %v4906 = vunpack.c.l.s4 1934713408
        %v4907 = vunpack.c.0.s8 %v4906
        %v4908 = vlaneseq
        %v4909 = vshrl.u32 %v4908, 7
        %v4910 = vsub.s32 %v4907, %v4909
        %v4911 = vrot.slane %v4903, %v4910
        %v4913 = vunpack.c.l.s4 1934713408
        %v4914 = vunpack.c.0.s8 %v4913
        %v4915 = vlaneseq
        %v4916 = vshrl.u32 %v4915, 7
        %v4917 = vsub.s32 %v4914, %v4916
        %v4918 = vrot.slane %v4904, %v4917
        %v4919 = vcombine.low %v4886, %v4902
        %v4920 = vcombine.high %v4886, %v4902
        %v4922 = vunpack.c.l.s4 1934713408
        %v4923 = vunpack.c.0.s8 %v4922
        %v4924 = vlaneseq
        %v4925 = vshrl.u32 %v4924, 7
        %v4926 = vsub.s32 %v4923, %v4925
        %v4927 = vrot.slane %v4919, %v4926
        %v4929 = vunpack.c.l.s4 1934713408
        %v4930 = vunpack.c.0.s8 %v4929
        %v4931 = vlaneseq
        %v4932 = vshrl.u32 %v4931, 7
        %v4933 = vsub.s32 %v4930, %v4932
        %v4934 = vrot.slane %v4920, %v4933
        %v4935 = vcombine.high %v4911, 0.0
        %v4936 = vcombine.high %v4918, 0.0
        %v4937 = vcombine.high %v4927, 0.0
        %v4938 = vcombine.high %v4934, 0.0
        %v4939 = vpack.c.bf16 %v4911, %v4911
        %v4940 = vpack.c.bf16 %v4935, %v4935
        %v4941 = vpack.c.bf16 %v4918, %v4918
        %v4942 = vpack.c.bf16 %v4936, %v4936
        %v4943 = vpack.c.bf16 %v4927, %v4927
        %v4944 = vpack.c.bf16 %v4937, %v4937
        %v4945 = vpack.c.bf16 %v4934, %v4934
        %v4946 = vpack.c.bf16 %v4938, %v4938
        %4948 = vrot.lane.b32.xlu0 %v4765, 120
        %v4949 = vpop.permute.xlu0 %4948
        %4950 = vrot.lane.b32.xlu0 %v4765, 112
        %v4951 = vpop.permute.xlu0 %4950
        %4952 = vrot.lane.b32.xlu0 %v4765, 104
        %v4953 = vpop.permute.xlu0 %4952
        %4954 = vrot.lane.b32.xlu0 %v4765, 64
        %v4955 = vpop.permute.xlu0 %4954
        %4956 = vrot.lane.b32.xlu0 %v4949, 64
        %v4957 = vpop.permute.xlu0 %4956
        %4958 = vrot.lane.b32.xlu0 %v4951, 64
        %v4959 = vpop.permute.xlu0 %4958
        %4960 = vrot.lane.b32.xlu0 %v4953, 64
        %v4961 = vpop.permute.xlu0 %4960
        %v4966 = vcombine.low %v4955, %v4959
        %v4967 = vcombine.high %v4955, %v4959
        %v4969 = vunpack.c.l.s4 1983009808
        %v4970 = vunpack.c.0.s8 %v4969
        %v4971 = vlaneseq
        %v4972 = vshrl.u32 %v4971, 7
        %v4973 = vsub.s32 %v4970, %v4972
        %v4974 = vrot.slane %v4966, %v4973
        %v4976 = vunpack.c.l.s4 1983009808
        %v4977 = vunpack.c.0.s8 %v4976
        %v4978 = vlaneseq
        %v4979 = vshrl.u32 %v4978, 7
        %v4980 = vsub.s32 %v4977, %v4979
        %v4981 = vrot.slane %v4967, %v4980
        %v4982 = vcombine.low %v4957, %v4961
        %v4983 = vcombine.high %v4957, %v4961
        %v4985 = vunpack.c.l.s4 1983009808
        %v4986 = vunpack.c.0.s8 %v4985
        %v4987 = vlaneseq
        %v4988 = vshrl.u32 %v4987, 7
        %v4989 = vsub.s32 %v4986, %v4988
        %v4990 = vrot.slane %v4982, %v4989
        %v4992 = vunpack.c.l.s4 1983009808
        %v4993 = vunpack.c.0.s8 %v4992
        %v4994 = vlaneseq
        %v4995 = vshrl.u32 %v4994, 7
        %v4996 = vsub.s32 %v4993, %v4995
        %v4997 = vrot.slane %v4983, %v4996
        %v4998 = vcombine.low %v4974, %v4990
        %v4999 = vcombine.high %v4974, %v4990
        %v5001 = vunpack.c.l.s4 1934713408
        %v5002 = vunpack.c.0.s8 %v5001
        %v5003 = vlaneseq
        %v5004 = vshrl.u32 %v5003, 7
        %v5005 = vsub.s32 %v5002, %v5004
        %v5006 = vrot.slane %v4998, %v5005
        %v5008 = vunpack.c.l.s4 1934713408
        %v5009 = vunpack.c.0.s8 %v5008
        %v5010 = vlaneseq
        %v5011 = vshrl.u32 %v5010, 7
        %v5012 = vsub.s32 %v5009, %v5011
        %v5013 = vrot.slane %v4999, %v5012
        %v5014 = vcombine.low %v4981, %v4997
        %v5015 = vcombine.high %v4981, %v4997
        %v5017 = vunpack.c.l.s4 1934713408
        %v5018 = vunpack.c.0.s8 %v5017
        %v5019 = vlaneseq
        %v5020 = vshrl.u32 %v5019, 7
        %v5021 = vsub.s32 %v5018, %v5020
        %v5022 = vrot.slane %v5014, %v5021
        %v5024 = vunpack.c.l.s4 1934713408
        %v5025 = vunpack.c.0.s8 %v5024
        %v5026 = vlaneseq
        %v5027 = vshrl.u32 %v5026, 7
        %v5028 = vsub.s32 %v5025, %v5027
        %v5029 = vrot.slane %v5015, %v5028
        %v5030 = vcombine.high %v5006, 0.0
        %v5031 = vcombine.high %v5013, 0.0
        %v5032 = vcombine.high %v5022, 0.0
        %v5033 = vcombine.high %v5029, 0.0
        %v5034 = vpack.c.bf16 %v5006, %v5006
        %v5035 = vpack.c.bf16 %v5030, %v5030
        %v5036 = vpack.c.bf16 %v5013, %v5013
        %v5037 = vpack.c.bf16 %v5031, %v5031
        %v5038 = vpack.c.bf16 %v5022, %v5022
        %v5039 = vpack.c.bf16 %v5032, %v5032
        %v5040 = vpack.c.bf16 %v5029, %v5029
        %v5041 = vpack.c.bf16 %v5033, %v5033
        %v5042 = vcombine.low %v4844, %v4848
        %v5044 = vunpack.c.l.s4 1983009808
        %v5045 = vunpack.c.0.s8 %v5044
        %v5046 = vlaneseq
        %v5047 = vshrl.u32 %v5046, 7
        %v5048 = vsub.s32 %v5045, %v5047
        %v5049 = vrot.slane %v5042, %v5048
        %v5050 = vcombine.low %v4846, %v4850
        %v5052 = vunpack.c.l.s4 1983009808
        %v5053 = vunpack.c.0.s8 %v5052
        %v5054 = vlaneseq
        %v5055 = vshrl.u32 %v5054, 7
        %v5056 = vsub.s32 %v5053, %v5055
        %v5057 = vrot.slane %v5050, %v5056
        %v5058 = vcombine.low %v5049, %v5057
        %v5060 = vunpack.c.l.s4 1934713408
        %v5061 = vunpack.c.0.s8 %v5060
        %v5062 = vlaneseq
        %v5063 = vshrl.u32 %v5062, 7
        %v5064 = vsub.s32 %v5061, %v5063
        %v5065 = vrot.slane %v5058, %v5064
        %v5066 = vcombine.high %v5065, 0
        %v5067 = vcombine.low %v4845, %v4849
        %v5069 = vunpack.c.l.s4 1983009808
        %v5070 = vunpack.c.0.s8 %v5069
        %v5071 = vlaneseq
        %v5072 = vshrl.u32 %v5071, 7
        %v5073 = vsub.s32 %v5070, %v5072
        %v5074 = vrot.slane %v5067, %v5073
        %v5075 = vcombine.low %v4847, %v4851
        %v5077 = vunpack.c.l.s4 1983009808
        %v5078 = vunpack.c.0.s8 %v5077
        %v5079 = vlaneseq
        %v5080 = vshrl.u32 %v5079, 7
        %v5081 = vsub.s32 %v5078, %v5080
        %v5082 = vrot.slane %v5075, %v5081
        %v5083 = vcombine.low %v5074, %v5082
        %v5085 = vunpack.c.l.s4 1934713408
        %v5086 = vunpack.c.0.s8 %v5085
        %v5087 = vlaneseq
        %v5088 = vshrl.u32 %v5087, 7
        %v5089 = vsub.s32 %v5086, %v5088
        %v5090 = vrot.slane %v5083, %v5089
        %v5091 = vcombine.high %v5090, 0
        %v5094 = vpack.i.b16 %v5090, %v5065
        %v5095 = vshrl.u32 %v5065, 16
        %v5096 = vshrl.u32 %v5090, 16
        %v5097 = vpack.i.b16 %v5096, %v5095
        %v5100 = vpack.i.b16 %v5091, %v5066
        %v5101 = vshrl.u32 %v5066, 16
        %v5102 = vshrl.u32 %v5091, 16
        %v5103 = vpack.i.b16 %v5102, %v5101
        %5104 = vxpose.xlu0.c.b16.start [1/8] %v4939, 128
        %5105 = vxpose.xlu0.c.b16.cont [2/8] 0, 128
        %5106 = vxpose.xlu0.c.b16.cont [3/8] 0, 128
        %5107 = vxpose.xlu0.c.b16.cont [4/8] 0, 128
        %5108 = vxpose.xlu0.c.b16.cont [5/8] 0, 128
        %5109 = vxpose.xlu0.c.b16.cont [6/8] 0, 128
        %5110 = vxpose.xlu0.c.b16.cont [7/8] 0, 128
        %5111 = vxpose.xlu0.c.b16.end [8/8] 0, 128
        %v5112 = vpop.trf.xlu0
        %v5113 = vpop.trf.xlu0
        %v5114 = vpop.trf.xlu0
        %v5115 = vpop.trf.xlu0
        %v5116 = vpop.trf.xlu0
        %v5117 = vpop.trf.xlu0
        %v5118 = vpop.trf.xlu0
        %v5119 = vpop.trf.xlu0
        %5120 = vxpose.xlu0.c.b16.start [1/8] %v4940, 128
        %5121 = vxpose.xlu0.c.b16.cont [2/8] 0, 128
        %5122 = vxpose.xlu0.c.b16.cont [3/8] 0, 128
        %5123 = vxpose.xlu0.c.b16.cont [4/8] 0, 128
        %5124 = vxpose.xlu0.c.b16.cont [5/8] 0, 128
        %5125 = vxpose.xlu0.c.b16.cont [6/8] 0, 128
        %5126 = vxpose.xlu0.c.b16.cont [7/8] 0, 128
        %5127 = vxpose.xlu0.c.b16.end [8/8] 0, 128
        %v5128 = vpop.trf.xlu0
        %v5129 = vpop.trf.xlu0
        %v5130 = vpop.trf.xlu0
        %v5131 = vpop.trf.xlu0
        %v5132 = vpop.trf.xlu0
        %v5133 = vpop.trf.xlu0
        %v5134 = vpop.trf.xlu0
        %v5135 = vpop.trf.xlu0
        %5136 = vxpose.xlu0.c.b16.start [1/8] %v4941, 128
        %5137 = vxpose.xlu0.c.b16.cont [2/8] 0, 128
        %5138 = vxpose.xlu0.c.b16.cont [3/8] 0, 128
        %5139 = vxpose.xlu0.c.b16.cont [4/8] 0, 128
        %5140 = vxpose.xlu0.c.b16.cont [5/8] 0, 128
        %5141 = vxpose.xlu0.c.b16.cont [6/8] 0, 128
        %5142 = vxpose.xlu0.c.b16.cont [7/8] 0, 128
        %5143 = vxpose.xlu0.c.b16.end [8/8] 0, 128
        %v5144 = vpop.trf.xlu0
        %v5145 = vpop.trf.xlu0
        %v5146 = vpop.trf.xlu0
        %v5147 = vpop.trf.xlu0
        %v5148 = vpop.trf.xlu0
        %v5149 = vpop.trf.xlu0
        %v5150 = vpop.trf.xlu0
        %v5151 = vpop.trf.xlu0
        %5152 = vxpose.xlu0.c.b16.start [1/8] %v4942, 128
        %5153 = vxpose.xlu0.c.b16.cont [2/8] 0, 128
        %5154 = vxpose.xlu0.c.b16.cont [3/8] 0, 128
        %5155 = vxpose.xlu0.c.b16.cont [4/8] 0, 128
        %5156 = vxpose.xlu0.c.b16.cont [5/8] 0, 128
        %5157 = vxpose.xlu0.c.b16.cont [6/8] 0, 128
        %5158 = vxpose.xlu0.c.b16.cont [7/8] 0, 128
        %5159 = vxpose.xlu0.c.b16.end [8/8] 0, 128
        %v5160 = vpop.trf.xlu0
        %v5161 = vpop.trf.xlu0
        %v5162 = vpop.trf.xlu0
        %v5163 = vpop.trf.xlu0
        %v5164 = vpop.trf.xlu0
        %v5165 = vpop.trf.xlu0
        %v5166 = vpop.trf.xlu0
        %v5167 = vpop.trf.xlu0
        %5168 = vxpose.xlu0.c.b16.start [1/8] %v4943, 128
        %5169 = vxpose.xlu0.c.b16.cont [2/8] 0, 128
        %5170 = vxpose.xlu0.c.b16.cont [3/8] 0, 128
        %5171 = vxpose.xlu0.c.b16.cont [4/8] 0, 128
        %5172 = vxpose.xlu0.c.b16.cont [5/8] 0, 128
        %5173 = vxpose.xlu0.c.b16.cont [6/8] 0, 128
        %5174 = vxpose.xlu0.c.b16.cont [7/8] 0, 128
        %5175 = vxpose.xlu0.c.b16.end [8/8] 0, 128
        %v5176 = vpop.trf.xlu0
        %v5177 = vpop.trf.xlu0
        %v5178 = vpop.trf.xlu0
        %v5179 = vpop.trf.xlu0
        %v5180 = vpop.trf.xlu0
        %v5181 = vpop.trf.xlu0
        %v5182 = vpop.trf.xlu0
        %v5183 = vpop.trf.xlu0
        %5184 = vxpose.xlu0.c.b16.start [1/8] %v4944, 128
        %5185 = vxpose.xlu0.c.b16.cont [2/8] 0, 128
        %5186 = vxpose.xlu0.c.b16.cont [3/8] 0, 128
        %5187 = vxpose.xlu0.c.b16.cont [4/8] 0, 128
        %5188 = vxpose.xlu0.c.b16.cont [5/8] 0, 128
        %5189 = vxpose.xlu0.c.b16.cont [6/8] 0, 128
        %5190 = vxpose.xlu0.c.b16.cont [7/8] 0, 128
        %5191 = vxpose.xlu0.c.b16.end [8/8] 0, 128
        %v5192 = vpop.trf.xlu0
        %v5193 = vpop.trf.xlu0
        %v5194 = vpop.trf.xlu0
        %v5195 = vpop.trf.xlu0
        %v5196 = vpop.trf.xlu0
        %v5197 = vpop.trf.xlu0
        %v5198 = vpop.trf.xlu0
        %v5199 = vpop.trf.xlu0
        %5200 = vxpose.xlu0.c.b16.start [1/8] %v4945, 128
        %5201 = vxpose.xlu0.c.b16.cont [2/8] 0, 128
        %5202 = vxpose.xlu0.c.b16.cont [3/8] 0, 128
        %5203 = vxpose.xlu0.c.b16.cont [4/8] 0, 128
        %5204 = vxpose.xlu0.c.b16.cont [5/8] 0, 128
        %5205 = vxpose.xlu0.c.b16.cont [6/8] 0, 128
        %5206 = vxpose.xlu0.c.b16.cont [7/8] 0, 128
        %5207 = vxpose.xlu0.c.b16.end [8/8] 0, 128
        %v5208 = vpop.trf.xlu0
        %v5209 = vpop.trf.xlu0
        %v5210 = vpop.trf.xlu0
        %v5211 = vpop.trf.xlu0
        %v5212 = vpop.trf.xlu0
        %v5213 = vpop.trf.xlu0
        %v5214 = vpop.trf.xlu0
        %v5215 = vpop.trf.xlu0
        %5216 = vxpose.xlu0.c.b16.start [1/8] %v4946, 128
        %5217 = vxpose.xlu0.c.b16.cont [2/8] 0, 128
        %5218 = vxpose.xlu0.c.b16.cont [3/8] 0, 128
        %5219 = vxpose.xlu0.c.b16.cont [4/8] 0, 128
        %5220 = vxpose.xlu0.c.b16.cont [5/8] 0, 128
        %5221 = vxpose.xlu0.c.b16.cont [6/8] 0, 128
        %5222 = vxpose.xlu0.c.b16.cont [7/8] 0, 128
        %5223 = vxpose.xlu0.c.b16.end [8/8] 0, 128
        %v5224 = vpop.trf.xlu0
        %v5225 = vpop.trf.xlu0
        %v5226 = vpop.trf.xlu0
        %v5227 = vpop.trf.xlu0
        %v5228 = vpop.trf.xlu0
        %v5229 = vpop.trf.xlu0
        %v5230 = vpop.trf.xlu0
        %v5231 = vpop.trf.xlu0
        %v5232 = vcombine.low %v5112, %v5176
        %v5234 = vunpack.c.l.s4 1983009808
        %v5235 = vunpack.c.0.s8 %v5234
        %v5236 = vlaneseq
        %v5237 = vshrl.u32 %v5236, 7
        %v5238 = vsub.s32 %v5235, %v5237
        %v5239 = vrot.slane %v5232, %v5238
        %v5240 = vcombine.low %v5144, %v5208
        %v5242 = vunpack.c.l.s4 1983009808
        %v5243 = vunpack.c.0.s8 %v5242
        %v5244 = vlaneseq
        %v5245 = vshrl.u32 %v5244, 7
        %v5246 = vsub.s32 %v5243, %v5245
        %v5247 = vrot.slane %v5240, %v5246
        %v5248 = vcombine.low %v5239, %v5247
        %v5249 = vcombine.high %v5239, %v5247
        %v5251 = vunpack.c.l.s4 1934713408
        %v5252 = vunpack.c.0.s8 %v5251
        %v5253 = vlaneseq
        %v5254 = vshrl.u32 %v5253, 7
        %v5255 = vsub.s32 %v5252, %v5254
        %v5256 = vrot.slane %v5248, %v5255
        %v5258 = vunpack.c.l.s4 1934713408
        %v5259 = vunpack.c.0.s8 %v5258
        %v5260 = vlaneseq
        %v5261 = vshrl.u32 %v5260, 7
        %v5262 = vsub.s32 %v5259, %v5261
        %v5263 = vrot.slane %v5249, %v5262
        %v5264 = vcombine.high %v5256, 0
        %v5265 = vcombine.high %v5263, 0
        %v5266 = vcombine.low %v5128, %v5192
        %v5268 = vunpack.c.l.s4 1983009808
        %v5269 = vunpack.c.0.s8 %v5268
        %v5270 = vlaneseq
        %v5271 = vshrl.u32 %v5270, 7
        %v5272 = vsub.s32 %v5269, %v5271
        %v5273 = vrot.slane %v5266, %v5272
        %v5274 = vcombine.low %v5160, %v5224
        %v5276 = vunpack.c.l.s4 1983009808
        %v5277 = vunpack.c.0.s8 %v5276
        %v5278 = vlaneseq
        %v5279 = vshrl.u32 %v5278, 7
        %v5280 = vsub.s32 %v5277, %v5279
        %v5281 = vrot.slane %v5274, %v5280
        %v5282 = vcombine.low %v5273, %v5281
        %v5283 = vcombine.high %v5273, %v5281
        %v5285 = vunpack.c.l.s4 1934713408
        %v5286 = vunpack.c.0.s8 %v5285
        %v5287 = vlaneseq
        %v5288 = vshrl.u32 %v5287, 7
        %v5289 = vsub.s32 %v5286, %v5288
        %v5290 = vrot.slane %v5282, %v5289
        %v5292 = vunpack.c.l.s4 1934713408
        %v5293 = vunpack.c.0.s8 %v5292
        %v5294 = vlaneseq
        %v5295 = vshrl.u32 %v5294, 7
        %v5296 = vsub.s32 %v5293, %v5295
        %v5297 = vrot.slane %v5283, %v5296
        %v5298 = vcombine.high %v5290, 0
        %v5299 = vcombine.high %v5297, 0
        %v5302 = vpack.i.b16 %v5290, %v5256
        %v5304 = vshrl.u32 %v5256, 16
        %v5305 = vshrl.u32 %v5290, 16
        %v5306 = vpack.i.b16 %v5305, %v5304
        %v5310 = vpack.i.b16 %v5298, %v5264
        %v5312 = vshrl.u32 %v5264, 16
        %v5313 = vshrl.u32 %v5298, 16
        %v5314 = vpack.i.b16 %v5313, %v5312
        %v5318 = vpack.i.b16 %v5297, %v5263
        %v5320 = vshrl.u32 %v5263, 16
        %v5321 = vshrl.u32 %v5297, 16
        %v5322 = vpack.i.b16 %v5321, %v5320
        %v5326 = vpack.i.b16 %v5299, %v5265
        %v5328 = vshrl.u32 %v5265, 16
        %v5329 = vshrl.u32 %v5299, 16
        %v5330 = vpack.i.b16 %v5329, %v5328
        %5332 = vxpose.xlu0.c.b16.start [1/8] %v5302, 128
        %5333 = vxpose.xlu0.c.b16.cont [2/8] 0, 128
        %5334 = vxpose.xlu0.c.b16.cont [3/8] 0, 128
        %5335 = vxpose.xlu0.c.b16.cont [4/8] 0, 128
        %5336 = vxpose.xlu0.c.b16.cont [5/8] 0, 128
        %5337 = vxpose.xlu0.c.b16.cont [6/8] 0, 128
        %5338 = vxpose.xlu0.c.b16.cont [7/8] 0, 128
        %5339 = vxpose.xlu0.c.b16.end [8/8] 0, 128
        %v5340 = vpop.trf.xlu0
        %v5341 = vpop.trf.xlu0
        %v5342 = vpop.trf.xlu0
        %v5343 = vpop.trf.xlu0
        %v5344 = vpop.trf.xlu0
        %v5345 = vpop.trf.xlu0
        %v5346 = vpop.trf.xlu0
        %v5347 = vpop.trf.xlu0
        %5348 = vxpose.xlu0.c.b16.start [1/8] %v5306, 128
        %5349 = vxpose.xlu0.c.b16.cont [2/8] 0, 128
        %5350 = vxpose.xlu0.c.b16.cont [3/8] 0, 128
        %5351 = vxpose.xlu0.c.b16.cont [4/8] 0, 128
        %5352 = vxpose.xlu0.c.b16.cont [5/8] 0, 128
        %5353 = vxpose.xlu0.c.b16.cont [6/8] 0, 128
        %5354 = vxpose.xlu0.c.b16.cont [7/8] 0, 128
        %5355 = vxpose.xlu0.c.b16.end [8/8] 0, 128
        %v5356 = vpop.trf.xlu0
        %v5357 = vpop.trf.xlu0
        %v5358 = vpop.trf.xlu0
        %v5359 = vpop.trf.xlu0
        %v5360 = vpop.trf.xlu0
        %v5361 = vpop.trf.xlu0
        %v5362 = vpop.trf.xlu0
        %v5363 = vpop.trf.xlu0
        %5364 = vxpose.xlu0.c.b16.start [1/8] %v5310, 128
        %5365 = vxpose.xlu0.c.b16.cont [2/8] 0, 128
        %5366 = vxpose.xlu0.c.b16.cont [3/8] 0, 128
        %5367 = vxpose.xlu0.c.b16.cont [4/8] 0, 128
        %5368 = vxpose.xlu0.c.b16.cont [5/8] 0, 128
        %5369 = vxpose.xlu0.c.b16.cont [6/8] 0, 128
        %5370 = vxpose.xlu0.c.b16.cont [7/8] 0, 128
        %5371 = vxpose.xlu0.c.b16.end [8/8] 0, 128
        %v5372 = vpop.trf.xlu0
        %v5373 = vpop.trf.xlu0
        %v5374 = vpop.trf.xlu0
        %v5375 = vpop.trf.xlu0
        %v5376 = vpop.trf.xlu0
        %v5377 = vpop.trf.xlu0
        %v5378 = vpop.trf.xlu0
        %v5379 = vpop.trf.xlu0
        %5380 = vxpose.xlu0.c.b16.start [1/8] %v5314, 128
        %5381 = vxpose.xlu0.c.b16.cont [2/8] 0, 128
        %5382 = vxpose.xlu0.c.b16.cont [3/8] 0, 128
        %5383 = vxpose.xlu0.c.b16.cont [4/8] 0, 128
        %5384 = vxpose.xlu0.c.b16.cont [5/8] 0, 128
        %5385 = vxpose.xlu0.c.b16.cont [6/8] 0, 128
        %5386 = vxpose.xlu0.c.b16.cont [7/8] 0, 128
        %5387 = vxpose.xlu0.c.b16.end [8/8] 0, 128
        %v5388 = vpop.trf.xlu0
        %v5389 = vpop.trf.xlu0
        %v5390 = vpop.trf.xlu0
        %v5391 = vpop.trf.xlu0
        %v5392 = vpop.trf.xlu0
        %v5393 = vpop.trf.xlu0
        %v5394 = vpop.trf.xlu0
        %v5395 = vpop.trf.xlu0
        %5396 = vxpose.xlu0.c.b16.start [1/8] %v5318, 128
        %5397 = vxpose.xlu0.c.b16.cont [2/8] 0, 128
        %5398 = vxpose.xlu0.c.b16.cont [3/8] 0, 128
        %5399 = vxpose.xlu0.c.b16.cont [4/8] 0, 128
        %5400 = vxpose.xlu0.c.b16.cont [5/8] 0, 128
        %5401 = vxpose.xlu0.c.b16.cont [6/8] 0, 128
        %5402 = vxpose.xlu0.c.b16.cont [7/8] 0, 128
        %5403 = vxpose.xlu0.c.b16.end [8/8] 0, 128
        %v5404 = vpop.trf.xlu0
        %v5405 = vpop.trf.xlu0
        %v5406 = vpop.trf.xlu0
        %v5407 = vpop.trf.xlu0
        %v5408 = vpop.trf.xlu0
        %v5409 = vpop.trf.xlu0
        %v5410 = vpop.trf.xlu0
        %v5411 = vpop.trf.xlu0
        %5412 = vxpose.xlu0.c.b16.start [1/8] %v5322, 128
        %5413 = vxpose.xlu0.c.b16.cont [2/8] 0, 128
        %5414 = vxpose.xlu0.c.b16.cont [3/8] 0, 128
        %5415 = vxpose.xlu0.c.b16.cont [4/8] 0, 128
        %5416 = vxpose.xlu0.c.b16.cont [5/8] 0, 128
        %5417 = vxpose.xlu0.c.b16.cont [6/8] 0, 128
        %5418 = vxpose.xlu0.c.b16.cont [7/8] 0, 128
        %5419 = vxpose.xlu0.c.b16.end [8/8] 0, 128
        %v5420 = vpop.trf.xlu0
        %v5421 = vpop.trf.xlu0
        %v5422 = vpop.trf.xlu0
        %v5423 = vpop.trf.xlu0
        %v5424 = vpop.trf.xlu0
        %v5425 = vpop.trf.xlu0
        %v5426 = vpop.trf.xlu0
        %v5427 = vpop.trf.xlu0
        %5428 = vxpose.xlu0.c.b16.start [1/8] %v5326, 128
        %5429 = vxpose.xlu0.c.b16.cont [2/8] 0, 128
        %5430 = vxpose.xlu0.c.b16.cont [3/8] 0, 128
        %5431 = vxpose.xlu0.c.b16.cont [4/8] 0, 128
        %5432 = vxpose.xlu0.c.b16.cont [5/8] 0, 128
        %5433 = vxpose.xlu0.c.b16.cont [6/8] 0, 128
        %5434 = vxpose.xlu0.c.b16.cont [7/8] 0, 128
        %5435 = vxpose.xlu0.c.b16.end [8/8] 0, 128
        %v5436 = vpop.trf.xlu0
        %v5437 = vpop.trf.xlu0
        %v5438 = vpop.trf.xlu0
        %v5439 = vpop.trf.xlu0
        %v5440 = vpop.trf.xlu0
        %v5441 = vpop.trf.xlu0
        %v5442 = vpop.trf.xlu0
        %v5443 = vpop.trf.xlu0
        %5444 = vxpose.xlu0.c.b16.start [1/8] %v5330, 128
        %5445 = vxpose.xlu0.c.b16.cont [2/8] 0, 128
        %5446 = vxpose.xlu0.c.b16.cont [3/8] 0, 128
        %5447 = vxpose.xlu0.c.b16.cont [4/8] 0, 128
        %5448 = vxpose.xlu0.c.b16.cont [5/8] 0, 128
        %5449 = vxpose.xlu0.c.b16.cont [6/8] 0, 128
        %5450 = vxpose.xlu0.c.b16.cont [7/8] 0, 128
        %5451 = vxpose.xlu0.c.b16.end [8/8] 0, 128
        %v5452 = vpop.trf.xlu0
        %v5453 = vpop.trf.xlu0
        %v5454 = vpop.trf.xlu0
        %v5455 = vpop.trf.xlu0
        %v5456 = vpop.trf.xlu0
        %v5457 = vpop.trf.xlu0
        %v5458 = vpop.trf.xlu0
        %v5459 = vpop.trf.xlu0
        %v5460 = vcombine.low %v5340, %v5404
        %v5462 = vunpack.c.l.s4 1983009808
        %v5463 = vunpack.c.0.s8 %v5462
        %v5464 = vlaneseq
        %v5465 = vshrl.u32 %v5464, 7
        %v5466 = vsub.s32 %v5463, %v5465
        %v5467 = vrot.slane %v5460, %v5466
        %v5468 = vcombine.low %v5372, %v5436
        %v5470 = vunpack.c.l.s4 1983009808
        %v5471 = vunpack.c.0.s8 %v5470
        %v5472 = vlaneseq
        %v5473 = vshrl.u32 %v5472, 7
        %v5474 = vsub.s32 %v5471, %v5473
        %v5475 = vrot.slane %v5468, %v5474
        %v5476 = vcombine.low %v5467, %v5475
        %v5478 = vunpack.c.l.s4 1934713408
        %v5479 = vunpack.c.0.s8 %v5478
        %v5480 = vlaneseq
        %v5481 = vshrl.u32 %v5480, 7
        %v5482 = vsub.s32 %v5479, %v5481
        %v5483 = vrot.slane %v5476, %v5482
        %v5484 = vcombine.high %v5483, 0
        %v5485 = vcombine.low %v5356, %v5420
        %v5487 = vunpack.c.l.s4 1983009808
        %v5488 = vunpack.c.0.s8 %v5487
        %v5489 = vlaneseq
        %v5490 = vshrl.u32 %v5489, 7
        %v5491 = vsub.s32 %v5488, %v5490
        %v5492 = vrot.slane %v5485, %v5491
        %v5493 = vcombine.low %v5388, %v5452
        %v5495 = vunpack.c.l.s4 1983009808
        %v5496 = vunpack.c.0.s8 %v5495
        %v5497 = vlaneseq
        %v5498 = vshrl.u32 %v5497, 7
        %v5499 = vsub.s32 %v5496, %v5498
        %v5500 = vrot.slane %v5493, %v5499
        %v5501 = vcombine.low %v5492, %v5500
        %v5503 = vunpack.c.l.s4 1934713408
        %v5504 = vunpack.c.0.s8 %v5503
        %v5505 = vlaneseq
        %v5506 = vshrl.u32 %v5505, 7
        %v5507 = vsub.s32 %v5504, %v5506
        %v5508 = vrot.slane %v5501, %v5507
        %v5509 = vcombine.high %v5508, 0
        %v5512 = vpack.i.b16 %v5508, %v5483
        %v5513 = vshrl.u32 %v5483, 16
        %v5514 = vshrl.u32 %v5508, 16
        %v5515 = vpack.i.b16 %v5514, %v5513
        %v5518 = vpack.i.b16 %v5509, %v5484
        %v5519 = vshrl.u32 %v5484, 16
        %v5520 = vshrl.u32 %v5509, 16
        %v5521 = vpack.i.b16 %v5520, %v5519
        %v5523 = vsel %vm1171, %v5094, 0
        %v5526 = vsel %vm1175, %v5512, 0
        %5528 = vmatprep.subr.bf16.mxu0 0
        %5529 = vmatpush1.bf16.msra.mxu0 0
        %5530 = vmatprep.subr.bf16.mxu0 0
        %5531 = vmatpush1.bf16.msra.mxu0 0
        %5532 = vmatprep.subr.bf16.mxu0 0
        %5533 = vmatpush1.bf16.msra.mxu0 0
        %5534 = vmatprep.subr.bf16.mxu0 0
        %5535 = vmatpush1.bf16.msra.mxu0 0
        %5536 = vmatprep.subr.bf16.mxu0 0
        %5537 = vmatpush1.bf16.msra.mxu0 0
        %5538 = vmatprep.subr.bf16.mxu0 0
        %5539 = vmatpush1.bf16.msra.mxu0 0
        %5540 = vmatprep.subr.bf16.mxu0 0
        %5541 = vmatpush1.bf16.msra.mxu0 0
        %5542 = vmatprep.subr.bf16.mxu0 0
        %5543 = vmatpush1.bf16.msra.mxu0 %v5526
        %5544 = vmatprep.subr.bf16.mxu0 0
        %5545 = vmatpush2.bf16.msra.mxu0 0
        %5546 = vmatprep.subr.bf16.mxu0 0
        %5547 = vmatpush2.bf16.msra.mxu0 0
        %5548 = vmatprep.subr.bf16.mxu0 0
        %5549 = vmatpush2.bf16.msra.mxu0 0
        %5550 = vmatprep.subr.bf16.mxu0 0
        %5551 = vmatpush2.bf16.msra.mxu0 0
        %5552 = vmatprep.subr.bf16.mxu0 0
        %5553 = vmatpush2.bf16.msra.mxu0 0
        %5554 = vmatprep.subr.bf16.mxu0 0
        %5555 = vmatpush2.bf16.msra.mxu0 0
        %5556 = vmatprep.subr.bf16.mxu0 0
        %5557 = vmatpush2.bf16.msra.mxu0 0
        %5558 = vmatprep.subr.bf16.mxu0 0
        %5559 = vmatpush2.bf16.msra.mxu0 0
        %5560 = vmatprep.mubr.bf16.mxu0 0
        %5561 = vmatmul.mubr.bf16.gmra.mxu0 %v5523
        %v5562 = vpop.f32.mrf.mxu0
        %v5563 = vadd.f32 0.0, %v5562
        %v5564 = vpop.f32.mrf.mxu0
        %v5565 = vpop.f32.mrf.mxu0
        %v5566 = vpop.f32.mrf.mxu0
        %5567 = vdwg.mxu0
        %v5569 = vsel %vm1171, %v5097, 0
        %v5572 = vsel %vm1175, %v5515, 0
        %5574 = vmatprep.subr.bf16.mxu0 0
        %5575 = vmatpush1.bf16.msra.mxu0 0
        %5576 = vmatprep.subr.bf16.mxu0 0
        %5577 = vmatpush1.bf16.msra.mxu0 0
        %5578 = vmatprep.subr.bf16.mxu0 0
        %5579 = vmatpush1.bf16.msra.mxu0 0
        %5580 = vmatprep.subr.bf16.mxu0 0
        %5581 = vmatpush1.bf16.msra.mxu0 0
        %5582 = vmatprep.subr.bf16.mxu0 0
        %5583 = vmatpush1.bf16.msra.mxu0 0
        %5584 = vmatprep.subr.bf16.mxu0 0
        %5585 = vmatpush1.bf16.msra.mxu0 0
        %5586 = vmatprep.subr.bf16.mxu0 0
        %5587 = vmatpush1.bf16.msra.mxu0 0
        %5588 = vmatprep.subr.bf16.mxu0 0
        %5589 = vmatpush1.bf16.msra.mxu0 %v5572
        %5590 = vmatprep.subr.bf16.mxu0 0
        %5591 = vmatpush2.bf16.msra.mxu0 0
        %5592 = vmatprep.subr.bf16.mxu0 0
        %5593 = vmatpush2.bf16.msra.mxu0 0
        %5594 = vmatprep.subr.bf16.mxu0 0
        %5595 = vmatpush2.bf16.msra.mxu0 0
        %5596 = vmatprep.subr.bf16.mxu0 0
        %5597 = vmatpush2.bf16.msra.mxu0 0
        %5598 = vmatprep.subr.bf16.mxu0 0
        %5599 = vmatpush2.bf16.msra.mxu0 0
        %5600 = vmatprep.subr.bf16.mxu0 0
        %5601 = vmatpush2.bf16.msra.mxu0 0
        %5602 = vmatprep.subr.bf16.mxu0 0
        %5603 = vmatpush2.bf16.msra.mxu0 0
        %5604 = vmatprep.subr.bf16.mxu0 0
        %5605 = vmatpush2.bf16.msra.mxu0 0
        %5606 = vmatprep.mubr.bf16.mxu0 0
        %5607 = vmatmul.mubr.bf16.gmra.mxu0 %v5569
        %v5608 = vpop.f32.mrf.mxu0
        %v5609 = vadd.f32 0.0, %v5608
        %v5610 = vpop.f32.mrf.mxu0
        %v5611 = vpop.f32.mrf.mxu0
        %v5612 = vpop.f32.mrf.mxu0
        %5613 = vdwg.mxu0
        %v5615 = vsel %vm1171, %v5100, 0
        %v5618 = vsel %vm1175, %v5518, 0
        %5620 = vmatprep.subr.bf16.mxu0 0
        %5621 = vmatpush1.bf16.msra.mxu0 0
        %5622 = vmatprep.subr.bf16.mxu0 0
        %5623 = vmatpush1.bf16.msra.mxu0 0
        %5624 = vmatprep.subr.bf16.mxu0 0
        %5625 = vmatpush1.bf16.msra.mxu0 0
        %5626 = vmatprep.subr.bf16.mxu0 0
        %5627 = vmatpush1.bf16.msra.mxu0 0
        %5628 = vmatprep.subr.bf16.mxu0 0
        %5629 = vmatpush1.bf16.msra.mxu0 0
        %5630 = vmatprep.subr.bf16.mxu0 0
        %5631 = vmatpush1.bf16.msra.mxu0 0
        %5632 = vmatprep.subr.bf16.mxu0 0
        %5633 = vmatpush1.bf16.msra.mxu0 0
        %5634 = vmatprep.subr.bf16.mxu0 0
        %5635 = vmatpush1.bf16.msra.mxu0 %v5618
        %5636 = vmatprep.subr.bf16.mxu0 0
        %5637 = vmatpush2.bf16.msra.mxu0 0
        %5638 = vmatprep.subr.bf16.mxu0 0
        %5639 = vmatpush2.bf16.msra.mxu0 0
        %5640 = vmatprep.subr.bf16.mxu0 0
        %5641 = vmatpush2.bf16.msra.mxu0 0
        %5642 = vmatprep.subr.bf16.mxu0 0
        %5643 = vmatpush2.bf16.msra.mxu0 0
        %5644 = vmatprep.subr.bf16.mxu0 0
        %5645 = vmatpush2.bf16.msra.mxu0 0
        %5646 = vmatprep.subr.bf16.mxu0 0
        %5647 = vmatpush2.bf16.msra.mxu0 0
        %5648 = vmatprep.subr.bf16.mxu0 0
        %5649 = vmatpush2.bf16.msra.mxu0 0
        %5650 = vmatprep.subr.bf16.mxu0 0
        %5651 = vmatpush2.bf16.msra.mxu0 0
        %5652 = vmatprep.mubr.bf16.mxu0 0
        %5653 = vmatmul.mubr.bf16.gmra.mxu0 %v5615
        %v5654 = vpop.f32.mrf.mxu0
        %v5655 = vadd.f32 0.0, %v5654
        %v5656 = vpop.f32.mrf.mxu0
        %v5657 = vpop.f32.mrf.mxu0
        %v5658 = vpop.f32.mrf.mxu0
        %5659 = vdwg.mxu0
        %v5661 = vsel %vm1171, %v5103, 0
        %v5664 = vsel %vm1175, %v5521, 0
        %5666 = vmatprep.subr.bf16.mxu0 0
        %5667 = vmatpush1.bf16.msra.mxu0 0
        %5668 = vmatprep.subr.bf16.mxu0 0
        %5669 = vmatpush1.bf16.msra.mxu0 0
        %5670 = vmatprep.subr.bf16.mxu0 0
        %5671 = vmatpush1.bf16.msra.mxu0 0
        %5672 = vmatprep.subr.bf16.mxu0 0
        %5673 = vmatpush1.bf16.msra.mxu0 0
        %5674 = vmatprep.subr.bf16.mxu0 0
        %5675 = vmatpush1.bf16.msra.mxu0 0
        %5676 = vmatprep.subr.bf16.mxu0 0
        %5677 = vmatpush1.bf16.msra.mxu0 0
        %5678 = vmatprep.subr.bf16.mxu0 0
        %5679 = vmatpush1.bf16.msra.mxu0 0
        %5680 = vmatprep.subr.bf16.mxu0 0
        %5681 = vmatpush1.bf16.msra.mxu0 %v5664
        %5682 = vmatprep.subr.bf16.mxu0 0
        %5683 = vmatpush2.bf16.msra.mxu0 0
        %5684 = vmatprep.subr.bf16.mxu0 0
        %5685 = vmatpush2.bf16.msra.mxu0 0
        %5686 = vmatprep.subr.bf16.mxu0 0
        %5687 = vmatpush2.bf16.msra.mxu0 0
        %5688 = vmatprep.subr.bf16.mxu0 0
        %5689 = vmatpush2.bf16.msra.mxu0 0
        %5690 = vmatprep.subr.bf16.mxu0 0
        %5691 = vmatpush2.bf16.msra.mxu0 0
        %5692 = vmatprep.subr.bf16.mxu0 0
        %5693 = vmatpush2.bf16.msra.mxu0 0
        %5694 = vmatprep.subr.bf16.mxu0 0
        %5695 = vmatpush2.bf16.msra.mxu0 0
        %5696 = vmatprep.subr.bf16.mxu0 0
        %5697 = vmatpush2.bf16.msra.mxu0 0
        %5698 = vmatprep.mubr.bf16.mxu0 0
        %5699 = vmatmul.mubr.bf16.gmra.mxu0 %v5661
        %v5700 = vpop.f32.mrf.mxu0
        %v5701 = vadd.f32 0.0, %v5700
        %v5702 = vpop.f32.mrf.mxu0
        %v5703 = vpop.f32.mrf.mxu0
        %v5704 = vpop.f32.mrf.mxu0
        %5705 = vdwg.mxu0
        %v5706 = vsel %vm1358, %v5563, -1e+30
        %v5707 = vsel %vm1358, %v5609, -1e+30
        %v5708 = vsel %vm1358, %v5655, -1e+30
        %v5709 = vsel %vm1358, %v5701, -1e+30
        %v5710 = vsel %vm1171, %v5706, -inf
        %5711 = vmax.xlane.f32.xlu0 %v5710
        %v5712 = vpop.xlane.xlu0 %5711
        %v5713 = vsel %vm1171, %v5707, -inf
        %5714 = vmax.xlane.f32.xlu0 %v5713
        %v5715 = vpop.xlane.xlu0 %5714
        %v5716 = vsel %vm1171, %v5708, -inf
        %5717 = vmax.xlane.f32.xlu0 %v5716
        %v5718 = vpop.xlane.xlu0 %5717
        %v5719 = vsel %vm1171, %v5709, -inf
        %5720 = vmax.xlane.f32.xlu0 %v5719
        %v5721 = vpop.xlane.xlu0 %5720
        %v5722 = vsub.f32 %v5706, %v5712
        %v5723 = vsub.f32 %v5707, %v5715
        %v5724 = vsub.f32 %v5708, %v5718
        %v5725 = vsub.f32 %v5709, %v5721
        %v5726 = vmul.f32 %v5722, 1.442695
        %v5727 = vpow.pop %v5726
        %v5728 = vmul.f32 %v5723, 1.442695
        %v5729 = vpow.pop %v5728
        %v5730 = vmul.f32 %v5724, 1.442695
        %v5731 = vpow.pop %v5730
        %v5732 = vmul.f32 %v5725, 1.442695
        %v5733 = vpow.pop %v5732
        %v5734 = vsel %vm1171, %v5727, 0.0
        %5735 = vadd.xlane.f32.xlu0 %v5734
        %v5736 = vpop.xlane.xlu0 %5735
        %v5737 = vsel %vm1171, %v5729, 0.0
        %5738 = vadd.xlane.f32.xlu0 %v5737
        %v5739 = vpop.xlane.xlu0 %5738
        %v5740 = vsel %vm1171, %v5731, 0.0
        %5741 = vadd.xlane.f32.xlu0 %v5740
        %v5742 = vpop.xlane.xlu0 %5741
        %v5743 = vsel %vm1171, %v5733, 0.0
        %5744 = vadd.xlane.f32.xlu0 %v5743
        %v5745 = vpop.xlane.xlu0 %5744
        %v5746 = vrcp.pop %v5736
        %v5747 = vrcp.pop %v5739
        %v5748 = vrcp.pop %v5742
        %v5749 = vrcp.pop %v5745
        %v5750 = vmul.f32 %v5727, %v5746
        %v5751 = vmul.f32 %v5729, %v5747
        %v5752 = vmul.f32 %v5731, %v5748
        %v5753 = vmul.f32 %v5733, %v5749
        %v5754 = vpack.c.bf16 %v5750, %v5750
        %v5755 = vpack.c.bf16 %v5751, %v5751
        %v5756 = vpack.c.bf16 %v5752, %v5752
        %v5757 = vpack.c.bf16 %v5753, %v5753
        %5758 = vxpose.xlu0.c.b16.start [1/8] %v5034, 128
        %5759 = vxpose.xlu0.c.b16.cont [2/8] 0, 128
        %5760 = vxpose.xlu0.c.b16.cont [3/8] 0, 128
        %5761 = vxpose.xlu0.c.b16.cont [4/8] 0, 128
        %5762 = vxpose.xlu0.c.b16.cont [5/8] 0, 128
        %5763 = vxpose.xlu0.c.b16.cont [6/8] 0, 128
        %5764 = vxpose.xlu0.c.b16.cont [7/8] 0, 128
        %5765 = vxpose.xlu0.c.b16.end [8/8] 0, 128
        %v5766 = vpop.trf.xlu0
        %v5767 = vpop.trf.xlu0
        %v5768 = vpop.trf.xlu0
        %v5769 = vpop.trf.xlu0
        %v5770 = vpop.trf.xlu0
        %v5771 = vpop.trf.xlu0
        %v5772 = vpop.trf.xlu0
        %v5773 = vpop.trf.xlu0
        %5774 = vxpose.xlu0.c.b16.start [1/8] %v5035, 128
        %5775 = vxpose.xlu0.c.b16.cont [2/8] 0, 128
        %5776 = vxpose.xlu0.c.b16.cont [3/8] 0, 128
        %5777 = vxpose.xlu0.c.b16.cont [4/8] 0, 128
        %5778 = vxpose.xlu0.c.b16.cont [5/8] 0, 128
        %5779 = vxpose.xlu0.c.b16.cont [6/8] 0, 128
        %5780 = vxpose.xlu0.c.b16.cont [7/8] 0, 128
        %5781 = vxpose.xlu0.c.b16.end [8/8] 0, 128
        %v5782 = vpop.trf.xlu0
        %v5783 = vpop.trf.xlu0
        %v5784 = vpop.trf.xlu0
        %v5785 = vpop.trf.xlu0
        %v5786 = vpop.trf.xlu0
        %v5787 = vpop.trf.xlu0
        %v5788 = vpop.trf.xlu0
        %v5789 = vpop.trf.xlu0
        %5790 = vxpose.xlu0.c.b16.start [1/8] %v5036, 128
        %5791 = vxpose.xlu0.c.b16.cont [2/8] 0, 128
        %5792 = vxpose.xlu0.c.b16.cont [3/8] 0, 128
        %5793 = vxpose.xlu0.c.b16.cont [4/8] 0, 128
        %5794 = vxpose.xlu0.c.b16.cont [5/8] 0, 128
        %5795 = vxpose.xlu0.c.b16.cont [6/8] 0, 128
        %5796 = vxpose.xlu0.c.b16.cont [7/8] 0, 128
        %5797 = vxpose.xlu0.c.b16.end [8/8] 0, 128
        %v5798 = vpop.trf.xlu0
        %v5799 = vpop.trf.xlu0
        %v5800 = vpop.trf.xlu0
        %v5801 = vpop.trf.xlu0
        %v5802 = vpop.trf.xlu0
        %v5803 = vpop.trf.xlu0
        %v5804 = vpop.trf.xlu0
        %v5805 = vpop.trf.xlu0
        %5806 = vxpose.xlu0.c.b16.start [1/8] %v5037, 128
        %5807 = vxpose.xlu0.c.b16.cont [2/8] 0, 128
        %5808 = vxpose.xlu0.c.b16.cont [3/8] 0, 128
        %5809 = vxpose.xlu0.c.b16.cont [4/8] 0, 128
        %5810 = vxpose.xlu0.c.b16.cont [5/8] 0, 128
        %5811 = vxpose.xlu0.c.b16.cont [6/8] 0, 128
        %5812 = vxpose.xlu0.c.b16.cont [7/8] 0, 128
        %5813 = vxpose.xlu0.c.b16.end [8/8] 0, 128
        %v5814 = vpop.trf.xlu0
        %v5815 = vpop.trf.xlu0
        %v5816 = vpop.trf.xlu0
        %v5817 = vpop.trf.xlu0
        %v5818 = vpop.trf.xlu0
        %v5819 = vpop.trf.xlu0
        %v5820 = vpop.trf.xlu0
        %v5821 = vpop.trf.xlu0
        %5822 = vxpose.xlu0.c.b16.start [1/8] %v5038, 128
        %5823 = vxpose.xlu0.c.b16.cont [2/8] 0, 128
        %5824 = vxpose.xlu0.c.b16.cont [3/8] 0, 128
        %5825 = vxpose.xlu0.c.b16.cont [4/8] 0, 128
        %5826 = vxpose.xlu0.c.b16.cont [5/8] 0, 128
        %5827 = vxpose.xlu0.c.b16.cont [6/8] 0, 128
        %5828 = vxpose.xlu0.c.b16.cont [7/8] 0, 128
        %5829 = vxpose.xlu0.c.b16.end [8/8] 0, 128
        %v5830 = vpop.trf.xlu0
        %v5831 = vpop.trf.xlu0
        %v5832 = vpop.trf.xlu0
        %v5833 = vpop.trf.xlu0
        %v5834 = vpop.trf.xlu0
        %v5835 = vpop.trf.xlu0
        %v5836 = vpop.trf.xlu0
        %v5837 = vpop.trf.xlu0
        %5838 = vxpose.xlu0.c.b16.start [1/8] %v5039, 128
        %5839 = vxpose.xlu0.c.b16.cont [2/8] 0, 128
        %5840 = vxpose.xlu0.c.b16.cont [3/8] 0, 128
        %5841 = vxpose.xlu0.c.b16.cont [4/8] 0, 128
        %5842 = vxpose.xlu0.c.b16.cont [5/8] 0, 128
        %5843 = vxpose.xlu0.c.b16.cont [6/8] 0, 128
        %5844 = vxpose.xlu0.c.b16.cont [7/8] 0, 128
        %5845 = vxpose.xlu0.c.b16.end [8/8] 0, 128
        %v5846 = vpop.trf.xlu0
        %v5847 = vpop.trf.xlu0
        %v5848 = vpop.trf.xlu0
        %v5849 = vpop.trf.xlu0
        %v5850 = vpop.trf.xlu0
        %v5851 = vpop.trf.xlu0
        %v5852 = vpop.trf.xlu0
        %v5853 = vpop.trf.xlu0
        %5854 = vxpose.xlu0.c.b16.start [1/8] %v5040, 128
        %5855 = vxpose.xlu0.c.b16.cont [2/8] 0, 128
        %5856 = vxpose.xlu0.c.b16.cont [3/8] 0, 128
        %5857 = vxpose.xlu0.c.b16.cont [4/8] 0, 128
        %5858 = vxpose.xlu0.c.b16.cont [5/8] 0, 128
        %5859 = vxpose.xlu0.c.b16.cont [6/8] 0, 128
        %5860 = vxpose.xlu0.c.b16.cont [7/8] 0, 128
        %5861 = vxpose.xlu0.c.b16.end [8/8] 0, 128
        %v5862 = vpop.trf.xlu0
        %v5863 = vpop.trf.xlu0
        %v5864 = vpop.trf.xlu0
        %v5865 = vpop.trf.xlu0
        %v5866 = vpop.trf.xlu0
        %v5867 = vpop.trf.xlu0
        %v5868 = vpop.trf.xlu0
        %v5869 = vpop.trf.xlu0
        %5870 = vxpose.xlu0.c.b16.start [1/8] %v5041, 128
        %5871 = vxpose.xlu0.c.b16.cont [2/8] 0, 128
        %5872 = vxpose.xlu0.c.b16.cont [3/8] 0, 128
        %5873 = vxpose.xlu0.c.b16.cont [4/8] 0, 128
        %5874 = vxpose.xlu0.c.b16.cont [5/8] 0, 128
        %5875 = vxpose.xlu0.c.b16.cont [6/8] 0, 128
        %5876 = vxpose.xlu0.c.b16.cont [7/8] 0, 128
        %5877 = vxpose.xlu0.c.b16.end [8/8] 0, 128
        %v5878 = vpop.trf.xlu0
        %v5879 = vpop.trf.xlu0
        %v5880 = vpop.trf.xlu0
        %v5881 = vpop.trf.xlu0
        %v5882 = vpop.trf.xlu0
        %v5883 = vpop.trf.xlu0
        %v5884 = vpop.trf.xlu0
        %v5885 = vpop.trf.xlu0
        %v5886 = vcombine.low %v5766, %v5830
        %v5888 = vunpack.c.l.s4 1983009808
        %v5889 = vunpack.c.0.s8 %v5888
        %v5890 = vlaneseq
        %v5891 = vshrl.u32 %v5890, 7
        %v5892 = vsub.s32 %v5889, %v5891
        %v5893 = vrot.slane %v5886, %v5892
        %v5894 = vcombine.low %v5798, %v5862
        %v5896 = vunpack.c.l.s4 1983009808
        %v5897 = vunpack.c.0.s8 %v5896
        %v5898 = vlaneseq
        %v5899 = vshrl.u32 %v5898, 7
        %v5900 = vsub.s32 %v5897, %v5899
        %v5901 = vrot.slane %v5894, %v5900
        %v5902 = vcombine.low %v5893, %v5901
        %v5903 = vcombine.high %v5893, %v5901
        %v5905 = vunpack.c.l.s4 1934713408
        %v5906 = vunpack.c.0.s8 %v5905
        %v5907 = vlaneseq
        %v5908 = vshrl.u32 %v5907, 7
        %v5909 = vsub.s32 %v5906, %v5908
        %v5910 = vrot.slane %v5902, %v5909
        %v5912 = vunpack.c.l.s4 1934713408
        %v5913 = vunpack.c.0.s8 %v5912
        %v5914 = vlaneseq
        %v5915 = vshrl.u32 %v5914, 7
        %v5916 = vsub.s32 %v5913, %v5915
        %v5917 = vrot.slane %v5903, %v5916
        %v5918 = vcombine.high %v5910, 0
        %v5919 = vcombine.high %v5917, 0
        %v5920 = vcombine.low %v5782, %v5846
        %v5922 = vunpack.c.l.s4 1983009808
        %v5923 = vunpack.c.0.s8 %v5922
        %v5924 = vlaneseq
        %v5925 = vshrl.u32 %v5924, 7
        %v5926 = vsub.s32 %v5923, %v5925
        %v5927 = vrot.slane %v5920, %v5926
        %v5928 = vcombine.low %v5814, %v5878
        %v5930 = vunpack.c.l.s4 1983009808
        %v5931 = vunpack.c.0.s8 %v5930
        %v5932 = vlaneseq
        %v5933 = vshrl.u32 %v5932, 7
        %v5934 = vsub.s32 %v5931, %v5933
        %v5935 = vrot.slane %v5928, %v5934
        %v5936 = vcombine.low %v5927, %v5935
        %v5937 = vcombine.high %v5927, %v5935
        %v5939 = vunpack.c.l.s4 1934713408
        %v5940 = vunpack.c.0.s8 %v5939
        %v5941 = vlaneseq
        %v5942 = vshrl.u32 %v5941, 7
        %v5943 = vsub.s32 %v5940, %v5942
        %v5944 = vrot.slane %v5936, %v5943
        %v5946 = vunpack.c.l.s4 1934713408
        %v5947 = vunpack.c.0.s8 %v5946
        %v5948 = vlaneseq
        %v5949 = vshrl.u32 %v5948, 7
        %v5950 = vsub.s32 %v5947, %v5949
        %v5951 = vrot.slane %v5937, %v5950
        %v5952 = vcombine.high %v5944, 0
        %v5953 = vcombine.high %v5951, 0
        %v5956 = vpack.i.b16 %v5944, %v5910
        %v5958 = vshrl.u32 %v5910, 16
        %v5959 = vshrl.u32 %v5944, 16
        %v5960 = vpack.i.b16 %v5959, %v5958
        %v5964 = vpack.i.b16 %v5952, %v5918
        %v5966 = vshrl.u32 %v5918, 16
        %v5967 = vshrl.u32 %v5952, 16
        %v5968 = vpack.i.b16 %v5967, %v5966
        %v5972 = vpack.i.b16 %v5951, %v5917
        %v5974 = vshrl.u32 %v5917, 16
        %v5975 = vshrl.u32 %v5951, 16
        %v5976 = vpack.i.b16 %v5975, %v5974
        %v5980 = vpack.i.b16 %v5953, %v5919
        %v5982 = vshrl.u32 %v5919, 16
        %v5983 = vshrl.u32 %v5953, 16
        %v5984 = vpack.i.b16 %v5983, %v5982
        %5986 = vxpose.xlu0.c.b16.start [1/8] %v5956, 128
        %5987 = vxpose.xlu0.c.b16.cont [2/8] 0, 128
        %5988 = vxpose.xlu0.c.b16.cont [3/8] 0, 128
        %5989 = vxpose.xlu0.c.b16.cont [4/8] 0, 128
        %5990 = vxpose.xlu0.c.b16.cont [5/8] 0, 128
        %5991 = vxpose.xlu0.c.b16.cont [6/8] 0, 128
        %5992 = vxpose.xlu0.c.b16.cont [7/8] 0, 128
        %5993 = vxpose.xlu0.c.b16.end [8/8] 0, 128
        %v5994 = vpop.trf.xlu0
        %v5995 = vpop.trf.xlu0
        %v5996 = vpop.trf.xlu0
        %v5997 = vpop.trf.xlu0
        %v5998 = vpop.trf.xlu0
        %v5999 = vpop.trf.xlu0
        %v6000 = vpop.trf.xlu0
        %v6001 = vpop.trf.xlu0
        %6002 = vxpose.xlu0.c.b16.start [1/8] %v5960, 128
        %6003 = vxpose.xlu0.c.b16.cont [2/8] 0, 128
        %6004 = vxpose.xlu0.c.b16.cont [3/8] 0, 128
        %6005 = vxpose.xlu0.c.b16.cont [4/8] 0, 128
        %6006 = vxpose.xlu0.c.b16.cont [5/8] 0, 128
        %6007 = vxpose.xlu0.c.b16.cont [6/8] 0, 128
        %6008 = vxpose.xlu0.c.b16.cont [7/8] 0, 128
        %6009 = vxpose.xlu0.c.b16.end [8/8] 0, 128
        %v6010 = vpop.trf.xlu0
        %v6011 = vpop.trf.xlu0
        %v6012 = vpop.trf.xlu0
        %v6013 = vpop.trf.xlu0
        %v6014 = vpop.trf.xlu0
        %v6015 = vpop.trf.xlu0
        %v6016 = vpop.trf.xlu0
        %v6017 = vpop.trf.xlu0
        %6018 = vxpose.xlu0.c.b16.start [1/8] %v5964, 128
        %6019 = vxpose.xlu0.c.b16.cont [2/8] 0, 128
        %6020 = vxpose.xlu0.c.b16.cont [3/8] 0, 128
        %6021 = vxpose.xlu0.c.b16.cont [4/8] 0, 128
        %6022 = vxpose.xlu0.c.b16.cont [5/8] 0, 128
        %6023 = vxpose.xlu0.c.b16.cont [6/8] 0, 128
        %6024 = vxpose.xlu0.c.b16.cont [7/8] 0, 128
        %6025 = vxpose.xlu0.c.b16.end [8/8] 0, 128
        %v6026 = vpop.trf.xlu0
        %v6027 = vpop.trf.xlu0
        %v6028 = vpop.trf.xlu0
        %v6029 = vpop.trf.xlu0
        %v6030 = vpop.trf.xlu0
        %v6031 = vpop.trf.xlu0
        %v6032 = vpop.trf.xlu0
        %v6033 = vpop.trf.xlu0
        %6034 = vxpose.xlu0.c.b16.start [1/8] %v5968, 128
        %6035 = vxpose.xlu0.c.b16.cont [2/8] 0, 128
        %6036 = vxpose.xlu0.c.b16.cont [3/8] 0, 128
        %6037 = vxpose.xlu0.c.b16.cont [4/8] 0, 128
        %6038 = vxpose.xlu0.c.b16.cont [5/8] 0, 128
        %6039 = vxpose.xlu0.c.b16.cont [6/8] 0, 128
        %6040 = vxpose.xlu0.c.b16.cont [7/8] 0, 128
        %6041 = vxpose.xlu0.c.b16.end [8/8] 0, 128
        %v6042 = vpop.trf.xlu0
        %v6043 = vpop.trf.xlu0
        %v6044 = vpop.trf.xlu0
        %v6045 = vpop.trf.xlu0
        %v6046 = vpop.trf.xlu0
        %v6047 = vpop.trf.xlu0
        %v6048 = vpop.trf.xlu0
        %v6049 = vpop.trf.xlu0
        %6050 = vxpose.xlu0.c.b16.start [1/8] %v5972, 128
        %6051 = vxpose.xlu0.c.b16.cont [2/8] 0, 128
        %6052 = vxpose.xlu0.c.b16.cont [3/8] 0, 128
        %6053 = vxpose.xlu0.c.b16.cont [4/8] 0, 128
        %6054 = vxpose.xlu0.c.b16.cont [5/8] 0, 128
        %6055 = vxpose.xlu0.c.b16.cont [6/8] 0, 128
        %6056 = vxpose.xlu0.c.b16.cont [7/8] 0, 128
        %6057 = vxpose.xlu0.c.b16.end [8/8] 0, 128
        %v6058 = vpop.trf.xlu0
        %v6059 = vpop.trf.xlu0
        %v6060 = vpop.trf.xlu0
        %v6061 = vpop.trf.xlu0
        %v6062 = vpop.trf.xlu0
        %v6063 = vpop.trf.xlu0
        %v6064 = vpop.trf.xlu0
        %v6065 = vpop.trf.xlu0
        %6066 = vxpose.xlu0.c.b16.start [1/8] %v5976, 128
        %6067 = vxpose.xlu0.c.b16.cont [2/8] 0, 128
        %6068 = vxpose.xlu0.c.b16.cont [3/8] 0, 128
        %6069 = vxpose.xlu0.c.b16.cont [4/8] 0, 128
        %6070 = vxpose.xlu0.c.b16.cont [5/8] 0, 128
        %6071 = vxpose.xlu0.c.b16.cont [6/8] 0, 128
        %6072 = vxpose.xlu0.c.b16.cont [7/8] 0, 128
        %6073 = vxpose.xlu0.c.b16.end [8/8] 0, 128
        %v6074 = vpop.trf.xlu0
        %v6075 = vpop.trf.xlu0
        %v6076 = vpop.trf.xlu0
        %v6077 = vpop.trf.xlu0
        %v6078 = vpop.trf.xlu0
        %v6079 = vpop.trf.xlu0
        %v6080 = vpop.trf.xlu0
        %v6081 = vpop.trf.xlu0
        %6082 = vxpose.xlu0.c.b16.start [1/8] %v5980, 128
        %6083 = vxpose.xlu0.c.b16.cont [2/8] 0, 128
        %6084 = vxpose.xlu0.c.b16.cont [3/8] 0, 128
        %6085 = vxpose.xlu0.c.b16.cont [4/8] 0, 128
        %6086 = vxpose.xlu0.c.b16.cont [5/8] 0, 128
        %6087 = vxpose.xlu0.c.b16.cont [6/8] 0, 128
        %6088 = vxpose.xlu0.c.b16.cont [7/8] 0, 128
        %6089 = vxpose.xlu0.c.b16.end [8/8] 0, 128
        %v6090 = vpop.trf.xlu0
        %v6091 = vpop.trf.xlu0
        %v6092 = vpop.trf.xlu0
        %v6093 = vpop.trf.xlu0
        %v6094 = vpop.trf.xlu0
        %v6095 = vpop.trf.xlu0
        %v6096 = vpop.trf.xlu0
        %v6097 = vpop.trf.xlu0
        %6098 = vxpose.xlu0.c.b16.start [1/8] %v5984, 128
        %6099 = vxpose.xlu0.c.b16.cont [2/8] 0, 128
        %6100 = vxpose.xlu0.c.b16.cont [3/8] 0, 128
        %6101 = vxpose.xlu0.c.b16.cont [4/8] 0, 128
        %6102 = vxpose.xlu0.c.b16.cont [5/8] 0, 128
        %6103 = vxpose.xlu0.c.b16.cont [6/8] 0, 128
        %6104 = vxpose.xlu0.c.b16.cont [7/8] 0, 128
        %6105 = vxpose.xlu0.c.b16.end [8/8] 0, 128
        %v6106 = vpop.trf.xlu0
        %v6107 = vpop.trf.xlu0
        %v6108 = vpop.trf.xlu0
        %v6109 = vpop.trf.xlu0
        %v6110 = vpop.trf.xlu0
        %v6111 = vpop.trf.xlu0
        %v6112 = vpop.trf.xlu0
        %v6113 = vpop.trf.xlu0
        %v6114 = vcombine.low %v5994, %v6058
        %v6116 = vunpack.c.l.s4 1983009808
        %v6117 = vunpack.c.0.s8 %v6116
        %v6118 = vlaneseq
        %v6119 = vshrl.u32 %v6118, 7
        %v6120 = vsub.s32 %v6117, %v6119
        %v6121 = vrot.slane %v6114, %v6120
        %v6122 = vcombine.low %v6026, %v6090
        %v6124 = vunpack.c.l.s4 1983009808
        %v6125 = vunpack.c.0.s8 %v6124
        %v6126 = vlaneseq
        %v6127 = vshrl.u32 %v6126, 7
        %v6128 = vsub.s32 %v6125, %v6127
        %v6129 = vrot.slane %v6122, %v6128
        %v6130 = vcombine.low %v6121, %v6129
        %v6132 = vunpack.c.l.s4 1934713408
        %v6133 = vunpack.c.0.s8 %v6132
        %v6134 = vlaneseq
        %v6135 = vshrl.u32 %v6134, 7
        %v6136 = vsub.s32 %v6133, %v6135
        %v6137 = vrot.slane %v6130, %v6136
        %v6138 = vcombine.high %v6137, 0
        %v6139 = vcombine.low %v6010, %v6074
        %v6141 = vunpack.c.l.s4 1983009808
        %v6142 = vunpack.c.0.s8 %v6141
        %v6143 = vlaneseq
        %v6144 = vshrl.u32 %v6143, 7
        %v6145 = vsub.s32 %v6142, %v6144
        %v6146 = vrot.slane %v6139, %v6145
        %v6147 = vcombine.low %v6042, %v6106
        %v6149 = vunpack.c.l.s4 1983009808
        %v6150 = vunpack.c.0.s8 %v6149
        %v6151 = vlaneseq
        %v6152 = vshrl.u32 %v6151, 7
        %v6153 = vsub.s32 %v6150, %v6152
        %v6154 = vrot.slane %v6147, %v6153
        %v6155 = vcombine.low %v6146, %v6154
        %v6157 = vunpack.c.l.s4 1934713408
        %v6158 = vunpack.c.0.s8 %v6157
        %v6159 = vlaneseq
        %v6160 = vshrl.u32 %v6159, 7
        %v6161 = vsub.s32 %v6158, %v6160
        %v6162 = vrot.slane %v6155, %v6161
        %v6163 = vcombine.high %v6162, 0
        %v6166 = vpack.i.b16 %v6162, %v6137
        %v6167 = vshrl.u32 %v6137, 16
        %v6168 = vshrl.u32 %v6162, 16
        %v6169 = vpack.i.b16 %v6168, %v6167
        %v6172 = vpack.i.b16 %v6163, %v6138
        %v6173 = vshrl.u32 %v6138, 16
        %v6174 = vshrl.u32 %v6163, 16
        %v6175 = vpack.i.b16 %v6174, %v6173
        %v6177 = vsel %vm1171, %v6166, 0
        %v6180 = vsel %vm1171, %v5754, 0
        %6182 = vmatprep.subr.bf16.mxu0 0
        %6183 = vmatpush1.bf16.xpose.msra.mxu0 0
        %6184 = vmatprep.subr.bf16.mxu0 0
        %6185 = vmatpush1.bf16.xpose.msra.mxu0 0
        %6186 = vmatprep.subr.bf16.mxu0 0
        %6187 = vmatpush1.bf16.xpose.msra.mxu0 0
        %6188 = vmatprep.subr.bf16.mxu0 0
        %6189 = vmatpush1.bf16.xpose.msra.mxu0 0
        %6190 = vmatprep.subr.bf16.mxu0 0
        %6191 = vmatpush1.bf16.xpose.msra.mxu0 0
        %6192 = vmatprep.subr.bf16.mxu0 0
        %6193 = vmatpush1.bf16.xpose.msra.mxu0 0
        %6194 = vmatprep.subr.bf16.mxu0 0
        %6195 = vmatpush1.bf16.xpose.msra.mxu0 0
        %6196 = vmatprep.subr.bf16.mxu0 0
        %6197 = vmatpush1.bf16.xpose.msra.mxu0 %v6180
        %6198 = vmatprep.subr.bf16.mxu0 0
        %6199 = vmatpush2.bf16.xpose.msra.mxu0 0
        %6200 = vmatprep.subr.bf16.mxu0 0
        %6201 = vmatpush2.bf16.xpose.msra.mxu0 0
        %6202 = vmatprep.subr.bf16.mxu0 0
        %6203 = vmatpush2.bf16.xpose.msra.mxu0 0
        %6204 = vmatprep.subr.bf16.mxu0 0
        %6205 = vmatpush2.bf16.xpose.msra.mxu0 0
        %6206 = vmatprep.subr.bf16.mxu0 0
        %6207 = vmatpush2.bf16.xpose.msra.mxu0 0
        %6208 = vmatprep.subr.bf16.mxu0 0
        %6209 = vmatpush2.bf16.xpose.msra.mxu0 0
        %6210 = vmatprep.subr.bf16.mxu0 0
        %6211 = vmatpush2.bf16.xpose.msra.mxu0 0
        %6212 = vmatprep.subr.bf16.mxu0 0
        %6213 = vmatpush2.bf16.xpose.msra.mxu0 0
        %6214 = vmatprep.mubr.bf16.mxu0 0
        %6215 = vmatmul.mubr.bf16.gmra.mxu0 %v6177
        %v6216 = vpop.f32.mrf.mxu0
        %v6217 = vadd.f32 0.0, %v6216
        %v6218 = vpop.f32.mrf.mxu0
        %v6219 = vpop.f32.mrf.mxu0
        %v6220 = vpop.f32.mrf.mxu0
        %6221 = vdwg.mxu0
        %v6223 = vsel %vm1171, %v6169, 0
        %v6226 = vsel %vm1171, %v5755, 0
        %6228 = vmatprep.subr.bf16.mxu0 0
        %6229 = vmatpush1.bf16.xpose.msra.mxu0 0
        %6230 = vmatprep.subr.bf16.mxu0 0
        %6231 = vmatpush1.bf16.xpose.msra.mxu0 0
        %6232 = vmatprep.subr.bf16.mxu0 0
        %6233 = vmatpush1.bf16.xpose.msra.mxu0 0
        %6234 = vmatprep.subr.bf16.mxu0 0
        %6235 = vmatpush1.bf16.xpose.msra.mxu0 0
        %6236 = vmatprep.subr.bf16.mxu0 0
        %6237 = vmatpush1.bf16.xpose.msra.mxu0 0
        %6238 = vmatprep.subr.bf16.mxu0 0
        %6239 = vmatpush1.bf16.xpose.msra.mxu0 0
        %6240 = vmatprep.subr.bf16.mxu0 0
        %6241 = vmatpush1.bf16.xpose.msra.mxu0 0
        %6242 = vmatprep.subr.bf16.mxu0 0
        %6243 = vmatpush1.bf16.xpose.msra.mxu0 %v6226
        %6244 = vmatprep.subr.bf16.mxu0 0
        %6245 = vmatpush2.bf16.xpose.msra.mxu0 0
        %6246 = vmatprep.subr.bf16.mxu0 0
        %6247 = vmatpush2.bf16.xpose.msra.mxu0 0
        %6248 = vmatprep.subr.bf16.mxu0 0
        %6249 = vmatpush2.bf16.xpose.msra.mxu0 0
        %6250 = vmatprep.subr.bf16.mxu0 0
        %6251 = vmatpush2.bf16.xpose.msra.mxu0 0
        %6252 = vmatprep.subr.bf16.mxu0 0
        %6253 = vmatpush2.bf16.xpose.msra.mxu0 0
        %6254 = vmatprep.subr.bf16.mxu0 0
        %6255 = vmatpush2.bf16.xpose.msra.mxu0 0
        %6256 = vmatprep.subr.bf16.mxu0 0
        %6257 = vmatpush2.bf16.xpose.msra.mxu0 0
        %6258 = vmatprep.subr.bf16.mxu0 0
        %6259 = vmatpush2.bf16.xpose.msra.mxu0 0
        %6260 = vmatprep.mubr.bf16.mxu0 0
        %6261 = vmatmul.mubr.bf16.gmra.mxu0 %v6223
        %v6262 = vpop.f32.mrf.mxu0
        %v6263 = vadd.f32 0.0, %v6262
        %v6264 = vpop.f32.mrf.mxu0
        %v6265 = vpop.f32.mrf.mxu0
        %v6266 = vpop.f32.mrf.mxu0
        %6267 = vdwg.mxu0
        %v6269 = vsel %vm1171, %v6172, 0
        %v6272 = vsel %vm1171, %v5756, 0
        %6274 = vmatprep.subr.bf16.mxu0 0
        %6275 = vmatpush1.bf16.xpose.msra.mxu0 0
        %6276 = vmatprep.subr.bf16.mxu0 0
        %6277 = vmatpush1.bf16.xpose.msra.mxu0 0
        %6278 = vmatprep.subr.bf16.mxu0 0
        %6279 = vmatpush1.bf16.xpose.msra.mxu0 0
        %6280 = vmatprep.subr.bf16.mxu0 0
        %6281 = vmatpush1.bf16.xpose.msra.mxu0 0
        %6282 = vmatprep.subr.bf16.mxu0 0
        %6283 = vmatpush1.bf16.xpose.msra.mxu0 0
        %6284 = vmatprep.subr.bf16.mxu0 0
        %6285 = vmatpush1.bf16.xpose.msra.mxu0 0
        %6286 = vmatprep.subr.bf16.mxu0 0
        %6287 = vmatpush1.bf16.xpose.msra.mxu0 0
        %6288 = vmatprep.subr.bf16.mxu0 0
        %6289 = vmatpush1.bf16.xpose.msra.mxu0 %v6272
        %6290 = vmatprep.subr.bf16.mxu0 0
        %6291 = vmatpush2.bf16.xpose.msra.mxu0 0
        %6292 = vmatprep.subr.bf16.mxu0 0
        %6293 = vmatpush2.bf16.xpose.msra.mxu0 0
        %6294 = vmatprep.subr.bf16.mxu0 0
        %6295 = vmatpush2.bf16.xpose.msra.mxu0 0
        %6296 = vmatprep.subr.bf16.mxu0 0
        %6297 = vmatpush2.bf16.xpose.msra.mxu0 0
        %6298 = vmatprep.subr.bf16.mxu0 0
        %6299 = vmatpush2.bf16.xpose.msra.mxu0 0
        %6300 = vmatprep.subr.bf16.mxu0 0
        %6301 = vmatpush2.bf16.xpose.msra.mxu0 0
        %6302 = vmatprep.subr.bf16.mxu0 0
        %6303 = vmatpush2.bf16.xpose.msra.mxu0 0
        %6304 = vmatprep.subr.bf16.mxu0 0
        %6305 = vmatpush2.bf16.xpose.msra.mxu0 0
        %6306 = vmatprep.mubr.bf16.mxu0 0
        %6307 = vmatmul.mubr.bf16.gmra.mxu0 %v6269
        %v6308 = vpop.f32.mrf.mxu0
        %v6309 = vadd.f32 0.0, %v6308
        %v6310 = vpop.f32.mrf.mxu0
        %v6311 = vpop.f32.mrf.mxu0
        %v6312 = vpop.f32.mrf.mxu0
        %6313 = vdwg.mxu0
        %v6315 = vsel %vm1171, %v6175, 0
        %v6318 = vsel %vm1171, %v5757, 0
        %6320 = vmatprep.subr.bf16.mxu0 0
        %6321 = vmatpush1.bf16.xpose.msra.mxu0 0
        %6322 = vmatprep.subr.bf16.mxu0 0
        %6323 = vmatpush1.bf16.xpose.msra.mxu0 0
        %6324 = vmatprep.subr.bf16.mxu0 0
        %6325 = vmatpush1.bf16.xpose.msra.mxu0 0
        %6326 = vmatprep.subr.bf16.mxu0 0
        %6327 = vmatpush1.bf16.xpose.msra.mxu0 0
        %6328 = vmatprep.subr.bf16.mxu0 0
        %6329 = vmatpush1.bf16.xpose.msra.mxu0 0
        %6330 = vmatprep.subr.bf16.mxu0 0
        %6331 = vmatpush1.bf16.xpose.msra.mxu0 0
        %6332 = vmatprep.subr.bf16.mxu0 0
        %6333 = vmatpush1.bf16.xpose.msra.mxu0 0
        %6334 = vmatprep.subr.bf16.mxu0 0
        %6335 = vmatpush1.bf16.xpose.msra.mxu0 %v6318
        %6336 = vmatprep.subr.bf16.mxu0 0
        %6337 = vmatpush2.bf16.xpose.msra.mxu0 0
        %6338 = vmatprep.subr.bf16.mxu0 0
        %6339 = vmatpush2.bf16.xpose.msra.mxu0 0
        %6340 = vmatprep.subr.bf16.mxu0 0
        %6341 = vmatpush2.bf16.xpose.msra.mxu0 0
        %6342 = vmatprep.subr.bf16.mxu0 0
        %6343 = vmatpush2.bf16.xpose.msra.mxu0 0
        %6344 = vmatprep.subr.bf16.mxu0 0
        %6345 = vmatpush2.bf16.xpose.msra.mxu0 0
        %6346 = vmatprep.subr.bf16.mxu0 0
        %6347 = vmatpush2.bf16.xpose.msra.mxu0 0
        %6348 = vmatprep.subr.bf16.mxu0 0
        %6349 = vmatpush2.bf16.xpose.msra.mxu0 0
        %6350 = vmatprep.subr.bf16.mxu0 0
        %6351 = vmatpush2.bf16.xpose.msra.mxu0 0
        %6352 = vmatprep.mubr.bf16.mxu0 0
        %6353 = vmatmul.mubr.bf16.gmra.mxu0 %v6315
        %v6354 = vpop.f32.mrf.mxu0
        %v6355 = vadd.f32 0.0, %v6354
        %v6356 = vpop.f32.mrf.mxu0
        %v6357 = vpop.f32.mrf.mxu0
        %v6358 = vpop.f32.mrf.mxu0
        %6359 = vdwg.mxu0
        %6360 = vxpose.xlu0.b32.start [1/16] %v6217, 128
        %6361 = vxpose.xlu0.b32.cont [2/16] 0.0, 128
        %6362 = vxpose.xlu0.b32.cont [3/16] 0.0, 128
        %6363 = vxpose.xlu0.b32.cont [4/16] 0.0, 128
        %6364 = vxpose.xlu0.b32.cont [5/16] 0.0, 128
        %6365 = vxpose.xlu0.b32.cont [6/16] 0.0, 128
        %6366 = vxpose.xlu0.b32.cont [7/16] 0.0, 128
        %6367 = vxpose.xlu0.b32.cont [8/16] 0.0, 128
        %6368 = vxpose.xlu0.b32.cont [9/16] 0.0, 128
        %6369 = vxpose.xlu0.b32.cont [10/16] 0.0, 128
        %6370 = vxpose.xlu0.b32.cont [11/16] 0.0, 128
        %6371 = vxpose.xlu0.b32.cont [12/16] 0.0, 128
        %6372 = vxpose.xlu0.b32.cont [13/16] 0.0, 128
        %6373 = vxpose.xlu0.b32.cont [14/16] 0.0, 128
        %6374 = vxpose.xlu0.b32.cont [15/16] 0.0, 128
        %6375 = vxpose.xlu0.b32.end [16/16] 0.0, 128
        %v6376 = vpop.trf.xlu0
        %v6377 = vpop.trf.xlu0
        %v6378 = vpop.trf.xlu0
        %v6379 = vpop.trf.xlu0
        %v6380 = vpop.trf.xlu0
        %v6381 = vpop.trf.xlu0
        %v6382 = vpop.trf.xlu0
        %v6383 = vpop.trf.xlu0
        %v6384 = vpop.trf.xlu0
        %v6385 = vpop.trf.xlu0
        %v6386 = vpop.trf.xlu0
        %v6387 = vpop.trf.xlu0
        %v6388 = vpop.trf.xlu0
        %v6389 = vpop.trf.xlu0
        %v6390 = vpop.trf.xlu0
        %v6391 = vpop.trf.xlu0
        %6392 = vxpose.xlu0.b32.start [1/16] %v6263, 128
        %6393 = vxpose.xlu0.b32.cont [2/16] 0.0, 128
        %6394 = vxpose.xlu0.b32.cont [3/16] 0.0, 128
        %6395 = vxpose.xlu0.b32.cont [4/16] 0.0, 128
        %6396 = vxpose.xlu0.b32.cont [5/16] 0.0, 128
        %6397 = vxpose.xlu0.b32.cont [6/16] 0.0, 128
        %6398 = vxpose.xlu0.b32.cont [7/16] 0.0, 128
        %6399 = vxpose.xlu0.b32.cont [8/16] 0.0, 128
        %6400 = vxpose.xlu0.b32.cont [9/16] 0.0, 128
        %6401 = vxpose.xlu0.b32.cont [10/16] 0.0, 128
        %6402 = vxpose.xlu0.b32.cont [11/16] 0.0, 128
        %6403 = vxpose.xlu0.b32.cont [12/16] 0.0, 128
        %6404 = vxpose.xlu0.b32.cont [13/16] 0.0, 128
        %6405 = vxpose.xlu0.b32.cont [14/16] 0.0, 128
        %6406 = vxpose.xlu0.b32.cont [15/16] 0.0, 128
        %6407 = vxpose.xlu0.b32.end [16/16] 0.0, 128
        %v6408 = vpop.trf.xlu0
        %v6409 = vpop.trf.xlu0
        %v6410 = vpop.trf.xlu0
        %v6411 = vpop.trf.xlu0
        %v6412 = vpop.trf.xlu0
        %v6413 = vpop.trf.xlu0
        %v6414 = vpop.trf.xlu0
        %v6415 = vpop.trf.xlu0
        %v6416 = vpop.trf.xlu0
        %v6417 = vpop.trf.xlu0
        %v6418 = vpop.trf.xlu0
        %v6419 = vpop.trf.xlu0
        %v6420 = vpop.trf.xlu0
        %v6421 = vpop.trf.xlu0
        %v6422 = vpop.trf.xlu0
        %v6423 = vpop.trf.xlu0
        %6424 = vxpose.xlu0.b32.start [1/16] %v6309, 128
        %6425 = vxpose.xlu0.b32.cont [2/16] 0.0, 128
        %6426 = vxpose.xlu0.b32.cont [3/16] 0.0, 128
        %6427 = vxpose.xlu0.b32.cont [4/16] 0.0, 128
        %6428 = vxpose.xlu0.b32.cont [5/16] 0.0, 128
        %6429 = vxpose.xlu0.b32.cont [6/16] 0.0, 128
        %6430 = vxpose.xlu0.b32.cont [7/16] 0.0, 128
        %6431 = vxpose.xlu0.b32.cont [8/16] 0.0, 128
        %6432 = vxpose.xlu0.b32.cont [9/16] 0.0, 128
        %6433 = vxpose.xlu0.b32.cont [10/16] 0.0, 128
        %6434 = vxpose.xlu0.b32.cont [11/16] 0.0, 128
        %6435 = vxpose.xlu0.b32.cont [12/16] 0.0, 128
        %6436 = vxpose.xlu0.b32.cont [13/16] 0.0, 128
        %6437 = vxpose.xlu0.b32.cont [14/16] 0.0, 128
        %6438 = vxpose.xlu0.b32.cont [15/16] 0.0, 128
        %6439 = vxpose.xlu0.b32.end [16/16] 0.0, 128
        %v6440 = vpop.trf.xlu0
        %v6441 = vpop.trf.xlu0
        %v6442 = vpop.trf.xlu0
        %v6443 = vpop.trf.xlu0
        %v6444 = vpop.trf.xlu0
        %v6445 = vpop.trf.xlu0
        %v6446 = vpop.trf.xlu0
        %v6447 = vpop.trf.xlu0
        %v6448 = vpop.trf.xlu0
        %v6449 = vpop.trf.xlu0
        %v6450 = vpop.trf.xlu0
        %v6451 = vpop.trf.xlu0
        %v6452 = vpop.trf.xlu0
        %v6453 = vpop.trf.xlu0
        %v6454 = vpop.trf.xlu0
        %v6455 = vpop.trf.xlu0
        %6456 = vxpose.xlu0.b32.start [1/16] %v6355, 128
        %6457 = vxpose.xlu0.b32.cont [2/16] 0.0, 128
        %6458 = vxpose.xlu0.b32.cont [3/16] 0.0, 128
        %6459 = vxpose.xlu0.b32.cont [4/16] 0.0, 128
        %6460 = vxpose.xlu0.b32.cont [5/16] 0.0, 128
        %6461 = vxpose.xlu0.b32.cont [6/16] 0.0, 128
        %6462 = vxpose.xlu0.b32.cont [7/16] 0.0, 128
        %6463 = vxpose.xlu0.b32.cont [8/16] 0.0, 128
        %6464 = vxpose.xlu0.b32.cont [9/16] 0.0, 128
        %6465 = vxpose.xlu0.b32.cont [10/16] 0.0, 128
        %6466 = vxpose.xlu0.b32.cont [11/16] 0.0, 128
        %6467 = vxpose.xlu0.b32.cont [12/16] 0.0, 128
        %6468 = vxpose.xlu0.b32.cont [13/16] 0.0, 128
        %6469 = vxpose.xlu0.b32.cont [14/16] 0.0, 128
        %6470 = vxpose.xlu0.b32.cont [15/16] 0.0, 128
        %6471 = vxpose.xlu0.b32.end [16/16] 0.0, 128
        %v6472 = vpop.trf.xlu0
        %v6473 = vpop.trf.xlu0
        %v6474 = vpop.trf.xlu0
        %v6475 = vpop.trf.xlu0
        %v6476 = vpop.trf.xlu0
        %v6477 = vpop.trf.xlu0
        %v6478 = vpop.trf.xlu0
        %v6479 = vpop.trf.xlu0
        %v6480 = vpop.trf.xlu0
        %v6481 = vpop.trf.xlu0
        %v6482 = vpop.trf.xlu0
        %v6483 = vpop.trf.xlu0
        %v6484 = vpop.trf.xlu0
        %v6485 = vpop.trf.xlu0
        %v6486 = vpop.trf.xlu0
        %v6487 = vpop.trf.xlu0
        %v6488 = vcombine.low %v6376, %v6440
        %v6489 = vcombine.high %v6376, %v6440
        %v6491 = vunpack.c.l.s4 1983009808
        %v6492 = vunpack.c.0.s8 %v6491
        %v6493 = vlaneseq
        %v6494 = vshrl.u32 %v6493, 7
        %v6495 = vsub.s32 %v6492, %v6494
        %v6496 = vrot.slane %v6488, %v6495
        %v6498 = vunpack.c.l.s4 1983009808
        %v6499 = vunpack.c.0.s8 %v6498
        %v6500 = vlaneseq
        %v6501 = vshrl.u32 %v6500, 7
        %v6502 = vsub.s32 %v6499, %v6501
        %v6503 = vrot.slane %v6489, %v6502
        %v6504 = vcombine.low %v6408, %v6472
        %v6505 = vcombine.high %v6408, %v6472
        %v6507 = vunpack.c.l.s4 1983009808
        %v6508 = vunpack.c.0.s8 %v6507
        %v6509 = vlaneseq
        %v6510 = vshrl.u32 %v6509, 7
        %v6511 = vsub.s32 %v6508, %v6510
        %v6512 = vrot.slane %v6504, %v6511
        %v6514 = vunpack.c.l.s4 1983009808
        %v6515 = vunpack.c.0.s8 %v6514
        %v6516 = vlaneseq
        %v6517 = vshrl.u32 %v6516, 7
        %v6518 = vsub.s32 %v6515, %v6517
        %v6519 = vrot.slane %v6505, %v6518
        %v6520 = vcombine.low %v6496, %v6512
        %v6521 = vcombine.high %v6496, %v6512
        %v6523 = vunpack.c.l.s4 1934713408
        %v6524 = vunpack.c.0.s8 %v6523
        %v6525 = vlaneseq
        %v6526 = vshrl.u32 %v6525, 7
        %v6527 = vsub.s32 %v6524, %v6526
        %v6528 = vrot.slane %v6520, %v6527
        %v6530 = vunpack.c.l.s4 1934713408
        %v6531 = vunpack.c.0.s8 %v6530
        %v6532 = vlaneseq
        %v6533 = vshrl.u32 %v6532, 7
        %v6534 = vsub.s32 %v6531, %v6533
        %v6535 = vrot.slane %v6521, %v6534
        %v6536 = vcombine.low %v6503, %v6519
        %v6537 = vcombine.high %v6503, %v6519
        %v6539 = vunpack.c.l.s4 1934713408
        %v6540 = vunpack.c.0.s8 %v6539
        %v6541 = vlaneseq
        %v6542 = vshrl.u32 %v6541, 7
        %v6543 = vsub.s32 %v6540, %v6542
        %v6544 = vrot.slane %v6536, %v6543
        %v6546 = vunpack.c.l.s4 1934713408
        %v6547 = vunpack.c.0.s8 %v6546
        %v6548 = vlaneseq
        %v6549 = vshrl.u32 %v6548, 7
        %v6550 = vsub.s32 %v6547, %v6549
        %v6551 = vrot.slane %v6537, %v6550
        %v6552 = vcombine.high %v6528, 0.0
        %v6553 = vcombine.high %v6535, 0.0
        %v6554 = vcombine.high %v6544, 0.0
        %v6555 = vcombine.high %v6551, 0.0
        %v6556 = vcombine.low %v6528, %v6535
        %v6558 = vunpack.c.l.s4 1983009808
        %v6559 = vunpack.c.0.s8 %v6558
        %v6560 = vlaneseq
        %v6561 = vshrl.u32 %v6560, 7
        %v6562 = vsub.s32 %v6559, %v6561
        %v6563 = vrot.slane %v6556, %v6562
        %v6564 = vcombine.low %v6552, %v6553
        %v6566 = vunpack.c.l.s4 1983009808
        %v6567 = vunpack.c.0.s8 %v6566
        %v6568 = vlaneseq
        %v6569 = vshrl.u32 %v6568, 7
        %v6570 = vsub.s32 %v6567, %v6569
        %v6571 = vrot.slane %v6564, %v6570
        %v6572 = vcombine.low %v6544, %v6551
        %v6574 = vunpack.c.l.s4 1983009808
        %v6575 = vunpack.c.0.s8 %v6574
        %v6576 = vlaneseq
        %v6577 = vshrl.u32 %v6576, 7
        %v6578 = vsub.s32 %v6575, %v6577
        %v6579 = vrot.slane %v6572, %v6578
        %v6580 = vcombine.low %v6554, %v6555
        %v6582 = vunpack.c.l.s4 1983009808
        %v6583 = vunpack.c.0.s8 %v6582
        %v6584 = vlaneseq
        %v6585 = vshrl.u32 %v6584, 7
        %v6586 = vsub.s32 %v6583, %v6585
        %v6587 = vrot.slane %v6580, %v6586
        %v6588 = vcombine.low %v6563, %v6571
        %v6589 = vcombine.high %v6563, %v6571
        %v6591 = vunpack.c.l.s4 1934713408
        %v6592 = vunpack.c.0.s8 %v6591
        %v6593 = vlaneseq
        %v6594 = vshrl.u32 %v6593, 7
        %v6595 = vsub.s32 %v6592, %v6594
        %v6596 = vrot.slane %v6588, %v6595
        %v6598 = vunpack.c.l.s4 1934713408
        %v6599 = vunpack.c.0.s8 %v6598
        %v6600 = vlaneseq
        %v6601 = vshrl.u32 %v6600, 7
        %v6602 = vsub.s32 %v6599, %v6601
        %v6603 = vrot.slane %v6589, %v6602
        %v6604 = vcombine.low %v6579, %v6587
        %v6605 = vcombine.high %v6579, %v6587
        %v6607 = vunpack.c.l.s4 1934713408
        %v6608 = vunpack.c.0.s8 %v6607
        %v6609 = vlaneseq
        %v6610 = vshrl.u32 %v6609, 7
        %v6611 = vsub.s32 %v6608, %v6610
        %v6612 = vrot.slane %v6604, %v6611
        %v6614 = vunpack.c.l.s4 1934713408
        %v6615 = vunpack.c.0.s8 %v6614
        %v6616 = vlaneseq
        %v6617 = vshrl.u32 %v6616, 7
        %v6618 = vsub.s32 %v6615, %v6617
        %v6619 = vrot.slane %v6605, %v6618
        %v6620 = vcombine.low %v6596, %v6612
        %v6621 = vcombine.high %v6596, %v6612
        %v6622 = vcombine.low %v6603, %v6619
        %v6623 = vcombine.high %v6603, %v6619
        %6625 = vrot.lane.b32.xlu0 %v6621, 8
        %v6626 = vpop.permute.xlu0 %6625
        %6629 = vrot.lane.b32.xlu0 %v6622, 16
        %v6630 = vpop.permute.xlu0 %6629
        %6633 = vrot.lane.b32.xlu0 %v6623, 24
        %v6634 = vpop.permute.xlu0 %6633
        %v6636 = vsel %vm1171, %v6620, %v6626
        %v6637 = vsel %vm2290, %v6636, %v6630
        %v6638 = vsel %vm2292, %v6637, %v6634
        %v6639 = vpack.c.bf16 %v6638, %v6638
        %v6640 = vld [vmem:[%s4682] sm:$0xf]
        %v6641 = vld [vmem:[%s4682 + $0x8] sm:$0xf]
        %v6642 = vld [vmem:[%s4682 + $0x10] sm:$0xf]
        %v6643 = vld [vmem:[%s4682 + $0x18] sm:$0xf]
        %v6644 = vlaneseq
        %v6645 = vshrl.u32 %v6644, 7
        %v6646 = vsub.s32 7, %v6645
        %v6647 = vrot.slane %v4655, %v6646
        %v6652 = vunpack.c.l.b16 %v6640
        %v6653 = vunpack.c.l.b16 %v6641
        %v6654 = vunpack.c.l.b16 %v6642
        %v6655 = vunpack.c.l.b16 %v6643
        %v6656 = vpack.c.b16 %v6653, %v6652
        %v6657 = vpack.c.b16 %v6655, %v6654
        %6658 = vrot.lane.b32.xlu0 %v6656, 32
        %v6659 = vpop.permute.xlu0 %6658
        %6660 = vrot.lane.b32.xlu0 %v6657, 32
        %v6661 = vpop.permute.xlu0 %6660
        %v6665 = vsel %vm306, %v6639, 0
        %6667 = vmatprep.subr.bf16.mxu0 0
        %6668 = vmatpush1.bf16.msra.mxu0 0
        %6669 = vmatprep.subr.bf16.mxu0 0
        %6670 = vmatpush1.bf16.msra.mxu0 0
        %6671 = vmatprep.subr.bf16.mxu0 0
        %6672 = vmatpush1.bf16.msra.mxu0 0
        %6673 = vmatprep.subr.bf16.mxu0 0
        %6674 = vmatpush1.bf16.msra.mxu0 0
        %6675 = vmatprep.subr.bf16.mxu0 0
        %6676 = vmatpush1.bf16.msra.mxu0 0
        %6677 = vmatprep.subr.bf16.mxu0 0
        %6678 = vmatpush1.bf16.msra.mxu0 0
        %6679 = vmatprep.subr.bf16.mxu0 0
        %6680 = vmatpush1.bf16.msra.mxu0 %v6661
        %6681 = vmatprep.subr.bf16.mxu0 0
        %6682 = vmatpush1.bf16.msra.mxu0 %v6659
        %6683 = vmatprep.subr.bf16.mxu0 0
        %6684 = vmatpush2.bf16.msra.mxu0 0
        %6685 = vmatprep.subr.bf16.mxu0 0
        %6686 = vmatpush2.bf16.msra.mxu0 0
        %6687 = vmatprep.subr.bf16.mxu0 0
        %6688 = vmatpush2.bf16.msra.mxu0 0
        %6689 = vmatprep.subr.bf16.mxu0 0
        %6690 = vmatpush2.bf16.msra.mxu0 0
        %6691 = vmatprep.subr.bf16.mxu0 0
        %6692 = vmatpush2.bf16.msra.mxu0 0
        %6693 = vmatprep.subr.bf16.mxu0 0
        %6694 = vmatpush2.bf16.msra.mxu0 0
        %6695 = vmatprep.subr.bf16.mxu0 0
        %6696 = vmatpush2.bf16.msra.mxu0 0
        %6697 = vmatprep.subr.bf16.mxu0 0
        %6698 = vmatpush2.bf16.msra.mxu0 0
        %6699 = vmatprep.mubr.bf16.mxu0 0
        %6700 = vmatmul.mubr.bf16.gmra.mxu0 %v6665
        %v6701 = vpop.f32.mrf.mxu0
        %v6702 = vadd.f32 %v6647, %v6701
        %v6703 = vpop.f32.mrf.mxu0
        %v6704 = vpop.f32.mrf.mxu0
        %v6705 = vpop.f32.mrf.mxu0
        %6706 = vdwg.mxu0
        %v6707 = vadd.f32 %v4657, %v6702
        %v6708 = vsel %vm306, %v6707, 0.0
        %6709 = vadd.xlane.f32.xlu0 %v6708
        %v6710 = vpop.xlane.xlu0 %6709
        %v6711 = vmul.f32 %v6710, %v310
        %v6712 = vsub.f32 %v6707, %v6711
        %v6713 = vmul.f32 %v6712, %v6712
        %v6714 = vsel %vm306, %v6713, 0.0
        %6715 = vadd.xlane.f32.xlu0 %v6714
        %v6716 = vpop.xlane.xlu0 %6715
        %v6717 = vmul.f32 %v6716, %v310
        %v6718 = vadd.f32 %v6717, 1e-05
        %v6719 = vrsqrt.pop %v6718
        %v6720 = vmul.f32 %v6712, %v6719
        %v6721 = vlaneseq
        %v6722 = vshrl.u32 %v6721, 7
        %v6723 = vsub.s32 2, %v6722
        %v6724 = vrot.slane %v4655, %v6723
        %v6725 = vmul.f32 %v6720, %v6724
        %v6726 = vlaneseq
        %v6727 = vshrl.u32 %v6726, 7
        %v6728 = vsub.s32 3, %v6727
        %v6729 = vrot.slane %v4655, %v6728
        %v6730 = vadd.f32 %v6725, %v6729
        %v6731 = vpack.c.bf16 %v6730, %v6730
        %v6732 = vld [vmem:[%s4682 + $0x4] sm:$0xf]
        %v6733 = vld [vmem:[%s4682 + $0xc] sm:$0xf]
        %v6734 = vld [vmem:[%s4682 + $0x14] sm:$0xf]
        %v6735 = vld [vmem:[%s4682 + $0x1c] sm:$0xf]
        %v6736 = vlaneseq
        %v6737 = vshrl.u32 %v6736, 7
        %v6738 = vsub.s32 0, %v6737
        %v6739 = vrot.slane %v4656, %v6738
        %v6744 = vunpack.c.l.b16 %v6732
        %v6745 = vunpack.c.l.b16 %v6733
        %v6746 = vunpack.c.l.b16 %v6734
        %v6747 = vunpack.c.l.b16 %v6735
        %v6748 = vpack.c.b16 %v6745, %v6744
        %v6749 = vpack.c.b16 %v6747, %v6746
        %v6753 = vsel %vm306, %v6731, 0
        %6755 = vmatprep.subr.bf16.mxu0 0
        %6756 = vmatpush1.bf16.msra.mxu0 0
        %6757 = vmatprep.subr.bf16.mxu0 0
        %6758 = vmatpush1.bf16.msra.mxu0 0
        %6759 = vmatprep.subr.bf16.mxu0 0
        %6760 = vmatpush1.bf16.msra.mxu0 0
        %6761 = vmatprep.subr.bf16.mxu0 0
        %6762 = vmatpush1.bf16.msra.mxu0 0
        %6763 = vmatprep.subr.bf16.mxu0 0
        %6764 = vmatpush1.bf16.msra.mxu0 0
        %6765 = vmatprep.subr.bf16.mxu0 0
        %6766 = vmatpush1.bf16.msra.mxu0 0
        %6767 = vmatprep.subr.bf16.mxu0 0
        %6768 = vmatpush1.bf16.msra.mxu0 %v6749
        %6769 = vmatprep.subr.bf16.mxu0 0
        %6770 = vmatpush1.bf16.msra.mxu0 %v6748
        %6771 = vmatprep.subr.bf16.mxu0 0
        %6772 = vmatpush2.bf16.msra.mxu0 0
        %6773 = vmatprep.subr.bf16.mxu0 0
        %6774 = vmatpush2.bf16.msra.mxu0 0
        %6775 = vmatprep.subr.bf16.mxu0 0
        %6776 = vmatpush2.bf16.msra.mxu0 0
        %6777 = vmatprep.subr.bf16.mxu0 0
        %6778 = vmatpush2.bf16.msra.mxu0 0
        %6779 = vmatprep.subr.bf16.mxu0 0
        %6780 = vmatpush2.bf16.msra.mxu0 0
        %6781 = vmatprep.subr.bf16.mxu0 0
        %6782 = vmatpush2.bf16.msra.mxu0 0
        %6783 = vmatprep.subr.bf16.mxu0 0
        %6784 = vmatpush2.bf16.msra.mxu0 0
        %6785 = vmatprep.subr.bf16.mxu0 0
        %6786 = vmatpush2.bf16.msra.mxu0 0
        %6787 = vmatprep.mubr.bf16.mxu0 0
        %6788 = vmatmul.mubr.bf16.gmra.mxu0 %v6753
        %v6789 = vpop.f32.mrf.mxu0
        %v6790 = vadd.f32 %v6739, %v6789
        %v6791 = vpop.f32.mrf.mxu0
        %v6792 = vpop.f32.mrf.mxu0
        %v6793 = vpop.f32.mrf.mxu0
        %6794 = vdwg.mxu0
        %v6795 = vmax.f32 %v6790, 0.0
        %v6796 = vpack.c.bf16 %v6795, %v6795
        %v6797 = vlaneseq
        %v6798 = vshrl.u32 %v6797, 7
        %v6799 = vsub.s32 1, %v6798
        %v6800 = vrot.slane %v4656, %v6799
        %6801 = vrot.lane.b32.xlu0 %v6748, 96
        %v6802 = vpop.permute.xlu0 %6801
        %6803 = vrot.lane.b32.xlu0 %v6749, 96
        %v6804 = vpop.permute.xlu0 %6803
        %v6808 = vsel %vm306, %v6796, 0
        %6810 = vmatprep.subr.bf16.mxu0 0
        %6811 = vmatpush1.bf16.msra.mxu0 0
        %6812 = vmatprep.subr.bf16.mxu0 0
        %6813 = vmatpush1.bf16.msra.mxu0 0
        %6814 = vmatprep.subr.bf16.mxu0 0
        %6815 = vmatpush1.bf16.msra.mxu0 0
        %6816 = vmatprep.subr.bf16.mxu0 0
        %6817 = vmatpush1.bf16.msra.mxu0 0
        %6818 = vmatprep.subr.bf16.mxu0 0
        %6819 = vmatpush1.bf16.msra.mxu0 0
        %6820 = vmatprep.subr.bf16.mxu0 0
        %6821 = vmatpush1.bf16.msra.mxu0 0
        %6822 = vmatprep.subr.bf16.mxu0 0
        %6823 = vmatpush1.bf16.msra.mxu0 %v6804
        %6824 = vmatprep.subr.bf16.mxu0 0
        %6825 = vmatpush1.bf16.msra.mxu0 %v6802
        %6826 = vmatprep.subr.bf16.mxu0 0
        %6827 = vmatpush2.bf16.msra.mxu0 0
        %6828 = vmatprep.subr.bf16.mxu0 0
        %6829 = vmatpush2.bf16.msra.mxu0 0
        %6830 = vmatprep.subr.bf16.mxu0 0
        %6831 = vmatpush2.bf16.msra.mxu0 0
        %6832 = vmatprep.subr.bf16.mxu0 0
        %6833 = vmatpush2.bf16.msra.mxu0 0
        %6834 = vmatprep.subr.bf16.mxu0 0
        %6835 = vmatpush2.bf16.msra.mxu0 0
        %6836 = vmatprep.subr.bf16.mxu0 0
        %6837 = vmatpush2.bf16.msra.mxu0 0
        %6838 = vmatprep.subr.bf16.mxu0 0
        %6839 = vmatpush2.bf16.msra.mxu0 0
        %6840 = vmatprep.subr.bf16.mxu0 0
        %6841 = vmatpush2.bf16.msra.mxu0 0
        %6842 = vmatprep.mubr.bf16.mxu0 0
        %6843 = vmatmul.mubr.bf16.gmra.mxu0 %v6808
        %v6844 = vpop.f32.mrf.mxu0
        %v6845 = vadd.f32 %v6800, %v6844
        %v6846 = vpop.f32.mrf.mxu0
        %v6847 = vpop.f32.mrf.mxu0
        %v6848 = vpop.f32.mrf.mxu0
        %6849 = vdwg.mxu0
        %v6850 = vadd.f32 %v6845, %v6707
        %6851 = vst.msk [vmem:[#allocation2] sm:$0xff] %vm306, %v6850
        %v6852 = vld [vmem:[%s2507] sm:$0xff]
        %v6853 = vsel %vm306, %v6852, 0.0
        %6854 = vadd.xlane.f32.xlu0 %v6853
        %v6855 = vpop.xlane.xlu0 %6854
        %v6856 = vmul.f32 %v6855, %v310
        %v6857 = vsub.f32 %v6852, %v6856
        %v6858 = vmul.f32 %v6857, %v6857
        %v6859 = vsel %vm306, %v6858, 0.0
        %6860 = vadd.xlane.f32.xlu0 %v6859
        %v6861 = vpop.xlane.xlu0 %6860
        %v6862 = vmul.f32 %v6861, %v310
        %v6863 = vadd.f32 %v6862, 1e-05
        %v6864 = vrsqrt.pop %v6863
        %v6865 = vmul.f32 %v6857, %v6864
        %v6866 = vmul.f32 %v6865, %v4674
        %v6867 = vadd.f32 %v6866, %v4679
        %v6868 = vpack.c.bf16 %v6867, %v6867
        %v6869 = vld [vmem:[%s4682] sm:$0xf]
        %v6870 = vld [vmem:[%s4682 + $0x8] sm:$0xf]
        %v6871 = vld [vmem:[%s4682 + $0x10] sm:$0xf]
        %v6872 = vld [vmem:[%s4682 + $0x18] sm:$0xf]
        %v6877 = vunpack.c.l.b16 %v6869
        %v6878 = vunpack.c.l.b16 %v6870
        %v6879 = vunpack.c.l.b16 %v6871
        %v6880 = vunpack.c.l.b16 %v6872
        %v6881 = vpack.c.b16 %v6878, %v6877
        %v6882 = vpack.c.b16 %v6880, %v6879
        %v6886 = vsel %vm306, %v6868, 0
        %6888 = vmatprep.subr.bf16.mxu0 0
        %6889 = vmatpush1.bf16.msra.mxu0 0
        %6890 = vmatprep.subr.bf16.mxu0 0
        %6891 = vmatpush1.bf16.msra.mxu0 0
        %6892 = vmatprep.subr.bf16.mxu0 0
        %6893 = vmatpush1.bf16.msra.mxu0 0
        %6894 = vmatprep.subr.bf16.mxu0 0
        %6895 = vmatpush1.bf16.msra.mxu0 0
        %6896 = vmatprep.subr.bf16.mxu0 0
        %6897 = vmatpush1.bf16.msra.mxu0 0
        %6898 = vmatprep.subr.bf16.mxu0 0
        %6899 = vmatpush1.bf16.msra.mxu0 0
        %6900 = vmatprep.subr.bf16.mxu0 0
        %6901 = vmatpush1.bf16.msra.mxu0 %v6882
        %6902 = vmatprep.subr.bf16.mxu0 0
        %6903 = vmatpush1.bf16.msra.mxu0 %v6881
        %6904 = vmatprep.subr.bf16.mxu0 0
        %6905 = vmatpush2.bf16.msra.mxu0 0
        %6906 = vmatprep.subr.bf16.mxu0 0
        %6907 = vmatpush2.bf16.msra.mxu0 0
        %6908 = vmatprep.subr.bf16.mxu0 0
        %6909 = vmatpush2.bf16.msra.mxu0 0
        %6910 = vmatprep.subr.bf16.mxu0 0
        %6911 = vmatpush2.bf16.msra.mxu0 0
        %6912 = vmatprep.subr.bf16.mxu0 0
        %6913 = vmatpush2.bf16.msra.mxu0 0
        %6914 = vmatprep.subr.bf16.mxu0 0
        %6915 = vmatpush2.bf16.msra.mxu0 0
        %6916 = vmatprep.subr.bf16.mxu0 0
        %6917 = vmatpush2.bf16.msra.mxu0 0
        %6918 = vmatprep.subr.bf16.mxu0 0
        %6919 = vmatpush2.bf16.msra.mxu0 0
        %6920 = vmatprep.mubr.bf16.mxu0 0
        %6921 = vmatmul.mubr.bf16.gmra.mxu0 %v6886
        %v6922 = vpop.f32.mrf.mxu0
        %v6923 = vadd.f32 0.0, %v6922
        %v6924 = vpop.f32.mrf.mxu0
        %v6925 = vpop.f32.mrf.mxu0
        %v6926 = vpop.f32.mrf.mxu0
        %6927 = vdwg.mxu0
        %v6928 = vadd.f32 %v6923, %v4745
        %v6929 = vmul.f32 %v6928, 0.17677669
        %v6930 = vadd.f32 %v6923, %v4754
        %v6931 = vadd.f32 %v6923, %v4763
        %6933 = vrot.lane.b32.xlu0 %v6929, 120
        %v6934 = vpop.permute.xlu0 %6933
        %6936 = vrot.lane.b32.xlu0 %v6929, 112
        %v6937 = vpop.permute.xlu0 %6936
        %6939 = vrot.lane.b32.xlu0 %v6929, 104
        %v6940 = vpop.permute.xlu0 %6939
        %v6942 = vcombine.low %v6929, %v6937
        %v6943 = vcombine.high %v6929, %v6937
        %v6945 = vunpack.c.l.s4 1983009808
        %v6946 = vunpack.c.0.s8 %v6945
        %v6947 = vlaneseq
        %v6948 = vshrl.u32 %v6947, 7
        %v6949 = vsub.s32 %v6946, %v6948
        %v6950 = vrot.slane %v6942, %v6949
        %v6952 = vunpack.c.l.s4 1983009808
        %v6953 = vunpack.c.0.s8 %v6952
        %v6954 = vlaneseq
        %v6955 = vshrl.u32 %v6954, 7
        %v6956 = vsub.s32 %v6953, %v6955
        %v6957 = vrot.slane %v6943, %v6956
        %v6958 = vcombine.low %v6934, %v6940
        %v6959 = vcombine.high %v6934, %v6940
        %v6961 = vunpack.c.l.s4 1983009808
        %v6962 = vunpack.c.0.s8 %v6961
        %v6963 = vlaneseq
        %v6964 = vshrl.u32 %v6963, 7
        %v6965 = vsub.s32 %v6962, %v6964
        %v6966 = vrot.slane %v6958, %v6965
        %v6968 = vunpack.c.l.s4 1983009808
        %v6969 = vunpack.c.0.s8 %v6968
        %v6970 = vlaneseq
        %v6971 = vshrl.u32 %v6970, 7
        %v6972 = vsub.s32 %v6969, %v6971
        %v6973 = vrot.slane %v6959, %v6972
        %v6974 = vcombine.low %v6950, %v6966
        %v6975 = vcombine.high %v6950, %v6966
        %v6977 = vunpack.c.l.s4 1934713408
        %v6978 = vunpack.c.0.s8 %v6977
        %v6979 = vlaneseq
        %v6980 = vshrl.u32 %v6979, 7
        %v6981 = vsub.s32 %v6978, %v6980
        %v6982 = vrot.slane %v6974, %v6981
        %v6984 = vunpack.c.l.s4 1934713408
        %v6985 = vunpack.c.0.s8 %v6984
        %v6986 = vlaneseq
        %v6987 = vshrl.u32 %v6986, 7
        %v6988 = vsub.s32 %v6985, %v6987
        %v6989 = vrot.slane %v6975, %v6988
        %v6990 = vcombine.low %v6957, %v6973
        %v6991 = vcombine.high %v6957, %v6973
        %v6993 = vunpack.c.l.s4 1934713408
        %v6994 = vunpack.c.0.s8 %v6993
        %v6995 = vlaneseq
        %v6996 = vshrl.u32 %v6995, 7
        %v6997 = vsub.s32 %v6994, %v6996
        %v6998 = vrot.slane %v6990, %v6997
        %v7000 = vunpack.c.l.s4 1934713408
        %v7001 = vunpack.c.0.s8 %v7000
        %v7002 = vlaneseq
        %v7003 = vshrl.u32 %v7002, 7
        %v7004 = vsub.s32 %v7001, %v7003
        %v7005 = vrot.slane %v6991, %v7004
        %v7006 = vcombine.high %v6982, 0.0
        %v7007 = vcombine.high %v6989, 0.0
        %v7008 = vcombine.high %v6998, 0.0
        %v7009 = vcombine.high %v7005, 0.0
        %v7010 = vpack.c.bf16 %v6982, %v6982
        %v7011 = vpack.c.bf16 %v7006, %v7006
        %v7012 = vpack.c.bf16 %v6989, %v6989
        %v7013 = vpack.c.bf16 %v7007, %v7007
        %v7014 = vpack.c.bf16 %v6998, %v6998
        %v7015 = vpack.c.bf16 %v7008, %v7008
        %v7016 = vpack.c.bf16 %v7005, %v7005
        %v7017 = vpack.c.bf16 %v7009, %v7009
        %7019 = vrot.lane.b32.xlu0 %v6930, 120
        %v7020 = vpop.permute.xlu0 %7019
        %7021 = vrot.lane.b32.xlu0 %v6930, 112
        %v7022 = vpop.permute.xlu0 %7021
        %7023 = vrot.lane.b32.xlu0 %v6930, 104
        %v7024 = vpop.permute.xlu0 %7023
        %7025 = vrot.lane.b32.xlu0 %v6930, 96
        %v7026 = vpop.permute.xlu0 %7025
        %7027 = vrot.lane.b32.xlu0 %v7020, 96
        %v7028 = vpop.permute.xlu0 %7027
        %7029 = vrot.lane.b32.xlu0 %v7022, 96
        %v7030 = vpop.permute.xlu0 %7029
        %7031 = vrot.lane.b32.xlu0 %v7024, 96
        %v7032 = vpop.permute.xlu0 %7031
        %v7037 = vcombine.low %v7026, %v7030
        %v7038 = vcombine.high %v7026, %v7030
        %v7040 = vunpack.c.l.s4 1983009808
        %v7041 = vunpack.c.0.s8 %v7040
        %v7042 = vlaneseq
        %v7043 = vshrl.u32 %v7042, 7
        %v7044 = vsub.s32 %v7041, %v7043
        %v7045 = vrot.slane %v7037, %v7044
        %v7047 = vunpack.c.l.s4 1983009808
        %v7048 = vunpack.c.0.s8 %v7047
        %v7049 = vlaneseq
        %v7050 = vshrl.u32 %v7049, 7
        %v7051 = vsub.s32 %v7048, %v7050
        %v7052 = vrot.slane %v7038, %v7051
        %v7053 = vcombine.low %v7028, %v7032
        %v7054 = vcombine.high %v7028, %v7032
        %v7056 = vunpack.c.l.s4 1983009808
        %v7057 = vunpack.c.0.s8 %v7056
        %v7058 = vlaneseq
        %v7059 = vshrl.u32 %v7058, 7
        %v7060 = vsub.s32 %v7057, %v7059
        %v7061 = vrot.slane %v7053, %v7060
        %v7063 = vunpack.c.l.s4 1983009808
        %v7064 = vunpack.c.0.s8 %v7063
        %v7065 = vlaneseq
        %v7066 = vshrl.u32 %v7065, 7
        %v7067 = vsub.s32 %v7064, %v7066
        %v7068 = vrot.slane %v7054, %v7067
        %v7069 = vcombine.low %v7045, %v7061
        %v7070 = vcombine.high %v7045, %v7061
        %v7072 = vunpack.c.l.s4 1934713408
        %v7073 = vunpack.c.0.s8 %v7072
        %v7074 = vlaneseq
        %v7075 = vshrl.u32 %v7074, 7
        %v7076 = vsub.s32 %v7073, %v7075
        %v7077 = vrot.slane %v7069, %v7076
        %v7079 = vunpack.c.l.s4 1934713408
        %v7080 = vunpack.c.0.s8 %v7079
        %v7081 = vlaneseq
        %v7082 = vshrl.u32 %v7081, 7
        %v7083 = vsub.s32 %v7080, %v7082
        %v7084 = vrot.slane %v7070, %v7083
        %v7085 = vcombine.low %v7052, %v7068
        %v7086 = vcombine.high %v7052, %v7068
        %v7088 = vunpack.c.l.s4 1934713408
        %v7089 = vunpack.c.0.s8 %v7088
        %v7090 = vlaneseq
        %v7091 = vshrl.u32 %v7090, 7
        %v7092 = vsub.s32 %v7089, %v7091
        %v7093 = vrot.slane %v7085, %v7092
        %v7095 = vunpack.c.l.s4 1934713408
        %v7096 = vunpack.c.0.s8 %v7095
        %v7097 = vlaneseq
        %v7098 = vshrl.u32 %v7097, 7
        %v7099 = vsub.s32 %v7096, %v7098
        %v7100 = vrot.slane %v7086, %v7099
        %v7101 = vcombine.high %v7077, 0.0
        %v7102 = vcombine.high %v7084, 0.0
        %v7103 = vcombine.high %v7093, 0.0
        %v7104 = vcombine.high %v7100, 0.0
        %v7105 = vpack.c.bf16 %v7077, %v7077
        %v7106 = vpack.c.bf16 %v7101, %v7101
        %v7107 = vpack.c.bf16 %v7084, %v7084
        %v7108 = vpack.c.bf16 %v7102, %v7102
        %v7109 = vpack.c.bf16 %v7093, %v7093
        %v7110 = vpack.c.bf16 %v7103, %v7103
        %v7111 = vpack.c.bf16 %v7100, %v7100
        %v7112 = vpack.c.bf16 %v7104, %v7104
        %7114 = vrot.lane.b32.xlu0 %v6931, 120
        %v7115 = vpop.permute.xlu0 %7114
        %7116 = vrot.lane.b32.xlu0 %v6931, 112
        %v7117 = vpop.permute.xlu0 %7116
        %7118 = vrot.lane.b32.xlu0 %v6931, 104
        %v7119 = vpop.permute.xlu0 %7118
        %7120 = vrot.lane.b32.xlu0 %v6931, 64
        %v7121 = vpop.permute.xlu0 %7120
        %7122 = vrot.lane.b32.xlu0 %v7115, 64
        %v7123 = vpop.permute.xlu0 %7122
        %7124 = vrot.lane.b32.xlu0 %v7117, 64
        %v7125 = vpop.permute.xlu0 %7124
        %7126 = vrot.lane.b32.xlu0 %v7119, 64
        %v7127 = vpop.permute.xlu0 %7126
        %v7132 = vcombine.low %v7121, %v7125
        %v7133 = vcombine.high %v7121, %v7125
        %v7135 = vunpack.c.l.s4 1983009808
        %v7136 = vunpack.c.0.s8 %v7135
        %v7137 = vlaneseq
        %v7138 = vshrl.u32 %v7137, 7
        %v7139 = vsub.s32 %v7136, %v7138
        %v7140 = vrot.slane %v7132, %v7139
        %v7142 = vunpack.c.l.s4 1983009808
        %v7143 = vunpack.c.0.s8 %v7142
        %v7144 = vlaneseq
        %v7145 = vshrl.u32 %v7144, 7
        %v7146 = vsub.s32 %v7143, %v7145
        %v7147 = vrot.slane %v7133, %v7146
        %v7148 = vcombine.low %v7123, %v7127
        %v7149 = vcombine.high %v7123, %v7127
        %v7151 = vunpack.c.l.s4 1983009808
        %v7152 = vunpack.c.0.s8 %v7151
        %v7153 = vlaneseq
        %v7154 = vshrl.u32 %v7153, 7
        %v7155 = vsub.s32 %v7152, %v7154
        %v7156 = vrot.slane %v7148, %v7155
        %v7158 = vunpack.c.l.s4 1983009808
        %v7159 = vunpack.c.0.s8 %v7158
        %v7160 = vlaneseq
        %v7161 = vshrl.u32 %v7160, 7
        %v7162 = vsub.s32 %v7159, %v7161
        %v7163 = vrot.slane %v7149, %v7162
        %v7164 = vcombine.low %v7140, %v7156
        %v7165 = vcombine.high %v7140, %v7156
        %v7167 = vunpack.c.l.s4 1934713408
        %v7168 = vunpack.c.0.s8 %v7167
        %v7169 = vlaneseq
        %v7170 = vshrl.u32 %v7169, 7
        %v7171 = vsub.s32 %v7168, %v7170
        %v7172 = vrot.slane %v7164, %v7171
        %v7174 = vunpack.c.l.s4 1934713408
        %v7175 = vunpack.c.0.s8 %v7174
        %v7176 = vlaneseq
        %v7177 = vshrl.u32 %v7176, 7
        %v7178 = vsub.s32 %v7175, %v7177
        %v7179 = vrot.slane %v7165, %v7178
        %v7180 = vcombine.low %v7147, %v7163
        %v7181 = vcombine.high %v7147, %v7163
        %v7183 = vunpack.c.l.s4 1934713408
        %v7184 = vunpack.c.0.s8 %v7183
        %v7185 = vlaneseq
        %v7186 = vshrl.u32 %v7185, 7
        %v7187 = vsub.s32 %v7184, %v7186
        %v7188 = vrot.slane %v7180, %v7187
        %v7190 = vunpack.c.l.s4 1934713408
        %v7191 = vunpack.c.0.s8 %v7190
        %v7192 = vlaneseq
        %v7193 = vshrl.u32 %v7192, 7
        %v7194 = vsub.s32 %v7191, %v7193
        %v7195 = vrot.slane %v7181, %v7194
        %v7196 = vcombine.high %v7172, 0.0
        %v7197 = vcombine.high %v7179, 0.0
        %v7198 = vcombine.high %v7188, 0.0
        %v7199 = vcombine.high %v7195, 0.0
        %v7200 = vpack.c.bf16 %v7172, %v7172
        %v7201 = vpack.c.bf16 %v7196, %v7196
        %v7202 = vpack.c.bf16 %v7179, %v7179
        %v7203 = vpack.c.bf16 %v7197, %v7197
        %v7204 = vpack.c.bf16 %v7188, %v7188
        %v7205 = vpack.c.bf16 %v7198, %v7198
        %v7206 = vpack.c.bf16 %v7195, %v7195
        %v7207 = vpack.c.bf16 %v7199, %v7199
        %v7208 = vcombine.low %v7010, %v7014
        %v7210 = vunpack.c.l.s4 1983009808
        %v7211 = vunpack.c.0.s8 %v7210
        %v7212 = vlaneseq
        %v7213 = vshrl.u32 %v7212, 7
        %v7214 = vsub.s32 %v7211, %v7213
        %v7215 = vrot.slane %v7208, %v7214
        %v7216 = vcombine.low %v7012, %v7016
        %v7218 = vunpack.c.l.s4 1983009808
        %v7219 = vunpack.c.0.s8 %v7218
        %v7220 = vlaneseq
        %v7221 = vshrl.u32 %v7220, 7
        %v7222 = vsub.s32 %v7219, %v7221
        %v7223 = vrot.slane %v7216, %v7222
        %v7224 = vcombine.low %v7215, %v7223
        %v7226 = vunpack.c.l.s4 1934713408
        %v7227 = vunpack.c.0.s8 %v7226
        %v7228 = vlaneseq
        %v7229 = vshrl.u32 %v7228, 7
        %v7230 = vsub.s32 %v7227, %v7229
        %v7231 = vrot.slane %v7224, %v7230
        %v7232 = vcombine.high %v7231, 0
        %v7233 = vcombine.low %v7011, %v7015
        %v7235 = vunpack.c.l.s4 1983009808
        %v7236 = vunpack.c.0.s8 %v7235
        %v7237 = vlaneseq
        %v7238 = vshrl.u32 %v7237, 7
        %v7239 = vsub.s32 %v7236, %v7238
        %v7240 = vrot.slane %v7233, %v7239
        %v7241 = vcombine.low %v7013, %v7017
        %v7243 = vunpack.c.l.s4 1983009808
        %v7244 = vunpack.c.0.s8 %v7243
        %v7245 = vlaneseq
        %v7246 = vshrl.u32 %v7245, 7
        %v7247 = vsub.s32 %v7244, %v7246
        %v7248 = vrot.slane %v7241, %v7247
        %v7249 = vcombine.low %v7240, %v7248
        %v7251 = vunpack.c.l.s4 1934713408
        %v7252 = vunpack.c.0.s8 %v7251
        %v7253 = vlaneseq
        %v7254 = vshrl.u32 %v7253, 7
        %v7255 = vsub.s32 %v7252, %v7254
        %v7256 = vrot.slane %v7249, %v7255
        %v7257 = vcombine.high %v7256, 0
        %v7260 = vpack.i.b16 %v7256, %v7231
        %v7261 = vshrl.u32 %v7231, 16
        %v7262 = vshrl.u32 %v7256, 16
        %v7263 = vpack.i.b16 %v7262, %v7261
        %v7266 = vpack.i.b16 %v7257, %v7232
        %v7267 = vshrl.u32 %v7232, 16
        %v7268 = vshrl.u32 %v7257, 16
        %v7269 = vpack.i.b16 %v7268, %v7267
        %7270 = vxpose.xlu0.c.b16.start [1/8] %v7105, 128
        %7271 = vxpose.xlu0.c.b16.cont [2/8] 0, 128
        %7272 = vxpose.xlu0.c.b16.cont [3/8] 0, 128
        %7273 = vxpose.xlu0.c.b16.cont [4/8] 0, 128
        %7274 = vxpose.xlu0.c.b16.cont [5/8] 0, 128
        %7275 = vxpose.xlu0.c.b16.cont [6/8] 0, 128
        %7276 = vxpose.xlu0.c.b16.cont [7/8] 0, 128
        %7277 = vxpose.xlu0.c.b16.end [8/8] 0, 128
        %v7278 = vpop.trf.xlu0
        %v7279 = vpop.trf.xlu0
        %v7280 = vpop.trf.xlu0
        %v7281 = vpop.trf.xlu0
        %v7282 = vpop.trf.xlu0
        %v7283 = vpop.trf.xlu0
        %v7284 = vpop.trf.xlu0
        %v7285 = vpop.trf.xlu0
        %7286 = vxpose.xlu0.c.b16.start [1/8] %v7106, 128
        %7287 = vxpose.xlu0.c.b16.cont [2/8] 0, 128
        %7288 = vxpose.xlu0.c.b16.cont [3/8] 0, 128
        %7289 = vxpose.xlu0.c.b16.cont [4/8] 0, 128
        %7290 = vxpose.xlu0.c.b16.cont [5/8] 0, 128
        %7291 = vxpose.xlu0.c.b16.cont [6/8] 0, 128
        %7292 = vxpose.xlu0.c.b16.cont [7/8] 0, 128
        %7293 = vxpose.xlu0.c.b16.end [8/8] 0, 128
        %v7294 = vpop.trf.xlu0
        %v7295 = vpop.trf.xlu0
        %v7296 = vpop.trf.xlu0
        %v7297 = vpop.trf.xlu0
        %v7298 = vpop.trf.xlu0
        %v7299 = vpop.trf.xlu0
        %v7300 = vpop.trf.xlu0
        %v7301 = vpop.trf.xlu0
        %7302 = vxpose.xlu0.c.b16.start [1/8] %v7107, 128
        %7303 = vxpose.xlu0.c.b16.cont [2/8] 0, 128
        %7304 = vxpose.xlu0.c.b16.cont [3/8] 0, 128
        %7305 = vxpose.xlu0.c.b16.cont [4/8] 0, 128
        %7306 = vxpose.xlu0.c.b16.cont [5/8] 0, 128
        %7307 = vxpose.xlu0.c.b16.cont [6/8] 0, 128
        %7308 = vxpose.xlu0.c.b16.cont [7/8] 0, 128
        %7309 = vxpose.xlu0.c.b16.end [8/8] 0, 128
        %v7310 = vpop.trf.xlu0
        %v7311 = vpop.trf.xlu0
        %v7312 = vpop.trf.xlu0
        %v7313 = vpop.trf.xlu0
        %v7314 = vpop.trf.xlu0
        %v7315 = vpop.trf.xlu0
        %v7316 = vpop.trf.xlu0
        %v7317 = vpop.trf.xlu0
        %7318 = vxpose.xlu0.c.b16.start [1/8] %v7108, 128
        %7319 = vxpose.xlu0.c.b16.cont [2/8] 0, 128
        %7320 = vxpose.xlu0.c.b16.cont [3/8] 0, 128
        %7321 = vxpose.xlu0.c.b16.cont [4/8] 0, 128
        %7322 = vxpose.xlu0.c.b16.cont [5/8] 0, 128
        %7323 = vxpose.xlu0.c.b16.cont [6/8] 0, 128
        %7324 = vxpose.xlu0.c.b16.cont [7/8] 0, 128
        %7325 = vxpose.xlu0.c.b16.end [8/8] 0, 128
        %v7326 = vpop.trf.xlu0
        %v7327 = vpop.trf.xlu0
        %v7328 = vpop.trf.xlu0
        %v7329 = vpop.trf.xlu0
        %v7330 = vpop.trf.xlu0
        %v7331 = vpop.trf.xlu0
        %v7332 = vpop.trf.xlu0
        %v7333 = vpop.trf.xlu0
        %7334 = vxpose.xlu0.c.b16.start [1/8] %v7109, 128
        %7335 = vxpose.xlu0.c.b16.cont [2/8] 0, 128
        %7336 = vxpose.xlu0.c.b16.cont [3/8] 0, 128
        %7337 = vxpose.xlu0.c.b16.cont [4/8] 0, 128
        %7338 = vxpose.xlu0.c.b16.cont [5/8] 0, 128
        %7339 = vxpose.xlu0.c.b16.cont [6/8] 0, 128
        %7340 = vxpose.xlu0.c.b16.cont [7/8] 0, 128
        %7341 = vxpose.xlu0.c.b16.end [8/8] 0, 128
        %v7342 = vpop.trf.xlu0
        %v7343 = vpop.trf.xlu0
        %v7344 = vpop.trf.xlu0
        %v7345 = vpop.trf.xlu0
        %v7346 = vpop.trf.xlu0
        %v7347 = vpop.trf.xlu0
        %v7348 = vpop.trf.xlu0
        %v7349 = vpop.trf.xlu0
        %7350 = vxpose.xlu0.c.b16.start [1/8] %v7110, 128
        %7351 = vxpose.xlu0.c.b16.cont [2/8] 0, 128
        %7352 = vxpose.xlu0.c.b16.cont [3/8] 0, 128
        %7353 = vxpose.xlu0.c.b16.cont [4/8] 0, 128
        %7354 = vxpose.xlu0.c.b16.cont [5/8] 0, 128
        %7355 = vxpose.xlu0.c.b16.cont [6/8] 0, 128
        %7356 = vxpose.xlu0.c.b16.cont [7/8] 0, 128
        %7357 = vxpose.xlu0.c.b16.end [8/8] 0, 128
        %v7358 = vpop.trf.xlu0
        %v7359 = vpop.trf.xlu0
        %v7360 = vpop.trf.xlu0
        %v7361 = vpop.trf.xlu0
        %v7362 = vpop.trf.xlu0
        %v7363 = vpop.trf.xlu0
        %v7364 = vpop.trf.xlu0
        %v7365 = vpop.trf.xlu0
        %7366 = vxpose.xlu0.c.b16.start [1/8] %v7111, 128
        %7367 = vxpose.xlu0.c.b16.cont [2/8] 0, 128
        %7368 = vxpose.xlu0.c.b16.cont [3/8] 0, 128
        %7369 = vxpose.xlu0.c.b16.cont [4/8] 0, 128
        %7370 = vxpose.xlu0.c.b16.cont [5/8] 0, 128
        %7371 = vxpose.xlu0.c.b16.cont [6/8] 0, 128
        %7372 = vxpose.xlu0.c.b16.cont [7/8] 0, 128
        %7373 = vxpose.xlu0.c.b16.end [8/8] 0, 128
        %v7374 = vpop.trf.xlu0
        %v7375 = vpop.trf.xlu0
        %v7376 = vpop.trf.xlu0
        %v7377 = vpop.trf.xlu0
        %v7378 = vpop.trf.xlu0
        %v7379 = vpop.trf.xlu0
        %v7380 = vpop.trf.xlu0
        %v7381 = vpop.trf.xlu0
        %7382 = vxpose.xlu0.c.b16.start [1/8] %v7112, 128
        %7383 = vxpose.xlu0.c.b16.cont [2/8] 0, 128
        %7384 = vxpose.xlu0.c.b16.cont [3/8] 0, 128
        %7385 = vxpose.xlu0.c.b16.cont [4/8] 0, 128
        %7386 = vxpose.xlu0.c.b16.cont [5/8] 0, 128
        %7387 = vxpose.xlu0.c.b16.cont [6/8] 0, 128
        %7388 = vxpose.xlu0.c.b16.cont [7/8] 0, 128
        %7389 = vxpose.xlu0.c.b16.end [8/8] 0, 128
        %v7390 = vpop.trf.xlu0
        %v7391 = vpop.trf.xlu0
        %v7392 = vpop.trf.xlu0
        %v7393 = vpop.trf.xlu0
        %v7394 = vpop.trf.xlu0
        %v7395 = vpop.trf.xlu0
        %v7396 = vpop.trf.xlu0
        %v7397 = vpop.trf.xlu0
        %v7398 = vcombine.low %v7278, %v7342
        %v7400 = vunpack.c.l.s4 1983009808
        %v7401 = vunpack.c.0.s8 %v7400
        %v7402 = vlaneseq
        %v7403 = vshrl.u32 %v7402, 7
        %v7404 = vsub.s32 %v7401, %v7403
        %v7405 = vrot.slane %v7398, %v7404
        %v7406 = vcombine.low %v7310, %v7374
        %v7408 = vunpack.c.l.s4 1983009808
        %v7409 = vunpack.c.0.s8 %v7408
        %v7410 = vlaneseq
        %v7411 = vshrl.u32 %v7410, 7
        %v7412 = vsub.s32 %v7409, %v7411
        %v7413 = vrot.slane %v7406, %v7412
        %v7414 = vcombine.low %v7405, %v7413
        %v7415 = vcombine.high %v7405, %v7413
        %v7417 = vunpack.c.l.s4 1934713408
        %v7418 = vunpack.c.0.s8 %v7417
        %v7419 = vlaneseq
        %v7420 = vshrl.u32 %v7419, 7
        %v7421 = vsub.s32 %v7418, %v7420
        %v7422 = vrot.slane %v7414, %v7421
        %v7424 = vunpack.c.l.s4 1934713408
        %v7425 = vunpack.c.0.s8 %v7424
        %v7426 = vlaneseq
        %v7427 = vshrl.u32 %v7426, 7
        %v7428 = vsub.s32 %v7425, %v7427
        %v7429 = vrot.slane %v7415, %v7428
        %v7430 = vcombine.high %v7422, 0
        %v7431 = vcombine.high %v7429, 0
        %v7432 = vcombine.low %v7294, %v7358
        %v7434 = vunpack.c.l.s4 1983009808
        %v7435 = vunpack.c.0.s8 %v7434
        %v7436 = vlaneseq
        %v7437 = vshrl.u32 %v7436, 7
        %v7438 = vsub.s32 %v7435, %v7437
        %v7439 = vrot.slane %v7432, %v7438
        %v7440 = vcombine.low %v7326, %v7390
        %v7442 = vunpack.c.l.s4 1983009808
        %v7443 = vunpack.c.0.s8 %v7442
        %v7444 = vlaneseq
        %v7445 = vshrl.u32 %v7444, 7
        %v7446 = vsub.s32 %v7443, %v7445
        %v7447 = vrot.slane %v7440, %v7446
        %v7448 = vcombine.low %v7439, %v7447
        %v7449 = vcombine.high %v7439, %v7447
        %v7451 = vunpack.c.l.s4 1934713408
        %v7452 = vunpack.c.0.s8 %v7451
        %v7453 = vlaneseq
        %v7454 = vshrl.u32 %v7453, 7
        %v7455 = vsub.s32 %v7452, %v7454
        %v7456 = vrot.slane %v7448, %v7455
        %v7458 = vunpack.c.l.s4 1934713408
        %v7459 = vunpack.c.0.s8 %v7458
        %v7460 = vlaneseq
        %v7461 = vshrl.u32 %v7460, 7
        %v7462 = vsub.s32 %v7459, %v7461
        %v7463 = vrot.slane %v7449, %v7462
        %v7464 = vcombine.high %v7456, 0
        %v7465 = vcombine.high %v7463, 0
        %v7468 = vpack.i.b16 %v7456, %v7422
        %v7470 = vshrl.u32 %v7422, 16
        %v7471 = vshrl.u32 %v7456, 16
        %v7472 = vpack.i.b16 %v7471, %v7470
        %v7476 = vpack.i.b16 %v7464, %v7430
        %v7478 = vshrl.u32 %v7430, 16
        %v7479 = vshrl.u32 %v7464, 16
        %v7480 = vpack.i.b16 %v7479, %v7478
        %v7484 = vpack.i.b16 %v7463, %v7429
        %v7486 = vshrl.u32 %v7429, 16
        %v7487 = vshrl.u32 %v7463, 16
        %v7488 = vpack.i.b16 %v7487, %v7486
        %v7492 = vpack.i.b16 %v7465, %v7431
        %v7494 = vshrl.u32 %v7431, 16
        %v7495 = vshrl.u32 %v7465, 16
        %v7496 = vpack.i.b16 %v7495, %v7494
        %7498 = vxpose.xlu0.c.b16.start [1/8] %v7468, 128
        %7499 = vxpose.xlu0.c.b16.cont [2/8] 0, 128
        %7500 = vxpose.xlu0.c.b16.cont [3/8] 0, 128
        %7501 = vxpose.xlu0.c.b16.cont [4/8] 0, 128
        %7502 = vxpose.xlu0.c.b16.cont [5/8] 0, 128
        %7503 = vxpose.xlu0.c.b16.cont [6/8] 0, 128
        %7504 = vxpose.xlu0.c.b16.cont [7/8] 0, 128
        %7505 = vxpose.xlu0.c.b16.end [8/8] 0, 128
        %v7506 = vpop.trf.xlu0
        %v7507 = vpop.trf.xlu0
        %v7508 = vpop.trf.xlu0
        %v7509 = vpop.trf.xlu0
        %v7510 = vpop.trf.xlu0
        %v7511 = vpop.trf.xlu0
        %v7512 = vpop.trf.xlu0
        %v7513 = vpop.trf.xlu0
        %7514 = vxpose.xlu0.c.b16.start [1/8] %v7472, 128
        %7515 = vxpose.xlu0.c.b16.cont [2/8] 0, 128
        %7516 = vxpose.xlu0.c.b16.cont [3/8] 0, 128
        %7517 = vxpose.xlu0.c.b16.cont [4/8] 0, 128
        %7518 = vxpose.xlu0.c.b16.cont [5/8] 0, 128
        %7519 = vxpose.xlu0.c.b16.cont [6/8] 0, 128
        %7520 = vxpose.xlu0.c.b16.cont [7/8] 0, 128
        %7521 = vxpose.xlu0.c.b16.end [8/8] 0, 128
        %v7522 = vpop.trf.xlu0
        %v7523 = vpop.trf.xlu0
        %v7524 = vpop.trf.xlu0
        %v7525 = vpop.trf.xlu0
        %v7526 = vpop.trf.xlu0
        %v7527 = vpop.trf.xlu0
        %v7528 = vpop.trf.xlu0
        %v7529 = vpop.trf.xlu0
        %7530 = vxpose.xlu0.c.b16.start [1/8] %v7476, 128
        %7531 = vxpose.xlu0.c.b16.cont [2/8] 0, 128
        %7532 = vxpose.xlu0.c.b16.cont [3/8] 0, 128
        %7533 = vxpose.xlu0.c.b16.cont [4/8] 0, 128
        %7534 = vxpose.xlu0.c.b16.cont [5/8] 0, 128
        %7535 = vxpose.xlu0.c.b16.cont [6/8] 0, 128
        %7536 = vxpose.xlu0.c.b16.cont [7/8] 0, 128
        %7537 = vxpose.xlu0.c.b16.end [8/8] 0, 128
        %v7538 = vpop.trf.xlu0
        %v7539 = vpop.trf.xlu0
        %v7540 = vpop.trf.xlu0
        %v7541 = vpop.trf.xlu0
        %v7542 = vpop.trf.xlu0
        %v7543 = vpop.trf.xlu0
        %v7544 = vpop.trf.xlu0
        %v7545 = vpop.trf.xlu0
        %7546 = vxpose.xlu0.c.b16.start [1/8] %v7480, 128
        %7547 = vxpose.xlu0.c.b16.cont [2/8] 0, 128
        %7548 = vxpose.xlu0.c.b16.cont [3/8] 0, 128
        %7549 = vxpose.xlu0.c.b16.cont [4/8] 0, 128
        %7550 = vxpose.xlu0.c.b16.cont [5/8] 0, 128
        %7551 = vxpose.xlu0.c.b16.cont [6/8] 0, 128
        %7552 = vxpose.xlu0.c.b16.cont [7/8] 0, 128
        %7553 = vxpose.xlu0.c.b16.end [8/8] 0, 128
        %v7554 = vpop.trf.xlu0
        %v7555 = vpop.trf.xlu0
        %v7556 = vpop.trf.xlu0
        %v7557 = vpop.trf.xlu0
        %v7558 = vpop.trf.xlu0
        %v7559 = vpop.trf.xlu0
        %v7560 = vpop.trf.xlu0
        %v7561 = vpop.trf.xlu0
        %7562 = vxpose.xlu0.c.b16.start [1/8] %v7484, 128
        %7563 = vxpose.xlu0.c.b16.cont [2/8] 0, 128
        %7564 = vxpose.xlu0.c.b16.cont [3/8] 0, 128
        %7565 = vxpose.xlu0.c.b16.cont [4/8] 0, 128
        %7566 = vxpose.xlu0.c.b16.cont [5/8] 0, 128
        %7567 = vxpose.xlu0.c.b16.cont [6/8] 0, 128
        %7568 = vxpose.xlu0.c.b16.cont [7/8] 0, 128
        %7569 = vxpose.xlu0.c.b16.end [8/8] 0, 128
        %v7570 = vpop.trf.xlu0
        %v7571 = vpop.trf.xlu0
        %v7572 = vpop.trf.xlu0
        %v7573 = vpop.trf.xlu0
        %v7574 = vpop.trf.xlu0
        %v7575 = vpop.trf.xlu0
        %v7576 = vpop.trf.xlu0
        %v7577 = vpop.trf.xlu0
        %7578 = vxpose.xlu0.c.b16.start [1/8] %v7488, 128
        %7579 = vxpose.xlu0.c.b16.cont [2/8] 0, 128
        %7580 = vxpose.xlu0.c.b16.cont [3/8] 0, 128
        %7581 = vxpose.xlu0.c.b16.cont [4/8] 0, 128
        %7582 = vxpose.xlu0.c.b16.cont [5/8] 0, 128
        %7583 = vxpose.xlu0.c.b16.cont [6/8] 0, 128
        %7584 = vxpose.xlu0.c.b16.cont [7/8] 0, 128
        %7585 = vxpose.xlu0.c.b16.end [8/8] 0, 128
        %v7586 = vpop.trf.xlu0
        %v7587 = vpop.trf.xlu0
        %v7588 = vpop.trf.xlu0
        %v7589 = vpop.trf.xlu0
        %v7590 = vpop.trf.xlu0
        %v7591 = vpop.trf.xlu0
        %v7592 = vpop.trf.xlu0
        %v7593 = vpop.trf.xlu0
        %7594 = vxpose.xlu0.c.b16.start [1/8] %v7492, 128
        %7595 = vxpose.xlu0.c.b16.cont [2/8] 0, 128
        %7596 = vxpose.xlu0.c.b16.cont [3/8] 0, 128
        %7597 = vxpose.xlu0.c.b16.cont [4/8] 0, 128
        %7598 = vxpose.xlu0.c.b16.cont [5/8] 0, 128
        %7599 = vxpose.xlu0.c.b16.cont [6/8] 0, 128
        %7600 = vxpose.xlu0.c.b16.cont [7/8] 0, 128
        %7601 = vxpose.xlu0.c.b16.end [8/8] 0, 128
        %v7602 = vpop.trf.xlu0
        %v7603 = vpop.trf.xlu0
        %v7604 = vpop.trf.xlu0
        %v7605 = vpop.trf.xlu0
        %v7606 = vpop.trf.xlu0
        %v7607 = vpop.trf.xlu0
        %v7608 = vpop.trf.xlu0
        %v7609 = vpop.trf.xlu0
        %7610 = vxpose.xlu0.c.b16.start [1/8] %v7496, 128
        %7611 = vxpose.xlu0.c.b16.cont [2/8] 0, 128
        %7612 = vxpose.xlu0.c.b16.cont [3/8] 0, 128
        %7613 = vxpose.xlu0.c.b16.cont [4/8] 0, 128
        %7614 = vxpose.xlu0.c.b16.cont [5/8] 0, 128
        %7615 = vxpose.xlu0.c.b16.cont [6/8] 0, 128
        %7616 = vxpose.xlu0.c.b16.cont [7/8] 0, 128
        %7617 = vxpose.xlu0.c.b16.end [8/8] 0, 128
        %v7618 = vpop.trf.xlu0
        %v7619 = vpop.trf.xlu0
        %v7620 = vpop.trf.xlu0
        %v7621 = vpop.trf.xlu0
        %v7622 = vpop.trf.xlu0
        %v7623 = vpop.trf.xlu0
        %v7624 = vpop.trf.xlu0
        %v7625 = vpop.trf.xlu0
        %v7626 = vcombine.low %v7506, %v7570
        %v7628 = vunpack.c.l.s4 1983009808
        %v7629 = vunpack.c.0.s8 %v7628
        %v7630 = vlaneseq
        %v7631 = vshrl.u32 %v7630, 7
        %v7632 = vsub.s32 %v7629, %v7631
        %v7633 = vrot.slane %v7626, %v7632
        %v7634 = vcombine.low %v7538, %v7602
        %v7636 = vunpack.c.l.s4 1983009808
        %v7637 = vunpack.c.0.s8 %v7636
        %v7638 = vlaneseq
        %v7639 = vshrl.u32 %v7638, 7
        %v7640 = vsub.s32 %v7637, %v7639
        %v7641 = vrot.slane %v7634, %v7640
        %v7642 = vcombine.low %v7633, %v7641
        %v7644 = vunpack.c.l.s4 1934713408
        %v7645 = vunpack.c.0.s8 %v7644
        %v7646 = vlaneseq
        %v7647 = vshrl.u32 %v7646, 7
        %v7648 = vsub.s32 %v7645, %v7647
        %v7649 = vrot.slane %v7642, %v7648
        %v7650 = vcombine.high %v7649, 0
        %v7651 = vcombine.low %v7522, %v7586
        %v7653 = vunpack.c.l.s4 1983009808
        %v7654 = vunpack.c.0.s8 %v7653
        %v7655 = vlaneseq
        %v7656 = vshrl.u32 %v7655, 7
        %v7657 = vsub.s32 %v7654, %v7656
        %v7658 = vrot.slane %v7651, %v7657
        %v7659 = vcombine.low %v7554, %v7618
        %v7661 = vunpack.c.l.s4 1983009808
        %v7662 = vunpack.c.0.s8 %v7661
        %v7663 = vlaneseq
        %v7664 = vshrl.u32 %v7663, 7
        %v7665 = vsub.s32 %v7662, %v7664
        %v7666 = vrot.slane %v7659, %v7665
        %v7667 = vcombine.low %v7658, %v7666
        %v7669 = vunpack.c.l.s4 1934713408
        %v7670 = vunpack.c.0.s8 %v7669
        %v7671 = vlaneseq
        %v7672 = vshrl.u32 %v7671, 7
        %v7673 = vsub.s32 %v7670, %v7672
        %v7674 = vrot.slane %v7667, %v7673
        %v7675 = vcombine.high %v7674, 0
        %v7678 = vpack.i.b16 %v7674, %v7649
        %v7679 = vshrl.u32 %v7649, 16
        %v7680 = vshrl.u32 %v7674, 16
        %v7681 = vpack.i.b16 %v7680, %v7679
        %v7684 = vpack.i.b16 %v7675, %v7650
        %v7685 = vshrl.u32 %v7650, 16
        %v7686 = vshrl.u32 %v7675, 16
        %v7687 = vpack.i.b16 %v7686, %v7685
        %v7689 = vsel %vm1171, %v7260, 0
        %v7692 = vsel %vm1175, %v7678, 0
        %7694 = vmatprep.subr.bf16.mxu0 0
        %7695 = vmatpush1.bf16.msra.mxu0 0
        %7696 = vmatprep.subr.bf16.mxu0 0
        %7697 = vmatpush1.bf16.msra.mxu0 0
        %7698 = vmatprep.subr.bf16.mxu0 0
        %7699 = vmatpush1.bf16.msra.mxu0 0
        %7700 = vmatprep.subr.bf16.mxu0 0
        %7701 = vmatpush1.bf16.msra.mxu0 0
        %7702 = vmatprep.subr.bf16.mxu0 0
        %7703 = vmatpush1.bf16.msra.mxu0 0
        %7704 = vmatprep.subr.bf16.mxu0 0
        %7705 = vmatpush1.bf16.msra.mxu0 0
        %7706 = vmatprep.subr.bf16.mxu0 0
        %7707 = vmatpush1.bf16.msra.mxu0 0
        %7708 = vmatprep.subr.bf16.mxu0 0
        %7709 = vmatpush1.bf16.msra.mxu0 %v7692
        %7710 = vmatprep.subr.bf16.mxu0 0
        %7711 = vmatpush2.bf16.msra.mxu0 0
        %7712 = vmatprep.subr.bf16.mxu0 0
        %7713 = vmatpush2.bf16.msra.mxu0 0
        %7714 = vmatprep.subr.bf16.mxu0 0
        %7715 = vmatpush2.bf16.msra.mxu0 0
        %7716 = vmatprep.subr.bf16.mxu0 0
        %7717 = vmatpush2.bf16.msra.mxu0 0
        %7718 = vmatprep.subr.bf16.mxu0 0
        %7719 = vmatpush2.bf16.msra.mxu0 0
        %7720 = vmatprep.subr.bf16.mxu0 0
        %7721 = vmatpush2.bf16.msra.mxu0 0
        %7722 = vmatprep.subr.bf16.mxu0 0
        %7723 = vmatpush2.bf16.msra.mxu0 0
        %7724 = vmatprep.subr.bf16.mxu0 0
        %7725 = vmatpush2.bf16.msra.mxu0 0
        %7726 = vmatprep.mubr.bf16.mxu0 0
        %7727 = vmatmul.mubr.bf16.gmra.mxu0 %v7689
        %v7728 = vpop.f32.mrf.mxu0
        %v7729 = vadd.f32 0.0, %v7728
        %v7730 = vpop.f32.mrf.mxu0
        %v7731 = vpop.f32.mrf.mxu0
        %v7732 = vpop.f32.mrf.mxu0
        %7733 = vdwg.mxu0
        %v7735 = vsel %vm1171, %v7263, 0
        %v7738 = vsel %vm1175, %v7681, 0
        %7740 = vmatprep.subr.bf16.mxu0 0
        %7741 = vmatpush1.bf16.msra.mxu0 0
        %7742 = vmatprep.subr.bf16.mxu0 0
        %7743 = vmatpush1.bf16.msra.mxu0 0
        %7744 = vmatprep.subr.bf16.mxu0 0
        %7745 = vmatpush1.bf16.msra.mxu0 0
        %7746 = vmatprep.subr.bf16.mxu0 0
        %7747 = vmatpush1.bf16.msra.mxu0 0
        %7748 = vmatprep.subr.bf16.mxu0 0
        %7749 = vmatpush1.bf16.msra.mxu0 0
        %7750 = vmatprep.subr.bf16.mxu0 0
        %7751 = vmatpush1.bf16.msra.mxu0 0
        %7752 = vmatprep.subr.bf16.mxu0 0
        %7753 = vmatpush1.bf16.msra.mxu0 0
        %7754 = vmatprep.subr.bf16.mxu0 0
        %7755 = vmatpush1.bf16.msra.mxu0 %v7738
        %7756 = vmatprep.subr.bf16.mxu0 0
        %7757 = vmatpush2.bf16.msra.mxu0 0
        %7758 = vmatprep.subr.bf16.mxu0 0
        %7759 = vmatpush2.bf16.msra.mxu0 0
        %7760 = vmatprep.subr.bf16.mxu0 0
        %7761 = vmatpush2.bf16.msra.mxu0 0
        %7762 = vmatprep.subr.bf16.mxu0 0
        %7763 = vmatpush2.bf16.msra.mxu0 0
        %7764 = vmatprep.subr.bf16.mxu0 0
        %7765 = vmatpush2.bf16.msra.mxu0 0
        %7766 = vmatprep.subr.bf16.mxu0 0
        %7767 = vmatpush2.bf16.msra.mxu0 0
        %7768 = vmatprep.subr.bf16.mxu0 0
        %7769 = vmatpush2.bf16.msra.mxu0 0
        %7770 = vmatprep.subr.bf16.mxu0 0
        %7771 = vmatpush2.bf16.msra.mxu0 0
        %7772 = vmatprep.mubr.bf16.mxu0 0
        %7773 = vmatmul.mubr.bf16.gmra.mxu0 %v7735
        %v7774 = vpop.f32.mrf.mxu0
        %v7775 = vadd.f32 0.0, %v7774
        %v7776 = vpop.f32.mrf.mxu0
        %v7777 = vpop.f32.mrf.mxu0
        %v7778 = vpop.f32.mrf.mxu0
        %7779 = vdwg.mxu0
        %v7781 = vsel %vm1171, %v7266, 0
        %v7784 = vsel %vm1175, %v7684, 0
        %7786 = vmatprep.subr.bf16.mxu0 0
        %7787 = vmatpush1.bf16.msra.mxu0 0
        %7788 = vmatprep.subr.bf16.mxu0 0
        %7789 = vmatpush1.bf16.msra.mxu0 0
        %7790 = vmatprep.subr.bf16.mxu0 0
        %7791 = vmatpush1.bf16.msra.mxu0 0
        %7792 = vmatprep.subr.bf16.mxu0 0
        %7793 = vmatpush1.bf16.msra.mxu0 0
        %7794 = vmatprep.subr.bf16.mxu0 0
        %7795 = vmatpush1.bf16.msra.mxu0 0
        %7796 = vmatprep.subr.bf16.mxu0 0
        %7797 = vmatpush1.bf16.msra.mxu0 0
        %7798 = vmatprep.subr.bf16.mxu0 0
        %7799 = vmatpush1.bf16.msra.mxu0 0
        %7800 = vmatprep.subr.bf16.mxu0 0
        %7801 = vmatpush1.bf16.msra.mxu0 %v7784
        %7802 = vmatprep.subr.bf16.mxu0 0
        %7803 = vmatpush2.bf16.msra.mxu0 0
        %7804 = vmatprep.subr.bf16.mxu0 0
        %7805 = vmatpush2.bf16.msra.mxu0 0
        %7806 = vmatprep.subr.bf16.mxu0 0
        %7807 = vmatpush2.bf16.msra.mxu0 0
        %7808 = vmatprep.subr.bf16.mxu0 0
        %7809 = vmatpush2.bf16.msra.mxu0 0
        %7810 = vmatprep.subr.bf16.mxu0 0
        %7811 = vmatpush2.bf16.msra.mxu0 0
        %7812 = vmatprep.subr.bf16.mxu0 0
        %7813 = vmatpush2.bf16.msra.mxu0 0
        %7814 = vmatprep.subr.bf16.mxu0 0
        %7815 = vmatpush2.bf16.msra.mxu0 0
        %7816 = vmatprep.subr.bf16.mxu0 0
        %7817 = vmatpush2.bf16.msra.mxu0 0
        %7818 = vmatprep.mubr.bf16.mxu0 0
        %7819 = vmatmul.mubr.bf16.gmra.mxu0 %v7781
        %v7820 = vpop.f32.mrf.mxu0
        %v7821 = vadd.f32 0.0, %v7820
        %v7822 = vpop.f32.mrf.mxu0
        %v7823 = vpop.f32.mrf.mxu0
        %v7824 = vpop.f32.mrf.mxu0
        %7825 = vdwg.mxu0
        %v7827 = vsel %vm1171, %v7269, 0
        %v7830 = vsel %vm1175, %v7687, 0
        %7832 = vmatprep.subr.bf16.mxu0 0
        %7833 = vmatpush1.bf16.msra.mxu0 0
        %7834 = vmatprep.subr.bf16.mxu0 0
        %7835 = vmatpush1.bf16.msra.mxu0 0
        %7836 = vmatprep.subr.bf16.mxu0 0
        %7837 = vmatpush1.bf16.msra.mxu0 0
        %7838 = vmatprep.subr.bf16.mxu0 0
        %7839 = vmatpush1.bf16.msra.mxu0 0
        %7840 = vmatprep.subr.bf16.mxu0 0
        %7841 = vmatpush1.bf16.msra.mxu0 0
        %7842 = vmatprep.subr.bf16.mxu0 0
        %7843 = vmatpush1.bf16.msra.mxu0 0
        %7844 = vmatprep.subr.bf16.mxu0 0
        %7845 = vmatpush1.bf16.msra.mxu0 0
        %7846 = vmatprep.subr.bf16.mxu0 0
        %7847 = vmatpush1.bf16.msra.mxu0 %v7830
        %7848 = vmatprep.subr.bf16.mxu0 0
        %7849 = vmatpush2.bf16.msra.mxu0 0
        %7850 = vmatprep.subr.bf16.mxu0 0
        %7851 = vmatpush2.bf16.msra.mxu0 0
        %7852 = vmatprep.subr.bf16.mxu0 0
        %7853 = vmatpush2.bf16.msra.mxu0 0
        %7854 = vmatprep.subr.bf16.mxu0 0
        %7855 = vmatpush2.bf16.msra.mxu0 0
        %7856 = vmatprep.subr.bf16.mxu0 0
        %7857 = vmatpush2.bf16.msra.mxu0 0
        %7858 = vmatprep.subr.bf16.mxu0 0
        %7859 = vmatpush2.bf16.msra.mxu0 0
        %7860 = vmatprep.subr.bf16.mxu0 0
        %7861 = vmatpush2.bf16.msra.mxu0 0
        %7862 = vmatprep.subr.bf16.mxu0 0
        %7863 = vmatpush2.bf16.msra.mxu0 0
        %7864 = vmatprep.mubr.bf16.mxu0 0
        %7865 = vmatmul.mubr.bf16.gmra.mxu0 %v7827
        %v7866 = vpop.f32.mrf.mxu0
        %v7867 = vadd.f32 0.0, %v7866
        %v7868 = vpop.f32.mrf.mxu0
        %v7869 = vpop.f32.mrf.mxu0
        %v7870 = vpop.f32.mrf.mxu0
        %7871 = vdwg.mxu0
        %v7872 = vsel %vm1358, %v7729, -1e+30
        %v7873 = vsel %vm1358, %v7775, -1e+30
        %v7874 = vsel %vm1358, %v7821, -1e+30
        %v7875 = vsel %vm1358, %v7867, -1e+30
        %v7876 = vsel %vm1171, %v7872, -inf
        %7877 = vmax.xlane.f32.xlu0 %v7876
        %v7878 = vpop.xlane.xlu0 %7877
        %v7879 = vsel %vm1171, %v7873, -inf
        %7880 = vmax.xlane.f32.xlu0 %v7879
        %v7881 = vpop.xlane.xlu0 %7880
        %v7882 = vsel %vm1171, %v7874, -inf
        %7883 = vmax.xlane.f32.xlu0 %v7882
        %v7884 = vpop.xlane.xlu0 %7883
        %v7885 = vsel %vm1171, %v7875, -inf
        %7886 = vmax.xlane.f32.xlu0 %v7885
        %v7887 = vpop.xlane.xlu0 %7886
        %v7888 = vsub.f32 %v7872, %v7878
        %v7889 = vsub.f32 %v7873, %v7881
        %v7890 = vsub.f32 %v7874, %v7884
        %v7891 = vsub.f32 %v7875, %v7887
        %v7892 = vmul.f32 %v7888, 1.442695
        %v7893 = vpow.pop %v7892
        %v7894 = vmul.f32 %v7889, 1.442695
        %v7895 = vpow.pop %v7894
        %v7896 = vmul.f32 %v7890, 1.442695
        %v7897 = vpow.pop %v7896
        %v7898 = vmul.f32 %v7891, 1.442695
        %v7899 = vpow.pop %v7898
        %v7900 = vsel %vm1171, %v7893, 0.0
        %7901 = vadd.xlane.f32.xlu0 %v7900
        %v7902 = vpop.xlane.xlu0 %7901
        %v7903 = vsel %vm1171, %v7895, 0.0
        %7904 = vadd.xlane.f32.xlu0 %v7903
        %v7905 = vpop.xlane.xlu0 %7904
        %v7906 = vsel %vm1171, %v7897, 0.0
        %7907 = vadd.xlane.f32.xlu0 %v7906
        %v7908 = vpop.xlane.xlu0 %7907
        %v7909 = vsel %vm1171, %v7899, 0.0
        %7910 = vadd.xlane.f32.xlu0 %v7909
        %v7911 = vpop.xlane.xlu0 %7910
        %v7912 = vrcp.pop %v7902
        %v7913 = vrcp.pop %v7905
        %v7914 = vrcp.pop %v7908
        %v7915 = vrcp.pop %v7911
        %v7916 = vmul.f32 %v7893, %v7912
        %v7917 = vmul.f32 %v7895, %v7913
        %v7918 = vmul.f32 %v7897, %v7914
        %v7919 = vmul.f32 %v7899, %v7915
        %v7920 = vpack.c.bf16 %v7916, %v7916
        %v7921 = vpack.c.bf16 %v7917, %v7917
        %v7922 = vpack.c.bf16 %v7918, %v7918
        %v7923 = vpack.c.bf16 %v7919, %v7919
        %7924 = vxpose.xlu0.c.b16.start [1/8] %v7200, 128
        %7925 = vxpose.xlu0.c.b16.cont [2/8] 0, 128
        %7926 = vxpose.xlu0.c.b16.cont [3/8] 0, 128
        %7927 = vxpose.xlu0.c.b16.cont [4/8] 0, 128
        %7928 = vxpose.xlu0.c.b16.cont [5/8] 0, 128
        %7929 = vxpose.xlu0.c.b16.cont [6/8] 0, 128
        %7930 = vxpose.xlu0.c.b16.cont [7/8] 0, 128
        %7931 = vxpose.xlu0.c.b16.end [8/8] 0, 128
        %v7932 = vpop.trf.xlu0
        %v7933 = vpop.trf.xlu0
        %v7934 = vpop.trf.xlu0
        %v7935 = vpop.trf.xlu0
        %v7936 = vpop.trf.xlu0
        %v7937 = vpop.trf.xlu0
        %v7938 = vpop.trf.xlu0
        %v7939 = vpop.trf.xlu0
        %7940 = vxpose.xlu0.c.b16.start [1/8] %v7201, 128
        %7941 = vxpose.xlu0.c.b16.cont [2/8] 0, 128
        %7942 = vxpose.xlu0.c.b16.cont [3/8] 0, 128
        %7943 = vxpose.xlu0.c.b16.cont [4/8] 0, 128
        %7944 = vxpose.xlu0.c.b16.cont [5/8] 0, 128
        %7945 = vxpose.xlu0.c.b16.cont [6/8] 0, 128
        %7946 = vxpose.xlu0.c.b16.cont [7/8] 0, 128
        %7947 = vxpose.xlu0.c.b16.end [8/8] 0, 128
        %v7948 = vpop.trf.xlu0
        %v7949 = vpop.trf.xlu0
        %v7950 = vpop.trf.xlu0
        %v7951 = vpop.trf.xlu0
        %v7952 = vpop.trf.xlu0
        %v7953 = vpop.trf.xlu0
        %v7954 = vpop.trf.xlu0
        %v7955 = vpop.trf.xlu0
        %7956 = vxpose.xlu0.c.b16.start [1/8] %v7202, 128
        %7957 = vxpose.xlu0.c.b16.cont [2/8] 0, 128
        %7958 = vxpose.xlu0.c.b16.cont [3/8] 0, 128
        %7959 = vxpose.xlu0.c.b16.cont [4/8] 0, 128
        %7960 = vxpose.xlu0.c.b16.cont [5/8] 0, 128
        %7961 = vxpose.xlu0.c.b16.cont [6/8] 0, 128
        %7962 = vxpose.xlu0.c.b16.cont [7/8] 0, 128
        %7963 = vxpose.xlu0.c.b16.end [8/8] 0, 128
        %v7964 = vpop.trf.xlu0
        %v7965 = vpop.trf.xlu0
        %v7966 = vpop.trf.xlu0
        %v7967 = vpop.trf.xlu0
        %v7968 = vpop.trf.xlu0
        %v7969 = vpop.trf.xlu0
        %v7970 = vpop.trf.xlu0
        %v7971 = vpop.trf.xlu0
        %7972 = vxpose.xlu0.c.b16.start [1/8] %v7203, 128
        %7973 = vxpose.xlu0.c.b16.cont [2/8] 0, 128
        %7974 = vxpose.xlu0.c.b16.cont [3/8] 0, 128
        %7975 = vxpose.xlu0.c.b16.cont [4/8] 0, 128
        %7976 = vxpose.xlu0.c.b16.cont [5/8] 0, 128
        %7977 = vxpose.xlu0.c.b16.cont [6/8] 0, 128
        %7978 = vxpose.xlu0.c.b16.cont [7/8] 0, 128
        %7979 = vxpose.xlu0.c.b16.end [8/8] 0, 128
        %v7980 = vpop.trf.xlu0
        %v7981 = vpop.trf.xlu0
        %v7982 = vpop.trf.xlu0
        %v7983 = vpop.trf.xlu0
        %v7984 = vpop.trf.xlu0
        %v7985 = vpop.trf.xlu0
        %v7986 = vpop.trf.xlu0
        %v7987 = vpop.trf.xlu0
        %7988 = vxpose.xlu0.c.b16.start [1/8] %v7204, 128
        %7989 = vxpose.xlu0.c.b16.cont [2/8] 0, 128
        %7990 = vxpose.xlu0.c.b16.cont [3/8] 0, 128
        %7991 = vxpose.xlu0.c.b16.cont [4/8] 0, 128
        %7992 = vxpose.xlu0.c.b16.cont [5/8] 0, 128
        %7993 = vxpose.xlu0.c.b16.cont [6/8] 0, 128
        %7994 = vxpose.xlu0.c.b16.cont [7/8] 0, 128
        %7995 = vxpose.xlu0.c.b16.end [8/8] 0, 128
        %v7996 = vpop.trf.xlu0
        %v7997 = vpop.trf.xlu0
        %v7998 = vpop.trf.xlu0
        %v7999 = vpop.trf.xlu0
        %v8000 = vpop.trf.xlu0
        %v8001 = vpop.trf.xlu0
        %v8002 = vpop.trf.xlu0
        %v8003 = vpop.trf.xlu0
        %8004 = vxpose.xlu0.c.b16.start [1/8] %v7205, 128
        %8005 = vxpose.xlu0.c.b16.cont [2/8] 0, 128
        %8006 = vxpose.xlu0.c.b16.cont [3/8] 0, 128
        %8007 = vxpose.xlu0.c.b16.cont [4/8] 0, 128
        %8008 = vxpose.xlu0.c.b16.cont [5/8] 0, 128
        %8009 = vxpose.xlu0.c.b16.cont [6/8] 0, 128
        %8010 = vxpose.xlu0.c.b16.cont [7/8] 0, 128
        %8011 = vxpose.xlu0.c.b16.end [8/8] 0, 128
        %v8012 = vpop.trf.xlu0
        %v8013 = vpop.trf.xlu0
        %v8014 = vpop.trf.xlu0
        %v8015 = vpop.trf.xlu0
        %v8016 = vpop.trf.xlu0
        %v8017 = vpop.trf.xlu0
        %v8018 = vpop.trf.xlu0
        %v8019 = vpop.trf.xlu0
        %8020 = vxpose.xlu0.c.b16.start [1/8] %v7206, 128
        %8021 = vxpose.xlu0.c.b16.cont [2/8] 0, 128
        %8022 = vxpose.xlu0.c.b16.cont [3/8] 0, 128
        %8023 = vxpose.xlu0.c.b16.cont [4/8] 0, 128
        %8024 = vxpose.xlu0.c.b16.cont [5/8] 0, 128
        %8025 = vxpose.xlu0.c.b16.cont [6/8] 0, 128
        %8026 = vxpose.xlu0.c.b16.cont [7/8] 0, 128
        %8027 = vxpose.xlu0.c.b16.end [8/8] 0, 128
        %v8028 = vpop.trf.xlu0
        %v8029 = vpop.trf.xlu0
        %v8030 = vpop.trf.xlu0
        %v8031 = vpop.trf.xlu0
        %v8032 = vpop.trf.xlu0
        %v8033 = vpop.trf.xlu0
        %v8034 = vpop.trf.xlu0
        %v8035 = vpop.trf.xlu0
        %8036 = vxpose.xlu0.c.b16.start [1/8] %v7207, 128
        %8037 = vxpose.xlu0.c.b16.cont [2/8] 0, 128
        %8038 = vxpose.xlu0.c.b16.cont [3/8] 0, 128
        %8039 = vxpose.xlu0.c.b16.cont [4/8] 0, 128
        %8040 = vxpose.xlu0.c.b16.cont [5/8] 0, 128
        %8041 = vxpose.xlu0.c.b16.cont [6/8] 0, 128
        %8042 = vxpose.xlu0.c.b16.cont [7/8] 0, 128
        %8043 = vxpose.xlu0.c.b16.end [8/8] 0, 128
        %v8044 = vpop.trf.xlu0
        %v8045 = vpop.trf.xlu0
        %v8046 = vpop.trf.xlu0
        %v8047 = vpop.trf.xlu0
        %v8048 = vpop.trf.xlu0
        %v8049 = vpop.trf.xlu0
        %v8050 = vpop.trf.xlu0
        %v8051 = vpop.trf.xlu0
        %v8052 = vcombine.low %v7932, %v7996
        %v8054 = vunpack.c.l.s4 1983009808
        %v8055 = vunpack.c.0.s8 %v8054
        %v8056 = vlaneseq
        %v8057 = vshrl.u32 %v8056, 7
        %v8058 = vsub.s32 %v8055, %v8057
        %v8059 = vrot.slane %v8052, %v8058
        %v8060 = vcombine.low %v7964, %v8028
        %v8062 = vunpack.c.l.s4 1983009808
        %v8063 = vunpack.c.0.s8 %v8062
        %v8064 = vlaneseq
        %v8065 = vshrl.u32 %v8064, 7
        %v8066 = vsub.s32 %v8063, %v8065
        %v8067 = vrot.slane %v8060, %v8066
        %v8068 = vcombine.low %v8059, %v8067
        %v8069 = vcombine.high %v8059, %v8067
        %v8071 = vunpack.c.l.s4 1934713408
        %v8072 = vunpack.c.0.s8 %v8071
        %v8073 = vlaneseq
        %v8074 = vshrl.u32 %v8073, 7
        %v8075 = vsub.s32 %v8072, %v8074
        %v8076 = vrot.slane %v8068, %v8075
        %v8078 = vunpack.c.l.s4 1934713408
        %v8079 = vunpack.c.0.s8 %v8078
        %v8080 = vlaneseq
        %v8081 = vshrl.u32 %v8080, 7
        %v8082 = vsub.s32 %v8079, %v8081
        %v8083 = vrot.slane %v8069, %v8082
        %v8084 = vcombine.high %v8076, 0
        %v8085 = vcombine.high %v8083, 0
        %v8086 = vcombine.low %v7948, %v8012
        %v8088 = vunpack.c.l.s4 1983009808
        %v8089 = vunpack.c.0.s8 %v8088
        %v8090 = vlaneseq
        %v8091 = vshrl.u32 %v8090, 7
        %v8092 = vsub.s32 %v8089, %v8091
        %v8093 = vrot.slane %v8086, %v8092
        %v8094 = vcombine.low %v7980, %v8044
        %v8096 = vunpack.c.l.s4 1983009808
        %v8097 = vunpack.c.0.s8 %v8096
        %v8098 = vlaneseq
        %v8099 = vshrl.u32 %v8098, 7
        %v8100 = vsub.s32 %v8097, %v8099
        %v8101 = vrot.slane %v8094, %v8100
        %v8102 = vcombine.low %v8093, %v8101
        %v8103 = vcombine.high %v8093, %v8101
        %v8105 = vunpack.c.l.s4 1934713408
        %v8106 = vunpack.c.0.s8 %v8105
        %v8107 = vlaneseq
        %v8108 = vshrl.u32 %v8107, 7
        %v8109 = vsub.s32 %v8106, %v8108
        %v8110 = vrot.slane %v8102, %v8109
        %v8112 = vunpack.c.l.s4 1934713408
        %v8113 = vunpack.c.0.s8 %v8112
        %v8114 = vlaneseq
        %v8115 = vshrl.u32 %v8114, 7
        %v8116 = vsub.s32 %v8113, %v8115
        %v8117 = vrot.slane %v8103, %v8116
        %v8118 = vcombine.high %v8110, 0
        %v8119 = vcombine.high %v8117, 0
        %v8122 = vpack.i.b16 %v8110, %v8076
        %v8124 = vshrl.u32 %v8076, 16
        %v8125 = vshrl.u32 %v8110, 16
        %v8126 = vpack.i.b16 %v8125, %v8124
        %v8130 = vpack.i.b16 %v8118, %v8084
        %v8132 = vshrl.u32 %v8084, 16
        %v8133 = vshrl.u32 %v8118, 16
        %v8134 = vpack.i.b16 %v8133, %v8132
        %v8138 = vpack.i.b16 %v8117, %v8083
        %v8140 = vshrl.u32 %v8083, 16
        %v8141 = vshrl.u32 %v8117, 16
        %v8142 = vpack.i.b16 %v8141, %v8140
        %v8146 = vpack.i.b16 %v8119, %v8085
        %v8148 = vshrl.u32 %v8085, 16
        %v8149 = vshrl.u32 %v8119, 16
        %v8150 = vpack.i.b16 %v8149, %v8148
        %8152 = vxpose.xlu0.c.b16.start [1/8] %v8122, 128
        %8153 = vxpose.xlu0.c.b16.cont [2/8] 0, 128
        %8154 = vxpose.xlu0.c.b16.cont [3/8] 0, 128
        %8155 = vxpose.xlu0.c.b16.cont [4/8] 0, 128
        %8156 = vxpose.xlu0.c.b16.cont [5/8] 0, 128
        %8157 = vxpose.xlu0.c.b16.cont [6/8] 0, 128
        %8158 = vxpose.xlu0.c.b16.cont [7/8] 0, 128
        %8159 = vxpose.xlu0.c.b16.end [8/8] 0, 128
        %v8160 = vpop.trf.xlu0
        %v8161 = vpop.trf.xlu0
        %v8162 = vpop.trf.xlu0
        %v8163 = vpop.trf.xlu0
        %v8164 = vpop.trf.xlu0
        %v8165 = vpop.trf.xlu0
        %v8166 = vpop.trf.xlu0
        %v8167 = vpop.trf.xlu0
        %8168 = vxpose.xlu0.c.b16.start [1/8] %v8126, 128
        %8169 = vxpose.xlu0.c.b16.cont [2/8] 0, 128
        %8170 = vxpose.xlu0.c.b16.cont [3/8] 0, 128
        %8171 = vxpose.xlu0.c.b16.cont [4/8] 0, 128
        %8172 = vxpose.xlu0.c.b16.cont [5/8] 0, 128
        %8173 = vxpose.xlu0.c.b16.cont [6/8] 0, 128
        %8174 = vxpose.xlu0.c.b16.cont [7/8] 0, 128
        %8175 = vxpose.xlu0.c.b16.end [8/8] 0, 128
        %v8176 = vpop.trf.xlu0
        %v8177 = vpop.trf.xlu0
        %v8178 = vpop.trf.xlu0
        %v8179 = vpop.trf.xlu0
        %v8180 = vpop.trf.xlu0
        %v8181 = vpop.trf.xlu0
        %v8182 = vpop.trf.xlu0
        %v8183 = vpop.trf.xlu0
        %8184 = vxpose.xlu0.c.b16.start [1/8] %v8130, 128
        %8185 = vxpose.xlu0.c.b16.cont [2/8] 0, 128
        %8186 = vxpose.xlu0.c.b16.cont [3/8] 0, 128
        %8187 = vxpose.xlu0.c.b16.cont [4/8] 0, 128
        %8188 = vxpose.xlu0.c.b16.cont [5/8] 0, 128
        %8189 = vxpose.xlu0.c.b16.cont [6/8] 0, 128
        %8190 = vxpose.xlu0.c.b16.cont [7/8] 0, 128
        %8191 = vxpose.xlu0.c.b16.end [8/8] 0, 128
        %v8192 = vpop.trf.xlu0
        %v8193 = vpop.trf.xlu0
        %v8194 = vpop.trf.xlu0
        %v8195 = vpop.trf.xlu0
        %v8196 = vpop.trf.xlu0
        %v8197 = vpop.trf.xlu0
        %v8198 = vpop.trf.xlu0
        %v8199 = vpop.trf.xlu0
        %8200 = vxpose.xlu0.c.b16.start [1/8] %v8134, 128
        %8201 = vxpose.xlu0.c.b16.cont [2/8] 0, 128
        %8202 = vxpose.xlu0.c.b16.cont [3/8] 0, 128
        %8203 = vxpose.xlu0.c.b16.cont [4/8] 0, 128
        %8204 = vxpose.xlu0.c.b16.cont [5/8] 0, 128
        %8205 = vxpose.xlu0.c.b16.cont [6/8] 0, 128
        %8206 = vxpose.xlu0.c.b16.cont [7/8] 0, 128
        %8207 = vxpose.xlu0.c.b16.end [8/8] 0, 128
        %v8208 = vpop.trf.xlu0
        %v8209 = vpop.trf.xlu0
        %v8210 = vpop.trf.xlu0
        %v8211 = vpop.trf.xlu0
        %v8212 = vpop.trf.xlu0
        %v8213 = vpop.trf.xlu0
        %v8214 = vpop.trf.xlu0
        %v8215 = vpop.trf.xlu0
        %8216 = vxpose.xlu0.c.b16.start [1/8] %v8138, 128
        %8217 = vxpose.xlu0.c.b16.cont [2/8] 0, 128
        %8218 = vxpose.xlu0.c.b16.cont [3/8] 0, 128
        %8219 = vxpose.xlu0.c.b16.cont [4/8] 0, 128
        %8220 = vxpose.xlu0.c.b16.cont [5/8] 0, 128
        %8221 = vxpose.xlu0.c.b16.cont [6/8] 0, 128
        %8222 = vxpose.xlu0.c.b16.cont [7/8] 0, 128
        %8223 = vxpose.xlu0.c.b16.end [8/8] 0, 128
        %v8224 = vpop.trf.xlu0
        %v8225 = vpop.trf.xlu0
        %v8226 = vpop.trf.xlu0
        %v8227 = vpop.trf.xlu0
        %v8228 = vpop.trf.xlu0
        %v8229 = vpop.trf.xlu0
        %v8230 = vpop.trf.xlu0
        %v8231 = vpop.trf.xlu0
        %8232 = vxpose.xlu0.c.b16.start [1/8] %v8142, 128
        %8233 = vxpose.xlu0.c.b16.cont [2/8] 0, 128
        %8234 = vxpose.xlu0.c.b16.cont [3/8] 0, 128
        %8235 = vxpose.xlu0.c.b16.cont [4/8] 0, 128
        %8236 = vxpose.xlu0.c.b16.cont [5/8] 0, 128
        %8237 = vxpose.xlu0.c.b16.cont [6/8] 0, 128
        %8238 = vxpose.xlu0.c.b16.cont [7/8] 0, 128
        %8239 = vxpose.xlu0.c.b16.end [8/8] 0, 128
        %v8240 = vpop.trf.xlu0
        %v8241 = vpop.trf.xlu0
        %v8242 = vpop.trf.xlu0
        %v8243 = vpop.trf.xlu0
        %v8244 = vpop.trf.xlu0
        %v8245 = vpop.trf.xlu0
        %v8246 = vpop.trf.xlu0
        %v8247 = vpop.trf.xlu0
        %8248 = vxpose.xlu0.c.b16.start [1/8] %v8146, 128
        %8249 = vxpose.xlu0.c.b16.cont [2/8] 0, 128
        %8250 = vxpose.xlu0.c.b16.cont [3/8] 0, 128
        %8251 = vxpose.xlu0.c.b16.cont [4/8] 0, 128
        %8252 = vxpose.xlu0.c.b16.cont [5/8] 0, 128
        %8253 = vxpose.xlu0.c.b16.cont [6/8] 0, 128
        %8254 = vxpose.xlu0.c.b16.cont [7/8] 0, 128
        %8255 = vxpose.xlu0.c.b16.end [8/8] 0, 128
        %v8256 = vpop.trf.xlu0
        %v8257 = vpop.trf.xlu0
        %v8258 = vpop.trf.xlu0
        %v8259 = vpop.trf.xlu0
        %v8260 = vpop.trf.xlu0
        %v8261 = vpop.trf.xlu0
        %v8262 = vpop.trf.xlu0
        %v8263 = vpop.trf.xlu0
        %8264 = vxpose.xlu0.c.b16.start [1/8] %v8150, 128
        %8265 = vxpose.xlu0.c.b16.cont [2/8] 0, 128
        %8266 = vxpose.xlu0.c.b16.cont [3/8] 0, 128
        %8267 = vxpose.xlu0.c.b16.cont [4/8] 0, 128
        %8268 = vxpose.xlu0.c.b16.cont [5/8] 0, 128
        %8269 = vxpose.xlu0.c.b16.cont [6/8] 0, 128
        %8270 = vxpose.xlu0.c.b16.cont [7/8] 0, 128
        %8271 = vxpose.xlu0.c.b16.end [8/8] 0, 128
        %v8272 = vpop.trf.xlu0
        %v8273 = vpop.trf.xlu0
        %v8274 = vpop.trf.xlu0
        %v8275 = vpop.trf.xlu0
        %v8276 = vpop.trf.xlu0
        %v8277 = vpop.trf.xlu0
        %v8278 = vpop.trf.xlu0
        %v8279 = vpop.trf.xlu0
        %v8280 = vcombine.low %v8160, %v8224
        %v8282 = vunpack.c.l.s4 1983009808
        %v8283 = vunpack.c.0.s8 %v8282
        %v8284 = vlaneseq
        %v8285 = vshrl.u32 %v8284, 7
        %v8286 = vsub.s32 %v8283, %v8285
        %v8287 = vrot.slane %v8280, %v8286
        %v8288 = vcombine.low %v8192, %v8256
        %v8290 = vunpack.c.l.s4 1983009808
        %v8291 = vunpack.c.0.s8 %v8290
        %v8292 = vlaneseq
        %v8293 = vshrl.u32 %v8292, 7
        %v8294 = vsub.s32 %v8291, %v8293
        %v8295 = vrot.slane %v8288, %v8294
        %v8296 = vcombine.low %v8287, %v8295
        %v8298 = vunpack.c.l.s4 1934713408
        %v8299 = vunpack.c.0.s8 %v8298
        %v8300 = vlaneseq
        %v8301 = vshrl.u32 %v8300, 7
        %v8302 = vsub.s32 %v8299, %v8301
        %v8303 = vrot.slane %v8296, %v8302
        %v8304 = vcombine.high %v8303, 0
        %v8305 = vcombine.low %v8176, %v8240
        %v8307 = vunpack.c.l.s4 1983009808
        %v8308 = vunpack.c.0.s8 %v8307
        %v8309 = vlaneseq
        %v8310 = vshrl.u32 %v8309, 7
        %v8311 = vsub.s32 %v8308, %v8310
        %v8312 = vrot.slane %v8305, %v8311
        %v8313 = vcombine.low %v8208, %v8272
        %v8315 = vunpack.c.l.s4 1983009808
        %v8316 = vunpack.c.0.s8 %v8315
        %v8317 = vlaneseq
        %v8318 = vshrl.u32 %v8317, 7
        %v8319 = vsub.s32 %v8316, %v8318
        %v8320 = vrot.slane %v8313, %v8319
        %v8321 = vcombine.low %v8312, %v8320
        %v8323 = vunpack.c.l.s4 1934713408
        %v8324 = vunpack.c.0.s8 %v8323
        %v8325 = vlaneseq
        %v8326 = vshrl.u32 %v8325, 7
        %v8327 = vsub.s32 %v8324, %v8326
        %v8328 = vrot.slane %v8321, %v8327
        %v8329 = vcombine.high %v8328, 0
        %v8332 = vpack.i.b16 %v8328, %v8303
        %v8333 = vshrl.u32 %v8303, 16
        %v8334 = vshrl.u32 %v8328, 16
        %v8335 = vpack.i.b16 %v8334, %v8333
        %v8338 = vpack.i.b16 %v8329, %v8304
        %v8339 = vshrl.u32 %v8304, 16
        %v8340 = vshrl.u32 %v8329, 16
        %v8341 = vpack.i.b16 %v8340, %v8339
        %v8343 = vsel %vm1171, %v8332, 0
        %v8346 = vsel %vm1171, %v7920, 0
        %8348 = vmatprep.subr.bf16.mxu0 0
        %8349 = vmatpush1.bf16.xpose.msra.mxu0 0
        %8350 = vmatprep.subr.bf16.mxu0 0
        %8351 = vmatpush1.bf16.xpose.msra.mxu0 0
        %8352 = vmatprep.subr.bf16.mxu0 0
        %8353 = vmatpush1.bf16.xpose.msra.mxu0 0
        %8354 = vmatprep.subr.bf16.mxu0 0
        %8355 = vmatpush1.bf16.xpose.msra.mxu0 0
        %8356 = vmatprep.subr.bf16.mxu0 0
        %8357 = vmatpush1.bf16.xpose.msra.mxu0 0
        %8358 = vmatprep.subr.bf16.mxu0 0
        %8359 = vmatpush1.bf16.xpose.msra.mxu0 0
        %8360 = vmatprep.subr.bf16.mxu0 0
        %8361 = vmatpush1.bf16.xpose.msra.mxu0 0
        %8362 = vmatprep.subr.bf16.mxu0 0
        %8363 = vmatpush1.bf16.xpose.msra.mxu0 %v8346
        %8364 = vmatprep.subr.bf16.mxu0 0
        %8365 = vmatpush2.bf16.xpose.msra.mxu0 0
        %8366 = vmatprep.subr.bf16.mxu0 0
        %8367 = vmatpush2.bf16.xpose.msra.mxu0 0
        %8368 = vmatprep.subr.bf16.mxu0 0
        %8369 = vmatpush2.bf16.xpose.msra.mxu0 0
        %8370 = vmatprep.subr.bf16.mxu0 0
        %8371 = vmatpush2.bf16.xpose.msra.mxu0 0
        %8372 = vmatprep.subr.bf16.mxu0 0
        %8373 = vmatpush2.bf16.xpose.msra.mxu0 0
        %8374 = vmatprep.subr.bf16.mxu0 0
        %8375 = vmatpush2.bf16.xpose.msra.mxu0 0
        %8376 = vmatprep.subr.bf16.mxu0 0
        %8377 = vmatpush2.bf16.xpose.msra.mxu0 0
        %8378 = vmatprep.subr.bf16.mxu0 0
        %8379 = vmatpush2.bf16.xpose.msra.mxu0 0
        %8380 = vmatprep.mubr.bf16.mxu0 0
        %8381 = vmatmul.mubr.bf16.gmra.mxu0 %v8343
        %v8382 = vpop.f32.mrf.mxu0
        %v8383 = vadd.f32 0.0, %v8382
        %v8384 = vpop.f32.mrf.mxu0
        %v8385 = vpop.f32.mrf.mxu0
        %v8386 = vpop.f32.mrf.mxu0
        %8387 = vdwg.mxu0
        %v8389 = vsel %vm1171, %v8335, 0
        %v8392 = vsel %vm1171, %v7921, 0
        %8394 = vmatprep.subr.bf16.mxu0 0
        %8395 = vmatpush1.bf16.xpose.msra.mxu0 0
        %8396 = vmatprep.subr.bf16.mxu0 0
        %8397 = vmatpush1.bf16.xpose.msra.mxu0 0
        %8398 = vmatprep.subr.bf16.mxu0 0
        %8399 = vmatpush1.bf16.xpose.msra.mxu0 0
        %8400 = vmatprep.subr.bf16.mxu0 0
        %8401 = vmatpush1.bf16.xpose.msra.mxu0 0
        %8402 = vmatprep.subr.bf16.mxu0 0
        %8403 = vmatpush1.bf16.xpose.msra.mxu0 0
        %8404 = vmatprep.subr.bf16.mxu0 0
        %8405 = vmatpush1.bf16.xpose.msra.mxu0 0
        %8406 = vmatprep.subr.bf16.mxu0 0
        %8407 = vmatpush1.bf16.xpose.msra.mxu0 0
        %8408 = vmatprep.subr.bf16.mxu0 0
        %8409 = vmatpush1.bf16.xpose.msra.mxu0 %v8392
        %8410 = vmatprep.subr.bf16.mxu0 0
        %8411 = vmatpush2.bf16.xpose.msra.mxu0 0
        %8412 = vmatprep.subr.bf16.mxu0 0
        %8413 = vmatpush2.bf16.xpose.msra.mxu0 0
        %8414 = vmatprep.subr.bf16.mxu0 0
        %8415 = vmatpush2.bf16.xpose.msra.mxu0 0
        %8416 = vmatprep.subr.bf16.mxu0 0
        %8417 = vmatpush2.bf16.xpose.msra.mxu0 0
        %8418 = vmatprep.subr.bf16.mxu0 0
        %8419 = vmatpush2.bf16.xpose.msra.mxu0 0
        %8420 = vmatprep.subr.bf16.mxu0 0
        %8421 = vmatpush2.bf16.xpose.msra.mxu0 0
        %8422 = vmatprep.subr.bf16.mxu0 0
        %8423 = vmatpush2.bf16.xpose.msra.mxu0 0
        %8424 = vmatprep.subr.bf16.mxu0 0
        %8425 = vmatpush2.bf16.xpose.msra.mxu0 0
        %8426 = vmatprep.mubr.bf16.mxu0 0
        %8427 = vmatmul.mubr.bf16.gmra.mxu0 %v8389
        %v8428 = vpop.f32.mrf.mxu0
        %v8429 = vadd.f32 0.0, %v8428
        %v8430 = vpop.f32.mrf.mxu0
        %v8431 = vpop.f32.mrf.mxu0
        %v8432 = vpop.f32.mrf.mxu0
        %8433 = vdwg.mxu0
        %v8435 = vsel %vm1171, %v8338, 0
        %v8438 = vsel %vm1171, %v7922, 0
        %8440 = vmatprep.subr.bf16.mxu0 0
        %8441 = vmatpush1.bf16.xpose.msra.mxu0 0
        %8442 = vmatprep.subr.bf16.mxu0 0
        %8443 = vmatpush1.bf16.xpose.msra.mxu0 0
        %8444 = vmatprep.subr.bf16.mxu0 0
        %8445 = vmatpush1.bf16.xpose.msra.mxu0 0
        %8446 = vmatprep.subr.bf16.mxu0 0
        %8447 = vmatpush1.bf16.xpose.msra.mxu0 0
        %8448 = vmatprep.subr.bf16.mxu0 0
        %8449 = vmatpush1.bf16.xpose.msra.mxu0 0
        %8450 = vmatprep.subr.bf16.mxu0 0
        %8451 = vmatpush1.bf16.xpose.msra.mxu0 0
        %8452 = vmatprep.subr.bf16.mxu0 0
        %8453 = vmatpush1.bf16.xpose.msra.mxu0 0
        %8454 = vmatprep.subr.bf16.mxu0 0
        %8455 = vmatpush1.bf16.xpose.msra.mxu0 %v8438
        %8456 = vmatprep.subr.bf16.mxu0 0
        %8457 = vmatpush2.bf16.xpose.msra.mxu0 0
        %8458 = vmatprep.subr.bf16.mxu0 0
        %8459 = vmatpush2.bf16.xpose.msra.mxu0 0
        %8460 = vmatprep.subr.bf16.mxu0 0
        %8461 = vmatpush2.bf16.xpose.msra.mxu0 0
        %8462 = vmatprep.subr.bf16.mxu0 0
        %8463 = vmatpush2.bf16.xpose.msra.mxu0 0
        %8464 = vmatprep.subr.bf16.mxu0 0
        %8465 = vmatpush2.bf16.xpose.msra.mxu0 0
        %8466 = vmatprep.subr.bf16.mxu0 0
        %8467 = vmatpush2.bf16.xpose.msra.mxu0 0
        %8468 = vmatprep.subr.bf16.mxu0 0
        %8469 = vmatpush2.bf16.xpose.msra.mxu0 0
        %8470 = vmatprep.subr.bf16.mxu0 0
        %8471 = vmatpush2.bf16.xpose.msra.mxu0 0
        %8472 = vmatprep.mubr.bf16.mxu0 0
        %8473 = vmatmul.mubr.bf16.gmra.mxu0 %v8435
        %v8474 = vpop.f32.mrf.mxu0
        %v8475 = vadd.f32 0.0, %v8474
        %v8476 = vpop.f32.mrf.mxu0
        %v8477 = vpop.f32.mrf.mxu0
        %v8478 = vpop.f32.mrf.mxu0
        %8479 = vdwg.mxu0
        %v8481 = vsel %vm1171, %v8341, 0
        %v8484 = vsel %vm1171, %v7923, 0
        %8486 = vmatprep.subr.bf16.mxu0 0
        %8487 = vmatpush1.bf16.xpose.msra.mxu0 0
        %8488 = vmatprep.subr.bf16.mxu0 0
        %8489 = vmatpush1.bf16.xpose.msra.mxu0 0
        %8490 = vmatprep.subr.bf16.mxu0 0
        %8491 = vmatpush1.bf16.xpose.msra.mxu0 0
        %8492 = vmatprep.subr.bf16.mxu0 0
        %8493 = vmatpush1.bf16.xpose.msra.mxu0 0
        %8494 = vmatprep.subr.bf16.mxu0 0
        %8495 = vmatpush1.bf16.xpose.msra.mxu0 0
        %8496 = vmatprep.subr.bf16.mxu0 0
        %8497 = vmatpush1.bf16.xpose.msra.mxu0 0
        %8498 = vmatprep.subr.bf16.mxu0 0
        %8499 = vmatpush1.bf16.xpose.msra.mxu0 0
        %8500 = vmatprep.subr.bf16.mxu0 0
        %8501 = vmatpush1.bf16.xpose.msra.mxu0 %v8484
        %8502 = vmatprep.subr.bf16.mxu0 0
        %8503 = vmatpush2.bf16.xpose.msra.mxu0 0
        %8504 = vmatprep.subr.bf16.mxu0 0
        %8505 = vmatpush2.bf16.xpose.msra.mxu0 0
        %8506 = vmatprep.subr.bf16.mxu0 0
        %8507 = vmatpush2.bf16.xpose.msra.mxu0 0
        %8508 = vmatprep.subr.bf16.mxu0 0
        %8509 = vmatpush2.bf16.xpose.msra.mxu0 0
        %8510 = vmatprep.subr.bf16.mxu0 0
        %8511 = vmatpush2.bf16.xpose.msra.mxu0 0
        %8512 = vmatprep.subr.bf16.mxu0 0
        %8513 = vmatpush2.bf16.xpose.msra.mxu0 0
        %8514 = vmatprep.subr.bf16.mxu0 0
        %8515 = vmatpush2.bf16.xpose.msra.mxu0 0
        %8516 = vmatprep.subr.bf16.mxu0 0
        %8517 = vmatpush2.bf16.xpose.msra.mxu0 0
        %8518 = vmatprep.mubr.bf16.mxu0 0
        %8519 = vmatmul.mubr.bf16.gmra.mxu0 %v8481
        %v8520 = vpop.f32.mrf.mxu0
        %v8521 = vadd.f32 0.0, %v8520
        %v8522 = vpop.f32.mrf.mxu0
        %v8523 = vpop.f32.mrf.mxu0
        %v8524 = vpop.f32.mrf.mxu0
        %8525 = vdwg.mxu0
        %8526 = vxpose.xlu0.b32.start [1/16] %v8383, 128
        %8527 = vxpose.xlu0.b32.cont [2/16] 0.0, 128
        %8528 = vxpose.xlu0.b32.cont [3/16] 0.0, 128
        %8529 = vxpose.xlu0.b32.cont [4/16] 0.0, 128
        %8530 = vxpose.xlu0.b32.cont [5/16] 0.0, 128
        %8531 = vxpose.xlu0.b32.cont [6/16] 0.0, 128
        %8532 = vxpose.xlu0.b32.cont [7/16] 0.0, 128
        %8533 = vxpose.xlu0.b32.cont [8/16] 0.0, 128
        %8534 = vxpose.xlu0.b32.cont [9/16] 0.0, 128
        %8535 = vxpose.xlu0.b32.cont [10/16] 0.0, 128
        %8536 = vxpose.xlu0.b32.cont [11/16] 0.0, 128
        %8537 = vxpose.xlu0.b32.cont [12/16] 0.0, 128
        %8538 = vxpose.xlu0.b32.cont [13/16] 0.0, 128
        %8539 = vxpose.xlu0.b32.cont [14/16] 0.0, 128
        %8540 = vxpose.xlu0.b32.cont [15/16] 0.0, 128
        %8541 = vxpose.xlu0.b32.end [16/16] 0.0, 128
        %v8542 = vpop.trf.xlu0
        %v8543 = vpop.trf.xlu0
        %v8544 = vpop.trf.xlu0
        %v8545 = vpop.trf.xlu0
        %v8546 = vpop.trf.xlu0
        %v8547 = vpop.trf.xlu0
        %v8548 = vpop.trf.xlu0
        %v8549 = vpop.trf.xlu0
        %v8550 = vpop.trf.xlu0
        %v8551 = vpop.trf.xlu0
        %v8552 = vpop.trf.xlu0
        %v8553 = vpop.trf.xlu0
        %v8554 = vpop.trf.xlu0
        %v8555 = vpop.trf.xlu0
        %v8556 = vpop.trf.xlu0
        %v8557 = vpop.trf.xlu0
        %8558 = vxpose.xlu0.b32.start [1/16] %v8429, 128
        %8559 = vxpose.xlu0.b32.cont [2/16] 0.0, 128
        %8560 = vxpose.xlu0.b32.cont [3/16] 0.0, 128
        %8561 = vxpose.xlu0.b32.cont [4/16] 0.0, 128
        %8562 = vxpose.xlu0.b32.cont [5/16] 0.0, 128
        %8563 = vxpose.xlu0.b32.cont [6/16] 0.0, 128
        %8564 = vxpose.xlu0.b32.cont [7/16] 0.0, 128
        %8565 = vxpose.xlu0.b32.cont [8/16] 0.0, 128
        %8566 = vxpose.xlu0.b32.cont [9/16] 0.0, 128
        %8567 = vxpose.xlu0.b32.cont [10/16] 0.0, 128
        %8568 = vxpose.xlu0.b32.cont [11/16] 0.0, 128
        %8569 = vxpose.xlu0.b32.cont [12/16] 0.0, 128
        %8570 = vxpose.xlu0.b32.cont [13/16] 0.0, 128
        %8571 = vxpose.xlu0.b32.cont [14/16] 0.0, 128
        %8572 = vxpose.xlu0.b32.cont [15/16] 0.0, 128
        %8573 = vxpose.xlu0.b32.end [16/16] 0.0, 128
        %v8574 = vpop.trf.xlu0
        %v8575 = vpop.trf.xlu0
        %v8576 = vpop.trf.xlu0
        %v8577 = vpop.trf.xlu0
        %v8578 = vpop.trf.xlu0
        %v8579 = vpop.trf.xlu0
        %v8580 = vpop.trf.xlu0
        %v8581 = vpop.trf.xlu0
        %v8582 = vpop.trf.xlu0
        %v8583 = vpop.trf.xlu0
        %v8584 = vpop.trf.xlu0
        %v8585 = vpop.trf.xlu0
        %v8586 = vpop.trf.xlu0
        %v8587 = vpop.trf.xlu0
        %v8588 = vpop.trf.xlu0
        %v8589 = vpop.trf.xlu0
        %8590 = vxpose.xlu0.b32.start [1/16] %v8475, 128
        %8591 = vxpose.xlu0.b32.cont [2/16] 0.0, 128
        %8592 = vxpose.xlu0.b32.cont [3/16] 0.0, 128
        %8593 = vxpose.xlu0.b32.cont [4/16] 0.0, 128
        %8594 = vxpose.xlu0.b32.cont [5/16] 0.0, 128
        %8595 = vxpose.xlu0.b32.cont [6/16] 0.0, 128
        %8596 = vxpose.xlu0.b32.cont [7/16] 0.0, 128
        %8597 = vxpose.xlu0.b32.cont [8/16] 0.0, 128
        %8598 = vxpose.xlu0.b32.cont [9/16] 0.0, 128
        %8599 = vxpose.xlu0.b32.cont [10/16] 0.0, 128
        %8600 = vxpose.xlu0.b32.cont [11/16] 0.0, 128
        %8601 = vxpose.xlu0.b32.cont [12/16] 0.0, 128
        %8602 = vxpose.xlu0.b32.cont [13/16] 0.0, 128
        %8603 = vxpose.xlu0.b32.cont [14/16] 0.0, 128
        %8604 = vxpose.xlu0.b32.cont [15/16] 0.0, 128
        %8605 = vxpose.xlu0.b32.end [16/16] 0.0, 128
        %v8606 = vpop.trf.xlu0
        %v8607 = vpop.trf.xlu0
        %v8608 = vpop.trf.xlu0
        %v8609 = vpop.trf.xlu0
        %v8610 = vpop.trf.xlu0
        %v8611 = vpop.trf.xlu0
        %v8612 = vpop.trf.xlu0
        %v8613 = vpop.trf.xlu0
        %v8614 = vpop.trf.xlu0
        %v8615 = vpop.trf.xlu0
        %v8616 = vpop.trf.xlu0
        %v8617 = vpop.trf.xlu0
        %v8618 = vpop.trf.xlu0
        %v8619 = vpop.trf.xlu0
        %v8620 = vpop.trf.xlu0
        %v8621 = vpop.trf.xlu0
        %8622 = vxpose.xlu0.b32.start [1/16] %v8521, 128
        %8623 = vxpose.xlu0.b32.cont [2/16] 0.0, 128
        %8624 = vxpose.xlu0.b32.cont [3/16] 0.0, 128
        %8625 = vxpose.xlu0.b32.cont [4/16] 0.0, 128
        %8626 = vxpose.xlu0.b32.cont [5/16] 0.0, 128
        %8627 = vxpose.xlu0.b32.cont [6/16] 0.0, 128
        %8628 = vxpose.xlu0.b32.cont [7/16] 0.0, 128
        %8629 = vxpose.xlu0.b32.cont [8/16] 0.0, 128
        %8630 = vxpose.xlu0.b32.cont [9/16] 0.0, 128
        %8631 = vxpose.xlu0.b32.cont [10/16] 0.0, 128
        %8632 = vxpose.xlu0.b32.cont [11/16] 0.0, 128
        %8633 = vxpose.xlu0.b32.cont [12/16] 0.0, 128
        %8634 = vxpose.xlu0.b32.cont [13/16] 0.0, 128
        %8635 = vxpose.xlu0.b32.cont [14/16] 0.0, 128
        %8636 = vxpose.xlu0.b32.cont [15/16] 0.0, 128
        %8637 = vxpose.xlu0.b32.end [16/16] 0.0, 128
        %v8638 = vpop.trf.xlu0
        %v8639 = vpop.trf.xlu0
        %v8640 = vpop.trf.xlu0
        %v8641 = vpop.trf.xlu0
        %v8642 = vpop.trf.xlu0
        %v8643 = vpop.trf.xlu0
        %v8644 = vpop.trf.xlu0
        %v8645 = vpop.trf.xlu0
        %v8646 = vpop.trf.xlu0
        %v8647 = vpop.trf.xlu0
        %v8648 = vpop.trf.xlu0
        %v8649 = vpop.trf.xlu0
        %v8650 = vpop.trf.xlu0
        %v8651 = vpop.trf.xlu0
        %v8652 = vpop.trf.xlu0
        %v8653 = vpop.trf.xlu0
        %v8654 = vcombine.low %v8542, %v8606
        %v8655 = vcombine.high %v8542, %v8606
        %v8657 = vunpack.c.l.s4 1983009808
        %v8658 = vunpack.c.0.s8 %v8657
        %v8659 = vlaneseq
        %v8660 = vshrl.u32 %v8659, 7
        %v8661 = vsub.s32 %v8658, %v8660
        %v8662 = vrot.slane %v8654, %v8661
        %v8664 = vunpack.c.l.s4 1983009808
        %v8665 = vunpack.c.0.s8 %v8664
        %v8666 = vlaneseq
        %v8667 = vshrl.u32 %v8666, 7
        %v8668 = vsub.s32 %v8665, %v8667
        %v8669 = vrot.slane %v8655, %v8668
        %v8670 = vcombine.low %v8574, %v8638
        %v8671 = vcombine.high %v8574, %v8638
        %v8673 = vunpack.c.l.s4 1983009808
        %v8674 = vunpack.c.0.s8 %v8673
        %v8675 = vlaneseq
        %v8676 = vshrl.u32 %v8675, 7
        %v8677 = vsub.s32 %v8674, %v8676
        %v8678 = vrot.slane %v8670, %v8677
        %v8680 = vunpack.c.l.s4 1983009808
        %v8681 = vunpack.c.0.s8 %v8680
        %v8682 = vlaneseq
        %v8683 = vshrl.u32 %v8682, 7
        %v8684 = vsub.s32 %v8681, %v8683
        %v8685 = vrot.slane %v8671, %v8684
        %v8686 = vcombine.low %v8662, %v8678
        %v8687 = vcombine.high %v8662, %v8678
        %v8689 = vunpack.c.l.s4 1934713408
        %v8690 = vunpack.c.0.s8 %v8689
        %v8691 = vlaneseq
        %v8692 = vshrl.u32 %v8691, 7
        %v8693 = vsub.s32 %v8690, %v8692
        %v8694 = vrot.slane %v8686, %v8693
        %v8696 = vunpack.c.l.s4 1934713408
        %v8697 = vunpack.c.0.s8 %v8696
        %v8698 = vlaneseq
        %v8699 = vshrl.u32 %v8698, 7
        %v8700 = vsub.s32 %v8697, %v8699
        %v8701 = vrot.slane %v8687, %v8700
        %v8702 = vcombine.low %v8669, %v8685
        %v8703 = vcombine.high %v8669, %v8685
        %v8705 = vunpack.c.l.s4 1934713408
        %v8706 = vunpack.c.0.s8 %v8705
        %v8707 = vlaneseq
        %v8708 = vshrl.u32 %v8707, 7
        %v8709 = vsub.s32 %v8706, %v8708
        %v8710 = vrot.slane %v8702, %v8709
        %v8712 = vunpack.c.l.s4 1934713408
        %v8713 = vunpack.c.0.s8 %v8712
        %v8714 = vlaneseq
        %v8715 = vshrl.u32 %v8714, 7
        %v8716 = vsub.s32 %v8713, %v8715
        %v8717 = vrot.slane %v8703, %v8716
        %v8718 = vcombine.high %v8694, 0.0
        %v8719 = vcombine.high %v8701, 0.0
        %v8720 = vcombine.high %v8710, 0.0
        %v8721 = vcombine.high %v8717, 0.0
        %v8722 = vcombine.low %v8694, %v8701
        %v8724 = vunpack.c.l.s4 1983009808
        %v8725 = vunpack.c.0.s8 %v8724
        %v8726 = vlaneseq
        %v8727 = vshrl.u32 %v8726, 7
        %v8728 = vsub.s32 %v8725, %v8727
        %v8729 = vrot.slane %v8722, %v8728
        %v8730 = vcombine.low %v8718, %v8719
        %v8732 = vunpack.c.l.s4 1983009808
        %v8733 = vunpack.c.0.s8 %v8732
        %v8734 = vlaneseq
        %v8735 = vshrl.u32 %v8734, 7
        %v8736 = vsub.s32 %v8733, %v8735
        %v8737 = vrot.slane %v8730, %v8736
        %v8738 = vcombine.low %v8710, %v8717
        %v8740 = vunpack.c.l.s4 1983009808
        %v8741 = vunpack.c.0.s8 %v8740
        %v8742 = vlaneseq
        %v8743 = vshrl.u32 %v8742, 7
        %v8744 = vsub.s32 %v8741, %v8743
        %v8745 = vrot.slane %v8738, %v8744
        %v8746 = vcombine.low %v8720, %v8721
        %v8748 = vunpack.c.l.s4 1983009808
        %v8749 = vunpack.c.0.s8 %v8748
        %v8750 = vlaneseq
        %v8751 = vshrl.u32 %v8750, 7
        %v8752 = vsub.s32 %v8749, %v8751
        %v8753 = vrot.slane %v8746, %v8752
        %v8754 = vcombine.low %v8729, %v8737
        %v8755 = vcombine.high %v8729, %v8737
        %v8757 = vunpack.c.l.s4 1934713408
        %v8758 = vunpack.c.0.s8 %v8757
        %v8759 = vlaneseq
        %v8760 = vshrl.u32 %v8759, 7
        %v8761 = vsub.s32 %v8758, %v8760
        %v8762 = vrot.slane %v8754, %v8761
        %v8764 = vunpack.c.l.s4 1934713408
        %v8765 = vunpack.c.0.s8 %v8764
        %v8766 = vlaneseq
        %v8767 = vshrl.u32 %v8766, 7
        %v8768 = vsub.s32 %v8765, %v8767
        %v8769 = vrot.slane %v8755, %v8768
        %v8770 = vcombine.low %v8745, %v8753
        %v8771 = vcombine.high %v8745, %v8753
        %v8773 = vunpack.c.l.s4 1934713408
        %v8774 = vunpack.c.0.s8 %v8773
        %v8775 = vlaneseq
        %v8776 = vshrl.u32 %v8775, 7
        %v8777 = vsub.s32 %v8774, %v8776
        %v8778 = vrot.slane %v8770, %v8777
        %v8780 = vunpack.c.l.s4 1934713408
        %v8781 = vunpack.c.0.s8 %v8780
        %v8782 = vlaneseq
        %v8783 = vshrl.u32 %v8782, 7
        %v8784 = vsub.s32 %v8781, %v8783
        %v8785 = vrot.slane %v8771, %v8784
        %v8786 = vcombine.low %v8762, %v8778
        %v8787 = vcombine.high %v8762, %v8778
        %v8788 = vcombine.low %v8769, %v8785
        %v8789 = vcombine.high %v8769, %v8785
        %8791 = vrot.lane.b32.xlu0 %v8787, 8
        %v8792 = vpop.permute.xlu0 %8791
        %8795 = vrot.lane.b32.xlu0 %v8788, 16
        %v8796 = vpop.permute.xlu0 %8795
        %8799 = vrot.lane.b32.xlu0 %v8789, 24
        %v8800 = vpop.permute.xlu0 %8799
        %v8802 = vsel %vm1171, %v8786, %v8792
        %v8803 = vsel %vm2290, %v8802, %v8796
        %v8804 = vsel %vm2292, %v8803, %v8800
        %v8805 = vpack.c.bf16 %v8804, %v8804
        %v8806 = vld [vmem:[%s4682] sm:$0xf]
        %v8807 = vld [vmem:[%s4682 + $0x8] sm:$0xf]
        %v8808 = vld [vmem:[%s4682 + $0x10] sm:$0xf]
        %v8809 = vld [vmem:[%s4682 + $0x18] sm:$0xf]
        %v8814 = vunpack.c.l.b16 %v8806
        %v8815 = vunpack.c.l.b16 %v8807
        %v8816 = vunpack.c.l.b16 %v8808
        %v8817 = vunpack.c.l.b16 %v8809
        %v8818 = vpack.c.b16 %v8815, %v8814
        %v8819 = vpack.c.b16 %v8817, %v8816
        %8820 = vrot.lane.b32.xlu0 %v8818, 32
        %v8821 = vpop.permute.xlu0 %8820
        %8822 = vrot.lane.b32.xlu0 %v8819, 32
        %v8823 = vpop.permute.xlu0 %8822
        %v8827 = vsel %vm306, %v8805, 0
        %8829 = vmatprep.subr.bf16.mxu0 0
        %8830 = vmatpush1.bf16.msra.mxu0 0
        %8831 = vmatprep.subr.bf16.mxu0 0
        %8832 = vmatpush1.bf16.msra.mxu0 0
        %8833 = vmatprep.subr.bf16.mxu0 0
        %8834 = vmatpush1.bf16.msra.mxu0 0
        %8835 = vmatprep.subr.bf16.mxu0 0
        %8836 = vmatpush1.bf16.msra.mxu0 0
        %8837 = vmatprep.subr.bf16.mxu0 0
        %8838 = vmatpush1.bf16.msra.mxu0 0
        %8839 = vmatprep.subr.bf16.mxu0 0
        %8840 = vmatpush1.bf16.msra.mxu0 0
        %8841 = vmatprep.subr.bf16.mxu0 0
        %8842 = vmatpush1.bf16.msra.mxu0 %v8823
        %8843 = vmatprep.subr.bf16.mxu0 0
        %8844 = vmatpush1.bf16.msra.mxu0 %v8821
        %8845 = vmatprep.subr.bf16.mxu0 0
        %8846 = vmatpush2.bf16.msra.mxu0 0
        %8847 = vmatprep.subr.bf16.mxu0 0
        %8848 = vmatpush2.bf16.msra.mxu0 0
        %8849 = vmatprep.subr.bf16.mxu0 0
        %8850 = vmatpush2.bf16.msra.mxu0 0
        %8851 = vmatprep.subr.bf16.mxu0 0
        %8852 = vmatpush2.bf16.msra.mxu0 0
        %8853 = vmatprep.subr.bf16.mxu0 0
        %8854 = vmatpush2.bf16.msra.mxu0 0
        %8855 = vmatprep.subr.bf16.mxu0 0
        %8856 = vmatpush2.bf16.msra.mxu0 0
        %8857 = vmatprep.subr.bf16.mxu0 0
        %8858 = vmatpush2.bf16.msra.mxu0 0
        %8859 = vmatprep.subr.bf16.mxu0 0
        %8860 = vmatpush2.bf16.msra.mxu0 0
        %8861 = vmatprep.mubr.bf16.mxu0 0
        %8862 = vmatmul.mubr.bf16.gmra.mxu0 %v8827
        %v8863 = vpop.f32.mrf.mxu0
        %v8864 = vadd.f32 %v6647, %v8863
        %v8865 = vpop.f32.mrf.mxu0
        %v8866 = vpop.f32.mrf.mxu0
        %v8867 = vpop.f32.mrf.mxu0
        %8868 = vdwg.mxu0
        %v8869 = vadd.f32 %v6852, %v8864
        %v8870 = vsel %vm306, %v8869, 0.0
        %8871 = vadd.xlane.f32.xlu0 %v8870
        %v8872 = vpop.xlane.xlu0 %8871
        %v8873 = vmul.f32 %v8872, %v310
        %v8874 = vsub.f32 %v8869, %v8873
        %v8875 = vmul.f32 %v8874, %v8874
        %v8876 = vsel %vm306, %v8875, 0.0
        %8877 = vadd.xlane.f32.xlu0 %v8876
        %v8878 = vpop.xlane.xlu0 %8877
        %v8879 = vmul.f32 %v8878, %v310
        %v8880 = vadd.f32 %v8879, 1e-05
        %v8881 = vrsqrt.pop %v8880
        %v8882 = vmul.f32 %v8874, %v8881
        %v8883 = vmul.f32 %v8882, %v6724
        %v8884 = vadd.f32 %v8883, %v6729
        %v8885 = vpack.c.bf16 %v8884, %v8884
        %v8886 = vld [vmem:[%s4682 + $0x4] sm:$0xf]
        %v8887 = vld [vmem:[%s4682 + $0xc] sm:$0xf]
        %v8888 = vld [vmem:[%s4682 + $0x14] sm:$0xf]
        %v8889 = vld [vmem:[%s4682 + $0x1c] sm:$0xf]
        %v8894 = vunpack.c.l.b16 %v8886
        %v8895 = vunpack.c.l.b16 %v8887
        %v8896 = vunpack.c.l.b16 %v8888
        %v8897 = vunpack.c.l.b16 %v8889
        %v8898 = vpack.c.b16 %v8895, %v8894
        %v8899 = vpack.c.b16 %v8897, %v8896
        %v8903 = vsel %vm306, %v8885, 0
        %8905 = vmatprep.subr.bf16.mxu0 0
        %8906 = vmatpush1.bf16.msra.mxu0 0
        %8907 = vmatprep.subr.bf16.mxu0 0
        %8908 = vmatpush1.bf16.msra.mxu0 0
        %8909 = vmatprep.subr.bf16.mxu0 0
        %8910 = vmatpush1.bf16.msra.mxu0 0
        %8911 = vmatprep.subr.bf16.mxu0 0
        %8912 = vmatpush1.bf16.msra.mxu0 0
        %8913 = vmatprep.subr.bf16.mxu0 0
        %8914 = vmatpush1.bf16.msra.mxu0 0
        %8915 = vmatprep.subr.bf16.mxu0 0
        %8916 = vmatpush1.bf16.msra.mxu0 0
        %8917 = vmatprep.subr.bf16.mxu0 0
        %8918 = vmatpush1.bf16.msra.mxu0 %v8899
        %8919 = vmatprep.subr.bf16.mxu0 0
        %8920 = vmatpush1.bf16.msra.mxu0 %v8898
        %8921 = vmatprep.subr.bf16.mxu0 0
        %8922 = vmatpush2.bf16.msra.mxu0 0
        %8923 = vmatprep.subr.bf16.mxu0 0
        %8924 = vmatpush2.bf16.msra.mxu0 0
        %8925 = vmatprep.subr.bf16.mxu0 0
        %8926 = vmatpush2.bf16.msra.mxu0 0
        %8927 = vmatprep.subr.bf16.mxu0 0
        %8928 = vmatpush2.bf16.msra.mxu0 0
        %8929 = vmatprep.subr.bf16.mxu0 0
        %8930 = vmatpush2.bf16.msra.mxu0 0
        %8931 = vmatprep.subr.bf16.mxu0 0
        %8932 = vmatpush2.bf16.msra.mxu0 0
        %8933 = vmatprep.subr.bf16.mxu0 0
        %8934 = vmatpush2.bf16.msra.mxu0 0
        %8935 = vmatprep.subr.bf16.mxu0 0
        %8936 = vmatpush2.bf16.msra.mxu0 0
        %8937 = vmatprep.mubr.bf16.mxu0 0
        %8938 = vmatmul.mubr.bf16.gmra.mxu0 %v8903
        %v8939 = vpop.f32.mrf.mxu0
        %v8940 = vadd.f32 %v6739, %v8939
        %v8941 = vpop.f32.mrf.mxu0
        %v8942 = vpop.f32.mrf.mxu0
        %v8943 = vpop.f32.mrf.mxu0
        %8944 = vdwg.mxu0
        %v8945 = vmax.f32 %v8940, 0.0
        %v8946 = vpack.c.bf16 %v8945, %v8945
        %8947 = vrot.lane.b32.xlu0 %v8898, 96
        %v8948 = vpop.permute.xlu0 %8947
        %8949 = vrot.lane.b32.xlu0 %v8899, 96
        %v8950 = vpop.permute.xlu0 %8949
        %v8954 = vsel %vm306, %v8946, 0
        %8956 = vmatprep.subr.bf16.mxu0 0
        %8957 = vmatpush1.bf16.msra.mxu0 0
        %8958 = vmatprep.subr.bf16.mxu0 0
        %8959 = vmatpush1.bf16.msra.mxu0 0
        %8960 = vmatprep.subr.bf16.mxu0 0
        %8961 = vmatpush1.bf16.msra.mxu0 0
        %8962 = vmatprep.subr.bf16.mxu0 0
        %8963 = vmatpush1.bf16.msra.mxu0 0
        %8964 = vmatprep.subr.bf16.mxu0 0
        %8965 = vmatpush1.bf16.msra.mxu0 0
        %8966 = vmatprep.subr.bf16.mxu0 0
        %8967 = vmatpush1.bf16.msra.mxu0 0
        %8968 = vmatprep.subr.bf16.mxu0 0
        %8969 = vmatpush1.bf16.msra.mxu0 %v8950
        %8970 = vmatprep.subr.bf16.mxu0 0
        %8971 = vmatpush1.bf16.msra.mxu0 %v8948
        %8972 = vmatprep.subr.bf16.mxu0 0
        %8973 = vmatpush2.bf16.msra.mxu0 0
        %8974 = vmatprep.subr.bf16.mxu0 0
        %8975 = vmatpush2.bf16.msra.mxu0 0
        %8976 = vmatprep.subr.bf16.mxu0 0
        %8977 = vmatpush2.bf16.msra.mxu0 0
        %8978 = vmatprep.subr.bf16.mxu0 0
        %8979 = vmatpush2.bf16.msra.mxu0 0
        %8980 = vmatprep.subr.bf16.mxu0 0
        %8981 = vmatpush2.bf16.msra.mxu0 0
        %8982 = vmatprep.subr.bf16.mxu0 0
        %8983 = vmatpush2.bf16.msra.mxu0 0
        %8984 = vmatprep.subr.bf16.mxu0 0
        %8985 = vmatpush2.bf16.msra.mxu0 0
        %8986 = vmatprep.subr.bf16.mxu0 0
        %8987 = vmatpush2.bf16.msra.mxu0 0
        %8988 = vmatprep.mubr.bf16.mxu0 0
        %8989 = vmatmul.mubr.bf16.gmra.mxu0 %v8954
        %v8990 = vpop.f32.mrf.mxu0
        %v8991 = vadd.f32 %v6800, %v8990
        %v8992 = vpop.f32.mrf.mxu0
        %v8993 = vpop.f32.mrf.mxu0
        %v8994 = vpop.f32.mrf.mxu0
        %8995 = vdwg.mxu0
        %v8996 = vadd.f32 %v8991, %v8869
        %8997 = vst.msk [vmem:[%s2507] sm:$0xff] %vm306, %v8996
        // Predicated region
        $region49: #{tpu_custom_call.1} parent=39 // pred_check
          %p8998 = pneg %p289
        $region50: #{tpu_custom_call.1} parent=39 // pred_check_branch
          %9000 = sbr.rel (%p8998) target = $region52
        $region51: #{tpu_custom_call.1} parent=39 // pred_region
          %v9001 = vld [vmem:[#allocation2] sm:$0xff]
          %v9002 = vpack.c.bf16 %v9001, %v9001
          %v9003 = vld [vmem:[%s3] sm:$0xf]
          %v9004 = vld [vmem:[%s3 + $0x4] sm:$0xf]
          %v9005 = vld [vmem:[%s3 + $0x8] sm:$0xf]
          %v9006 = vld [vmem:[%s3 + $0xc] sm:$0xf]
          %v9007 = vld [vmem:[%s4] sm:$0x1]
          %v9009 = vlaneseq
          %v9010 = vshrl.u32 %v9009, 7
          %v9011 = vsub.s32 0, %v9010
          %v9012 = vrot.slane %v9007, %v9011
          %v9018 = vunpack.c.l.b16 %v9003
          %v9019 = vunpack.c.l.b16 %v9004
          %v9020 = vunpack.c.l.b16 %v9005
          %v9021 = vunpack.c.l.b16 %v9006
          %v9022 = vpack.c.b16 %v9019, %v9018
          %v9023 = vpack.c.b16 %v9021, %v9020
          %v9027 = vsel %vm306, %v9002, 0
          %9029 = vmatprep.subr.bf16.mxu0 0
          %9030 = vmatpush1.bf16.msra.mxu0 0
          %9031 = vmatprep.subr.bf16.mxu0 0
          %9032 = vmatpush1.bf16.msra.mxu0 0
          %9033 = vmatprep.subr.bf16.mxu0 0
          %9034 = vmatpush1.bf16.msra.mxu0 0
          %9035 = vmatprep.subr.bf16.mxu0 0
          %9036 = vmatpush1.bf16.msra.mxu0 0
          %9037 = vmatprep.subr.bf16.mxu0 0
          %9038 = vmatpush1.bf16.msra.mxu0 0
          %9039 = vmatprep.subr.bf16.mxu0 0
          %9040 = vmatpush1.bf16.msra.mxu0 0
          %9041 = vmatprep.subr.bf16.mxu0 0
          %9042 = vmatpush1.bf16.msra.mxu0 %v9023
          %9043 = vmatprep.subr.bf16.mxu0 0
          %9044 = vmatpush1.bf16.msra.mxu0 %v9022
          %9045 = vmatprep.subr.bf16.mxu0 0
          %9046 = vmatpush2.bf16.msra.mxu0 0
          %9047 = vmatprep.subr.bf16.mxu0 0
          %9048 = vmatpush2.bf16.msra.mxu0 0
          %9049 = vmatprep.subr.bf16.mxu0 0
          %9050 = vmatpush2.bf16.msra.mxu0 0
          %9051 = vmatprep.subr.bf16.mxu0 0
          %9052 = vmatpush2.bf16.msra.mxu0 0
          %9053 = vmatprep.subr.bf16.mxu0 0
          %9054 = vmatpush2.bf16.msra.mxu0 0
          %9055 = vmatprep.subr.bf16.mxu0 0
          %9056 = vmatpush2.bf16.msra.mxu0 0
          %9057 = vmatprep.subr.bf16.mxu0 0
          %9058 = vmatpush2.bf16.msra.mxu0 0
          %9059 = vmatprep.subr.bf16.mxu0 0
          %9060 = vmatpush2.bf16.msra.mxu0 0
          %9061 = vmatprep.mubr.bf16.mxu0 0
          %9062 = vmatmul.mubr.bf16.gmra.mxu0 %v9027
          %v9063 = vpop.f32.mrf.mxu0
          %v9064 = vadd.f32 %v9012, %v9063
          %v9065 = vpop.f32.mrf.mxu0
          %v9066 = vpop.f32.mrf.mxu0
          %v9067 = vpop.f32.mrf.mxu0
          %9068 = vdwg.mxu0
          %9069 = vmax.xlane.f32.xlu0 %v9064
          %v9070 = vpop.xlane.xlu0 %9069
          %v9071 = vsub.f32 %v9064, %v9070
          %v9072 = vmul.f32 %v9071, 1.442695
          %v9073 = vpow.pop %v9072
          %9074 = vadd.xlane.f32.xlu0 %v9073
          %v9075 = vpop.xlane.xlu0 %9074
          %v9076 = vrcp.pop %v9075
          %v9077 = vmul.f32 %v9073, %v9076
          %9078 = vst [vmem:[%s272] sm:$0xff] %v9077
          %v9079 = vld [vmem:[%s2507] sm:$0xff]
          %v9080 = vpack.c.bf16 %v9079, %v9079
          %v9081 = vld [vmem:[%s3] sm:$0xf]
          %v9082 = vld [vmem:[%s3 + $0x4] sm:$0xf]
          %v9083 = vld [vmem:[%s3 + $0x8] sm:$0xf]
          %v9084 = vld [vmem:[%s3 + $0xc] sm:$0xf]
          %v9085 = vld [vmem:[%s4] sm:$0x1]
          %v9087 = vlaneseq
          %v9088 = vshrl.u32 %v9087, 7
          %v9089 = vsub.s32 0, %v9088
          %v9090 = vrot.slane %v9085, %v9089
          %v9096 = vunpack.c.l.b16 %v9081
          %v9097 = vunpack.c.l.b16 %v9082
          %v9098 = vunpack.c.l.b16 %v9083
          %v9099 = vunpack.c.l.b16 %v9084
          %v9100 = vpack.c.b16 %v9097, %v9096
          %v9101 = vpack.c.b16 %v9099, %v9098
          %v9105 = vsel %vm306, %v9080, 0
          %9107 = vmatprep.subr.bf16.mxu0 0
          %9108 = vmatpush1.bf16.msra.mxu0 0
          %9109 = vmatprep.subr.bf16.mxu0 0
          %9110 = vmatpush1.bf16.msra.mxu0 0
          %9111 = vmatprep.subr.bf16.mxu0 0
          %9112 = vmatpush1.bf16.msra.mxu0 0
          %9113 = vmatprep.subr.bf16.mxu0 0
          %9114 = vmatpush1.bf16.msra.mxu0 0
          %9115 = vmatprep.subr.bf16.mxu0 0
          %9116 = vmatpush1.bf16.msra.mxu0 0
          %9117 = vmatprep.subr.bf16.mxu0 0
          %9118 = vmatpush1.bf16.msra.mxu0 0
          %9119 = vmatprep.subr.bf16.mxu0 0
          %9120 = vmatpush1.bf16.msra.mxu0 %v9101
          %9121 = vmatprep.subr.bf16.mxu0 0
          %9122 = vmatpush1.bf16.msra.mxu0 %v9100
          %9123 = vmatprep.subr.bf16.mxu0 0
          %9124 = vmatpush2.bf16.msra.mxu0 0
          %9125 = vmatprep.subr.bf16.mxu0 0
          %9126 = vmatpush2.bf16.msra.mxu0 0
          %9127 = vmatprep.subr.bf16.mxu0 0
          %9128 = vmatpush2.bf16.msra.mxu0 0
          %9129 = vmatprep.subr.bf16.mxu0 0
          %9130 = vmatpush2.bf16.msra.mxu0 0
          %9131 = vmatprep.subr.bf16.mxu0 0
          %9132 = vmatpush2.bf16.msra.mxu0 0
          %9133 = vmatprep.subr.bf16.mxu0 0
          %9134 = vmatpush2.bf16.msra.mxu0 0
          %9135 = vmatprep.subr.bf16.mxu0 0
          %9136 = vmatpush2.bf16.msra.mxu0 0
          %9137 = vmatprep.subr.bf16.mxu0 0
          %9138 = vmatpush2.bf16.msra.mxu0 0
          %9139 = vmatprep.mubr.bf16.mxu0 0
          %9140 = vmatmul.mubr.bf16.gmra.mxu0 %v9105
          %v9141 = vpop.f32.mrf.mxu0
          %v9142 = vadd.f32 %v9090, %v9141
          %v9143 = vpop.f32.mrf.mxu0
          %v9144 = vpop.f32.mrf.mxu0
          %v9145 = vpop.f32.mrf.mxu0
          %9146 = vdwg.mxu0
          %9147 = vmax.xlane.f32.xlu0 %v9142
          %v9148 = vpop.xlane.xlu0 %9147
          %v9149 = vsub.f32 %v9142, %v9148
          %v9150 = vmul.f32 %v9149, 1.442695
          %v9151 = vpow.pop %v9150
          %9152 = vadd.xlane.f32.xlu0 %v9151
          %v9153 = vpop.xlane.xlu0 %9152
          %v9154 = vrcp.pop %v9153
          %v9155 = vmul.f32 %v9151, %v9154
          %s9156 = scalar_lea.vmem %s272, 8 [#allocation6]
          %9157 = vst [vmem:[%s9156] sm:$0xff] %v9155
        $region52: #{tpu_custom_call.1} parent=39 // pred_fallthru
          _
        %s9158 = sand.u32 %s160, 1
        %s9159 = scalar_lea.sflag [#allocation5], %s9158
        %s9160 = sand.u32 %s160, 1
        %s9161 = smul.addr %s9160, 16
        %s9162 = scalar_lea.vmem [#allocation6], %s9161
        // Predicated region
        $region53: #{tpu_custom_call.1} parent=39 // pred_check
          %p9163 = pneg %p170
        $region54: #{tpu_custom_call.1} parent=39 // pred_check_branch
          %9165 = sbr.rel (%p9163) target = $region56
        $region55: #{tpu_custom_call.1} parent=39 // pred_region
          %s9166 = smul.u32 2, %s24
          %s9168 = ssub.s32 256, 256
          %9169 = vsyncadd %s9159, %s9168
          %s9170 = smul.addr %s9166, 128
          %s9171 = scalar_lea.hbm %s5, %s9170
          %s9172 = sshll.u32 %s9162, 4
          %s9173 = int_to_ptr.vmem [resolvable:$true] %s9172
          %9178 = dma.vmem_to_hbm [thread:$0]  %s9173, 256, %s9171, %s9159, 128, 128, 8
        $region56: #{tpu_custom_call.1} parent=39 // pred_fallthru
          _
      $region40: #{tpu_custom_call.1} parent=5 // pred_fallthru
        _
      %p9179 = scmp.le.s32.totalorder 2, %s15
      // Predicated region
      $region57: #{tpu_custom_call.1} parent=5 // pred_check
        %p9180 = pneg %p9179
      $region58: #{tpu_custom_call.1} parent=5 // pred_check_branch
        %9182 = sbr.rel (%p9180) target = $region60
      $region59: #{tpu_custom_call.1} parent=5 // pred_region
        %s9183 = ssub.s32 %s15, 2
        // Predicated region
        $region61: #{tpu_custom_call.1} parent=59 // pred_check
          %p9184 = pneg %p176
        $region62: #{tpu_custom_call.1} parent=59 // pred_check_branch
          %9186 = sbr.rel (%p9184) target = $region64
        $region63: #{tpu_custom_call.1} parent=59 // pred_region
          %s9187 = sand.u32 %s161, 1
          %s9188 = scalar_lea.sflag [#allocation5], %s9187
          %s9189 = sand.u32 %s161, 1
          %s9190 = smul.addr %s9189, 16
          %s9191 = scalar_lea.vmem [#allocation6], %s9190
          %9192 = dma.done %s9188, 256
        $region64: #{tpu_custom_call.1} parent=59 // pred_fallthru
          _
      $region60: #{tpu_custom_call.1} parent=5 // pred_fallthru
        _
    $region6: #{tpu_custom_call.1} parent=1 // loop_footer
      %s19 = sadd.s32 1, %s15
    $region7: #{tpu_custom_call.1} parent=1 // loop_footer_branch
      %14 = sbr.rel target = $region3
    $region8: #{tpu_custom_call.1} parent=1 // loop_exit
      _
    %9193 = vsyncpa [#allocation4], 1
    %s9194 = scalar_lea.sflag [#allocation4], 1
    %9195 = vsyncpa %s9194, 1
    %9196 = vsyncpa [#allocation5], 1
    %s9197 = scalar_lea.sflag [#allocation5], 1
    %9198 = vsyncpa %s9197, 1

</llo_original>
